<compile_context>
chip_gen: v7x
topology: tpu7x:2x2x1
jax: 0.10.0
libtpu: 0.0.40
codegen_flags: <defaults>
</compile_context>

<pallas_src>
import functools
import math

import jax
import jax.numpy as jnp
from jax.experimental import pallas as pl
from jax.experimental.pallas import tpu as pltpu

LN_EPS = 1e-5                                  # torch nn.LayerNorm default
VMEM_LIMIT_BYTES = 48 * 1024 * 1024            # below v7x 64 MiB physical, above v5e/v6e defaults
_TILE_CANDIDATES = (512, 256, 128)             # tune per chip: 128-aligned on v5e, 256 on v6e/v7x


# ---------------------------------------------------------------------------
# in-kernel math helpers
# ---------------------------------------------------------------------------
def _erf(x):
    # Abramowitz & Stegun 7.1.26 (|err| < 1.5e-7); Mosaic has no native erf.
    a1, a2, a3, a4, a5 = 0.254829592, -0.284496736, 1.421413741, -1.453152027, 1.061405429
    p = 0.3275911
    s = jnp.where(x >= 0.0, 1.0, -1.0)
    ax = jnp.abs(x)
    t = 1.0 / (1.0 + p * ax)
    y = 1.0 - ((((a5 * t + a4) * t + a3) * t + a2) * t + a1) * t * jnp.exp(-ax * ax)
    return s * y


def _gelu_exact(x):
    return 0.5 * x * (1.0 + _erf(x * (1.0 / math.sqrt(2.0))))


def _layer_norm(x, g, b):
    mu = jnp.mean(x, axis=-1, keepdims=True)
    var = jnp.mean((x - mu) ** 2, axis=-1, keepdims=True)
    return (x - mu) * jax.lax.rsqrt(var + LN_EPS) * g + b


def _row_mask(length, s, e):
    # (s, e) boolean mask: row i kept iff i < length (query-length mask)
    qpos = jax.lax.broadcasted_iota(jnp.int32, (s, e), 0)
    return qpos < length


def _pick_tile(dim):
    for c in _TILE_CANDIDATES:
        if dim >= c and dim % c == 0:
            return c
    return dim


def _cparams(*sems):
    return pltpu.CompilerParams(dimension_semantics=sems,
                                vmem_limit_bytes=VMEM_LIMIT_BYTES)


# ---------------------------------------------------------------------------
# Pallas kernels
# ---------------------------------------------------------------------------
def _embed_kernel(tlen_ref, emb_ref, pe_ref, o_ref, *, scale):
    # (emb * sqrt(E) + positional_encoding) * length_mask   (one batch / step)
    b = pl.program_id(0)
    s, e = pe_ref.shape
    y = emb_ref[...] * scale + pe_ref[...]
    o_ref[...] = jnp.where(_row_mask(tlen_ref[b], s, e), y, 0.0)


def _split_matmul_kernel(x_ref, w_ref, *refs):
    # tiled y = x @ W with f32 VMEM accumulator; final result is split along
    # the output (lane) dim into the separate, lane-dense output refs.
    out_refs, acc_ref = refs[:-1], refs[-1]

    @pl.when(pl.program_id(1) == 0)
    def _():
        acc_ref[...] = jnp.zeros_like(acc_ref)

    acc_ref[...] += jnp.dot(x_ref[...], w_ref[...], preferred_element_type=jnp.float32)

    @pl.when(pl.program_id(1) == pl.num_programs(1) - 1)
    def _():
        acc = acc_ref[...]
        off = 0
        for o_ref in out_refs:
            w_i = o_ref.shape[1]
            o_ref[...] = acc[:, off:off + w_i]
            off += w_i


def _self_attn_kernel(tlen_ref, flag_ref, q_ref, k_ref, v_ref, o_ref, *, causal, scale):
    # masked self-attention core for one (batch, head); pad+causal mask built
    # in-kernel from the SMEM length; deferred softmax normalization.
    b = pl.program_id(0)
    length = tlen_ref[b]
    # torch "any row entirely -inf" fallback (global, exactly like the module)
    fill = jnp.where(flag_ref[0] > 0, jnp.float32(-1e9), jnp.float32(-jnp.inf))
    q = q_ref[...] * scale                     # (Sq, hd), 1/sqrt(hd) folded in
    k = k_ref[...]
    v = v_ref[...]
    sq, sk = q.shape[0], k.shape[0]
    s = jnp.einsum('qd,kd->qk', q, k, preferred_element_type=jnp.float32)
    kpos = jax.lax.broadcasted_iota(jnp.int32, (sq, sk), 1)
    mask = kpos >= length
    if causal:
        qpos = jax.lax.broadcasted_iota(jnp.int32, (sq, sk), 0)
        mask = mask | (kpos > qpos)
    s = jnp.where(mask, fill, s)
    mx = jnp.max(s, axis=-1, keepdims=True)
    ex = jnp.exp(s - mx)
    denom = jnp.sum(ex, axis=-1, keepdims=True)
    ctx = jnp.einsum('qk,kd->qd', ex, v, preferred_element_type=jnp.float32)
    o_ref[...] = ctx * (1.0 / denom)           # deferred normalization


def _self_epilogue_kernel(tlen_ref, ctx_ref, wo_ref, bo_ref, res_ref,
                          lng_ref, lnb_ref, wq_ref, qn_ref, qp_ref):
    # self-attn out-proj + query-mask + residual, cross-attn pre-LayerNorm,
    # and the cross-attention Q projection — one kernel, one grid step / batch.
    b = pl.program_id(0)
    s, e = res_ref.shape
    y = jnp.dot(ctx_ref[...], wo_ref[...], preferred_element_type=jnp.float32) + bo_ref[...]
    y = jnp.where(_row_mask(tlen_ref[b], s, e), y, 0.0)
    qn = _layer_norm(y + res_ref[...], lng_ref[...], lnb_ref[...])
    qn_ref[...] = qn
    qp_ref[...] = jnp.dot(qn, wq_ref[...], preferred_element_type=jnp.float32)


def _cross_ffn_kernel(tlen_ref, klen_ref, q_ref, k_ref, v_ref, qn_ref,
                      wo_ref, bo_ref, ln1g_ref, ln1b_ref, w1_ref, b1_ref,
                      w2_ref, b2_ref, ln2g_ref, ln2b_ref, o_ref, *, scale):
    # fused: cross-attention core (key-padding mask, fill = -inf, matching
    # torch: no all-masked-row fallback in DecoderCrossAttention) + the
    # transpose(1,2).view head merge + out-proj + query-mask + residual
    # (onto query_norm) + full FeedForward sublayer (pre-LN, Lin-GELU-Lin,
    # mask, residual, post-LN).
    b = pl.program_id(0)
    qlen = tlen_ref[b]
    klen = klen_ref[b]
    n_heads, sq, _ = q_ref.shape
    sk = k_ref.shape[1]
    kpos = jax.lax.broadcasted_iota(jnp.int32, (sq, sk), 1)
    kmask = kpos >= klen

    ctx_heads = []
    for h in range(n_heads):                   # static unroll (H is small)
        qh = q_ref[h] * scale
        kh = k_ref[h]
        vh = v_ref[h]
        s = jnp.einsum('qd,kd->qk', qh, kh, preferred_element_type=jnp.float32)
        s = jnp.where(kmask, jnp.float32(-jnp.inf), s)
        mx = jnp.max(s, axis=-1, keepdims=True)
        ex = jnp.exp(s - mx)
        denom = jnp.sum(ex, axis=-1, keepdims=True)
        ch = jnp.einsum('qk,kd->qd', ex, vh, preferred_element_type=jnp.float32)
        ctx_heads.append(ch * (1.0 / denom))
    # torch transpose(1,2).contiguous().view(B, Sq, D): head h -> lanes [h*hd,(h+1)*hd)
    ctx = jnp.concatenate(ctx_heads, axis=-1)  # (Sq, D)

    s_, e_ = qn_ref.shape
    qmask = _row_mask(qlen, s_, e_)
    y = jnp.dot(ctx, wo_ref[...], preferred_element_type=jnp.float32) + bo_ref[...]
    y = jnp.where(qmask, y, 0.0)
    x1 = y + qn_ref[...]                       # cross-attn output_skip (residual onto query_norm)
    nx = _layer_norm(x1, ln1g_ref[...], ln1b_ref[...])
    h1 = _gelu_exact(jnp.dot(nx, w1_ref[...], preferred_element_type=jnp.float32) + b1_ref[...])
    f = jnp.dot(h1, w2_ref[...], preferred_element_type=jnp.float32) + b2_ref[...]
    f = jnp.where(qmask, f, 0.0)
    o_ref[...] = _layer_norm(f + x1, ln2g_ref[...], ln2b_ref[...])


# ---------------------------------------------------------------------------
# pallas_call wrappers
# ---------------------------------------------------------------------------
def embed_pallas(tlen, emb, pe, scale):
    B, S, E = emb.shape
    gs = pltpu.PrefetchScalarGridSpec(
        num_scalar_prefetch=1, grid=(B,),
        in_specs=[pl.BlockSpec((None, S, E), lambda b, *_: (b, 0, 0)),
                  pl.BlockSpec((S, E), lambda b, *_: (0, 0))],
        out_specs=pl.BlockSpec((None, S, E), lambda b, *_: (b, 0, 0)))
    return pl.pallas_call(
        functools.partial(_embed_kernel, scale=scale),
        grid_spec=gs,
        out_shape=jax.ShapeDtypeStruct((B, S, E), jnp.float32),
        compiler_params=_cparams("parallel"))(tlen, emb, pe)


def split_matmul_pallas(x2d, w, out_widths):
    # tiled (M, K) @ (K, N) with N = sum(out_widths); the result is emitted as
    # len(out_widths) separate lane-dense outputs (no XLA slicing afterwards).
    M, K = x2d.shape
    N = w.shape[1]
    assert sum(out_widths) == N
    tm = _pick_tile(M)
    tk = _pick_tile(K)
    gs = pltpu.PrefetchScalarGridSpec(
        num_scalar_prefetch=0, grid=(M // tm, K // tk),
        in_specs=[pl.BlockSpec((tm, tk), lambda i, k: (i, k)),
                  pl.BlockSpec((tk, N), lambda i, k: (k, 0))],
        out_specs=[pl.BlockSpec((tm, wd), lambda i, k: (i, 0)) for wd in out_widths],
        scratch_shapes=[pltpu.VMEM((tm, N), jnp.float32)])
    return pl.pallas_call(
        _split_matmul_kernel,
        grid_spec=gs,
        out_shape=tuple(jax.ShapeDtypeStruct((M, wd), jnp.float32) for wd in out_widths),
        compiler_params=_cparams("parallel", "arbitrary"))(x2d, w)


def self_attn_pallas(tlen, fill_flag, q4, k4, v4, causal):
    B, H, S, hd = q4.shape
    scale = 1.0 / math.sqrt(hd)
    spec = pl.BlockSpec((None, None, S, hd), lambda b, h, *_: (b, h, 0, 0))
    gs = pltpu.PrefetchScalarGridSpec(
        num_scalar_prefetch=2, grid=(B, H),
        in_specs=[spec, spec, spec],
        out_specs=pl.BlockSpec((None, None, S, hd), lambda b, h, *_: (b, h, 0, 0)))
    return pl.pallas_call(
        functools.partial(_self_attn_kernel, causal=causal, scale=scale),
        grid_spec=gs,
        out_shape=jax.ShapeDtypeStruct((B, H, S, hd), jnp.float32),
        compiler_params=_cparams("parallel", "parallel"))(tlen, fill_flag, q4, k4, v4)


def self_epilogue_pallas(tlen, ctx2, wo_t, bo, res, ln_g, ln_b, wq_t):
    B, S, D = ctx2.shape
    E = wo_t.shape[1]
    Dh = wq_t.shape[1]
    const = lambda shape: pl.BlockSpec(shape, lambda b, *_: (0,) * len(shape))
    gs = pltpu.PrefetchScalarGridSpec(
        num_scalar_prefetch=1, grid=(B,),
        in_specs=[pl.BlockSpec((None, S, D), lambda b, *_: (b, 0, 0)),
                  const((D, E)), const((1, E)),
                  pl.BlockSpec((None, S, E), lambda b, *_: (b, 0, 0)),
                  const((1, E)), const((1, E)), const((E, Dh))],
        out_specs=[pl.BlockSpec((None, S, E), lambda b, *_: (b, 0, 0)),
                   pl.BlockSpec((None, S, Dh), lambda b, *_: (b, 0, 0))])
    return pl.pallas_call(
        _self_epilogue_kernel,
        grid_spec=gs,
        out_shape=(jax.ShapeDtypeStruct((B, S, E), jnp.float32),
                   jax.ShapeDtypeStruct((B, S, Dh), jnp.float32)),
        compiler_params=_cparams("parallel"))(tlen, ctx2, wo_t, bo, res, ln_g, ln_b, wq_t)


def cross_ffn_pallas(tlen, klen, q4, k4, v4, qn, wo_t, bo, ffn_p):
    B, H, S, hd = q4.shape
    Sk = k4.shape[2]
    D, E = wo_t.shape
    F = ffn_p['w1_t'].shape[1]
    scale = 1.0 / math.sqrt(hd)
    const = lambda shape: pl.BlockSpec(shape, lambda b, *_: (0,) * len(shape))
    # TODO(synk): on v7x, weight specs below should use pipeline_mode=pl.Buffered(1)
    # once E/F reach production size (constant index_map => no double buffer needed).
    gs = pltpu.PrefetchScalarGridSpec(
        num_scalar_prefetch=2, grid=(B,),
        in_specs=[pl.BlockSpec((None, H, S, hd), lambda b, *_: (b, 0, 0, 0)),
                  pl.BlockSpec((None, H, Sk, hd), lambda b, *_: (b, 0, 0, 0)),
                  pl.BlockSpec((None, H, Sk, hd), lambda b, *_: (b, 0, 0, 0)),
                  pl.BlockSpec((None, S, E), lambda b, *_: (b, 0, 0)),
                  const((D, E)), const((1, E)),
                  const((1, E)), const((1, E)),
                  const((E, F)), const((1, F)),
                  const((F, E)), const((1, E)),
                  const((1, E)), const((1, E))],
        out_specs=pl.BlockSpec((None, S, E), lambda b, *_: (b, 0, 0)))
    return pl.pallas_call(
        functools.partial(_cross_ffn_kernel, scale=scale),
        grid_spec=gs,
        out_shape=jax.ShapeDtypeStruct((B, S, E), jnp.float32),
        compiler_params=_cparams("parallel"))(
            tlen, klen, q4, k4, v4, qn, wo_t, bo,
            ffn_p['ln1_g'], ffn_p['ln1_b'], ffn_p['w1_t'], ffn_p['b1'],
            ffn_p['w2_t'], ffn_p['b2'], ffn_p['ln2_g'], ffn_p['ln2_b'])


# ---------------------------------------------------------------------------
# parameters (deterministic synthetic init; kernel-ready layout built ONCE)
# ---------------------------------------------------------------------------
def init_params(rng, num_layers, vocab, E, D, F, max_len, pad_token=0):
    keys = jax.random.split(rng, 1 + num_layers)
    nrm = lambda k, s: 0.02 * jax.random.normal(k, s, jnp.float32)

    emb = nrm(keys[0], (vocab, E)).at[pad_token].set(0.0)   # padding_idx row = 0

    pos = jnp.arange(max_len, dtype=jnp.float32)[:, None]
    i = jnp.arange(0, E, 2, dtype=jnp.float32)
    ang = pos / jnp.power(10000.0, i / E)
    pe = jnp.zeros((max_len, E), jnp.float32)
    pe = pe.at[:, 0::2].set(jnp.sin(ang)).at[:, 1::2].set(jnp.cos(ang))

    layers, wk_all, wv_all = [], [], []
    for l in range(num_layers):
        k = jax.random.split(keys[1 + l], 16)
        # torch layout is (out, in); pre-transpose / fuse / reshape once here.
        sa_wq, sa_wk, sa_wv = nrm(k[0], (D, E)), nrm(k[1], (D, E)), nrm(k[2], (D, E))
        sa_wo, sa_bo = nrm(k[3], (E, D)), nrm(k[4], (E,))
        ca_wq, ca_wk, ca_wv = nrm(k[5], (D, E)), nrm(k[6], (D, E)), nrm(k[7], (D, E))
        ca_wo, ca_bo = nrm(k[8], (E, D)), nrm(k[9], (E,))
        w1, b1 = nrm(k[10], (F, E)), nrm(k[11], (F,))
        w2, b2 = nrm(k[12], (E, F)), nrm(k[13], (E,))
        wk_all.append(ca_wk.T)
        wv_all.append(ca_wv.T)
        layers.append(dict(
            sa_wqkv=jnp.concatenate([sa_wq.T, sa_wk.T, sa_wv.T], axis=1),  # (E, 3D)
            sa_wo_t=sa_wo.T, sa_bo=sa_bo.reshape(1, E),
            ca_ln_g=jnp.ones((1, E), jnp.float32), ca_ln_b=jnp.zeros((1, E), jnp.float32),
            ca_wq_t=ca_wq.T,
            ca_wo_t=ca_wo.T, ca_bo=ca_bo.reshape(1, E),
            ffn=dict(
                ln1_g=jnp.ones((1, E), jnp.float32), ln1_b=jnp.zeros((1, E), jnp.float32),
                w1_t=w1.T, b1=b1.reshape(1, F),
                w2_t=w2.T, b2=b2.reshape(1, E),
                ln2_g=jnp.ones((1, E), jnp.float32), ln2_b=jnp.zeros((1, E), jnp.float32)),
        ))
    return dict(emb=emb, pe=pe, layers=layers,
                enc_wk_all=jnp.concatenate(wk_all, axis=1),   # (E, D*L)
                enc_wv_all=jnp.concatenate(wv_all, axis=1))   # (E, D*L)


# ---------------------------------------------------------------------------
# DecoderBlocks forward (eval mode: dropout == identity)
# ---------------------------------------------------------------------------
def decoder_blocks_forward(params, target, target_lengths, enc_key, enc_value,
                           key_lengths, num_heads, causal=True):
    B, S = target.shape
    E = params['emb'].shape[1]
    L = len(params['layers'])
    D = params['layers'][0]['sa_wqkv'].shape[1] // 3
    H = num_heads
    hd = D // H
    Sk = enc_key.shape[1]

    tlen = target_lengths.astype(jnp.int32)
    klen = key_lengths.astype(jnp.int32)

    # ---- EmbeddingLayer ----
    # TODO(synk): token-embedding gather stays in XLA (no clean tiled form for a
    # (vocab, E) row gather at these sizes); scale + PE + length-mask are fused.
    emb = jnp.take(params['emb'], target, axis=0)                        # (B,S,E)
    x = embed_pallas(tlen, emb, params['pe'][:S], float(E) ** 0.5)

    # torch's "any row entirely -inf" fallback is global: with finite activations
    # a fully-masked row exists iff some target length <= 0.
    fill_flag = jnp.any(tlen <= 0).astype(jnp.int32).reshape(1)

    # ---- encoder-side K/V projections for every layer: two tiled matmuls ----
    kp_all = split_matmul_pallas(enc_key.reshape(B * Sk, E), params['enc_wk_all'], (D,) * L)
    vp_all = split_matmul_pallas(enc_value.reshape(B * Sk, E), params['enc_wv_all'], (D,) * L)
    # reproduce torch's raw .view(B, H, Sk, hd) head split (no transpose!)
    k4c = [kp.reshape(B, H, Sk, hd) for kp in kp_all]
    v4c = [vp.reshape(B, H, Sk, hd) for vp in vp_all]

    for li, lp in enumerate(params['layers']):
        # ---------- masked multi-head self-attention ----------
        q2d, k2d, v2d = split_matmul_pallas(x.reshape(B * S, E), lp['sa_wqkv'], (D, D, D))
        q4 = q2d.reshape(B, H, S, hd)            # raw torch .view head split
        k4 = k2d.reshape(B, H, S, hd)
        v4 = v2d.reshape(B, H, S, hd)
        ctx4 = self_attn_pallas(tlen, fill_flag, q4, k4, v4, causal)
        ctx2 = ctx4.reshape(B, S, D)             # raw torch .view merge
        # out-proj + qmask + residual + cross pre-LN + cross Q projection
        qn, qp = self_epilogue_pallas(tlen, ctx2, lp['sa_wo_t'], lp['sa_bo'], x,
                                      lp['ca_ln_g'], lp['ca_ln_b'], lp['ca_wq_t'])

        # ---------- cross-attention + FFN (single fused kernel) ----------
        q4x = qp.reshape(B, H, S, hd)            # raw .view head split
        x = cross_ffn_pallas(tlen, klen, q4x, k4c[li], v4c[li], qn,
                             lp['ca_wo_t'], lp['ca_bo'], lp['ffn'])

    return x


# ---------------------------------------------------------------------------
if __name__ == "__main__":
    num_layers = 2
    vocab_size = 32
    E = 32            # embed_size
    D = 32            # d_out_n_heads
    H = 4             # num_heads
    F = 64            # ffn_hidden_dim
    context_length = 16
    B, S, Sk = 2, 8, 8

    root = jax.random.PRNGKey(0)
    kp, kt, ke = jax.random.split(root, 3)
    params = init_params(kp, num_layers, vocab_size, E, D, F, context_length)

    target = jax.random.randint(kt, (B, S), 1, vocab_size, dtype=jnp.int32)
    target_lengths = jnp.array([8, 5], jnp.int32)
    enc_out = 0.5 * jax.random.normal(ke, (B, Sk, E), jnp.float32)   # encoder key == value
    key_lengths = jnp.array([8, 6], jnp.int32)

    fwd = jax.jit(decoder_blocks_forward, static_argnames=("num_heads", "causal"))
    out = fwd(params, target, target_lengths, enc_out, enc_out, key_lengths,
              num_heads=H, causal=True)
    out = jax.block_until_ready(out)
    assert out.shape == (B, S, E)
    assert bool(jnp.all(jnp.isfinite(out)))
    print("KERNEL_OK")
</pallas_src>

<mosaic_0001>
module attributes {stable_mosaic.version = 11 : i64} {
  func.func @_embed_kernel(%arg0: i32, %arg1: memref<2xi32, #tpu.memory_space<smem>>, %arg2: memref<1x8x32xf32, #tpu.memory_space<vmem>>, %arg3: memref<8x32xf32, #tpu.memory_space<vmem>>, %arg4: memref<1x8x32xf32, #tpu.memory_space<vmem>>) attributes {dimension_semantics = [#tpu.dimension_semantics<parallel>], iteration_bounds = array<i64: 2>, scalar_prefetch = 1 : i64, scratch_operands = 0 : i64, tpu.core_type = #tpu.core_type<tc>, window_params = [{transform_indices = @transform_0, window_bounds = array<i64: 1, 8, 32>}, {pipeline_mode = #tpu.pipeline_mode<synchronous>, transform_indices = @transform_1, window_bounds = array<i64: 8, 32>}, {transform_indices = @transform_2, window_bounds = array<i64: 1, 8, 32>}]} {
    %c0 = arith.constant 0 : index
    %c0_0 = arith.constant 0 : index
    %c0_1 = arith.constant 0 : index
    %0 = vector.load %arg2[%c0, %c0_0, %c0_1] : memref<1x8x32xf32, #tpu.memory_space<vmem>>, vector<1x8x32xf32>
    %1 = vector.shape_cast %0 : vector<1x8x32xf32> to vector<8x32xf32>
    %cst = arith.constant 5.65685415 : f32
    %2 = vector.broadcast %cst : f32 to vector<8x32xf32>
    %3 = arith.mulf %1, %2 : vector<8x32xf32>
    %c0_2 = arith.constant 0 : index
    %c0_3 = arith.constant 0 : index
    %4 = vector.load %arg3[%c0_2, %c0_3] : memref<8x32xf32, #tpu.memory_space<vmem>>, vector<8x32xf32>
    %5 = arith.addf %3, %4 : vector<8x32xf32>
    %6 = arith.index_cast %arg0 : i32 to index
    %7 = memref.load %arg1[%6] : memref<2xi32, #tpu.memory_space<smem>>
    %8 = tpu.iota {dimensions = array<i32: 0>} : vector<8x32xi32>
    %9 = vector.broadcast %7 : i32 to vector<8x32xi32>
    %10 = arith.cmpi slt, %8, %9 : vector<8x32xi32>
    %cst_4 = arith.constant 0.000000e+00 : f32
    %11 = vector.broadcast %cst_4 : f32 to vector<8x32xf32>
    %12 = arith.select %10, %5, %11 : vector<8x32xi1>, vector<8x32xf32>
    %c0_5 = arith.constant 0 : index
    %c0_6 = arith.constant 0 : index
    %c0_7 = arith.constant 0 : index
    %13 = vector.load %arg4[%c0_5, %c0_6, %c0_7] : memref<1x8x32xf32, #tpu.memory_space<vmem>>, vector<1x8x32xf32>
    %14 = vector.shape_cast %13 : vector<1x8x32xf32> to vector<8x32xf32>
    %15 = vector.shape_cast %12 : vector<8x32xf32> to vector<1x8x32xf32>
    tpu.vector_store %arg4[%c0_5, %c0_6, %c0_7], %15 {strides = array<i32>} : memref<1x8x32xf32, #tpu.memory_space<vmem>>, vector<1x8x32xf32>,
    return
  }
  func.func @transform_0(%arg0: i32, %arg1: memref<2xi32, #tpu.memory_space<smem>>) -> (i32, i32, i32) {
    %c0_i32 = arith.constant 0 : i32
    %c0_i32_0 = arith.constant 0 : i32
    %c0_i32_1 = arith.constant 0 : i32
    return %arg0, %c0_i32, %c0_i32_0 : i32, i32, i32
  }
  func.func @transform_1(%arg0: i32, %arg1: memref<2xi32, #tpu.memory_space<smem>>) -> (i32, i32) {
    %c0_i32 = arith.constant 0 : i32
    %c0_i32_0 = arith.constant 0 : i32
    %c0_i32_1 = arith.constant 0 : i32
    return %c0_i32, %c0_i32_0 : i32, i32
  }
  func.func @transform_2(%arg0: i32, %arg1: memref<2xi32, #tpu.memory_space<smem>>) -> (i32, i32, i32) {
    %c0_i32 = arith.constant 0 : i32
    %c0_i32_0 = arith.constant 0 : i32
    %c0_i32_1 = arith.constant 0 : i32
    return %arg0, %c0_i32, %c0_i32_0 : i32, i32, i32
  }
}

module attributes {stable_mosaic.version = 11 : i64} {
  func.func @_split_matmul_kernel(%arg0: i32, %arg1: i32, %arg2: memref<16x32xf32, #tpu.memory_space<vmem>>, %arg3: memref<32x96xf32, #tpu.memory_space<vmem>>, %arg4: memref<16x32xf32, #tpu.memory_space<vmem>>, %arg5: memref<16x32xf32, #tpu.memory_space<vmem>>, %arg6: memref<16x32xf32, #tpu.memory_space<vmem>>, %arg7: memref<16x96xf32, #tpu.memory_space<vmem>>) attributes {dimension_semantics = [#tpu.dimension_semantics<parallel>, #tpu.dimension_semantics<arbitrary>], iteration_bounds = array<i64: 1, 1>, scalar_prefetch = 0 : i64, scratch_operands = 1 : i64, tpu.core_type = #tpu.core_type<tc>, window_params = [{transform_indices = @transform_0, window_bounds = array<i64: 16, 32>}, {transform_indices = @transform_1, window_bounds = array<i64: 32, 96>}, {transform_indices = @transform_2, window_bounds = array<i64: 16, 32>}, {transform_indices = @transform_3, window_bounds = array<i64: 16, 32>}, {transform_indices = @transform_4, window_bounds = array<i64: 16, 32>}]} {
    %c0_i32 = arith.constant 0 : i32
    %0 = arith.cmpi eq, %arg1, %c0_i32 : i32
    %1 = arith.extui %0 : i1 to i32
    %c0_i32_0 = arith.constant 0 : i32
    %2 = arith.cmpi ne, %1, %c0_i32_0 : i32
    scf.if %2 {
      %cst_10 = arith.constant 0.000000e+00 : f32
      %12 = vector.broadcast %cst_10 : f32 to vector<16x96xf32>
      %c0_11 = arith.constant 0 : index
      %c0_12 = arith.constant 0 : index
      %13 = vector.load %arg7[%c0_11, %c0_12] : memref<16x96xf32, #tpu.memory_space<vmem>>, vector<16x96xf32>
      tpu.vector_store %arg7[%c0_11, %c0_12], %12 {strides = array<i32>} : memref<16x96xf32, #tpu.memory_space<vmem>>, vector<16x96xf32>,
    } else {
    }
    %c0 = arith.constant 0 : index
    %c0_1 = arith.constant 0 : index
    %3 = vector.load %arg7[%c0, %c0_1] : memref<16x96xf32, #tpu.memory_space<vmem>>, vector<16x96xf32>
    %c0_2 = arith.constant 0 : index
    %c0_3 = arith.constant 0 : index
    %4 = vector.load %arg2[%c0_2, %c0_3] : memref<16x32xf32, #tpu.memory_space<vmem>>, vector<16x32xf32>
    %c0_4 = arith.constant 0 : index
    %c0_5 = arith.constant 0 : index
    %5 = vector.load %arg3[%c0_4, %c0_5] : memref<32x96xf32, #tpu.memory_space<vmem>>, vector<32x96xf32>
    %cst = arith.constant dense<0.000000e+00> : vector<16x96xf32>
    %6 = tpu.matmul %4, %5, %cst {dimension_numbers = #tpu.dot_dimension_numbers<[1], [0], [0], [1], [0, 0, 1, 1], [], []>} : vector<16x32xf32>, vector<32x96xf32>, vector<16x96xf32> -> vector<16x96xf32>
    %7 = arith.addf %3, %6 : vector<16x96xf32>
    %c0_6 = arith.constant 0 : index
    %c0_7 = arith.constant 0 : index
    %8 = vector.load %arg7[%c0_6, %c0_7] : memref<16x96xf32, #tpu.memory_space<vmem>>, vector<16x96xf32>
    tpu.vector_store %arg7[%c0_6, %c0_7], %7 {strides = array<i32>} : memref<16x96xf32, #tpu.memory_space<vmem>>, vector<16x96xf32>,
    %c0_i32_8 = arith.constant 0 : i32
    %9 = arith.cmpi eq, %arg1, %c0_i32_8 : i32
    %10 = arith.extui %9 : i1 to i32
    %c0_i32_9 = arith.constant 0 : i32
    %11 = arith.cmpi ne, %10, %c0_i32_9 : i32
    scf.if %11 {
      %c0_10 = arith.constant 0 : index
      %c0_11 = arith.constant 0 : index
      %12 = vector.load %arg7[%c0_10, %c0_11] : memref<16x96xf32, #tpu.memory_space<vmem>>, vector<16x96xf32>
      %13 = vector.extract_strided_slice %12 {offsets = [0, 0], sizes = [16, 32], strides = [1, 1]} : vector<16x96xf32> to vector<16x32xf32>
      %c0_12 = arith.constant 0 : index
      %c0_13 = arith.constant 0 : index
      %14 = vector.load %arg4[%c0_12, %c0_13] : memref<16x32xf32, #tpu.memory_space<vmem>>, vector<16x32xf32>
      tpu.vector_store %arg4[%c0_12, %c0_13], %13 {strides = array<i32>} : memref<16x32xf32, #tpu.memory_space<vmem>>, vector<16x32xf32>,
      %15 = vector.extract_strided_slice %12 {offsets = [0, 32], sizes = [16, 32], strides = [1, 1]} : vector<16x96xf32> to vector<16x32xf32>
      %c0_14 = arith.constant 0 : index
      %c0_15 = arith.constant 0 : index
      %16 = vector.load %arg5[%c0_14, %c0_15] : memref<16x32xf32, #tpu.memory_space<vmem>>, vector<16x32xf32>
      tpu.vector_store %arg5[%c0_14, %c0_15], %15 {strides = array<i32>} : memref<16x32xf32, #tpu.memory_space<vmem>>, vector<16x32xf32>,
      %17 = vector.extract_strided_slice %12 {offsets = [0, 64], sizes = [16, 32], strides = [1, 1]} : vector<16x96xf32> to vector<16x32xf32>
      %c0_16 = arith.constant 0 : index
      %c0_17 = arith.constant 0 : index
      %18 = vector.load %arg6[%c0_16, %c0_17] : memref<16x32xf32, #tpu.memory_space<vmem>>, vector<16x32xf32>
      tpu.vector_store %arg6[%c0_16, %c0_17], %17 {strides = array<i32>} : memref<16x32xf32, #tpu.memory_space<vmem>>, vector<16x32xf32>,
    } else {
    }
    return
  }
  func.func @transform_0(%arg0: i32, %arg1: i32) -> (i32, i32) {
    %c0_i32 = arith.constant 0 : i32
    return %arg0, %arg1 : i32, i32
  }
  func.func @transform_1(%arg0: i32, %arg1: i32) -> (i32, i32) {
    %c0_i32 = arith.constant 0 : i32
    %c0_i32_0 = arith.constant 0 : i32
    return %arg1, %c0_i32 : i32, i32
  }
  func.func @transform_2(%arg0: i32, %arg1: i32) -> (i32, i32) {
    %c0_i32 = arith.constant 0 : i32
    %c0_i32_0 = arith.constant 0 : i32
    return %arg0, %c0_i32 : i32, i32
  }
  func.func @transform_3(%arg0: i32, %arg1: i32) -> (i32, i32) {
    %c0_i32 = arith.constant 0 : i32
    %c0_i32_0 = arith.constant 0 : i32
    return %arg0, %c0_i32 : i32, i32
  }
  func.func @transform_4(%arg0: i32, %arg1: i32) -> (i32, i32) {
    %c0_i32 = arith.constant 0 : i32
    %c0_i32_0 = arith.constant 0 : i32
    return %arg0, %c0_i32 : i32, i32
  }
}

module attributes {stable_mosaic.version = 11 : i64} {
  func.func @_self_attn_kernel(%arg0: i32, %arg1: i32, %arg2: memref<2xi32, #tpu.memory_space<smem>>, %arg3: memref<1xi32, #tpu.memory_space<smem>>, %arg4: memref<1x1x8x8xf32, #tpu.memory_space<vmem>>, %arg5: memref<1x1x8x8xf32, #tpu.memory_space<vmem>>, %arg6: memref<1x1x8x8xf32, #tpu.memory_space<vmem>>, %arg7: memref<1x1x8x8xf32, #tpu.memory_space<vmem>>) attributes {dimension_semantics = [#tpu.dimension_semantics<parallel>, #tpu.dimension_semantics<parallel>], iteration_bounds = array<i64: 2, 4>, scalar_prefetch = 2 : i64, scratch_operands = 0 : i64, tpu.core_type = #tpu.core_type<tc>, window_params = [{transform_indices = @transform_0, window_bounds = array<i64: 1, 1, 8, 8>}, {transform_indices = @transform_1, window_bounds = array<i64: 1, 1, 8, 8>}, {transform_indices = @transform_2, window_bounds = array<i64: 1, 1, 8, 8>}, {transform_indices = @transform_3, window_bounds = array<i64: 1, 1, 8, 8>}]} {
    %0 = arith.index_cast %arg0 : i32 to index
    %1 = memref.load %arg2[%0] : memref<2xi32, #tpu.memory_space<smem>>
    %c0 = arith.constant 0 : index
    %2 = memref.load %arg3[%c0] : memref<1xi32, #tpu.memory_space<smem>>
    %c0_i32 = arith.constant 0 : i32
    %3 = arith.cmpi sgt, %2, %c0_i32 : i32
    %cst = arith.constant -1.000000e+09 : f32
    %cst_0 = arith.constant 0xFF800000 : f32
    %4 = arith.select %3, %cst, %cst_0 : f32
    %c0_1 = arith.constant 0 : index
    %c0_2 = arith.constant 0 : index
    %c0_3 = arith.constant 0 : index
    %c0_4 = arith.constant 0 : index
    %5 = vector.load %arg4[%c0_1, %c0_2, %c0_3, %c0_4] : memref<1x1x8x8xf32, #tpu.memory_space<vmem>>, vector<1x1x8x8xf32>
    %6 = vector.shape_cast %5 : vector<1x1x8x8xf32> to vector<8x8xf32>
    %cst_5 = arith.constant 0.353553385 : f32
    %7 = vector.broadcast %cst_5 : f32 to vector<8x8xf32>
    %8 = arith.mulf %6, %7 : vector<8x8xf32>
    %c0_6 = arith.constant 0 : index
    %c0_7 = arith.constant 0 : index
    %c0_8 = arith.constant 0 : index
    %c0_9 = arith.constant 0 : index
    %9 = vector.load %arg5[%c0_6, %c0_7, %c0_8, %c0_9] : memref<1x1x8x8xf32, #tpu.memory_space<vmem>>, vector<1x1x8x8xf32>
    %10 = vector.shape_cast %9 : vector<1x1x8x8xf32> to vector<8x8xf32>
    %c0_10 = arith.constant 0 : index
    %c0_11 = arith.constant 0 : index
    %c0_12 = arith.constant 0 : index
    %c0_13 = arith.constant 0 : index
    %11 = vector.load %arg6[%c0_10, %c0_11, %c0_12, %c0_13] : memref<1x1x8x8xf32, #tpu.memory_space<vmem>>, vector<1x1x8x8xf32>
    %12 = vector.shape_cast %11 : vector<1x1x8x8xf32> to vector<8x8xf32>
    "tpu.trace_start"() <{level = 10 : i32, message = "qd,kd->qk"}> : () -> ()
    %cst_14 = arith.constant dense<0.000000e+00> : vector<8x8xf32>
    %13 = tpu.matmul %8, %10, %cst_14 {dimension_numbers = #tpu.dot_dimension_numbers<[1], [1], [0], [0], [0, 0, 1, 0], [], []>} : vector<8x8xf32>, vector<8x8xf32>, vector<8x8xf32> -> vector<8x8xf32>
    "tpu.trace_stop"() : () -> ()
    %14 = tpu.iota {dimensions = array<i32: 1>} : vector<8x8xi32>
    %15 = vector.broadcast %1 : i32 to vector<8x8xi32>
    %16 = arith.cmpi sge, %14, %15 : vector<8x8xi32>
    %17 = tpu.iota {dimensions = array<i32: 0>} : vector<8x8xi32>
    %18 = arith.cmpi sgt, %14, %17 : vector<8x8xi32>
    %19 = arith.ori %16, %18 : vector<8x8xi1>
    %20 = vector.broadcast %4 : f32 to vector<8x8xf32>
    %21 = arith.select %19, %20, %13 : vector<8x8xi1>, vector<8x8xf32>
    %cst_15 = arith.constant dense<0xFF800000> : vector<8xf32>
    %22 = vector.multi_reduction <maximumf>, %21, %cst_15 [1] : vector<8x8xf32> to vector<8xf32>
    %23 = vector.shape_cast %22 : vector<8xf32> to vector<8x1xf32>
    %24 = vector.broadcast %23 : vector<8x1xf32> to vector<8x8xf32>
    %25 = arith.subf %21, %24 : vector<8x8xf32>
    %26 = math.exp %25 : vector<8x8xf32>
    %cst_16 = arith.constant dense<0.000000e+00> : vector<8xf32>
    %27 = vector.multi_reduction <add>, %26, %cst_16 [1] : vector<8x8xf32> to vector<8xf32>
    %28 = vector.shape_cast %27 : vector<8xf32> to vector<8x1xf32>
    "tpu.trace_start"() <{level = 10 : i32, message = "qk,kd->qd"}> : () -> ()
    %cst_17 = arith.constant dense<0.000000e+00> : vector<8x8xf32>
    %29 = tpu.matmul %26, %12, %cst_17 {dimension_numbers = #tpu.dot_dimension_numbers<[1], [0], [0], [1], [0, 0, 1, 1], [], []>} : vector<8x8xf32>, vector<8x8xf32>, vector<8x8xf32> -> vector<8x8xf32>
    "tpu.trace_stop"() : () -> ()
    %cst_18 = arith.constant 1.000000e+00 : f32
    %30 = vector.broadcast %cst_18 : f32 to vector<8x1xf32>
    %31 = arith.divf %30, %28 : vector<8x1xf32>
    %32 = vector.broadcast %31 : vector<8x1xf32> to vector<8x8xf32>
    %33 = arith.mulf %29, %32 : vector<8x8xf32>
    %c0_19 = arith.constant 0 : index
    %c0_20 = arith.constant 0 : index
    %c0_21 = arith.constant 0 : index
    %c0_22 = arith.constant 0 : index
    %34 = vector.load %arg7[%c0_19, %c0_20, %c0_21, %c0_22] : memref<1x1x8x8xf32, #tpu.memory_space<vmem>>, vector<1x1x8x8xf32>
    %35 = vector.shape_cast %34 : vector<1x1x8x8xf32> to vector<8x8xf32>
    %36 = vector.shape_cast %33 : vector<8x8xf32> to vector<1x1x8x8xf32>
    tpu.vector_store %arg7[%c0_19, %c0_20, %c0_21, %c0_22], %36 {strides = array<i32>} : memref<1x1x8x8xf32, #tpu.memory_space<vmem>>, vector<1x1x8x8xf32>,
    return
  }
  func.func @transform_0(%arg0: i32, %arg1: i32, %arg2: memref<2xi32, #tpu.memory_space<smem>>, %arg3: memref<1xi32, #tpu.memory_space<smem>>) -> (i32, i32, i32, i32) {
    %c0_i32 = arith.constant 0 : i32
    %c0_i32_0 = arith.constant 0 : i32
    %c0_i32_1 = arith.constant 0 : i32
    return %arg0, %arg1, %c0_i32, %c0_i32_0 : i32, i32, i32, i32
  }
  func.func @transform_1(%arg0: i32, %arg1: i32, %arg2: memref<2xi32, #tpu.memory_space<smem>>, %arg3: memref<1xi32, #tpu.memory_space<smem>>) -> (i32, i32, i32, i32) {
    %c0_i32 = arith.constant 0 : i32
    %c0_i32_0 = arith.constant 0 : i32
    %c0_i32_1 = arith.constant 0 : i32
    return %arg0, %arg1, %c0_i32, %c0_i32_0 : i32, i32, i32, i32
  }
  func.func @transform_2(%arg0: i32, %arg1: i32, %arg2: memref<2xi32, #tpu.memory_space<smem>>, %arg3: memref<1xi32, #tpu.memory_space<smem>>) -> (i32, i32, i32, i32) {
    %c0_i32 = arith.constant 0 : i32
    %c0_i32_0 = arith.constant 0 : i32
    %c0_i32_1 = arith.constant 0 : i32
    return %arg0, %arg1, %c0_i32, %c0_i32_0 : i32, i32, i32, i32
  }
  func.func @transform_3(%arg0: i32, %arg1: i32, %arg2: memref<2xi32, #tpu.memory_space<smem>>, %arg3: memref<1xi32, #tpu.memory_space<smem>>) -> (i32, i32, i32, i32) {
    %c0_i32 = arith.constant 0 : i32
    %c0_i32_0 = arith.constant 0 : i32
    %c0_i32_1 = arith.constant 0 : i32
    return %arg0, %arg1, %c0_i32, %c0_i32_0 : i32, i32, i32, i32
  }
}

module attributes {stable_mosaic.version = 11 : i64} {
  func.func @_self_epilogue_kernel(%arg0: i32, %arg1: memref<2xi32, #tpu.memory_space<smem>>, %arg2: memref<1x8x32xf32, #tpu.memory_space<vmem>>, %arg3: memref<32x32xf32, #tpu.memory_space<vmem>>, %arg4: memref<1x32xf32, #tpu.memory_space<vmem>>, %arg5: memref<1x8x32xf32, #tpu.memory_space<vmem>>, %arg6: memref<1x32xf32, #tpu.memory_space<vmem>>, %arg7: memref<1x32xf32, #tpu.memory_space<vmem>>, %arg8: memref<32x32xf32, #tpu.memory_space<vmem>>, %arg9: memref<1x8x32xf32, #tpu.memory_space<vmem>>, %arg10: memref<1x8x32xf32, #tpu.memory_space<vmem>>) attributes {dimension_semantics = [#tpu.dimension_semantics<parallel>], iteration_bounds = array<i64: 2>, scalar_prefetch = 1 : i64, scratch_operands = 0 : i64, tpu.core_type = #tpu.core_type<tc>, window_params = [{transform_indices = @transform_0, window_bounds = array<i64: 1, 8, 32>}, {pipeline_mode = #tpu.pipeline_mode<synchronous>, transform_indices = @transform_1, window_bounds = array<i64: 32, 32>}, {pipeline_mode = #tpu.pipeline_mode<synchronous>, transform_indices = @transform_2, window_bounds = array<i64: 1, 32>}, {transform_indices = @transform_3, window_bounds = array<i64: 1, 8, 32>}, {pipeline_mode = #tpu.pipeline_mode<synchronous>, transform_indices = @transform_4, window_bounds = array<i64: 1, 32>}, {pipeline_mode = #tpu.pipeline_mode<synchronous>, transform_indices = @transform_5, window_bounds = array<i64: 1, 32>}, {pipeline_mode = #tpu.pipeline_mode<synchronous>, transform_indices = @transform_6, window_bounds = array<i64: 32, 32>}, {transform_indices = @transform_7, window_bounds = array<i64: 1, 8, 32>}, {transform_indices = @transform_8, window_bounds = array<i64: 1, 8, 32>}]} {
    %c0 = arith.constant 0 : index
    %c0_0 = arith.constant 0 : index
    %c0_1 = arith.constant 0 : index
    %0 = vector.load %arg2[%c0, %c0_0, %c0_1] : memref<1x8x32xf32, #tpu.memory_space<vmem>>, vector<1x8x32xf32>
    %1 = vector.shape_cast %0 : vector<1x8x32xf32> to vector<8x32xf32>
    %c0_2 = arith.constant 0 : index
    %c0_3 = arith.constant 0 : index
    %2 = vector.load %arg3[%c0_2, %c0_3] : memref<32x32xf32, #tpu.memory_space<vmem>>, vector<32x32xf32>
    %cst = arith.constant dense<0.000000e+00> : vector<8x32xf32>
    %3 = tpu.matmul %1, %2, %cst {dimension_numbers = #tpu.dot_dimension_numbers<[1], [0], [0], [1], [0, 0, 1, 1], [], []>} : vector<8x32xf32>, vector<32x32xf32>, vector<8x32xf32> -> vector<8x32xf32>
    %c0_4 = arith.constant 0 : index
    %c0_5 = arith.constant 0 : index
    %4 = vector.load %arg4[%c0_4, %c0_5] : memref<1x32xf32, #tpu.memory_space<vmem>>, vector<1x32xf32>
    %5 = vector.broadcast %4 : vector<1x32xf32> to vector<8x32xf32>
    %6 = arith.addf %3, %5 : vector<8x32xf32>
    %7 = arith.index_cast %arg0 : i32 to index
    %8 = memref.load %arg1[%7] : memref<2xi32, #tpu.memory_space<smem>>
    %9 = tpu.iota {dimensions = array<i32: 0>} : vector<8x32xi32>
    %10 = vector.broadcast %8 : i32 to vector<8x32xi32>
    %11 = arith.cmpi slt, %9, %10 : vector<8x32xi32>
    %cst_6 = arith.constant 0.000000e+00 : f32
    %12 = vector.broadcast %cst_6 : f32 to vector<8x32xf32>
    %13 = arith.select %11, %6, %12 : vector<8x32xi1>, vector<8x32xf32>
    %c0_7 = arith.constant 0 : index
    %c0_8 = arith.constant 0 : index
    %c0_9 = arith.constant 0 : index
    %14 = vector.load %arg5[%c0_7, %c0_8, %c0_9] : memref<1x8x32xf32, #tpu.memory_space<vmem>>, vector<1x8x32xf32>
    %15 = vector.shape_cast %14 : vector<1x8x32xf32> to vector<8x32xf32>
    %16 = arith.addf %13, %15 : vector<8x32xf32>
    %c0_10 = arith.constant 0 : index
    %c0_11 = arith.constant 0 : index
    %17 = vector.load %arg6[%c0_10, %c0_11] : memref<1x32xf32, #tpu.memory_space<vmem>>, vector<1x32xf32>
    %c0_12 = arith.constant 0 : index
    %c0_13 = arith.constant 0 : index
    %18 = vector.load %arg7[%c0_12, %c0_13] : memref<1x32xf32, #tpu.memory_space<vmem>>, vector<1x32xf32>
    %cst_14 = arith.constant dense<0.000000e+00> : vector<8xf32>
    %19 = vector.multi_reduction <add>, %16, %cst_14 [1] : vector<8x32xf32> to vector<8xf32>
    %20 = vector.shape_cast %19 : vector<8xf32> to vector<8x1xf32>
    %cst_15 = arith.constant 3.200000e+01 : f32
    %21 = vector.broadcast %cst_15 : f32 to vector<8x1xf32>
    %22 = arith.divf %20, %21 : vector<8x1xf32>
    %23 = vector.broadcast %22 : vector<8x1xf32> to vector<8x32xf32>
    %24 = arith.subf %16, %23 : vector<8x32xf32>
    %25 = arith.mulf %24, %24 : vector<8x32xf32>
    %cst_16 = arith.constant dense<0.000000e+00> : vector<8xf32>
    %26 = vector.multi_reduction <add>, %25, %cst_16 [1] : vector<8x32xf32> to vector<8xf32>
    %27 = vector.shape_cast %26 : vector<8xf32> to vector<8x1xf32>
    %cst_17 = arith.constant 3.200000e+01 : f32
    %28 = vector.broadcast %cst_17 : f32 to vector<8x1xf32>
    %29 = arith.divf %27, %28 : vector<8x1xf32>
    %30 = vector.broadcast %22 : vector<8x1xf32> to vector<8x32xf32>
    %31 = arith.subf %16, %30 : vector<8x32xf32>
    %cst_18 = arith.constant 9.99999974E-6 : f32
    %32 = vector.broadcast %cst_18 : f32 to vector<8x1xf32>
    %33 = arith.addf %29, %32 : vector<8x1xf32>
    %34 = math.rsqrt %33 : vector<8x1xf32>
    %35 = vector.broadcast %34 : vector<8x1xf32> to vector<8x32xf32>
    %36 = arith.mulf %31, %35 : vector<8x32xf32>
    %37 = vector.broadcast %17 : vector<1x32xf32> to vector<8x32xf32>
    %38 = arith.mulf %36, %37 : vector<8x32xf32>
    %39 = vector.broadcast %18 : vector<1x32xf32> to vector<8x32xf32>
    %40 = arith.addf %38, %39 : vector<8x32xf32>
    %c0_19 = arith.constant 0 : index
    %c0_20 = arith.constant 0 : index
    %c0_21 = arith.constant 0 : index
    %41 = vector.load %arg9[%c0_19, %c0_20, %c0_21] : memref<1x8x32xf32, #tpu.memory_space<vmem>>, vector<1x8x32xf32>
    %42 = vector.shape_cast %41 : vector<1x8x32xf32> to vector<8x32xf32>
    %43 = vector.shape_cast %40 : vector<8x32xf32> to vector<1x8x32xf32>
    tpu.vector_store %arg9[%c0_19, %c0_20, %c0_21], %43 {strides = array<i32>} : memref<1x8x32xf32, #tpu.memory_space<vmem>>, vector<1x8x32xf32>,
    %c0_22 = arith.constant 0 : index
    %c0_23 = arith.constant 0 : index
    %44 = vector.load %arg8[%c0_22, %c0_23] : memref<32x32xf32, #tpu.memory_space<vmem>>, vector<32x32xf32>
    %cst_24 = arith.constant dense<0.000000e+00> : vector<8x32xf32>
    %45 = tpu.matmul %40, %44, %cst_24 {dimension_numbers = #tpu.dot_dimension_numbers<[1], [0], [0], [1], [0, 0, 1, 1], [], []>} : vector<8x32xf32>, vector<32x32xf32>, vector<8x32xf32> -> vector<8x32xf32>
    %c0_25 = arith.constant 0 : index
    %c0_26 = arith.constant 0 : index
    %c0_27 = arith.constant 0 : index
    %46 = vector.load %arg10[%c0_25, %c0_26, %c0_27] : memref<1x8x32xf32, #tpu.memory_space<vmem>>, vector<1x8x32xf32>
    %47 = vector.shape_cast %46 : vector<1x8x32xf32> to vector<8x32xf32>
    %48 = vector.shape_cast %45 : vector<8x32xf32> to vector<1x8x32xf32>
    tpu.vector_store %arg10[%c0_25, %c0_26, %c0_27], %48 {strides = array<i32>} : memref<1x8x32xf32, #tpu.memory_space<vmem>>, vector<1x8x32xf32>,
    return
  }
  func.func @transform_0(%arg0: i32, %arg1: memref<2xi32, #tpu.memory_space<smem>>) -> (i32, i32, i32) {
    %c0_i32 = arith.constant 0 : i32
    %c0_i32_0 = arith.constant 0 : i32
    %c0_i32_1 = arith.constant 0 : i32
    return %arg0, %c0_i32, %c0_i32_0 : i32, i32, i32
  }
  func.func @transform_1(%arg0: i32, %arg1: memref<2xi32, #tpu.memory_space<smem>>) -> (i32, i32) {
    %c0_i32 = arith.constant 0 : i32
    %c0_i32_0 = arith.constant 0 : i32
    %c0_i32_1 = arith.constant 0 : i32
    return %c0_i32, %c0_i32_0 : i32, i32
  }
  func.func @transform_2(%arg0: i32, %arg1: memref<2xi32, #tpu.memory_space<smem>>) -> (i32, i32) {
    %c0_i32 = arith.constant 0 : i32
    %c0_i32_0 = arith.constant 0 : i32
    %c0_i32_1 = arith.constant 0 : i32
    return %c0_i32, %c0_i32_0 : i32, i32
  }
  func.func @transform_3(%arg0: i32, %arg1: memref<2xi32, #tpu.memory_space<smem>>) -> (i32, i32, i32) {
    %c0_i32 = arith.constant 0 : i32
    %c0_i32_0 = arith.constant 0 : i32
    %c0_i32_1 = arith.constant 0 : i32
    return %arg0, %c0_i32, %c0_i32_0 : i32, i32, i32
  }
  func.func @transform_4(%arg0: i32, %arg1: memref<2xi32, #tpu.memory_space<smem>>) -> (i32, i32) {
    %c0_i32 = arith.constant 0 : i32
    %c0_i32_0 = arith.constant 0 : i32
    %c0_i32_1 = arith.constant 0 : i32
    return %c0_i32, %c0_i32_0 : i32, i32
  }
  func.func @transform_5(%arg0: i32, %arg1: memref<2xi32, #tpu.memory_space<smem>>) -> (i32, i32) {
    %c0_i32 = arith.constant 0 : i32
    %c0_i32_0 = arith.constant 0 : i32
    %c0_i32_1 = arith.constant 0 : i32
    return %c0_i32, %c0_i32_0 : i32, i32
  }
  func.func @transform_6(%arg0: i32, %arg1: memref<2xi32, #tpu.memory_space<smem>>) -> (i32, i32) {
    %c0_i32 = arith.constant 0 : i32
    %c0_i32_0 = arith.constant 0 : i32
    %c0_i32_1 = arith.constant 0 : i32
    return %c0_i32, %c0_i32_0 : i32, i32
  }
  func.func @transform_7(%arg0: i32, %arg1: memref<2xi32, #tpu.memory_space<smem>>) -> (i32, i32, i32) {
    %c0_i32 = arith.constant 0 : i32
    %c0_i32_0 = arith.constant 0 : i32
    %c0_i32_1 = arith.constant 0 : i32
    return %arg0, %c0_i32, %c0_i32_0 : i32, i32, i32
  }
  func.func @transform_8(%arg0: i32, %arg1: memref<2xi32, #tpu.memory_space<smem>>) -> (i32, i32, i32) {
    %c0_i32 = arith.constant 0 : i32
    %c0_i32_0 = arith.constant 0 : i32
    %c0_i32_1 = arith.constant 0 : i32
    return %arg0, %c0_i32, %c0_i32_0 : i32, i32, i32
  }
}

module attributes {stable_mosaic.version = 11 : i64} {
  func.func @_split_matmul_kernel(%arg0: i32, %arg1: i32, %arg2: memref<16x32xf32, #tpu.memory_space<vmem>>, %arg3: memref<32x64xf32, #tpu.memory_space<vmem>>, %arg4: memref<16x32xf32, #tpu.memory_space<vmem>>, %arg5: memref<16x32xf32, #tpu.memory_space<vmem>>, %arg6: memref<16x64xf32, #tpu.memory_space<vmem>>) attributes {dimension_semantics = [#tpu.dimension_semantics<parallel>, #tpu.dimension_semantics<arbitrary>], iteration_bounds = array<i64: 1, 1>, scalar_prefetch = 0 : i64, scratch_operands = 1 : i64, tpu.core_type = #tpu.core_type<tc>, window_params = [{transform_indices = @transform_0, window_bounds = array<i64: 16, 32>}, {transform_indices = @transform_1, window_bounds = array<i64: 32, 64>}, {transform_indices = @transform_2, window_bounds = array<i64: 16, 32>}, {transform_indices = @transform_3, window_bounds = array<i64: 16, 32>}]} {
    %c0_i32 = arith.constant 0 : i32
    %0 = arith.cmpi eq, %arg1, %c0_i32 : i32
    %1 = arith.extui %0 : i1 to i32
    %c0_i32_0 = arith.constant 0 : i32
    %2 = arith.cmpi ne, %1, %c0_i32_0 : i32
    scf.if %2 {
      %cst_10 = arith.constant 0.000000e+00 : f32
      %12 = vector.broadcast %cst_10 : f32 to vector<16x64xf32>
      %c0_11 = arith.constant 0 : index
      %c0_12 = arith.constant 0 : index
      %13 = vector.load %arg6[%c0_11, %c0_12] : memref<16x64xf32, #tpu.memory_space<vmem>>, vector<16x64xf32>
      tpu.vector_store %arg6[%c0_11, %c0_12], %12 {strides = array<i32>} : memref<16x64xf32, #tpu.memory_space<vmem>>, vector<16x64xf32>,
    } else {
    }
    %c0 = arith.constant 0 : index
    %c0_1 = arith.constant 0 : index
    %3 = vector.load %arg6[%c0, %c0_1] : memref<16x64xf32, #tpu.memory_space<vmem>>, vector<16x64xf32>
    %c0_2 = arith.constant 0 : index
    %c0_3 = arith.constant 0 : index
    %4 = vector.load %arg2[%c0_2, %c0_3] : memref<16x32xf32, #tpu.memory_space<vmem>>, vector<16x32xf32>
    %c0_4 = arith.constant 0 : index
    %c0_5 = arith.constant 0 : index
    %5 = vector.load %arg3[%c0_4, %c0_5] : memref<32x64xf32, #tpu.memory_space<vmem>>, vector<32x64xf32>
    %cst = arith.constant dense<0.000000e+00> : vector<16x64xf32>
    %6 = tpu.matmul %4, %5, %cst {dimension_numbers = #tpu.dot_dimension_numbers<[1], [0], [0], [1], [0, 0, 1, 1], [], []>} : vector<16x32xf32>, vector<32x64xf32>, vector<16x64xf32> -> vector<16x64xf32>
    %7 = arith.addf %3, %6 : vector<16x64xf32>
    %c0_6 = arith.constant 0 : index
    %c0_7 = arith.constant 0 : index
    %8 = vector.load %arg6[%c0_6, %c0_7] : memref<16x64xf32, #tpu.memory_space<vmem>>, vector<16x64xf32>
    tpu.vector_store %arg6[%c0_6, %c0_7], %7 {strides = array<i32>} : memref<16x64xf32, #tpu.memory_space<vmem>>, vector<16x64xf32>,
    %c0_i32_8 = arith.constant 0 : i32
    %9 = arith.cmpi eq, %arg1, %c0_i32_8 : i32
    %10 = arith.extui %9 : i1 to i32
    %c0_i32_9 = arith.constant 0 : i32
    %11 = arith.cmpi ne, %10, %c0_i32_9 : i32
    scf.if %11 {
      %c0_10 = arith.constant 0 : index
      %c0_11 = arith.constant 0 : index
      %12 = vector.load %arg6[%c0_10, %c0_11] : memref<16x64xf32, #tpu.memory_space<vmem>>, vector<16x64xf32>
      %13 = vector.extract_strided_slice %12 {offsets = [0, 0], sizes = [16, 32], strides = [1, 1]} : vector<16x64xf32> to vector<16x32xf32>
      %c0_12 = arith.constant 0 : index
      %c0_13 = arith.constant 0 : index
      %14 = vector.load %arg4[%c0_12, %c0_13] : memref<16x32xf32, #tpu.memory_space<vmem>>, vector<16x32xf32>
      tpu.vector_store %arg4[%c0_12, %c0_13], %13 {strides = array<i32>} : memref<16x32xf32, #tpu.memory_space<vmem>>, vector<16x32xf32>,
      %15 = vector.extract_strided_slice %12 {offsets = [0, 32], sizes = [16, 32], strides = [1, 1]} : vector<16x64xf32> to vector<16x32xf32>
      %c0_14 = arith.constant 0 : index
      %c0_15 = arith.constant 0 : index
      %16 = vector.load %arg5[%c0_14, %c0_15] : memref<16x32xf32, #tpu.memory_space<vmem>>, vector<16x32xf32>
      tpu.vector_store %arg5[%c0_14, %c0_15], %15 {strides = array<i32>} : memref<16x32xf32, #tpu.memory_space<vmem>>, vector<16x32xf32>,
    } else {
    }
    return
  }
  func.func @transform_0(%arg0: i32, %arg1: i32) -> (i32, i32) {
    %c0_i32 = arith.constant 0 : i32
    return %arg0, %arg1 : i32, i32
  }
  func.func @transform_1(%arg0: i32, %arg1: i32) -> (i32, i32) {
    %c0_i32 = arith.constant 0 : i32
    %c0_i32_0 = arith.constant 0 : i32
    return %arg1, %c0_i32 : i32, i32
  }
  func.func @transform_2(%arg0: i32, %arg1: i32) -> (i32, i32) {
    %c0_i32 = arith.constant 0 : i32
    %c0_i32_0 = arith.constant 0 : i32
    return %arg0, %c0_i32 : i32, i32
  }
  func.func @transform_3(%arg0: i32, %arg1: i32) -> (i32, i32) {
    %c0_i32 = arith.constant 0 : i32
    %c0_i32_0 = arith.constant 0 : i32
    return %arg0, %c0_i32 : i32, i32
  }
}

module attributes {stable_mosaic.version = 11 : i64} {
  func.func @_cross_ffn_kernel(%arg0: i32, %arg1: memref<2xi32, #tpu.memory_space<smem>>, %arg2: memref<2xi32, #tpu.memory_space<smem>>, %arg3: memref<1x4x8x8xf32, #tpu.memory_space<vmem>>, %arg4: memref<1x4x8x8xf32, #tpu.memory_space<vmem>>, %arg5: memref<1x4x8x8xf32, #tpu.memory_space<vmem>>, %arg6: memref<1x8x32xf32, #tpu.memory_space<vmem>>, %arg7: memref<32x32xf32, #tpu.memory_space<vmem>>, %arg8: memref<1x32xf32, #tpu.memory_space<vmem>>, %arg9: memref<1x32xf32, #tpu.memory_space<vmem>>, %arg10: memref<1x32xf32, #tpu.memory_space<vmem>>, %arg11: memref<32x64xf32, #tpu.memory_space<vmem>>, %arg12: memref<1x64xf32, #tpu.memory_space<vmem>>, %arg13: memref<64x32xf32, #tpu.memory_space<vmem>>, %arg14: memref<1x32xf32, #tpu.memory_space<vmem>>, %arg15: memref<1x32xf32, #tpu.memory_space<vmem>>, %arg16: memref<1x32xf32, #tpu.memory_space<vmem>>, %arg17: memref<1x8x32xf32, #tpu.memory_space<vmem>>) attributes {dimension_semantics = [#tpu.dimension_semantics<parallel>], iteration_bounds = array<i64: 2>, scalar_prefetch = 2 : i64, scratch_operands = 0 : i64, tpu.core_type = #tpu.core_type<tc>, window_params = [{transform_indices = @transform_0, window_bounds = array<i64: 1, 4, 8, 8>}, {transform_indices = @transform_1, window_bounds = array<i64: 1, 4, 8, 8>}, {transform_indices = @transform_2, window_bounds = array<i64: 1, 4, 8, 8>}, {transform_indices = @transform_3, window_bounds = array<i64: 1, 8, 32>}, {pipeline_mode = #tpu.pipeline_mode<synchronous>, transform_indices = @transform_4, window_bounds = array<i64: 32, 32>}, {pipeline_mode = #tpu.pipeline_mode<synchronous>, transform_indices = @transform_5, window_bounds = array<i64: 1, 32>}, {pipeline_mode = #tpu.pipeline_mode<synchronous>, transform_indices = @transform_6, window_bounds = array<i64: 1, 32>}, {pipeline_mode = #tpu.pipeline_mode<synchronous>, transform_indices = @transform_7, window_bounds = array<i64: 1, 32>}, {pipeline_mode = #tpu.pipeline_mode<synchronous>, transform_indices = @transform_8, window_bounds = array<i64: 32, 64>}, {pipeline_mode = #tpu.pipeline_mode<synchronous>, transform_indices = @transform_9, window_bounds = array<i64: 1, 64>}, {pipeline_mode = #tpu.pipeline_mode<synchronous>, transform_indices = @transform_10, window_bounds = array<i64: 64, 32>}, {pipeline_mode = #tpu.pipeline_mode<synchronous>, transform_indices = @transform_11, window_bounds = array<i64: 1, 32>}, {pipeline_mode = #tpu.pipeline_mode<synchronous>, transform_indices = @transform_12, window_bounds = array<i64: 1, 32>}, {pipeline_mode = #tpu.pipeline_mode<synchronous>, transform_indices = @transform_13, window_bounds = array<i64: 1, 32>}, {transform_indices = @transform_14, window_bounds = array<i64: 1, 8, 32>}]} {
    %0 = arith.index_cast %arg0 : i32 to index
    %1 = memref.load %arg1[%0] : memref<2xi32, #tpu.memory_space<smem>>
    %2 = arith.index_cast %arg0 : i32 to index
    %3 = memref.load %arg2[%2] : memref<2xi32, #tpu.memory_space<smem>>
    %4 = tpu.iota {dimensions = array<i32: 1>} : vector<8x8xi32>
    %5 = vector.broadcast %3 : i32 to vector<8x8xi32>
    %6 = arith.cmpi sge, %4, %5 : vector<8x8xi32>
    %c0 = arith.constant 0 : index
    %c0_0 = arith.constant 0 : index
    %c0_1 = arith.constant 0 : index
    %c0_2 = arith.constant 0 : index
    %7 = vector.load %arg3[%c0, %c0_0, %c0_1, %c0_2] : memref<1x4x8x8xf32, #tpu.memory_space<vmem>>, vector<1x1x8x8xf32>
    %8 = vector.shape_cast %7 : vector<1x1x8x8xf32> to vector<8x8xf32>
    %cst = arith.constant 0.353553385 : f32
    %9 = vector.broadcast %cst : f32 to vector<8x8xf32>
    %10 = arith.mulf %8, %9 : vector<8x8xf32>
    %c0_3 = arith.constant 0 : index
    %c0_4 = arith.constant 0 : index
    %c0_5 = arith.constant 0 : index
    %c0_6 = arith.constant 0 : index
    %11 = vector.load %arg4[%c0_3, %c0_4, %c0_5, %c0_6] : memref<1x4x8x8xf32, #tpu.memory_space<vmem>>, vector<1x1x8x8xf32>
    %12 = vector.shape_cast %11 : vector<1x1x8x8xf32> to vector<8x8xf32>
    %c0_7 = arith.constant 0 : index
    %c0_8 = arith.constant 0 : index
    %c0_9 = arith.constant 0 : index
    %c0_10 = arith.constant 0 : index
    %13 = vector.load %arg5[%c0_7, %c0_8, %c0_9, %c0_10] : memref<1x4x8x8xf32, #tpu.memory_space<vmem>>, vector<1x1x8x8xf32>
    %14 = vector.shape_cast %13 : vector<1x1x8x8xf32> to vector<8x8xf32>
    "tpu.trace_start"() <{level = 10 : i32, message = "qd,kd->qk"}> : () -> ()
    %cst_11 = arith.constant dense<0.000000e+00> : vector<8x8xf32>
    %15 = tpu.matmul %10, %12, %cst_11 {dimension_numbers = #tpu.dot_dimension_numbers<[1], [1], [0], [0], [0, 0, 1, 0], [], []>} : vector<8x8xf32>, vector<8x8xf32>, vector<8x8xf32> -> vector<8x8xf32>
    %cst_12 = arith.constant 0xFF800000 : f32
    "tpu.trace_stop"() : () -> ()
    %16 = vector.broadcast %cst_12 : f32 to vector<8x8xf32>
    %17 = arith.select %6, %16, %15 : vector<8x8xi1>, vector<8x8xf32>
    %cst_13 = arith.constant dense<0xFF800000> : vector<8xf32>
    %18 = vector.multi_reduction <maximumf>, %17, %cst_13 [1] : vector<8x8xf32> to vector<8xf32>
    %19 = vector.shape_cast %18 : vector<8xf32> to vector<8x1xf32>
    %20 = vector.broadcast %19 : vector<8x1xf32> to vector<8x8xf32>
    %21 = arith.subf %17, %20 : vector<8x8xf32>
    %22 = math.exp %21 : vector<8x8xf32>
    %cst_14 = arith.constant dense<0.000000e+00> : vector<8xf32>
    %23 = vector.multi_reduction <add>, %22, %cst_14 [1] : vector<8x8xf32> to vector<8xf32>
    %24 = vector.shape_cast %23 : vector<8xf32> to vector<8x1xf32>
    "tpu.trace_start"() <{level = 10 : i32, message = "qk,kd->qd"}> : () -> ()
    %cst_15 = arith.constant dense<0.000000e+00> : vector<8x8xf32>
    %25 = tpu.matmul %22, %14, %cst_15 {dimension_numbers = #tpu.dot_dimension_numbers<[1], [0], [0], [1], [0, 0, 1, 1], [], []>} : vector<8x8xf32>, vector<8x8xf32>, vector<8x8xf32> -> vector<8x8xf32>
    "tpu.trace_stop"() : () -> ()
    %cst_16 = arith.constant 1.000000e+00 : f32
    %26 = vector.broadcast %cst_16 : f32 to vector<8x1xf32>
    %27 = arith.divf %26, %24 : vector<8x1xf32>
    %28 = vector.broadcast %27 : vector<8x1xf32> to vector<8x8xf32>
    %29 = arith.mulf %25, %28 : vector<8x8xf32>
    %c0_17 = arith.constant 0 : index
    %c1 = arith.constant 1 : index
    %c0_18 = arith.constant 0 : index
    %c0_19 = arith.constant 0 : index
    %30 = vector.load %arg3[%c0_17, %c1, %c0_18, %c0_19] : memref<1x4x8x8xf32, #tpu.memory_space<vmem>>, vector<1x1x8x8xf32>
    %31 = vector.shape_cast %30 : vector<1x1x8x8xf32> to vector<8x8xf32>
    %cst_20 = arith.constant 0.353553385 : f32
    %32 = vector.broadcast %cst_20 : f32 to vector<8x8xf32>
    %33 = arith.mulf %31, %32 : vector<8x8xf32>
    %c0_21 = arith.constant 0 : index
    %c1_22 = arith.constant 1 : index
    %c0_23 = arith.constant 0 : index
    %c0_24 = arith.constant 0 : index
    %34 = vector.load %arg4[%c0_21, %c1_22, %c0_23, %c0_24] : memref<1x4x8x8xf32, #tpu.memory_space<vmem>>, vector<1x1x8x8xf32>
    %35 = vector.shape_cast %34 : vector<1x1x8x8xf32> to vector<8x8xf32>
    %c0_25 = arith.constant 0 : index
    %c1_26 = arith.constant 1 : index
    %c0_27 = arith.constant 0 : index
    %c0_28 = arith.constant 0 : index
    %36 = vector.load %arg5[%c0_25, %c1_26, %c0_27, %c0_28] : memref<1x4x8x8xf32, #tpu.memory_space<vmem>>, vector<1x1x8x8xf32>
    %37 = vector.shape_cast %36 : vector<1x1x8x8xf32> to vector<8x8xf32>
    "tpu.trace_start"() <{level = 10 : i32, message = "qd,kd->qk"}> : () -> ()
    %cst_29 = arith.constant dense<0.000000e+00> : vector<8x8xf32>
    %38 = tpu.matmul %33, %35, %cst_29 {dimension_numbers = #tpu.dot_dimension_numbers<[1], [1], [0], [0], [0, 0, 1, 0], [], []>} : vector<8x8xf32>, vector<8x8xf32>, vector<8x8xf32> -> vector<8x8xf32>
    %cst_30 = arith.constant 0xFF800000 : f32
    "tpu.trace_stop"() : () -> ()
    %39 = vector.broadcast %cst_30 : f32 to vector<8x8xf32>
    %40 = arith.select %6, %39, %38 : vector<8x8xi1>, vector<8x8xf32>
    %cst_31 = arith.constant dense<0xFF800000> : vector<8xf32>
    %41 = vector.multi_reduction <maximumf>, %40, %cst_31 [1] : vector<8x8xf32> to vector<8xf32>
    %42 = vector.shape_cast %41 : vector<8xf32> to vector<8x1xf32>
    %43 = vector.broadcast %42 : vector<8x1xf32> to vector<8x8xf32>
    %44 = arith.subf %40, %43 : vector<8x8xf32>
    %45 = math.exp %44 : vector<8x8xf32>
    %cst_32 = arith.constant dense<0.000000e+00> : vector<8xf32>
    %46 = vector.multi_reduction <add>, %45, %cst_32 [1] : vector<8x8xf32> to vector<8xf32>
    %47 = vector.shape_cast %46 : vector<8xf32> to vector<8x1xf32>
    "tpu.trace_start"() <{level = 10 : i32, message = "qk,kd->qd"}> : () -> ()
    %cst_33 = arith.constant dense<0.000000e+00> : vector<8x8xf32>
    %48 = tpu.matmul %45, %37, %cst_33 {dimension_numbers = #tpu.dot_dimension_numbers<[1], [0], [0], [1], [0, 0, 1, 1], [], []>} : vector<8x8xf32>, vector<8x8xf32>, vector<8x8xf32> -> vector<8x8xf32>
    "tpu.trace_stop"() : () -> ()
    %cst_34 = arith.constant 1.000000e+00 : f32
    %49 = vector.broadcast %cst_34 : f32 to vector<8x1xf32>
    %50 = arith.divf %49, %47 : vector<8x1xf32>
    %51 = vector.broadcast %50 : vector<8x1xf32> to vector<8x8xf32>
    %52 = arith.mulf %48, %51 : vector<8x8xf32>
    %c0_35 = arith.constant 0 : index
    %c2 = arith.constant 2 : index
    %c0_36 = arith.constant 0 : index
    %c0_37 = arith.constant 0 : index
    %53 = vector.load %arg3[%c0_35, %c2, %c0_36, %c0_37] : memref<1x4x8x8xf32, #tpu.memory_space<vmem>>, vector<1x1x8x8xf32>
    %54 = vector.shape_cast %53 : vector<1x1x8x8xf32> to vector<8x8xf32>
    %cst_38 = arith.constant 0.353553385 : f32
    %55 = vector.broadcast %cst_38 : f32 to vector<8x8xf32>
    %56 = arith.mulf %54, %55 : vector<8x8xf32>
    %c0_39 = arith.constant 0 : index
    %c2_40 = arith.constant 2 : index
    %c0_41 = arith.constant 0 : index
    %c0_42 = arith.constant 0 : index
    %57 = vector.load %arg4[%c0_39, %c2_40, %c0_41, %c0_42] : memref<1x4x8x8xf32, #tpu.memory_space<vmem>>, vector<1x1x8x8xf32>
    %58 = vector.shape_cast %57 : vector<1x1x8x8xf32> to vector<8x8xf32>
    %c0_43 = arith.constant 0 : index
    %c2_44 = arith.constant 2 : index
    %c0_45 = arith.constant 0 : index
    %c0_46 = arith.constant 0 : index
    %59 = vector.load %arg5[%c0_43, %c2_44, %c0_45, %c0_46] : memref<1x4x8x8xf32, #tpu.memory_space<vmem>>, vector<1x1x8x8xf32>
    %60 = vector.shape_cast %59 : vector<1x1x8x8xf32> to vector<8x8xf32>
    "tpu.trace_start"() <{level = 10 : i32, message = "qd,kd->qk"}> : () -> ()
    %cst_47 = arith.constant dense<0.000000e+00> : vector<8x8xf32>
    %61 = tpu.matmul %56, %58, %cst_47 {dimension_numbers = #tpu.dot_dimension_numbers<[1], [1], [0], [0], [0, 0, 1, 0], [], []>} : vector<8x8xf32>, vector<8x8xf32>, vector<8x8xf32> -> vector<8x8xf32>
    %cst_48 = arith.constant 0xFF800000 : f32
    "tpu.trace_stop"() : () -> ()
    %62 = vector.broadcast %cst_48 : f32 to vector<8x8xf32>
    %63 = arith.select %6, %62, %61 : vector<8x8xi1>, vector<8x8xf32>
    %cst_49 = arith.constant dense<0xFF800000> : vector<8xf32>
    %64 = vector.multi_reduction <maximumf>, %63, %cst_49 [1] : vector<8x8xf32> to vector<8xf32>
    %65 = vector.shape_cast %64 : vector<8xf32> to vector<8x1xf32>
    %66 = vector.broadcast %65 : vector<8x1xf32> to vector<8x8xf32>
    %67 = arith.subf %63, %66 : vector<8x8xf32>
    %68 = math.exp %67 : vector<8x8xf32>
    %cst_50 = arith.constant dense<0.000000e+00> : vector<8xf32>
    %69 = vector.multi_reduction <add>, %68, %cst_50 [1] : vector<8x8xf32> to vector<8xf32>
    %70 = vector.shape_cast %69 : vector<8xf32> to vector<8x1xf32>
    "tpu.trace_start"() <{level = 10 : i32, message = "qk,kd->qd"}> : () -> ()
    %cst_51 = arith.constant dense<0.000000e+00> : vector<8x8xf32>
    %71 = tpu.matmul %68, %60, %cst_51 {dimension_numbers = #tpu.dot_dimension_numbers<[1], [0], [0], [1], [0, 0, 1, 1], [], []>} : vector<8x8xf32>, vector<8x8xf32>, vector<8x8xf32> -> vector<8x8xf32>
    "tpu.trace_stop"() : () -> ()
    %cst_52 = arith.constant 1.000000e+00 : f32
    %72 = vector.broadcast %cst_52 : f32 to vector<8x1xf32>
    %73 = arith.divf %72, %70 : vector<8x1xf32>
    %74 = vector.broadcast %73 : vector<8x1xf32> to vector<8x8xf32>
    %75 = arith.mulf %71, %74 : vector<8x8xf32>
    %c0_53 = arith.constant 0 : index
    %c3 = arith.constant 3 : index
    %c0_54 = arith.constant 0 : index
    %c0_55 = arith.constant 0 : index
    %76 = vector.load %arg3[%c0_53, %c3, %c0_54, %c0_55] : memref<1x4x8x8xf32, #tpu.memory_space<vmem>>, vector<1x1x8x8xf32>
    %77 = vector.shape_cast %76 : vector<1x1x8x8xf32> to vector<8x8xf32>
    %cst_56 = arith.constant 0.353553385 : f32
    %78 = vector.broadcast %cst_56 : f32 to vector<8x8xf32>
    %79 = arith.mulf %77, %78 : vector<8x8xf32>
    %c0_57 = arith.constant 0 : index
    %c3_58 = arith.constant 3 : index
    %c0_59 = arith.constant 0 : index
    %c0_60 = arith.constant 0 : index
    %80 = vector.load %arg4[%c0_57, %c3_58, %c0_59, %c0_60] : memref<1x4x8x8xf32, #tpu.memory_space<vmem>>, vector<1x1x8x8xf32>
    %81 = vector.shape_cast %80 : vector<1x1x8x8xf32> to vector<8x8xf32>
    %c0_61 = arith.constant 0 : index
    %c3_62 = arith.constant 3 : index
    %c0_63 = arith.constant 0 : index
    %c0_64 = arith.constant 0 : index
    %82 = vector.load %arg5[%c0_61, %c3_62, %c0_63, %c0_64] : memref<1x4x8x8xf32, #tpu.memory_space<vmem>>, vector<1x1x8x8xf32>
    %83 = vector.shape_cast %82 : vector<1x1x8x8xf32> to vector<8x8xf32>
    "tpu.trace_start"() <{level = 10 : i32, message = "qd,kd->qk"}> : () -> ()
    %cst_65 = arith.constant dense<0.000000e+00> : vector<8x8xf32>
    %84 = tpu.matmul %79, %81, %cst_65 {dimension_numbers = #tpu.dot_dimension_numbers<[1], [1], [0], [0], [0, 0, 1, 0], [], []>} : vector<8x8xf32>, vector<8x8xf32>, vector<8x8xf32> -> vector<8x8xf32>
    %cst_66 = arith.constant 0xFF800000 : f32
    "tpu.trace_stop"() : () -> ()
    %85 = vector.broadcast %cst_66 : f32 to vector<8x8xf32>
    %86 = arith.select %6, %85, %84 : vector<8x8xi1>, vector<8x8xf32>
    %cst_67 = arith.constant dense<0xFF800000> : vector<8xf32>
    %87 = vector.multi_reduction <maximumf>, %86, %cst_67 [1] : vector<8x8xf32> to vector<8xf32>
    %88 = vector.shape_cast %87 : vector<8xf32> to vector<8x1xf32>
    %89 = vector.broadcast %88 : vector<8x1xf32> to vector<8x8xf32>
    %90 = arith.subf %86, %89 : vector<8x8xf32>
    %91 = math.exp %90 : vector<8x8xf32>
    %cst_68 = arith.constant dense<0.000000e+00> : vector<8xf32>
    %92 = vector.multi_reduction <add>, %91, %cst_68 [1] : vector<8x8xf32> to vector<8xf32>
    %93 = vector.shape_cast %92 : vector<8xf32> to vector<8x1xf32>
    "tpu.trace_start"() <{level = 10 : i32, message = "qk,kd->qd"}> : () -> ()
    %cst_69 = arith.constant dense<0.000000e+00> : vector<8x8xf32>
    %94 = tpu.matmul %91, %83, %cst_69 {dimension_numbers = #tpu.dot_dimension_numbers<[1], [0], [0], [1], [0, 0, 1, 1], [], []>} : vector<8x8xf32>, vector<8x8xf32>, vector<8x8xf32> -> vector<8x8xf32>
    "tpu.trace_stop"() : () -> ()
    %cst_70 = arith.constant 1.000000e+00 : f32
    %95 = vector.broadcast %cst_70 : f32 to vector<8x1xf32>
    %96 = arith.divf %95, %93 : vector<8x1xf32>
    %97 = vector.broadcast %96 : vector<8x1xf32> to vector<8x8xf32>
    %98 = arith.mulf %94, %97 : vector<8x8xf32>
    %99 = tpu.concatenate %29, %52, %75, %98 in 1 : vector<8x8xf32>, vector<8x8xf32>, vector<8x8xf32>, vector<8x8xf32> -> vector<8x32xf32>
    %100 = tpu.iota {dimensions = array<i32: 0>} : vector<8x32xi32>
    %101 = vector.broadcast %1 : i32 to vector<8x32xi32>
    %102 = arith.cmpi slt, %100, %101 : vector<8x32xi32>
    %c0_71 = arith.constant 0 : index
    %c0_72 = arith.constant 0 : index
    %103 = vector.load %arg7[%c0_71, %c0_72] : memref<32x32xf32, #tpu.memory_space<vmem>>, vector<32x32xf32>
    %cst_73 = arith.constant dense<0.000000e+00> : vector<8x32xf32>
    %104 = tpu.matmul %99, %103, %cst_73 {dimension_numbers = #tpu.dot_dimension_numbers<[1], [0], [0], [1], [0, 0, 1, 1], [], []>} : vector<8x32xf32>, vector<32x32xf32>, vector<8x32xf32> -> vector<8x32xf32>
    %c0_74 = arith.constant 0 : index
    %c0_75 = arith.constant 0 : index
    %105 = vector.load %arg8[%c0_74, %c0_75] : memref<1x32xf32, #tpu.memory_space<vmem>>, vector<1x32xf32>
    %106 = vector.broadcast %105 : vector<1x32xf32> to vector<8x32xf32>
    %107 = arith.addf %104, %106 : vector<8x32xf32>
    %cst_76 = arith.constant 0.000000e+00 : f32
    %108 = vector.broadcast %cst_76 : f32 to vector<8x32xf32>
    %109 = arith.select %102, %107, %108 : vector<8x32xi1>, vector<8x32xf32>
    %c0_77 = arith.constant 0 : index
    %c0_78 = arith.constant 0 : index
    %c0_79 = arith.constant 0 : index
    %110 = vector.load %arg6[%c0_77, %c0_78, %c0_79] : memref<1x8x32xf32, #tpu.memory_space<vmem>>, vector<1x8x32xf32>
    %111 = vector.shape_cast %110 : vector<1x8x32xf32> to vector<8x32xf32>
    %112 = arith.addf %109, %111 : vector<8x32xf32>
    %c0_80 = arith.constant 0 : index
    %c0_81 = arith.constant 0 : index
    %113 = vector.load %arg9[%c0_80, %c0_81] : memref<1x32xf32, #tpu.memory_space<vmem>>, vector<1x32xf32>
    %c0_82 = arith.constant 0 : index
    %c0_83 = arith.constant 0 : index
    %114 = vector.load %arg10[%c0_82, %c0_83] : memref<1x32xf32, #tpu.memory_space<vmem>>, vector<1x32xf32>
    %cst_84 = arith.constant dense<0.000000e+00> : vector<8xf32>
    %115 = vector.multi_reduction <add>, %112, %cst_84 [1] : vector<8x32xf32> to vector<8xf32>
    %116 = vector.shape_cast %115 : vector<8xf32> to vector<8x1xf32>
    %cst_85 = arith.constant 3.200000e+01 : f32
    %117 = vector.broadcast %cst_85 : f32 to vector<8x1xf32>
    %118 = arith.divf %116, %117 : vector<8x1xf32>
    %119 = vector.broadcast %118 : vector<8x1xf32> to vector<8x32xf32>
    %120 = arith.subf %112, %119 : vector<8x32xf32>
    %121 = arith.mulf %120, %120 : vector<8x32xf32>
    %cst_86 = arith.constant dense<0.000000e+00> : vector<8xf32>
    %122 = vector.multi_reduction <add>, %121, %cst_86 [1] : vector<8x32xf32> to vector<8xf32>
    %123 = vector.shape_cast %122 : vector<8xf32> to vector<8x1xf32>
    %cst_87 = arith.constant 3.200000e+01 : f32
    %124 = vector.broadcast %cst_87 : f32 to vector<8x1xf32>
    %125 = arith.divf %123, %124 : vector<8x1xf32>
    %126 = vector.broadcast %118 : vector<8x1xf32> to vector<8x32xf32>
    %127 = arith.subf %112, %126 : vector<8x32xf32>
    %cst_88 = arith.constant 9.99999974E-6 : f32
    %128 = vector.broadcast %cst_88 : f32 to vector<8x1xf32>
    %129 = arith.addf %125, %128 : vector<8x1xf32>
    %130 = math.rsqrt %129 : vector<8x1xf32>
    %131 = vector.broadcast %130 : vector<8x1xf32> to vector<8x32xf32>
    %132 = arith.mulf %127, %131 : vector<8x32xf32>
    %133 = vector.broadcast %113 : vector<1x32xf32> to vector<8x32xf32>
    %134 = arith.mulf %132, %133 : vector<8x32xf32>
    %135 = vector.broadcast %114 : vector<1x32xf32> to vector<8x32xf32>
    %136 = arith.addf %134, %135 : vector<8x32xf32>
    %c0_89 = arith.constant 0 : index
    %c0_90 = arith.constant 0 : index
    %137 = vector.load %arg11[%c0_89, %c0_90] : memref<32x64xf32, #tpu.memory_space<vmem>>, vector<32x64xf32>
    %cst_91 = arith.constant dense<0.000000e+00> : vector<8x64xf32>
    %138 = tpu.matmul %136, %137, %cst_91 {dimension_numbers = #tpu.dot_dimension_numbers<[1], [0], [0], [1], [0, 0, 1, 1], [], []>} : vector<8x32xf32>, vector<32x64xf32>, vector<8x64xf32> -> vector<8x64xf32>
    %c0_92 = arith.constant 0 : index
    %c0_93 = arith.constant 0 : index
    %139 = vector.load %arg12[%c0_92, %c0_93] : memref<1x64xf32, #tpu.memory_space<vmem>>, vector<1x64xf32>
    %140 = vector.broadcast %139 : vector<1x64xf32> to vector<8x64xf32>
    %141 = arith.addf %138, %140 : vector<8x64xf32>
    %cst_94 = arith.constant 5.000000e-01 : f32
    %142 = vector.broadcast %cst_94 : f32 to vector<8x64xf32>
    %143 = arith.mulf %142, %141 : vector<8x64xf32>
    %cst_95 = arith.constant 0.707106769 : f32
    %144 = vector.broadcast %cst_95 : f32 to vector<8x64xf32>
    %145 = arith.mulf %141, %144 : vector<8x64xf32>
    %cst_96 = arith.constant 0.000000e+00 : f32
    %146 = vector.broadcast %cst_96 : f32 to vector<8x64xf32>
    %147 = arith.cmpf oge, %145, %146 : vector<8x64xf32>
    %cst_97 = arith.constant 1.000000e+00 : f32
    %cst_98 = arith.constant -1.000000e+00 : f32
    %148 = vector.broadcast %cst_97 : f32 to vector<8x64xf32>
    %149 = vector.broadcast %cst_98 : f32 to vector<8x64xf32>
    %150 = arith.select %147, %148, %149 : vector<8x64xi1>, vector<8x64xf32>
    %151 = math.absf %145 : vector<8x64xf32>
    %cst_99 = arith.constant 0.327591091 : f32
    %152 = vector.broadcast %cst_99 : f32 to vector<8x64xf32>
    %153 = arith.mulf %152, %151 : vector<8x64xf32>
    %cst_100 = arith.constant 1.000000e+00 : f32
    %154 = vector.broadcast %cst_100 : f32 to vector<8x64xf32>
    %155 = arith.addf %154, %153 : vector<8x64xf32>
    %cst_101 = arith.constant 1.000000e+00 : f32
    %156 = vector.broadcast %cst_101 : f32 to vector<8x64xf32>
    %157 = arith.divf %156, %155 : vector<8x64xf32>
    %cst_102 = arith.constant 1.06140542 : f32
    %158 = vector.broadcast %cst_102 : f32 to vector<8x64xf32>
    %159 = arith.mulf %158, %157 : vector<8x64xf32>
    %cst_103 = arith.constant -1.45315206 : f32
    %160 = vector.broadcast %cst_103 : f32 to vector<8x64xf32>
    %161 = arith.addf %159, %160 : vector<8x64xf32>
    %162 = arith.mulf %161, %157 : vector<8x64xf32>
    %cst_104 = arith.constant 1.42141378 : f32
    %163 = vector.broadcast %cst_104 : f32 to vector<8x64xf32>
    %164 = arith.addf %162, %163 : vector<8x64xf32>
    %165 = arith.mulf %164, %157 : vector<8x64xf32>
    %cst_105 = arith.constant -0.284496725 : f32
    %166 = vector.broadcast %cst_105 : f32 to vector<8x64xf32>
    %167 = arith.addf %165, %166 : vector<8x64xf32>
    %168 = arith.mulf %167, %157 : vector<8x64xf32>
    %cst_106 = arith.constant 0.254829586 : f32
    %169 = vector.broadcast %cst_106 : f32 to vector<8x64xf32>
    %170 = arith.addf %168, %169 : vector<8x64xf32>
    %171 = arith.mulf %170, %157 : vector<8x64xf32>
    %cst_107 = arith.constant 0.000000e+00 : f32
    %172 = vector.broadcast %cst_107 : f32 to vector<8x64xf32>
    %173 = arith.subf %172, %151 : vector<8x64xf32>
    %174 = arith.mulf %173, %151 : vector<8x64xf32>
    %175 = math.exp %174 : vector<8x64xf32>
    %176 = arith.mulf %171, %175 : vector<8x64xf32>
    %cst_108 = arith.constant 1.000000e+00 : f32
    %177 = vector.broadcast %cst_108 : f32 to vector<8x64xf32>
    %178 = arith.subf %177, %176 : vector<8x64xf32>
    %179 = arith.mulf %150, %178 : vector<8x64xf32>
    %cst_109 = arith.constant 1.000000e+00 : f32
    %180 = vector.broadcast %cst_109 : f32 to vector<8x64xf32>
    %181 = arith.addf %180, %179 : vector<8x64xf32>
    %182 = arith.mulf %143, %181 : vector<8x64xf32>
    %c0_110 = arith.constant 0 : index
    %c0_111 = arith.constant 0 : index
    %183 = vector.load %arg13[%c0_110, %c0_111] : memref<64x32xf32, #tpu.memory_space<vmem>>, vector<64x32xf32>
    %cst_112 = arith.constant dense<0.000000e+00> : vector<8x32xf32>
    %184 = tpu.matmul %182, %183, %cst_112 {dimension_numbers = #tpu.dot_dimension_numbers<[1], [0], [0], [1], [0, 0, 1, 1], [], []>} : vector<8x64xf32>, vector<64x32xf32>, vector<8x32xf32> -> vector<8x32xf32>
    %c0_113 = arith.constant 0 : index
    %c0_114 = arith.constant 0 : index
    %185 = vector.load %arg14[%c0_113, %c0_114] : memref<1x32xf32, #tpu.memory_space<vmem>>, vector<1x32xf32>
    %186 = vector.broadcast %185 : vector<1x32xf32> to vector<8x32xf32>
    %187 = arith.addf %184, %186 : vector<8x32xf32>
    %cst_115 = arith.constant 0.000000e+00 : f32
    %188 = vector.broadcast %cst_115 : f32 to vector<8x32xf32>
    %189 = arith.select %102, %187, %188 : vector<8x32xi1>, vector<8x32xf32>
    %190 = arith.addf %189, %112 : vector<8x32xf32>
    %c0_116 = arith.constant 0 : index
    %c0_117 = arith.constant 0 : index
    %191 = vector.load %arg15[%c0_116, %c0_117] : memref<1x32xf32, #tpu.memory_space<vmem>>, vector<1x32xf32>
    %c0_118 = arith.constant 0 : index
    %c0_119 = arith.constant 0 : index
    %192 = vector.load %arg16[%c0_118, %c0_119] : memref<1x32xf32, #tpu.memory_space<vmem>>, vector<1x32xf32>
    %cst_120 = arith.constant dense<0.000000e+00> : vector<8xf32>
    %193 = vector.multi_reduction <add>, %190, %cst_120 [1] : vector<8x32xf32> to vector<8xf32>
    %194 = vector.shape_cast %193 : vector<8xf32> to vector<8x1xf32>
    %cst_121 = arith.constant 3.200000e+01 : f32
    %195 = vector.broadcast %cst_121 : f32 to vector<8x1xf32>
    %196 = arith.divf %194, %195 : vector<8x1xf32>
    %197 = vector.broadcast %196 : vector<8x1xf32> to vector<8x32xf32>
    %198 = arith.subf %190, %197 : vector<8x32xf32>
    %199 = arith.mulf %198, %198 : vector<8x32xf32>
    %cst_122 = arith.constant dense<0.000000e+00> : vector<8xf32>
    %200 = vector.multi_reduction <add>, %199, %cst_122 [1] : vector<8x32xf32> to vector<8xf32>
    %201 = vector.shape_cast %200 : vector<8xf32> to vector<8x1xf32>
    %cst_123 = arith.constant 3.200000e+01 : f32
    %202 = vector.broadcast %cst_123 : f32 to vector<8x1xf32>
    %203 = arith.divf %201, %202 : vector<8x1xf32>
    %204 = vector.broadcast %196 : vector<8x1xf32> to vector<8x32xf32>
    %205 = arith.subf %190, %204 : vector<8x32xf32>
    %cst_124 = arith.constant 9.99999974E-6 : f32
    %206 = vector.broadcast %cst_124 : f32 to vector<8x1xf32>
    %207 = arith.addf %203, %206 : vector<8x1xf32>
    %208 = math.rsqrt %207 : vector<8x1xf32>
    %209 = vector.broadcast %208 : vector<8x1xf32> to vector<8x32xf32>
    %210 = arith.mulf %205, %209 : vector<8x32xf32>
    %211 = vector.broadcast %191 : vector<1x32xf32> to vector<8x32xf32>
    %212 = arith.mulf %210, %211 : vector<8x32xf32>
    %213 = vector.broadcast %192 : vector<1x32xf32> to vector<8x32xf32>
    %214 = arith.addf %212, %213 : vector<8x32xf32>
    %c0_125 = arith.constant 0 : index
    %c0_126 = arith.constant 0 : index
    %c0_127 = arith.constant 0 : index
    %215 = vector.load %arg17[%c0_125, %c0_126, %c0_127] : memref<1x8x32xf32, #tpu.memory_space<vmem>>, vector<1x8x32xf32>
    %216 = vector.shape_cast %215 : vector<1x8x32xf32> to vector<8x32xf32>
    %217 = vector.shape_cast %214 : vector<8x32xf32> to vector<1x8x32xf32>
    tpu.vector_store %arg17[%c0_125, %c0_126, %c0_127], %217 {strides = array<i32>} : memref<1x8x32xf32, #tpu.memory_space<vmem>>, vector<1x8x32xf32>,
    return
  }
  func.func @transform_0(%arg0: i32, %arg1: memref<2xi32, #tpu.memory_space<smem>>, %arg2: memref<2xi32, #tpu.memory_space<smem>>) -> (i32, i32, i32, i32) {
    %c0_i32 = arith.constant 0 : i32
    %c0_i32_0 = arith.constant 0 : i32
    %c0_i32_1 = arith.constant 0 : i32
    %c0_i32_2 = arith.constant 0 : i32
    return %arg0, %c0_i32, %c0_i32_0, %c0_i32_1 : i32, i32, i32, i32
  }
  func.func @transform_1(%arg0: i32, %arg1: memref<2xi32, #tpu.memory_space<smem>>, %arg2: memref<2xi32, #tpu.memory_space<smem>>) -> (i32, i32, i32, i32) {
    %c0_i32 = arith.constant 0 : i32
    %c0_i32_0 = arith.constant 0 : i32
    %c0_i32_1 = arith.constant 0 : i32
    %c0_i32_2 = arith.constant 0 : i32
    return %arg0, %c0_i32, %c0_i32_0, %c0_i32_1 : i32, i32, i32, i32
  }
  func.func @transform_2(%arg0: i32, %arg1: memref<2xi32, #tpu.memory_space<smem>>, %arg2: memref<2xi32, #tpu.memory_space<smem>>) -> (i32, i32, i32, i32) {
    %c0_i32 = arith.constant 0 : i32
    %c0_i32_0 = arith.constant 0 : i32
    %c0_i32_1 = arith.constant 0 : i32
    %c0_i32_2 = arith.constant 0 : i32
    return %arg0, %c0_i32, %c0_i32_0, %c0_i32_1 : i32, i32, i32, i32
  }
  func.func @transform_3(%arg0: i32, %arg1: memref<2xi32, #tpu.memory_space<smem>>, %arg2: memref<2xi32, #tpu.memory_space<smem>>) -> (i32, i32, i32) {
    %c0_i32 = arith.constant 0 : i32
    %c0_i32_0 = arith.constant 0 : i32
    %c0_i32_1 = arith.constant 0 : i32
    return %arg0, %c0_i32, %c0_i32_0 : i32, i32, i32
  }
  func.func @transform_4(%arg0: i32, %arg1: memref<2xi32, #tpu.memory_space<smem>>, %arg2: memref<2xi32, #tpu.memory_space<smem>>) -> (i32, i32) {
    %c0_i32 = arith.constant 0 : i32
    %c0_i32_0 = arith.constant 0 : i32
    %c0_i32_1 = arith.constant 0 : i32
    return %c0_i32, %c0_i32_0 : i32, i32
  }
  func.func @transform_5(%arg0: i32, %arg1: memref<2xi32, #tpu.memory_space<smem>>, %arg2: memref<2xi32, #tpu.memory_space<smem>>) -> (i32, i32) {
    %c0_i32 = arith.constant 0 : i32
    %c0_i32_0 = arith.constant 0 : i32
    %c0_i32_1 = arith.constant 0 : i32
    return %c0_i32, %c0_i32_0 : i32, i32
  }
  func.func @transform_6(%arg0: i32, %arg1: memref<2xi32, #tpu.memory_space<smem>>, %arg2: memref<2xi32, #tpu.memory_space<smem>>) -> (i32, i32) {
    %c0_i32 = arith.constant 0 : i32
    %c0_i32_0 = arith.constant 0 : i32
    %c0_i32_1 = arith.constant 0 : i32
    return %c0_i32, %c0_i32_0 : i32, i32
  }
  func.func @transform_7(%arg0: i32, %arg1: memref<2xi32, #tpu.memory_space<smem>>, %arg2: memref<2xi32, #tpu.memory_space<smem>>) -> (i32, i32) {
    %c0_i32 = arith.constant 0 : i32
    %c0_i32_0 = arith.constant 0 : i32
    %c0_i32_1 = arith.constant 0 : i32
    return %c0_i32, %c0_i32_0 : i32, i32
  }
  func.func @transform_8(%arg0: i32, %arg1: memref<2xi32, #tpu.memory_space<smem>>, %arg2: memref<2xi32, #tpu.memory_space<smem>>) -> (i32, i32) {
    %c0_i32 = arith.constant 0 : i32
    %c0_i32_0 = arith.constant 0 : i32
    %c0_i32_1 = arith.constant 0 : i32
    return %c0_i32, %c0_i32_0 : i32, i32
  }
  func.func @transform_9(%arg0: i32, %arg1: memref<2xi32, #tpu.memory_space<smem>>, %arg2: memref<2xi32, #tpu.memory_space<smem>>) -> (i32, i32) {
    %c0_i32 = arith.constant 0 : i32
    %c0_i32_0 = arith.constant 0 : i32
    %c0_i32_1 = arith.constant 0 : i32
    return %c0_i32, %c0_i32_0 : i32, i32
  }
  func.func @transform_10(%arg0: i32, %arg1: memref<2xi32, #tpu.memory_space<smem>>, %arg2: memref<2xi32, #tpu.memory_space<smem>>) -> (i32, i32) {
    %c0_i32 = arith.constant 0 : i32
    %c0_i32_0 = arith.constant 0 : i32
    %c0_i32_1 = arith.constant 0 : i32
    return %c0_i32, %c0_i32_0 : i32, i32
  }
  func.func @transform_11(%arg0: i32, %arg1: memref<2xi32, #tpu.memory_space<smem>>, %arg2: memref<2xi32, #tpu.memory_space<smem>>) -> (i32, i32) {
    %c0_i32 = arith.constant 0 : i32
    %c0_i32_0 = arith.constant 0 : i32
    %c0_i32_1 = arith.constant 0 : i32
    return %c0_i32, %c0_i32_0 : i32, i32
  }
  func.func @transform_12(%arg0: i32, %arg1: memref<2xi32, #tpu.memory_space<smem>>, %arg2: memref<2xi32, #tpu.memory_space<smem>>) -> (i32, i32) {
    %c0_i32 = arith.constant 0 : i32
    %c0_i32_0 = arith.constant 0 : i32
    %c0_i32_1 = arith.constant 0 : i32
    return %c0_i32, %c0_i32_0 : i32, i32
  }
  func.func @transform_13(%arg0: i32, %arg1: memref<2xi32, #tpu.memory_space<smem>>, %arg2: memref<2xi32, #tpu.memory_space<smem>>) -> (i32, i32) {
    %c0_i32 = arith.constant 0 : i32
    %c0_i32_0 = arith.constant 0 : i32
    %c0_i32_1 = arith.constant 0 : i32
    return %c0_i32, %c0_i32_0 : i32, i32
  }
  func.func @transform_14(%arg0: i32, %arg1: memref<2xi32, #tpu.memory_space<smem>>, %arg2: memref<2xi32, #tpu.memory_space<smem>>) -> (i32, i32, i32) {
    %c0_i32 = arith.constant 0 : i32
    %c0_i32_0 = arith.constant 0 : i32
    %c0_i32_1 = arith.constant 0 : i32
    return %arg0, %c0_i32, %c0_i32_0 : i32, i32, i32
  }
}

module attributes {stable_mosaic.version = 11 : i64} {
  func.func @_cross_ffn_kernel(%arg0: i32, %arg1: memref<2xi32, #tpu.memory_space<smem>>, %arg2: memref<2xi32, #tpu.memory_space<smem>>, %arg3: memref<1x4x8x8xf32, #tpu.memory_space<vmem>>, %arg4: memref<1x4x8x8xf32, #tpu.memory_space<vmem>>, %arg5: memref<1x4x8x8xf32, #tpu.memory_space<vmem>>, %arg6: memref<1x8x32xf32, #tpu.memory_space<vmem>>, %arg7: memref<32x32xf32, #tpu.memory_space<vmem>>, %arg8: memref<1x32xf32, #tpu.memory_space<vmem>>, %arg9: memref<1x32xf32, #tpu.memory_space<vmem>>, %arg10: memref<1x32xf32, #tpu.memory_space<vmem>>, %arg11: memref<32x64xf32, #tpu.memory_space<vmem>>, %arg12: memref<1x64xf32, #tpu.memory_space<vmem>>, %arg13: memref<64x32xf32, #tpu.memory_space<vmem>>, %arg14: memref<1x32xf32, #tpu.memory_space<vmem>>, %arg15: memref<1x32xf32, #tpu.memory_space<vmem>>, %arg16: memref<1x32xf32, #tpu.memory_space<vmem>>, %arg17: memref<1x8x32xf32, #tpu.memory_space<vmem>>) attributes {dimension_semantics = [#tpu.dimension_semantics<parallel>], iteration_bounds = array<i64: 2>, scalar_prefetch = 2 : i64, scratch_operands = 0 : i64, tpu.core_type = #tpu.core_type<tc>, window_params = [{transform_indices = @transform_0, window_bounds = array<i64: 1, 4, 8, 8>}, {transform_indices = @transform_1, window_bounds = array<i64: 1, 4, 8, 8>}, {transform_indices = @transform_2, window_bounds = array<i64: 1, 4, 8, 8>}, {transform_indices = @transform_3, window_bounds = array<i64: 1, 8, 32>}, {pipeline_mode = #tpu.pipeline_mode<synchronous>, transform_indices = @transform_4, window_bounds = array<i64: 32, 32>}, {pipeline_mode = #tpu.pipeline_mode<synchronous>, transform_indices = @transform_5, window_bounds = array<i64: 1, 32>}, {pipeline_mode = #tpu.pipeline_mode<synchronous>, transform_indices = @transform_6, window_bounds = array<i64: 1, 32>}, {pipeline_mode = #tpu.pipeline_mode<synchronous>, transform_indices = @transform_7, window_bounds = array<i64: 1, 32>}, {pipeline_mode = #tpu.pipeline_mode<synchronous>, transform_indices = @transform_8, window_bounds = array<i64: 32, 64>}, {pipeline_mode = #tpu.pipeline_mode<synchronous>, transform_indices = @transform_9, window_bounds = array<i64: 1, 64>}, {pipeline_mode = #tpu.pipeline_mode<synchronous>, transform_indices = @transform_10, window_bounds = array<i64: 64, 32>}, {pipeline_mode = #tpu.pipeline_mode<synchronous>, transform_indices = @transform_11, window_bounds = array<i64: 1, 32>}, {pipeline_mode = #tpu.pipeline_mode<synchronous>, transform_indices = @transform_12, window_bounds = array<i64: 1, 32>}, {pipeline_mode = #tpu.pipeline_mode<synchronous>, transform_indices = @transform_13, window_bounds = array<i64: 1, 32>}, {transform_indices = @transform_14, window_bounds = array<i64: 1, 8, 32>}]} {
    %0 = arith.index_cast %arg0 : i32 to index
    %1 = memref.load %arg1[%0] : memref<2xi32, #tpu.memory_space<smem>>
    %2 = arith.index_cast %arg0 : i32 to index
    %3 = memref.load %arg2[%2] : memref<2xi32, #tpu.memory_space<smem>>
    %4 = tpu.iota {dimensions = array<i32: 1>} : vector<8x8xi32>
    %5 = vector.broadcast %3 : i32 to vector<8x8xi32>
    %6 = arith.cmpi sge, %4, %5 : vector<8x8xi32>
    %c0 = arith.constant 0 : index
    %c0_0 = arith.constant 0 : index
    %c0_1 = arith.constant 0 : index
    %c0_2 = arith.constant 0 : index
    %7 = vector.load %arg3[%c0, %c0_0, %c0_1, %c0_2] : memref<1x4x8x8xf32, #tpu.memory_space<vmem>>, vector<1x1x8x8xf32>
    %8 = vector.shape_cast %7 : vector<1x1x8x8xf32> to vector<8x8xf32>
    %cst = arith.constant 0.353553385 : f32
    %9 = vector.broadcast %cst : f32 to vector<8x8xf32>
    %10 = arith.mulf %8, %9 : vector<8x8xf32>
    %c0_3 = arith.constant 0 : index
    %c0_4 = arith.constant 0 : index
    %c0_5 = arith.constant 0 : index
    %c0_6 = arith.constant 0 : index
    %11 = vector.load %arg4[%c0_3, %c0_4, %c0_5, %c0_6] : memref<1x4x8x8xf32, #tpu.memory_space<vmem>>, vector<1x1x8x8xf32>
    %12 = vector.shape_cast %11 : vector<1x1x8x8xf32> to vector<8x8xf32>
    %c0_7 = arith.constant 0 : index
    %c0_8 = arith.constant 0 : index
    %c0_9 = arith.constant 0 : index
    %c0_10 = arith.constant 0 : index
    %13 = vector.load %arg5[%c0_7, %c0_8, %c0_9, %c0_10] : memref<1x4x8x8xf32, #tpu.memory_space<vmem>>, vector<1x1x8x8xf32>
    %14 = vector.shape_cast %13 : vector<1x1x8x8xf32> to vector<8x8xf32>
    "tpu.trace_start"() <{level = 10 : i32, message = "qd,kd->qk"}> : () -> ()
    %cst_11 = arith.constant dense<0.000000e+00> : vector<8x8xf32>
    %15 = tpu.matmul %10, %12, %cst_11 {dimension_numbers = #tpu.dot_dimension_numbers<[1], [1], [0], [0], [0, 0, 1, 0], [], []>} : vector<8x8xf32>, vector<8x8xf32>, vector<8x8xf32> -> vector<8x8xf32>
    %cst_12 = arith.constant 0xFF800000 : f32
    "tpu.trace_stop"() : () -> ()
    %16 = vector.broadcast %cst_12 : f32 to vector<8x8xf32>
    %17 = arith.select %6, %16, %15 : vector<8x8xi1>, vector<8x8xf32>
    %cst_13 = arith.constant dense<0xFF800000> : vector<8xf32>
    %18 = vector.multi_reduction <maximumf>, %17, %cst_13 [1] : vector<8x8xf32> to vector<8xf32>
    %19 = vector.shape_cast %18 : vector<8xf32> to vector<8x1xf32>
    %20 = vector.broadcast %19 : vector<8x1xf32> to vector<8x8xf32>
    %21 = arith.subf %17, %20 : vector<8x8xf32>
    %22 = math.exp %21 : vector<8x8xf32>
    %cst_14 = arith.constant dense<0.000000e+00> : vector<8xf32>
    %23 = vector.multi_reduction <add>, %22, %cst_14 [1] : vector<8x8xf32> to vector<8xf32>
    %24 = vector.shape_cast %23 : vector<8xf32> to vector<8x1xf32>
    "tpu.trace_start"() <{level = 10 : i32, message = "qk,kd->qd"}> : () -> ()
    %cst_15 = arith.constant dense<0.000000e+00> : vector<8x8xf32>
    %25 = tpu.matmul %22, %14, %cst_15 {dimension_numbers = #tpu.dot_dimension_numbers<[1], [0], [0], [1], [0, 0, 1, 1], [], []>} : vector<8x8xf32>, vector<8x8xf32>, vector<8x8xf32> -> vector<8x8xf32>
    "tpu.trace_stop"() : () -> ()
    %cst_16 = arith.constant 1.000000e+00 : f32
    %26 = vector.broadcast %cst_16 : f32 to vector<8x1xf32>
    %27 = arith.divf %26, %24 : vector<8x1xf32>
    %28 = vector.broadcast %27 : vector<8x1xf32> to vector<8x8xf32>
    %29 = arith.mulf %25, %28 : vector<8x8xf32>
    %c0_17 = arith.constant 0 : index
    %c1 = arith.constant 1 : index
    %c0_18 = arith.constant 0 : index
    %c0_19 = arith.constant 0 : index
    %30 = vector.load %arg3[%c0_17, %c1, %c0_18, %c0_19] : memref<1x4x8x8xf32, #tpu.memory_space<vmem>>, vector<1x1x8x8xf32>
    %31 = vector.shape_cast %30 : vector<1x1x8x8xf32> to vector<8x8xf32>
    %cst_20 = arith.constant 0.353553385 : f32
    %32 = vector.broadcast %cst_20 : f32 to vector<8x8xf32>
    %33 = arith.mulf %31, %32 : vector<8x8xf32>
    %c0_21 = arith.constant 0 : index
    %c1_22 = arith.constant 1 : index
    %c0_23 = arith.constant 0 : index
    %c0_24 = arith.constant 0 : index
    %34 = vector.load %arg4[%c0_21, %c1_22, %c0_23, %c0_24] : memref<1x4x8x8xf32, #tpu.memory_space<vmem>>, vector<1x1x8x8xf32>
    %35 = vector.shape_cast %34 : vector<1x1x8x8xf32> to vector<8x8xf32>
    %c0_25 = arith.constant 0 : index
    %c1_26 = arith.constant 1 : index
    %c0_27 = arith.constant 0 : index
    %c0_28 = arith.constant 0 : index
    %36 = vector.load %arg5[%c0_25, %c1_26, %c0_27, %c0_28] : memref<1x4x8x8xf32, #tpu.memory_space<vmem>>, vector<1x1x8x8xf32>
    %37 = vector.shape_cast %36 : vector<1x1x8x8xf32> to vector<8x8xf32>
    "tpu.trace_start"() <{level = 10 : i32, message = "qd,kd->qk"}> : () -> ()
    %cst_29 = arith.constant dense<0.000000e+00> : vector<8x8xf32>
    %38 = tpu.matmul %33, %35, %cst_29 {dimension_numbers = #tpu.dot_dimension_numbers<[1], [1], [0], [0], [0, 0, 1, 0], [], []>} : vector<8x8xf32>, vector<8x8xf32>, vector<8x8xf32> -> vector<8x8xf32>
    %cst_30 = arith.constant 0xFF800000 : f32
    "tpu.trace_stop"() : () -> ()
    %39 = vector.broadcast %cst_30 : f32 to vector<8x8xf32>
    %40 = arith.select %6, %39, %38 : vector<8x8xi1>, vector<8x8xf32>
    %cst_31 = arith.constant dense<0xFF800000> : vector<8xf32>
    %41 = vector.multi_reduction <maximumf>, %40, %cst_31 [1] : vector<8x8xf32> to vector<8xf32>
    %42 = vector.shape_cast %41 : vector<8xf32> to vector<8x1xf32>
    %43 = vector.broadcast %42 : vector<8x1xf32> to vector<8x8xf32>
    %44 = arith.subf %40, %43 : vector<8x8xf32>
    %45 = math.exp %44 : vector<8x8xf32>
    %cst_32 = arith.constant dense<0.000000e+00> : vector<8xf32>
    %46 = vector.multi_reduction <add>, %45, %cst_32 [1] : vector<8x8xf32> to vector<8xf32>
    %47 = vector.shape_cast %46 : vector<8xf32> to vector<8x1xf32>
    "tpu.trace_start"() <{level = 10 : i32, message = "qk,kd->qd"}> : () -> ()
    %cst_33 = arith.constant dense<0.000000e+00> : vector<8x8xf32>
    %48 = tpu.matmul %45, %37, %cst_33 {dimension_numbers = #tpu.dot_dimension_numbers<[1], [0], [0], [1], [0, 0, 1, 1], [], []>} : vector<8x8xf32>, vector<8x8xf32>, vector<8x8xf32> -> vector<8x8xf32>
    "tpu.trace_stop"() : () -> ()
    %cst_34 = arith.constant 1.000000e+00 : f32
    %49 = vector.broadcast %cst_34 : f32 to vector<8x1xf32>
    %50 = arith.divf %49, %47 : vector<8x1xf32>
    %51 = vector.broadcast %50 : vector<8x1xf32> to vector<8x8xf32>
    %52 = arith.mulf %48, %51 : vector<8x8xf32>
    %c0_35 = arith.constant 0 : index
    %c2 = arith.constant 2 : index
    %c0_36 = arith.constant 0 : index
    %c0_37 = arith.constant 0 : index
    %53 = vector.load %arg3[%c0_35, %c2, %c0_36, %c0_37] : memref<1x4x8x8xf32, #tpu.memory_space<vmem>>, vector<1x1x8x8xf32>
    %54 = vector.shape_cast %53 : vector<1x1x8x8xf32> to vector<8x8xf32>
    %cst_38 = arith.constant 0.353553385 : f32
    %55 = vector.broadcast %cst_38 : f32 to vector<8x8xf32>
    %56 = arith.mulf %54, %55 : vector<8x8xf32>
    %c0_39 = arith.constant 0 : index
    %c2_40 = arith.constant 2 : index
    %c0_41 = arith.constant 0 : index
    %c0_42 = arith.constant 0 : index
    %57 = vector.load %arg4[%c0_39, %c2_40, %c0_41, %c0_42] : memref<1x4x8x8xf32, #tpu.memory_space<vmem>>, vector<1x1x8x8xf32>
    %58 = vector.shape_cast %57 : vector<1x1x8x8xf32> to vector<8x8xf32>
    %c0_43 = arith.constant 0 : index
    %c2_44 = arith.constant 2 : index
    %c0_45 = arith.constant 0 : index
    %c0_46 = arith.constant 0 : index
    %59 = vector.load %arg5[%c0_43, %c2_44, %c0_45, %c0_46] : memref<1x4x8x8xf32, #tpu.memory_space<vmem>>, vector<1x1x8x8xf32>
    %60 = vector.shape_cast %59 : vector<1x1x8x8xf32> to vector<8x8xf32>
    "tpu.trace_start"() <{level = 10 : i32, message = "qd,kd->qk"}> : () -> ()
    %cst_47 = arith.constant dense<0.000000e+00> : vector<8x8xf32>
    %61 = tpu.matmul %56, %58, %cst_47 {dimension_numbers = #tpu.dot_dimension_numbers<[1], [1], [0], [0], [0, 0, 1, 0], [], []>} : vector<8x8xf32>, vector<8x8xf32>, vector<8x8xf32> -> vector<8x8xf32>
    %cst_48 = arith.constant 0xFF800000 : f32
    "tpu.trace_stop"() : () -> ()
    %62 = vector.broadcast %cst_48 : f32 to vector<8x8xf32>
    %63 = arith.select %6, %62, %61 : vector<8x8xi1>, vector<8x8xf32>
    %cst_49 = arith.constant dense<0xFF800000> : vector<8xf32>
    %64 = vector.multi_reduction <maximumf>, %63, %cst_49 [1] : vector<8x8xf32> to vector<8xf32>
    %65 = vector.shape_cast %64 : vector<8xf32> to vector<8x1xf32>
    %66 = vector.broadcast %65 : vector<8x1xf32> to vector<8x8xf32>
    %67 = arith.subf %63, %66 : vector<8x8xf32>
    %68 = math.exp %67 : vector<8x8xf32>
    %cst_50 = arith.constant dense<0.000000e+00> : vector<8xf32>
    %69 = vector.multi_reduction <add>, %68, %cst_50 [1] : vector<8x8xf32> to vector<8xf32>
    %70 = vector.shape_cast %69 : vector<8xf32> to vector<8x1xf32>
    "tpu.trace_start"() <{level = 10 : i32, message = "qk,kd->qd"}> : () -> ()
    %cst_51 = arith.constant dense<0.000000e+00> : vector<8x8xf32>
    %71 = tpu.matmul %68, %60, %cst_51 {dimension_numbers = #tpu.dot_dimension_numbers<[1], [0], [0], [1], [0, 0, 1, 1], [], []>} : vector<8x8xf32>, vector<8x8xf32>, vector<8x8xf32> -> vector<8x8xf32>
    "tpu.trace_stop"() : () -> ()
    %cst_52 = arith.constant 1.000000e+00 : f32
    %72 = vector.broadcast %cst_52 : f32 to vector<8x1xf32>
    %73 = arith.divf %72, %70 : vector<8x1xf32>
    %74 = vector.broadcast %73 : vector<8x1xf32> to vector<8x8xf32>
    %75 = arith.mulf %71, %74 : vector<8x8xf32>
    %c0_53 = arith.constant 0 : index
    %c3 = arith.constant 3 : index
    %c0_54 = arith.constant 0 : index
    %c0_55 = arith.constant 0 : index
    %76 = vector.load %arg3[%c0_53, %c3, %c0_54, %c0_55] : memref<1x4x8x8xf32, #tpu.memory_space<vmem>>, vector<1x1x8x8xf32>
    %77 = vector.shape_cast %76 : vector<1x1x8x8xf32> to vector<8x8xf32>
    %cst_56 = arith.constant 0.353553385 : f32
    %78 = vector.broadcast %cst_56 : f32 to vector<8x8xf32>
    %79 = arith.mulf %77, %78 : vector<8x8xf32>
    %c0_57 = arith.constant 0 : index
    %c3_58 = arith.constant 3 : index
    %c0_59 = arith.constant 0 : index
    %c0_60 = arith.constant 0 : index
    %80 = vector.load %arg4[%c0_57, %c3_58, %c0_59, %c0_60] : memref<1x4x8x8xf32, #tpu.memory_space<vmem>>, vector<1x1x8x8xf32>
    %81 = vector.shape_cast %80 : vector<1x1x8x8xf32> to vector<8x8xf32>
    %c0_61 = arith.constant 0 : index
    %c3_62 = arith.constant 3 : index
    %c0_63 = arith.constant 0 : index
    %c0_64 = arith.constant 0 : index
    %82 = vector.load %arg5[%c0_61, %c3_62, %c0_63, %c0_64] : memref<1x4x8x8xf32, #tpu.memory_space<vmem>>, vector<1x1x8x8xf32>
    %83 = vector.shape_cast %82 : vector<1x1x8x8xf32> to vector<8x8xf32>
    "tpu.trace_start"() <{level = 10 : i32, message = "qd,kd->qk"}> : () -> ()
    %cst_65 = arith.constant dense<0.000000e+00> : vector<8x8xf32>
    %84 = tpu.matmul %79, %81, %cst_65 {dimension_numbers = #tpu.dot_dimension_numbers<[1], [1], [0], [0], [0, 0, 1, 0], [], []>} : vector<8x8xf32>, vector<8x8xf32>, vector<8x8xf32> -> vector<8x8xf32>
    %cst_66 = arith.constant 0xFF800000 : f32
    "tpu.trace_stop"() : () -> ()
    %85 = vector.broadcast %cst_66 : f32 to vector<8x8xf32>
    %86 = arith.select %6, %85, %84 : vector<8x8xi1>, vector<8x8xf32>
    %cst_67 = arith.constant dense<0xFF800000> : vector<8xf32>
    %87 = vector.multi_reduction <maximumf>, %86, %cst_67 [1] : vector<8x8xf32> to vector<8xf32>
    %88 = vector.shape_cast %87 : vector<8xf32> to vector<8x1xf32>
    %89 = vector.broadcast %88 : vector<8x1xf32> to vector<8x8xf32>
    %90 = arith.subf %86, %89 : vector<8x8xf32>
    %91 = math.exp %90 : vector<8x8xf32>
    %cst_68 = arith.constant dense<0.000000e+00> : vector<8xf32>
    %92 = vector.multi_reduction <add>, %91, %cst_68 [1] : vector<8x8xf32> to vector<8xf32>
    %93 = vector.shape_cast %92 : vector<8xf32> to vector<8x1xf32>
    "tpu.trace_start"() <{level = 10 : i32, message = "qk,kd->qd"}> : () -> ()
    %cst_69 = arith.constant dense<0.000000e+00> : vector<8x8xf32>
    %94 = tpu.matmul %91, %83, %cst_69 {dimension_numbers = #tpu.dot_dimension_numbers<[1], [0], [0], [1], [0, 0, 1, 1], [], []>} : vector<8x8xf32>, vector<8x8xf32>, vector<8x8xf32> -> vector<8x8xf32>
    "tpu.trace_stop"() : () -> ()
    %cst_70 = arith.constant 1.000000e+00 : f32
    %95 = vector.broadcast %cst_70 : f32 to vector<8x1xf32>
    %96 = arith.divf %95, %93 : vector<8x1xf32>
    %97 = vector.broadcast %96 : vector<8x1xf32> to vector<8x8xf32>
    %98 = arith.mulf %94, %97 : vector<8x8xf32>
    %99 = tpu.concatenate %29, %52, %75, %98 in 1 : vector<8x8xf32>, vector<8x8xf32>, vector<8x8xf32>, vector<8x8xf32> -> vector<8x32xf32>
    %100 = tpu.iota {dimensions = array<i32: 0>} : vector<8x32xi32>
    %101 = vector.broadcast %1 : i32 to vector<8x32xi32>
    %102 = arith.cmpi slt, %100, %101 : vector<8x32xi32>
    %c0_71 = arith.constant 0 : index
    %c0_72 = arith.constant 0 : index
    %103 = vector.load %arg7[%c0_71, %c0_72] : memref<32x32xf32, #tpu.memory_space<vmem>>, vector<32x32xf32>
    %cst_73 = arith.constant dense<0.000000e+00> : vector<8x32xf32>
    %104 = tpu.matmul %99, %103, %cst_73 {dimension_numbers = #tpu.dot_dimension_numbers<[1], [0], [0], [1], [0, 0, 1, 1], [], []>} : vector<8x32xf32>, vector<32x32xf32>, vector<8x32xf32> -> vector<8x32xf32>
    %c0_74 = arith.constant 0 : index
    %c0_75 = arith.constant 0 : index
    %105 = vector.load %arg8[%c0_74, %c0_75] : memref<1x32xf32, #tpu.memory_space<vmem>>, vector<1x32xf32>
    %106 = vector.broadcast %105 : vector<1x32xf32> to vector<8x32xf32>
    %107 = arith.addf %104, %106 : vector<8x32xf32>
    %cst_76 = arith.constant 0.000000e+00 : f32
    %108 = vector.broadcast %cst_76 : f32 to vector<8x32xf32>
    %109 = arith.select %102, %107, %108 : vector<8x32xi1>, vector<8x32xf32>
    %c0_77 = arith.constant 0 : index
    %c0_78 = arith.constant 0 : index
    %c0_79 = arith.constant 0 : index
    %110 = vector.load %arg6[%c0_77, %c0_78, %c0_79] : memref<1x8x32xf32, #tpu.memory_space<vmem>>, vector<1x8x32xf32>
    %111 = vector.shape_cast %110 : vector<1x8x32xf32> to vector<8x32xf32>
    %112 = arith.addf %109, %111 : vector<8x32xf32>
    %c0_80 = arith.constant 0 : index
    %c0_81 = arith.constant 0 : index
    %113 = vector.load %arg9[%c0_80, %c0_81] : memref<1x32xf32, #tpu.memory_space<vmem>>, vector<1x32xf32>
    %c0_82 = arith.constant 0 : index
    %c0_83 = arith.constant 0 : index
    %114 = vector.load %arg10[%c0_82, %c0_83] : memref<1x32xf32, #tpu.memory_space<vmem>>, vector<1x32xf32>
    %cst_84 = arith.constant dense<0.000000e+00> : vector<8xf32>
    %115 = vector.multi_reduction <add>, %112, %cst_84 [1] : vector<8x32xf32> to vector<8xf32>
    %116 = vector.shape_cast %115 : vector<8xf32> to vector<8x1xf32>
    %cst_85 = arith.constant 3.200000e+01 : f32
    %117 = vector.broadcast %cst_85 : f32 to vector<8x1xf32>
    %118 = arith.divf %116, %117 : vector<8x1xf32>
    %119 = vector.broadcast %118 : vector<8x1xf32> to vector<8x32xf32>
    %120 = arith.subf %112, %119 : vector<8x32xf32>
    %121 = arith.mulf %120, %120 : vector<8x32xf32>
    %cst_86 = arith.constant dense<0.000000e+00> : vector<8xf32>
    %122 = vector.multi_reduction <add>, %121, %cst_86 [1] : vector<8x32xf32> to vector<8xf32>
    %123 = vector.shape_cast %122 : vector<8xf32> to vector<8x1xf32>
    %cst_87 = arith.constant 3.200000e+01 : f32
    %124 = vector.broadcast %cst_87 : f32 to vector<8x1xf32>
    %125 = arith.divf %123, %124 : vector<8x1xf32>
    %126 = vector.broadcast %118 : vector<8x1xf32> to vector<8x32xf32>
    %127 = arith.subf %112, %126 : vector<8x32xf32>
    %cst_88 = arith.constant 9.99999974E-6 : f32
    %128 = vector.broadcast %cst_88 : f32 to vector<8x1xf32>
    %129 = arith.addf %125, %128 : vector<8x1xf32>
    %130 = math.rsqrt %129 : vector<8x1xf32>
    %131 = vector.broadcast %130 : vector<8x1xf32> to vector<8x32xf32>
    %132 = arith.mulf %127, %131 : vector<8x32xf32>
    %133 = vector.broadcast %113 : vector<1x32xf32> to vector<8x32xf32>
    %134 = arith.mulf %132, %133 : vector<8x32xf32>
    %135 = vector.broadcast %114 : vector<1x32xf32> to vector<8x32xf32>
    %136 = arith.addf %134, %135 : vector<8x32xf32>
    %c0_89 = arith.constant 0 : index
    %c0_90 = arith.constant 0 : index
    %137 = vector.load %arg11[%c0_89, %c0_90] : memref<32x64xf32, #tpu.memory_space<vmem>>, vector<32x64xf32>
    %cst_91 = arith.constant dense<0.000000e+00> : vector<8x64xf32>
    %138 = tpu.matmul %136, %137, %cst_91 {dimension_numbers = #tpu.dot_dimension_numbers<[1], [0], [0], [1], [0, 0, 1, 1], [], []>} : vector<8x32xf32>, vector<32x64xf32>, vector<8x64xf32> -> vector<8x64xf32>
    %c0_92 = arith.constant 0 : index
    %c0_93 = arith.constant 0 : index
    %139 = vector.load %arg12[%c0_92, %c0_93] : memref<1x64xf32, #tpu.memory_space<vmem>>, vector<1x64xf32>
    %140 = vector.broadcast %139 : vector<1x64xf32> to vector<8x64xf32>
    %141 = arith.addf %138, %140 : vector<8x64xf32>
    %cst_94 = arith.constant 5.000000e-01 : f32
    %142 = vector.broadcast %cst_94 : f32 to vector<8x64xf32>
    %143 = arith.mulf %142, %141 : vector<8x64xf32>
    %cst_95 = arith.constant 0.707106769 : f32
    %144 = vector.broadcast %cst_95 : f32 to vector<8x64xf32>
    %145 = arith.mulf %141, %144 : vector<8x64xf32>
    %cst_96 = arith.constant 0.000000e+00 : f32
    %146 = vector.broadcast %cst_96 : f32 to vector<8x64xf32>
    %147 = arith.cmpf oge, %145, %146 : vector<8x64xf32>
    %cst_97 = arith.constant 1.000000e+00 : f32
    %cst_98 = arith.constant -1.000000e+00 : f32
    %148 = vector.broadcast %cst_97 : f32 to vector<8x64xf32>
    %149 = vector.broadcast %cst_98 : f32 to vector<8x64xf32>
    %150 = arith.select %147, %148, %149 : vector<8x64xi1>, vector<8x64xf32>
    %151 = math.absf %145 : vector<8x64xf32>
    %cst_99 = arith.constant 0.327591091 : f32
    %152 = vector.broadcast %cst_99 : f32 to vector<8x64xf32>
    %153 = arith.mulf %152, %151 : vector<8x64xf32>
    %cst_100 = arith.constant 1.000000e+00 : f32
    %154 = vector.broadcast %cst_100 : f32 to vector<8x64xf32>
    %155 = arith.addf %154, %153 : vector<8x64xf32>
    %cst_101 = arith.constant 1.000000e+00 : f32
    %156 = vector.broadcast %cst_101 : f32 to vector<8x64xf32>
    %157 = arith.divf %156, %155 : vector<8x64xf32>
    %cst_102 = arith.constant 1.06140542 : f32
    %158 = vector.broadcast %cst_102 : f32 to vector<8x64xf32>
    %159 = arith.mulf %158, %157 : vector<8x64xf32>
    %cst_103 = arith.constant -1.45315206 : f32
    %160 = vector.broadcast %cst_103 : f32 to vector<8x64xf32>
    %161 = arith.addf %159, %160 : vector<8x64xf32>
    %162 = arith.mulf %161, %157 : vector<8x64xf32>
    %cst_104 = arith.constant 1.42141378 : f32
    %163 = vector.broadcast %cst_104 : f32 to vector<8x64xf32>
    %164 = arith.addf %162, %163 : vector<8x64xf32>
    %165 = arith.mulf %164, %157 : vector<8x64xf32>
    %cst_105 = arith.constant -0.284496725 : f32
    %166 = vector.broadcast %cst_105 : f32 to vector<8x64xf32>
    %167 = arith.addf %165, %166 : vector<8x64xf32>
    %168 = arith.mulf %167, %157 : vector<8x64xf32>
    %cst_106 = arith.constant 0.254829586 : f32
    %169 = vector.broadcast %cst_106 : f32 to vector<8x64xf32>
    %170 = arith.addf %168, %169 : vector<8x64xf32>
    %171 = arith.mulf %170, %157 : vector<8x64xf32>
    %cst_107 = arith.constant 0.000000e+00 : f32
    %172 = vector.broadcast %cst_107 : f32 to vector<8x64xf32>
    %173 = arith.subf %172, %151 : vector<8x64xf32>
    %174 = arith.mulf %173, %151 : vector<8x64xf32>
    %175 = math.exp %174 : vector<8x64xf32>
    %176 = arith.mulf %171, %175 : vector<8x64xf32>
    %cst_108 = arith.constant 1.000000e+00 : f32
    %177 = vector.broadcast %cst_108 : f32 to vector<8x64xf32>
    %178 = arith.subf %177, %176 : vector<8x64xf32>
    %179 = arith.mulf %150, %178 : vector<8x64xf32>
    %cst_109 = arith.constant 1.000000e+00 : f32
    %180 = vector.broadcast %cst_109 : f32 to vector<8x64xf32>
    %181 = arith.addf %180, %179 : vector<8x64xf32>
    %182 = arith.mulf %143, %181 : vector<8x64xf32>
    %c0_110 = arith.constant 0 : index
    %c0_111 = arith.constant 0 : index
    %183 = vector.load %arg13[%c0_110, %c0_111] : memref<64x32xf32, #tpu.memory_space<vmem>>, vector<64x32xf32>
    %cst_112 = arith.constant dense<0.000000e+00> : vector<8x32xf32>
    %184 = tpu.matmul %182, %183, %cst_112 {dimension_numbers = #tpu.dot_dimension_numbers<[1], [0], [0], [1], [0, 0, 1, 1], [], []>} : vector<8x64xf32>, vector<64x32xf32>, vector<8x32xf32> -> vector<8x32xf32>
    %c0_113 = arith.constant 0 : index
    %c0_114 = arith.constant 0 : index
    %185 = vector.load %arg14[%c0_113, %c0_114] : memref<1x32xf32, #tpu.memory_space<vmem>>, vector<1x32xf32>
    %186 = vector.broadcast %185 : vector<1x32xf32> to vector<8x32xf32>
    %187 = arith.addf %184, %186 : vector<8x32xf32>
    %cst_115 = arith.constant 0.000000e+00 : f32
    %188 = vector.broadcast %cst_115 : f32 to vector<8x32xf32>
    %189 = arith.select %102, %187, %188 : vector<8x32xi1>, vector<8x32xf32>
    %190 = arith.addf %189, %112 : vector<8x32xf32>
    %c0_116 = arith.constant 0 : index
    %c0_117 = arith.constant 0 : index
    %191 = vector.load %arg15[%c0_116, %c0_117] : memref<1x32xf32, #tpu.memory_space<vmem>>, vector<1x32xf32>
    %c0_118 = arith.constant 0 : index
    %c0_119 = arith.constant 0 : index
    %192 = vector.load %arg16[%c0_118, %c0_119] : memref<1x32xf32, #tpu.memory_space<vmem>>, vector<1x32xf32>
    %cst_120 = arith.constant dense<0.000000e+00> : vector<8xf32>
    %193 = vector.multi_reduction <add>, %190, %cst_120 [1] : vector<8x32xf32> to vector<8xf32>
    %194 = vector.shape_cast %193 : vector<8xf32> to vector<8x1xf32>
    %cst_121 = arith.constant 3.200000e+01 : f32
    %195 = vector.broadcast %cst_121 : f32 to vector<8x1xf32>
    %196 = arith.divf %194, %195 : vector<8x1xf32>
    %197 = vector.broadcast %196 : vector<8x1xf32> to vector<8x32xf32>
    %198 = arith.subf %190, %197 : vector<8x32xf32>
    %199 = arith.mulf %198, %198 : vector<8x32xf32>
    %cst_122 = arith.constant dense<0.000000e+00> : vector<8xf32>
    %200 = vector.multi_reduction <add>, %199, %cst_122 [1] : vector<8x32xf32> to vector<8xf32>
    %201 = vector.shape_cast %200 : vector<8xf32> to vector<8x1xf32>
    %cst_123 = arith.constant 3.200000e+01 : f32
    %202 = vector.broadcast %cst_123 : f32 to vector<8x1xf32>
    %203 = arith.divf %201, %202 : vector<8x1xf32>
    %204 = vector.broadcast %196 : vector<8x1xf32> to vector<8x32xf32>
    %205 = arith.subf %190, %204 : vector<8x32xf32>
    %cst_124 = arith.constant 9.99999974E-6 : f32
    %206 = vector.broadcast %cst_124 : f32 to vector<8x1xf32>
    %207 = arith.addf %203, %206 : vector<8x1xf32>
    %208 = math.rsqrt %207 : vector<8x1xf32>
    %209 = vector.broadcast %208 : vector<8x1xf32> to vector<8x32xf32>
    %210 = arith.mulf %205, %209 : vector<8x32xf32>
    %211 = vector.broadcast %191 : vector<1x32xf32> to vector<8x32xf32>
    %212 = arith.mulf %210, %211 : vector<8x32xf32>
    %213 = vector.broadcast %192 : vector<1x32xf32> to vector<8x32xf32>
    %214 = arith.addf %212, %213 : vector<8x32xf32>
    %c0_125 = arith.constant 0 : index
    %c0_126 = arith.constant 0 : index
    %c0_127 = arith.constant 0 : index
    %215 = vector.load %arg17[%c0_125, %c0_126, %c0_127] : memref<1x8x32xf32, #tpu.memory_space<vmem>>, vector<1x8x32xf32>
    %216 = vector.shape_cast %215 : vector<1x8x32xf32> to vector<8x32xf32>
    %217 = vector.shape_cast %214 : vector<8x32xf32> to vector<1x8x32xf32>
    tpu.vector_store %arg17[%c0_125, %c0_126, %c0_127], %217 {strides = array<i32>} : memref<1x8x32xf32, #tpu.memory_space<vmem>>, vector<1x8x32xf32>,
    return
  }
  func.func @transform_0(%arg0: i32, %arg1: memref<2xi32, #tpu.memory_space<smem>>, %arg2: memref<2xi32, #tpu.memory_space<smem>>) -> (i32, i32, i32, i32) {
    %c0_i32 = arith.constant 0 : i32
    %c0_i32_0 = arith.constant 0 : i32
    %c0_i32_1 = arith.constant 0 : i32
    %c0_i32_2 = arith.constant 0 : i32
    return %arg0, %c0_i32, %c0_i32_0, %c0_i32_1 : i32, i32, i32, i32
  }
  func.func @transform_1(%arg0: i32, %arg1: memref<2xi32, #tpu.memory_space<smem>>, %arg2: memref<2xi32, #tpu.memory_space<smem>>) -> (i32, i32, i32, i32) {
    %c0_i32 = arith.constant 0 : i32
    %c0_i32_0 = arith.constant 0 : i32
    %c0_i32_1 = arith.constant 0 : i32
    %c0_i32_2 = arith.constant 0 : i32
    return %arg0, %c0_i32, %c0_i32_0, %c0_i32_1 : i32, i32, i32, i32
  }
  func.func @transform_2(%arg0: i32, %arg1: memref<2xi32, #tpu.memory_space<smem>>, %arg2: memref<2xi32, #tpu.memory_space<smem>>) -> (i32, i32, i32, i32) {
    %c0_i32 = arith.constant 0 : i32
    %c0_i32_0 = arith.constant 0 : i32
    %c0_i32_1 = arith.constant 0 : i32
    %c0_i32_2 = arith.constant 0 : i32
    return %arg0, %c0_i32, %c0_i32_0, %c0_i32_1 : i32, i32, i32, i32
  }
  func.func @transform_3(%arg0: i32, %arg1: memref<2xi32, #tpu.memory_space<smem>>, %arg2: memref<2xi32, #tpu.memory_space<smem>>) -> (i32, i32, i32) {
    %c0_i32 = arith.constant 0 : i32
    %c0_i32_0 = arith.constant 0 : i32
    %c0_i32_1 = arith.constant 0 : i32
    return %arg0, %c0_i32, %c0_i32_0 : i32, i32, i32
  }
  func.func @transform_4(%arg0: i32, %arg1: memref<2xi32, #tpu.memory_space<smem>>, %arg2: memref<2xi32, #tpu.memory_space<smem>>) -> (i32, i32) {
    %c0_i32 = arith.constant 0 : i32
    %c0_i32_0 = arith.constant 0 : i32
    %c0_i32_1 = arith.constant 0 : i32
    return %c0_i32, %c0_i32_0 : i32, i32
  }
  func.func @transform_5(%arg0: i32, %arg1: memref<2xi32, #tpu.memory_space<smem>>, %arg2: memref<2xi32, #tpu.memory_space<smem>>) -> (i32, i32) {
    %c0_i32 = arith.constant 0 : i32
    %c0_i32_0 = arith.constant 0 : i32
    %c0_i32_1 = arith.constant 0 : i32
    return %c0_i32, %c0_i32_0 : i32, i32
  }
  func.func @transform_6(%arg0: i32, %arg1: memref<2xi32, #tpu.memory_space<smem>>, %arg2: memref<2xi32, #tpu.memory_space<smem>>) -> (i32, i32) {
    %c0_i32 = arith.constant 0 : i32
    %c0_i32_0 = arith.constant 0 : i32
    %c0_i32_1 = arith.constant 0 : i32
    return %c0_i32, %c0_i32_0 : i32, i32
  }
  func.func @transform_7(%arg0: i32, %arg1: memref<2xi32, #tpu.memory_space<smem>>, %arg2: memref<2xi32, #tpu.memory_space<smem>>) -> (i32, i32) {
    %c0_i32 = arith.constant 0 : i32
    %c0_i32_0 = arith.constant 0 : i32
    %c0_i32_1 = arith.constant 0 : i32
    return %c0_i32, %c0_i32_0 : i32, i32
  }
  func.func @transform_8(%arg0: i32, %arg1: memref<2xi32, #tpu.memory_space<smem>>, %arg2: memref<2xi32, #tpu.memory_space<smem>>) -> (i32, i32) {
    %c0_i32 = arith.constant 0 : i32
    %c0_i32_0 = arith.constant 0 : i32
    %c0_i32_1 = arith.constant 0 : i32
    return %c0_i32, %c0_i32_0 : i32, i32
  }
  func.func @transform_9(%arg0: i32, %arg1: memref<2xi32, #tpu.memory_space<smem>>, %arg2: memref<2xi32, #tpu.memory_space<smem>>) -> (i32, i32) {
    %c0_i32 = arith.constant 0 : i32
    %c0_i32_0 = arith.constant 0 : i32
    %c0_i32_1 = arith.constant 0 : i32
    return %c0_i32, %c0_i32_0 : i32, i32
  }
  func.func @transform_10(%arg0: i32, %arg1: memref<2xi32, #tpu.memory_space<smem>>, %arg2: memref<2xi32, #tpu.memory_space<smem>>) -> (i32, i32) {
    %c0_i32 = arith.constant 0 : i32
    %c0_i32_0 = arith.constant 0 : i32
    %c0_i32_1 = arith.constant 0 : i32
    return %c0_i32, %c0_i32_0 : i32, i32
  }
  func.func @transform_11(%arg0: i32, %arg1: memref<2xi32, #tpu.memory_space<smem>>, %arg2: memref<2xi32, #tpu.memory_space<smem>>) -> (i32, i32) {
    %c0_i32 = arith.constant 0 : i32
    %c0_i32_0 = arith.constant 0 : i32
    %c0_i32_1 = arith.constant 0 : i32
    return %c0_i32, %c0_i32_0 : i32, i32
  }
  func.func @transform_12(%arg0: i32, %arg1: memref<2xi32, #tpu.memory_space<smem>>, %arg2: memref<2xi32, #tpu.memory_space<smem>>) -> (i32, i32) {
    %c0_i32 = arith.constant 0 : i32
    %c0_i32_0 = arith.constant 0 : i32
    %c0_i32_1 = arith.constant 0 : i32
    return %c0_i32, %c0_i32_0 : i32, i32
  }
  func.func @transform_13(%arg0: i32, %arg1: memref<2xi32, #tpu.memory_space<smem>>, %arg2: memref<2xi32, #tpu.memory_space<smem>>) -> (i32, i32) {
    %c0_i32 = arith.constant 0 : i32
    %c0_i32_0 = arith.constant 0 : i32
    %c0_i32_1 = arith.constant 0 : i32
    return %c0_i32, %c0_i32_0 : i32, i32
  }
  func.func @transform_14(%arg0: i32, %arg1: memref<2xi32, #tpu.memory_space<smem>>, %arg2: memref<2xi32, #tpu.memory_space<smem>>) -> (i32, i32, i32) {
    %c0_i32 = arith.constant 0 : i32
    %c0_i32_0 = arith.constant 0 : i32
    %c0_i32_1 = arith.constant 0 : i32
    return %arg0, %c0_i32, %c0_i32_0 : i32, i32, i32
  }
}

</mosaic_0001>

<llo_original>
// kernel: decoder_blocks_forward.11
$region0: #{decoder_blocks_forward.11}
  #allocation0 [shape = 'u32[]', space=smem, size = 0x4, offset = 0x4, fixed_abs, tag = 'smem constant byte address 0x4 - core index']
  #allocation1 [shape = 'u32[144,128]{1,0:T(1,128)}', space=vmem, size = 0x12000, scoped, tag = 'internal scratch']
  #allocation2 [shape = 's32[1]{0}', space=sflag, size = 0x4, scoped, tag = 'scoped memory for decoder_blocks_forward.11']
  #allocation3 [shape = 'u8[512]{0}', space=smem, size = 0x200, scoped, tag = 'prefetched SMEM operand 0']
  %s0 = inlined_call_operand.vmem [shape: s32[2], index: 0, kind: input, shape index: {}]
  %s1 = inlined_call_operand.vmem [shape: f32[2,8,32], index: 1, kind: input, shape index: {}]
  %s2 = inlined_call_operand.vmem [shape: f32[8,32], index: 2, kind: input, shape index: {}]
  %s3 = inlined_call_operand.vmem [shape: f32[2,8,32], index: 3, kind: output, shape index: {}]
  %s4 = sld [smem:[#allocation0]]
  $region41: #{decoder_blocks_forward.11} parent=0
    _
  %s6 = ssub.s32 1, %s4
  %s7 = scalar_select 0, %s6, %s4
  %s8 = sshll.u32 %s0, 4
  %s9 = int_to_ptr.vmem [resolvable:$true] %s8
  %11 = dma.vmem_to_smem %s9, 16, [#allocation3], [#allocation2]
  %12 = dma.done [#allocation2], 16
  %13 = sfence
  loop: start=0, step=1, limit=4
  $region2: #{decoder_blocks_forward.11} parent=0 // loop_pre_header
    _
  $region3: #{decoder_blocks_forward.11} parent=0 // loop_header
    %s15 = sphi 0, %s19
    %p16 = scmp.ge.s32.totalorder %s15, 4
    %s25 = sphi 0, %s27
    %s28 = sphi 0, %s25
    %s29 = sphi 0, %s28
    %s45 = sphi 0, %s29
    %s49 = sphi 0, %s49
    %s51 = sphi 0, %s49
    %s52 = sphi 0, %s51
    %s66 = sphi 0, %s52
    %s72 = sphi 0, %s74
    %s75 = sphi 0, %s72
    %s76 = sphi 0, %s75
    %s92 = sphi 0, %s76
  $region4: #{decoder_blocks_forward.11} parent=0 // loop_header_branch
    %18 = sbr.rel (%p16) target = $region8
  $region5: #{decoder_blocks_forward.11} parent=0 // loop_body
    %s20 = ssub.s32 %s15, 1
    %s21 = ssub.s32 %s15, 2
    %s22 = sadd.s32 %s15, 1
    %s23 = ssub.s32 %s15, %s22
    %p24 = scmp.eq.s32.totalorder %s23, 0
    %s26 = sadd.s32 %s25, 1
    %s27 = scalar_select %p24, %s25, %s26
    %p30 = pneg %p24
    %p31 = scmp.eq.s32.totalorder %s15, 1
    %p32 = por %p30, %p31
    %p33 = scmp.ne.s32.totalorder %s25, %s28
    %p34 = scmp.eq.s32.totalorder %s15, 0
    %p35 = por %p33, %p34
    %p36 = scmp.ne.s32.totalorder %s25, %s28
    %p37 = scmp.eq.s32.totalorder %s20, 1
    %p38 = por %p36, %p37
    %p39 = scmp.ne.s32.totalorder %s28, %s29
    %p40 = scmp.eq.s32.totalorder %s20, 0
    %p41 = por %p39, %p40
    %p42 = scmp.ne.s32.totalorder %s28, %s29
    %p43 = scmp.eq.s32.totalorder %s21, 1
    %p44 = por %p42, %p43
    %p46 = scmp.ne.s32.totalorder %s29, %s45
    %p47 = scmp.eq.s32.totalorder %s21, 0
    %p48 = por %p46, %p47
    %s50 = sadd.s32 %s49, 1
    %p53 = scmp.eq.s32.totalorder %s15, 1
    %p54 = scmp.ne.s32.totalorder %s49, %s51
    %p55 = scmp.eq.s32.totalorder %s15, 0
    %p56 = por %p54, %p55
    %p57 = scmp.ne.s32.totalorder %s49, %s51
    %p58 = scmp.eq.s32.totalorder %s20, 1
    %p59 = por %p57, %p58
    %p60 = scmp.ne.s32.totalorder %s51, %s52
    %p61 = scmp.eq.s32.totalorder %s20, 0
    %p62 = por %p60, %p61
    %p63 = scmp.ne.s32.totalorder %s51, %s52
    %p64 = scmp.eq.s32.totalorder %s21, 1
    %p65 = por %p63, %p64
    %p67 = scmp.ne.s32.totalorder %s52, %s66
    %p68 = scmp.eq.s32.totalorder %s21, 0
    %p69 = por %p67, %p68
    %s70 = ssub.s32 %s15, %s22
    %p71 = scmp.eq.s32.totalorder %s70, 0
    %s73 = sadd.s32 %s72, 1
    %s74 = scalar_select %p71, %s72, %s73
    %p77 = pneg %p71
    %p78 = scmp.eq.s32.totalorder %s15, 1
    %p79 = por %p77, %p78
    %p80 = scmp.ne.s32.totalorder %s72, %s75
    %p81 = scmp.eq.s32.totalorder %s15, 0
    %p82 = por %p80, %p81
    %p83 = scmp.ne.s32.totalorder %s72, %s75
    %p84 = scmp.eq.s32.totalorder %s20, 1
    %p85 = por %p83, %p84
    %p86 = scmp.ne.s32.totalorder %s75, %s76
    %p87 = scmp.eq.s32.totalorder %s20, 0
    %p88 = por %p86, %p87
    %p89 = scmp.ne.s32.totalorder %s75, %s76
    %p90 = scmp.eq.s32.totalorder %s21, 1
    %p91 = por %p89, %p90
    %p93 = scmp.ne.s32.totalorder %s76, %s92
    %p94 = scmp.eq.s32.totalorder %s21, 0
    %p95 = por %p93, %p94
    %p96 = scmp.le.s32.totalorder 1, %s15
    %p97 = scmp.lt.s32.totalorder %s15, 3
    %p98 = pnand %p96, %p97
    %p99 = pneg %p98
    // Predicated region
    $region9: #{decoder_blocks_forward.11} parent=5 // pred_check
      _
    $region10: #{decoder_blocks_forward.11} parent=5 // pred_check_branch
      %101 = sbr.rel (%p98) target = $region12
    $region11: #{decoder_blocks_forward.11} parent=5 // pred_region
      %s102 = ssub.s32 %s15, 1
      // Predicated region
      $region13: #{decoder_blocks_forward.11} parent=11 // pred_check
        %p103 = pneg %p62
      $region14: #{decoder_blocks_forward.11} parent=11 // pred_check_branch
        %105 = sbr.rel (%p103) target = $region16
      $region15: #{decoder_blocks_forward.11} parent=11 // pred_region
        _
      $region16: #{decoder_blocks_forward.11} parent=11 // pred_fallthru
        _
    $region12: #{decoder_blocks_forward.11} parent=5 // pred_fallthru
      _
    %p106 = scmp.lt.s32.totalorder %s15, 2
    // Predicated region
    $region17: #{decoder_blocks_forward.11} parent=5 // pred_check
      %p107 = pneg %p106
    $region18: #{decoder_blocks_forward.11} parent=5 // pred_check_branch
      %109 = sbr.rel (%p107) target = $region20
    $region19: #{decoder_blocks_forward.11} parent=5 // pred_region
      // Predicated region
      $region21: #{decoder_blocks_forward.11} parent=19 // pred_check
        %p110 = pneg %p35
      $region22: #{decoder_blocks_forward.11} parent=19 // pred_check_branch
        %112 = sbr.rel (%p110) target = $region24
      $region23: #{decoder_blocks_forward.11} parent=19 // pred_region
        %p113 = scmp.lt.s32.totalorder %s15, 1
        %s114 = scalar_select %p113, %s15, 1
        %s115 = smul.addr %s114, 8
        %s116 = scalar_lea.vmem %s1, %s115
      $region24: #{decoder_blocks_forward.11} parent=19 // pred_fallthru
        _
    $region20: #{decoder_blocks_forward.11} parent=5 // pred_fallthru
      _
    %p117 = scmp.le.s32.totalorder 1, %s15
    %p118 = scmp.lt.s32.totalorder %s15, 3
    %p119 = pnand %p117, %p118
    %p120 = pneg %p119
    // Predicated region
    $region25: #{decoder_blocks_forward.11} parent=5 // pred_check
      _
    $region26: #{decoder_blocks_forward.11} parent=5 // pred_check_branch
      %122 = sbr.rel (%p119) target = $region28
    $region27: #{decoder_blocks_forward.11} parent=5 // pred_region
      %s123 = ssub.s32 %s15, 1
      %p124 = scmp.lt.s32.totalorder %s20, 1
      %s125 = scalar_select %p124, %s20, 1
      %s126 = smul.addr %s125, 8
      %s127 = scalar_lea.vmem %s1, %s126
      %p128 = pneg %p41
      %p129 = pneg %p38
      %p130 = pneg %p62
      %p131 = pneg %p59
      %p132 = pneg %p88
      %p133 = pneg %p85
      %p134 = scmp.lt.s32.totalorder %s20, 1
      %s135 = scalar_select %p134, %s20, 1
      %s136 = smul.addr %s135, 8
      %s137 = scalar_lea.vmem %s3, %s136
      %p138 = scmp.lt.s32.totalorder %s20, 1
      %s139 = scalar_select %p138, %s20, 1
      %s140 = smul.addr %s139, 8
      %s141 = scalar_lea.vmem %s1, %s140
      %p142 = scmp.lt.s32.totalorder %s20, 1
      %s143 = scalar_select %p142, %s20, 1
      %s144 = smul.addr %s143, 8
      %s145 = scalar_lea.vmem %s3, %s144
      %v146 = vld [vmem:[%s141] sm:$0xff]
      %v147 = vmul.f32 %v146, 5.656854
      %v148 = vld [vmem:[%s2] sm:$0xff]
      %v149 = vadd.f32 %v147, %v148
      %s150 = sld [smem:[#allocation3 + %s20]]
      %v151 = vlaneseq
      %v152 = vshrl.u32 %v151, 7
      %v153 = vstv %s150
      %vm154 = vcmp.lt.s32.totalorder %v152, %v153
      %v155 = vsel %vm154, %v149, 0.0
      %vm156 = vcmask 261120
      %157 = vst.msk [vmem:[%s145] sm:$0xff] %vm156, %v155
      %p158 = scmp.lt.s32.totalorder %s20, 1
      %s159 = scalar_select %p158, %s20, 1
      %s160 = smul.addr %s159, 8
      %s161 = scalar_lea.vmem %s3, %s160
      // Predicated region
      $region29: #{decoder_blocks_forward.11} parent=27 // pred_check
        %p162 = pneg %p85
      $region30: #{decoder_blocks_forward.11} parent=27 // pred_check_branch
        %164 = sbr.rel (%p162) target = $region32
      $region31: #{decoder_blocks_forward.11} parent=27 // pred_region
        _
      $region32: #{decoder_blocks_forward.11} parent=27 // pred_fallthru
        _
    $region28: #{decoder_blocks_forward.11} parent=5 // pred_fallthru
      _
    %p165 = scmp.le.s32.totalorder 2, %s15
    // Predicated region
    $region33: #{decoder_blocks_forward.11} parent=5 // pred_check
      %p166 = pneg %p165
    $region34: #{decoder_blocks_forward.11} parent=5 // pred_check_branch
      %168 = sbr.rel (%p166) target = $region36
    $region35: #{decoder_blocks_forward.11} parent=5 // pred_region
      %s169 = ssub.s32 %s15, 2
      // Predicated region
      $region37: #{decoder_blocks_forward.11} parent=35 // pred_check
        %p170 = pneg %p91
      $region38: #{decoder_blocks_forward.11} parent=35 // pred_check_branch
        %172 = sbr.rel (%p170) target = $region40
      $region39: #{decoder_blocks_forward.11} parent=35 // pred_region
        %p173 = scmp.lt.s32.totalorder %s21, 1
        %s174 = scalar_select %p173, %s21, 1
        %s175 = smul.addr %s174, 8
        %s176 = scalar_lea.vmem %s3, %s175
      $region40: #{decoder_blocks_forward.11} parent=35 // pred_fallthru
        _
    $region36: #{decoder_blocks_forward.11} parent=5 // pred_fallthru
      _
  $region6: #{decoder_blocks_forward.11} parent=0 // loop_footer
    %s19 = sadd.s32 1, %s15
  $region7: #{decoder_blocks_forward.11} parent=0 // loop_footer_branch
    %14 = sbr.rel target = $region3
  $region8: #{decoder_blocks_forward.11} parent=0 // loop_exit
    _

// kernel: decoder_blocks_forward.14
$region0: #{decoder_blocks_forward.14}
  #allocation0 [shape = 'u32[]', space=smem, size = 0x4, offset = 0x4, fixed_abs, tag = 'smem constant byte address 0x4 - core index']
  #allocation1 [shape = 'u32[144,128]{1,0:T(1,128)}', space=vmem, size = 0x12000, scoped, tag = 'internal scratch']
  #allocation2 [shape = 'f32[16,96]{1,0:T(8,128)}', space=vmem, size = 0x2000, scoped, tag = 'scratch operand']
  %s0 = inlined_call_operand.vmem [shape: f32[16,32], index: 0, kind: input, shape index: {}]
  %s1 = inlined_call_operand.vmem [shape: f32[32,96], index: 1, kind: input, shape index: {}]
  %s2 = inlined_call_operand.vmem [shape: f32[16,32], index: 2, kind: output, shape index: {0}]
  %s3 = inlined_call_operand.vmem [shape: f32[16,32], index: 3, kind: output, shape index: {1}]
  %s4 = inlined_call_operand.vmem [shape: f32[16,32], index: 4, kind: output, shape index: {2}]
  %5 = xla_tuple %s2, %s3, %s4
  %s6 = sld [smem:[#allocation0]]
  $region42: #{decoder_blocks_forward.14} parent=0
    _
  %s8 = ssub.s32 1, %s6
  %s9 = scalar_select 0, %s8, %s6
  // Predicated region
  $region2: #{decoder_blocks_forward.14} parent=0 // pred_check
    _
  $region3: #{decoder_blocks_forward.14} parent=0 // pred_check_branch
    %11 = sbr.rel (0) target = $region5
  $region4: #{decoder_blocks_forward.14} parent=0 // pred_region
    _
  $region5: #{decoder_blocks_forward.14} parent=0 // pred_fallthru
    _
  // Predicated region
  $region6: #{decoder_blocks_forward.14} parent=0 // pred_check
    _
  $region7: #{decoder_blocks_forward.14} parent=0 // pred_check_branch
    %13 = sbr.rel (0) target = $region9
  $region8: #{decoder_blocks_forward.14} parent=0 // pred_region
    _
  $region9: #{decoder_blocks_forward.14} parent=0 // pred_fallthru
    _
  %p14 = scmp.eq.s32.totalorder 0, 0
  // Predicated region
  $region10: #{decoder_blocks_forward.14} parent=0 // pred_check
    %p15 = pneg %p14
  $region11: #{decoder_blocks_forward.14} parent=0 // pred_check_branch
    %17 = sbr.rel (%p15) target = $region13
  $region12: #{decoder_blocks_forward.14} parent=0 // pred_region
    %vm18 = vcmask 785408
    %19 = vst.msk [vmem:[#allocation2] sm:$0xff] %vm18, 0.0
    %20 = vst.msk [vmem:[#allocation2 + $0x8] sm:$0xff] %vm18, 0.0
  $region13: #{decoder_blocks_forward.14} parent=0 // pred_fallthru
    _
  %v21 = vld [vmem:[#allocation2] sm:$0xff]
  %v22 = vld [vmem:[#allocation2 + $0x8] sm:$0xff]
  %v23 = vld [vmem:[%s0] sm:$0xff]
  %v24 = vld [vmem:[%s0 + $0x8] sm:$0xff]
  %v25 = vld [vmem:[%s1] sm:$0xff]
  %v26 = vld [vmem:[%s1 + $0x8] sm:$0xff]
  %v27 = vld [vmem:[%s1 + $0x10] sm:$0xff]
  %v28 = vld [vmem:[%s1 + $0x18] sm:$0xff]
  %vm29 = vcmask 261120
  %v31 = vsel %vm29, %v23, 0
  %v34 = vsel %vm29, %v24, 0
  %36 = vmatprep.subr.mxu0 0.0
  %37 = vmatpush1.msra.mxu0 %v25
  %38 = vmatprep.subr.mxu0 0.0
  %39 = vmatpush1.msra.mxu0 %v26
  %40 = vmatprep.subr.mxu0 0.0
  %41 = vmatpush1.msra.mxu0 %v27
  %42 = vmatprep.subr.mxu0 0.0
  %43 = vmatpush1.msra.mxu0 %v28
  %44 = vmatprep.subr.mxu0 0.0
  %45 = vmatpush1.msra.mxu0 0.0
  %46 = vmatprep.subr.mxu0 0.0
  %47 = vmatpush1.msra.mxu0 0.0
  %48 = vmatprep.subr.mxu0 0.0
  %49 = vmatpush1.msra.mxu0 0.0
  %50 = vmatprep.subr.mxu0 0.0
  %51 = vmatpush1.msra.mxu0 0.0
  %52 = vmatprep.subr.mxu0 0.0
  %53 = vmatpush1.msra.mxu0 0.0
  %54 = vmatprep.subr.mxu0 0.0
  %55 = vmatpush1.msra.mxu0 0.0
  %56 = vmatprep.subr.mxu0 0.0
  %57 = vmatpush1.msra.mxu0 0.0
  %58 = vmatprep.subr.mxu0 0.0
  %59 = vmatpush1.msra.mxu0 0.0
  %60 = vmatprep.subr.mxu0 0.0
  %61 = vmatpush1.msra.mxu0 0.0
  %62 = vmatprep.subr.mxu0 0.0
  %63 = vmatpush1.msra.mxu0 0.0
  %64 = vmatprep.subr.mxu0 0.0
  %65 = vmatpush1.msra.mxu0 0.0
  %66 = vmatprep.subr.mxu0 0.0
  %67 = vmatpush1.msra.mxu0 0.0
  %68 = vmatprep.subr.mxu0 0.0
  %69 = vmatpush1.msra.mxu0 0.0
  %70 = vmatprep.subr.mxu0 0.0
  %71 = vmatpush1.msra.mxu0 0.0
  %72 = vmatprep.subr.mxu0 0.0
  %73 = vmatpush1.msra.mxu0 0.0
  %74 = vmatprep.subr.mxu0 0.0
  %75 = vmatpush1.msra.mxu0 0.0
  %76 = vmatprep.subr.mxu0 0.0
  %77 = vmatpush1.msra.mxu0 0.0
  %78 = vmatprep.subr.mxu0 0.0
  %79 = vmatpush1.msra.mxu0 0.0
  %80 = vmatprep.subr.mxu0 0.0
  %81 = vmatpush1.msra.mxu0 0.0
  %82 = vmatprep.subr.mxu0 0.0
  %83 = vmatpush1.msra.mxu0 0.0
  %84 = vmatprep.subr.mxu0 0.0
  %85 = vmatpush1.msra.mxu0 0.0
  %86 = vmatprep.subr.mxu0 0.0
  %87 = vmatpush1.msra.mxu0 0.0
  %88 = vmatprep.subr.mxu0 0.0
  %89 = vmatpush1.msra.mxu0 0.0
  %90 = vmatprep.subr.mxu0 0.0
  %91 = vmatpush1.msra.mxu0 0.0
  %92 = vmatprep.subr.mxu0 0.0
  %93 = vmatpush1.msra.mxu0 0.0
  %94 = vmatprep.subr.mxu0 0.0
  %95 = vmatpush1.msra.mxu0 0.0
  %96 = vmatprep.subr.mxu0 0.0
  %97 = vmatpush1.msra.mxu0 0.0
  %98 = vmatprep.subr.mxu0 0.0
  %99 = vmatpush1.msra.mxu0 0.0
  %100 = vmatprep.mubr.f32.mxu0 0.0
  %101 = vmatmul.mubr.f32.gmra.mrb[0].mxu0 %v31
  %v102 = vpop.f32.mrb[0].mxu0
  %v103 = vadd.f32 0.0, %v102
  %v104 = vpop.f32.mrb[0].mxu0
  %105 = vmatprep.mubr.f32.mxu0 0.0
  %106 = vmatmul.mubr.f32.gmra.mrb[0].mxu0 %v34
  %v107 = vpop.f32.mrb[0].mxu0
  %v108 = vadd.f32 0.0, %v107
  %v109 = vpop.f32.mrb[0].mxu0
  %110 = vdwg.mxu0
  %v111 = vadd.f32 %v21, %v103
  %v112 = vadd.f32 %v22, %v108
  %vm113 = vcmask 785408
  %114 = vst.msk [vmem:[#allocation2] sm:$0xff] %vm113, %v111
  %115 = vst.msk [vmem:[#allocation2 + $0x8] sm:$0xff] %vm113, %v112
  // Predicated region
  $region14: #{decoder_blocks_forward.14} parent=0 // pred_check
    %p116 = pneg %p14
  $region15: #{decoder_blocks_forward.14} parent=0 // pred_check_branch
    %118 = sbr.rel (%p116) target = $region17
  $region16: #{decoder_blocks_forward.14} parent=0 // pred_region
    %v119 = vld [vmem:[#allocation2] sm:$0xff]
    %v120 = vld [vmem:[#allocation2 + $0x8] sm:$0xff]
    %121 = vst.msk [vmem:[%s2] sm:$0xff] %vm29, %v119
    %122 = vst.msk [vmem:[%s2 + $0x8] sm:$0xff] %vm29, %v120
    %125 = vrot.lane.b32.xlu0 %v119, 96
    %v126 = vpop.permute.xlu0 %125
    %127 = vrot.lane.b32.xlu0 %v120, 96
    %v128 = vpop.permute.xlu0 %127
    %131 = vst.msk [vmem:[%s3] sm:$0xff] %vm29, %v126
    %132 = vst.msk [vmem:[%s3 + $0x8] sm:$0xff] %vm29, %v128
    %133 = vrot.lane.b32.xlu0 %v119, 64
    %v134 = vpop.permute.xlu0 %133
    %135 = vrot.lane.b32.xlu0 %v120, 64
    %v136 = vpop.permute.xlu0 %135
    %139 = vst.msk [vmem:[%s4] sm:$0xff] %vm29, %v134
    %140 = vst.msk [vmem:[%s4 + $0x8] sm:$0xff] %vm29, %v136
  $region17: #{decoder_blocks_forward.14} parent=0 // pred_fallthru
    _
  // Predicated region
  $region18: #{decoder_blocks_forward.14} parent=0 // pred_check
    _
  $region19: #{decoder_blocks_forward.14} parent=0 // pred_check_branch
    %142 = sbr.rel (0) target = $region21
  $region20: #{decoder_blocks_forward.14} parent=0 // pred_region
    _
  $region21: #{decoder_blocks_forward.14} parent=0 // pred_fallthru
    _
  // Predicated region
  $region22: #{decoder_blocks_forward.14} parent=0 // pred_check
    _
  $region23: #{decoder_blocks_forward.14} parent=0 // pred_check_branch
    %144 = sbr.rel (0) target = $region25
  $region24: #{decoder_blocks_forward.14} parent=0 // pred_region
    _
  $region25: #{decoder_blocks_forward.14} parent=0 // pred_fallthru
    _
  // Predicated region
  $region26: #{decoder_blocks_forward.14} parent=0 // pred_check
    _
  $region27: #{decoder_blocks_forward.14} parent=0 // pred_check_branch
    %146 = sbr.rel (0) target = $region29
  $region28: #{decoder_blocks_forward.14} parent=0 // pred_region
    _
  $region29: #{decoder_blocks_forward.14} parent=0 // pred_fallthru
    _
  // Predicated region
  $region30: #{decoder_blocks_forward.14} parent=0 // pred_check
    _
  $region31: #{decoder_blocks_forward.14} parent=0 // pred_check_branch
    %148 = sbr.rel (0) target = $region33
  $region32: #{decoder_blocks_forward.14} parent=0 // pred_region
    _
  $region33: #{decoder_blocks_forward.14} parent=0 // pred_fallthru
    _
  // Predicated region
  $region34: #{decoder_blocks_forward.14} parent=0 // pred_check
    _
  $region35: #{decoder_blocks_forward.14} parent=0 // pred_check_branch
    %150 = sbr.rel (0) target = $region37
  $region36: #{decoder_blocks_forward.14} parent=0 // pred_region
    _
  $region37: #{decoder_blocks_forward.14} parent=0 // pred_fallthru
    _
  // Predicated region
  $region38: #{decoder_blocks_forward.14} parent=0 // pred_check
    _
  $region39: #{decoder_blocks_forward.14} parent=0 // pred_check_branch
    %152 = sbr.rel (0) target = $region41
  $region40: #{decoder_blocks_forward.14} parent=0 // pred_region
    _
  $region41: #{decoder_blocks_forward.14} parent=0 // pred_fallthru
    _

// kernel: decoder_blocks_forward.15
$region0: #{decoder_blocks_forward.15}
  #allocation0 [shape = 'u32[]', space=smem, size = 0x4, offset = 0x4, fixed_abs, tag = 'smem constant byte address 0x4 - core index']
  #allocation1 [shape = 'u32[144,128]{1,0:T(1,128)}', space=vmem, size = 0x12000, scoped, tag = 'internal scratch']
  #allocation2 [shape = 's32[1]{0}', space=sflag, size = 0x4, scoped, tag = 'scoped memory for decoder_blocks_forward.15']
  #allocation3 [shape = 'u8[512]{0}', space=smem, size = 0x200, scoped, tag = 'prefetched SMEM operand 0']
  #allocation4 [shape = 's32[1]{0:T(128)S(6)}', space=smem, size = 0x200, scoped, tag = 'prefetched SMEM operand 1']
  %s0 = inlined_call_operand.vmem [shape: s32[2], index: 0, kind: input, shape index: {}]
  %s1 = inlined_call_operand.<no memory space> [shape: s32[1], index: 1, kind: input, shape index: {}]
  %s2 = inlined_call_operand.vmem [shape: f32[2,4,8,8], index: 2, kind: input, shape index: {}]
  %s3 = inlined_call_operand.vmem [shape: f32[2,4,8,8], index: 3, kind: input, shape index: {}]
  %s4 = inlined_call_operand.vmem [shape: f32[2,4,8,8], index: 4, kind: input, shape index: {}]
  %s5 = inlined_call_operand.vmem [shape: f32[2,4,8,8], index: 5, kind: output, shape index: {}]
  %s6 = sld [smem:[#allocation0]]
  $region45: #{decoder_blocks_forward.15} parent=0
    _
  %s8 = ssub.s32 1, %s6
  %s9 = scalar_select 0, %s8, %s6
  %s10 = sshll.u32 %s0, 4
  %s11 = int_to_ptr.vmem [resolvable:$true] %s10
  %13 = dma.vmem_to_smem %s11, 16, [#allocation3], [#allocation2]
  %14 = sst [smem:[#allocation4]] %s1
  %15 = dma.done [#allocation2], 16
  %16 = sfence
  loop: start=0, step=1, limit=10
  $region2: #{decoder_blocks_forward.15} parent=0 // loop_pre_header
    _
  $region3: #{decoder_blocks_forward.15} parent=0 // loop_header
    %s18 = sphi 0, %s22
    %p19 = scmp.ge.s32.totalorder %s18, 10
    %s25 = sphi 0, %s37
    %s26 = sphi 0, %s33
    %s27 = sphi 0, %s25
    %s28 = sphi 0, %s26
    %s29 = sphi 0, %s27
    %s30 = sphi 0, %s28
    %s42 = sphi 0, %s44
    %s45 = sphi 0, %s42
    %s46 = sphi 0, %s45
    %s62 = sphi 0, %s46
    %s70 = sphi 0, %s72
    %s73 = sphi 0, %s70
    %s74 = sphi 0, %s73
    %s90 = sphi 0, %s74
    %s98 = sphi 0, %s100
    %s101 = sphi 0, %s98
    %s102 = sphi 0, %s101
    %s118 = sphi 0, %s102
    %s126 = sphi 0, %s128
    %s129 = sphi 0, %s126
    %s130 = sphi 0, %s129
    %s146 = sphi 0, %s130
  $region4: #{decoder_blocks_forward.15} parent=0 // loop_header_branch
    %21 = sbr.rel (%p19) target = $region8
  $region5: #{decoder_blocks_forward.15} parent=0 // loop_body
    %s23 = ssub.s32 %s18, 1
    %s24 = ssub.s32 %s18, 2
    %s31 = sadd.s32 1, %s26
    %p32 = scmp.ge.s32.totalorder %s31, 4
    %s33 = scalar_select %p32, 0, %s31
    %s34 = sadd.s32 1, %s25
    %s35 = scalar_select %p32, %s34, %s25
    %p36 = scmp.ge.s32.totalorder %s35, 2
    %s37 = scalar_select %p36, 0, %s35
    %s38 = ssub.s32 %s25, %s37
    %s39 = ssub.s32 %s26, %s33
    %s40 = sor.u32 %s38, %s39
    %p41 = scmp.eq.s32.totalorder %s40, 0
    %s43 = sadd.s32 %s42, 1
    %s44 = scalar_select %p41, %s42, %s43
    %p47 = pneg %p41
    %p48 = scmp.eq.s32.totalorder %s18, 7
    %p49 = por %p47, %p48
    %p50 = scmp.ne.s32.totalorder %s42, %s45
    %p51 = scmp.eq.s32.totalorder %s18, 0
    %p52 = por %p50, %p51
    %p53 = scmp.ne.s32.totalorder %s42, %s45
    %p54 = scmp.eq.s32.totalorder %s23, 7
    %p55 = por %p53, %p54
    %p56 = scmp.ne.s32.totalorder %s45, %s46
    %p57 = scmp.eq.s32.totalorder %s23, 0
    %p58 = por %p56, %p57
    %p59 = scmp.ne.s32.totalorder %s45, %s46
    %p60 = scmp.eq.s32.totalorder %s24, 7
    %p61 = por %p59, %p60
    %p63 = scmp.ne.s32.totalorder %s46, %s62
    %p64 = scmp.eq.s32.totalorder %s24, 0
    %p65 = por %p63, %p64
    %s66 = ssub.s32 %s25, %s37
    %s67 = ssub.s32 %s26, %s33
    %s68 = sor.u32 %s66, %s67
    %p69 = scmp.eq.s32.totalorder %s68, 0
    %s71 = sadd.s32 %s70, 1
    %s72 = scalar_select %p69, %s70, %s71
    %p75 = pneg %p69
    %p76 = scmp.eq.s32.totalorder %s18, 7
    %p77 = por %p75, %p76
    %p78 = scmp.ne.s32.totalorder %s70, %s73
    %p79 = scmp.eq.s32.totalorder %s18, 0
    %p80 = por %p78, %p79
    %p81 = scmp.ne.s32.totalorder %s70, %s73
    %p82 = scmp.eq.s32.totalorder %s23, 7
    %p83 = por %p81, %p82
    %p84 = scmp.ne.s32.totalorder %s73, %s74
    %p85 = scmp.eq.s32.totalorder %s23, 0
    %p86 = por %p84, %p85
    %p87 = scmp.ne.s32.totalorder %s73, %s74
    %p88 = scmp.eq.s32.totalorder %s24, 7
    %p89 = por %p87, %p88
    %p91 = scmp.ne.s32.totalorder %s74, %s90
    %p92 = scmp.eq.s32.totalorder %s24, 0
    %p93 = por %p91, %p92
    %s94 = ssub.s32 %s25, %s37
    %s95 = ssub.s32 %s26, %s33
    %s96 = sor.u32 %s94, %s95
    %p97 = scmp.eq.s32.totalorder %s96, 0
    %s99 = sadd.s32 %s98, 1
    %s100 = scalar_select %p97, %s98, %s99
    %p103 = pneg %p97
    %p104 = scmp.eq.s32.totalorder %s18, 7
    %p105 = por %p103, %p104
    %p106 = scmp.ne.s32.totalorder %s98, %s101
    %p107 = scmp.eq.s32.totalorder %s18, 0
    %p108 = por %p106, %p107
    %p109 = scmp.ne.s32.totalorder %s98, %s101
    %p110 = scmp.eq.s32.totalorder %s23, 7
    %p111 = por %p109, %p110
    %p112 = scmp.ne.s32.totalorder %s101, %s102
    %p113 = scmp.eq.s32.totalorder %s23, 0
    %p114 = por %p112, %p113
    %p115 = scmp.ne.s32.totalorder %s101, %s102
    %p116 = scmp.eq.s32.totalorder %s24, 7
    %p117 = por %p115, %p116
    %p119 = scmp.ne.s32.totalorder %s102, %s118
    %p120 = scmp.eq.s32.totalorder %s24, 0
    %p121 = por %p119, %p120
    %s122 = ssub.s32 %s25, %s37
    %s123 = ssub.s32 %s26, %s33
    %s124 = sor.u32 %s122, %s123
    %p125 = scmp.eq.s32.totalorder %s124, 0
    %s127 = sadd.s32 %s126, 1
    %s128 = scalar_select %p125, %s126, %s127
    %p131 = pneg %p125
    %p132 = scmp.eq.s32.totalorder %s18, 7
    %p133 = por %p131, %p132
    %p134 = scmp.ne.s32.totalorder %s126, %s129
    %p135 = scmp.eq.s32.totalorder %s18, 0
    %p136 = por %p134, %p135
    %p137 = scmp.ne.s32.totalorder %s126, %s129
    %p138 = scmp.eq.s32.totalorder %s23, 7
    %p139 = por %p137, %p138
    %p140 = scmp.ne.s32.totalorder %s129, %s130
    %p141 = scmp.eq.s32.totalorder %s23, 0
    %p142 = por %p140, %p141
    %p143 = scmp.ne.s32.totalorder %s129, %s130
    %p144 = scmp.eq.s32.totalorder %s24, 7
    %p145 = por %p143, %p144
    %p147 = scmp.ne.s32.totalorder %s130, %s146
    %p148 = scmp.eq.s32.totalorder %s24, 0
    %p149 = por %p147, %p148
    %p150 = scmp.le.s32.totalorder 1, %s18
    %p151 = scmp.lt.s32.totalorder %s18, 9
    %p152 = pnand %p150, %p151
    %p153 = pneg %p152
    // Predicated region
    $region9: #{decoder_blocks_forward.15} parent=5 // pred_check
      _
    $region10: #{decoder_blocks_forward.15} parent=5 // pred_check_branch
      %155 = sbr.rel (%p152) target = $region12
    $region11: #{decoder_blocks_forward.15} parent=5 // pred_region
      %s156 = ssub.s32 %s18, 1
    $region12: #{decoder_blocks_forward.15} parent=5 // pred_fallthru
      _
    %p157 = scmp.lt.s32.totalorder %s18, 8
    // Predicated region
    $region13: #{decoder_blocks_forward.15} parent=5 // pred_check
      %p158 = pneg %p157
    $region14: #{decoder_blocks_forward.15} parent=5 // pred_check_branch
      %160 = sbr.rel (%p158) target = $region16
    $region15: #{decoder_blocks_forward.15} parent=5 // pred_region
      // Predicated region
      $region17: #{decoder_blocks_forward.15} parent=15 // pred_check
        %p161 = pneg %p52
      $region18: #{decoder_blocks_forward.15} parent=15 // pred_check_branch
        %163 = sbr.rel (%p161) target = $region20
      $region19: #{decoder_blocks_forward.15} parent=15 // pred_region
        %p164 = scmp.lt.s32.totalorder %s25, 1
        %s165 = scalar_select %p164, %s25, 1
        %p166 = scmp.lt.s32.totalorder %s26, 3
        %s167 = scalar_select %p166, %s26, 3
        %s168 = smul.addr %s165, 4
        %s169 = sadd.s32 %s167, %s168
        %s170 = smul.addr %s169, 8
        %s171 = scalar_lea.vmem %s2, %s170
      $region20: #{decoder_blocks_forward.15} parent=15 // pred_fallthru
        _
      // Predicated region
      $region21: #{decoder_blocks_forward.15} parent=15 // pred_check
        %p172 = pneg %p80
      $region22: #{decoder_blocks_forward.15} parent=15 // pred_check_branch
        %174 = sbr.rel (%p172) target = $region24
      $region23: #{decoder_blocks_forward.15} parent=15 // pred_region
        %p175 = scmp.lt.s32.totalorder %s25, 1
        %s176 = scalar_select %p175, %s25, 1
        %p177 = scmp.lt.s32.totalorder %s26, 3
        %s178 = scalar_select %p177, %s26, 3
        %s179 = smul.addr %s176, 4
        %s180 = sadd.s32 %s178, %s179
        %s181 = smul.addr %s180, 8
        %s182 = scalar_lea.vmem %s3, %s181
      $region24: #{decoder_blocks_forward.15} parent=15 // pred_fallthru
        _
      // Predicated region
      $region25: #{decoder_blocks_forward.15} parent=15 // pred_check
        %p183 = pneg %p108
      $region26: #{decoder_blocks_forward.15} parent=15 // pred_check_branch
        %185 = sbr.rel (%p183) target = $region28
      $region27: #{decoder_blocks_forward.15} parent=15 // pred_region
        %p186 = scmp.lt.s32.totalorder %s25, 1
        %s187 = scalar_select %p186, %s25, 1
        %p188 = scmp.lt.s32.totalorder %s26, 3
        %s189 = scalar_select %p188, %s26, 3
        %s190 = smul.addr %s187, 4
        %s191 = sadd.s32 %s189, %s190
        %s192 = smul.addr %s191, 8
        %s193 = scalar_lea.vmem %s4, %s192
      $region28: #{decoder_blocks_forward.15} parent=15 // pred_fallthru
        _
    $region16: #{decoder_blocks_forward.15} parent=5 // pred_fallthru
      _
    %p194 = scmp.le.s32.totalorder 1, %s18
    %p195 = scmp.lt.s32.totalorder %s18, 9
    %p196 = pnand %p194, %p195
    %p197 = pneg %p196
    // Predicated region
    $region29: #{decoder_blocks_forward.15} parent=5 // pred_check
      _
    $region30: #{decoder_blocks_forward.15} parent=5 // pred_check_branch
      %199 = sbr.rel (%p196) target = $region32
    $region31: #{decoder_blocks_forward.15} parent=5 // pred_region
      %s200 = ssub.s32 %s18, 1
      %p201 = scmp.lt.s32.totalorder %s27, 1
      %s202 = scalar_select %p201, %s27, 1
      %p203 = scmp.lt.s32.totalorder %s28, 3
      %s204 = scalar_select %p203, %s28, 3
      %s205 = smul.addr %s202, 4
      %s206 = sadd.s32 %s204, %s205
      %s207 = smul.addr %s206, 8
      %s208 = scalar_lea.vmem %s2, %s207
      %p209 = pneg %p58
      %p210 = pneg %p55
      %p211 = scmp.lt.s32.totalorder %s27, 1
      %s212 = scalar_select %p211, %s27, 1
      %p213 = scmp.lt.s32.totalorder %s28, 3
      %s214 = scalar_select %p213, %s28, 3
      %s215 = smul.addr %s212, 4
      %s216 = sadd.s32 %s214, %s215
      %s217 = smul.addr %s216, 8
      %s218 = scalar_lea.vmem %s3, %s217
      %p219 = pneg %p86
      %p220 = pneg %p83
      %p221 = scmp.lt.s32.totalorder %s27, 1
      %s222 = scalar_select %p221, %s27, 1
      %p223 = scmp.lt.s32.totalorder %s28, 3
      %s224 = scalar_select %p223, %s28, 3
      %s225 = smul.addr %s222, 4
      %s226 = sadd.s32 %s224, %s225
      %s227 = smul.addr %s226, 8
      %s228 = scalar_lea.vmem %s4, %s227
      %p229 = pneg %p114
      %p230 = pneg %p111
      %p231 = pneg %p142
      %p232 = pneg %p139
      %p233 = scmp.lt.s32.totalorder %s27, 1
      %s234 = scalar_select %p233, %s27, 1
      %p235 = scmp.lt.s32.totalorder %s28, 3
      %s236 = scalar_select %p235, %s28, 3
      %s237 = smul.addr %s234, 4
      %s238 = sadd.s32 %s236, %s237
      %s239 = smul.addr %s238, 8
      %s240 = scalar_lea.vmem %s5, %s239
      %p241 = scmp.lt.s32.totalorder %s27, 1
      %s242 = scalar_select %p241, %s27, 1
      %p243 = scmp.lt.s32.totalorder %s28, 3
      %s244 = scalar_select %p243, %s28, 3
      %s245 = smul.addr %s242, 4
      %s246 = sadd.s32 %s244, %s245
      %s247 = smul.addr %s246, 8
      %s248 = scalar_lea.vmem %s2, %s247
      %p249 = scmp.lt.s32.totalorder %s27, 1
      %s250 = scalar_select %p249, %s27, 1
      %p251 = scmp.lt.s32.totalorder %s28, 3
      %s252 = scalar_select %p251, %s28, 3
      %s253 = smul.addr %s250, 4
      %s254 = sadd.s32 %s252, %s253
      %s255 = smul.addr %s254, 8
      %s256 = scalar_lea.vmem %s3, %s255
      %p257 = scmp.lt.s32.totalorder %s27, 1
      %s258 = scalar_select %p257, %s27, 1
      %p259 = scmp.lt.s32.totalorder %s28, 3
      %s260 = scalar_select %p259, %s28, 3
      %s261 = smul.addr %s258, 4
      %s262 = sadd.s32 %s260, %s261
      %s263 = smul.addr %s262, 8
      %s264 = scalar_lea.vmem %s4, %s263
      %p265 = scmp.lt.s32.totalorder %s27, 1
      %s266 = scalar_select %p265, %s27, 1
      %p267 = scmp.lt.s32.totalorder %s28, 3
      %s268 = scalar_select %p267, %s28, 3
      %s269 = smul.addr %s266, 4
      %s270 = sadd.s32 %s268, %s269
      %s271 = smul.addr %s270, 8
      %s272 = scalar_lea.vmem %s5, %s271
      %s273 = sld [smem:[#allocation3 + %s27]]
      %s274 = sld [smem:[#allocation4]]
      %p275 = scmp.gt.s32.totalorder %s274, 0
      %s276 = scalar_select %p275, -1e+09, -inf
      %v277 = vld [vmem:[%s248] sm:$0xff]
      %v278 = vmul.f32 %v277, 0.35355338
      %v279 = vld [vmem:[%s256] sm:$0xff]
      %v280 = vld [vmem:[%s264] sm:$0xff]
      %vm281 = vcmask 64512
      %v283 = vsel %vm281, %v278, 0
      %v286 = vsel %vm281, %v279, 0
      %288 = vmatprep.subr.mxu0 0.0
      %289 = vmatpush1.xpose.msra.mxu0 %v286
      %290 = vmatprep.subr.mxu0 0.0
      %291 = vmatpush1.xpose.msra.mxu0 0.0
      %292 = vmatprep.subr.mxu0 0.0
      %293 = vmatpush1.xpose.msra.mxu0 0.0
      %294 = vmatprep.subr.mxu0 0.0
      %295 = vmatpush1.xpose.msra.mxu0 0.0
      %296 = vmatprep.subr.mxu0 0.0
      %297 = vmatpush1.xpose.msra.mxu0 0.0
      %298 = vmatprep.subr.mxu0 0.0
      %299 = vmatpush1.xpose.msra.mxu0 0.0
      %300 = vmatprep.subr.mxu0 0.0
      %301 = vmatpush1.xpose.msra.mxu0 0.0
      %302 = vmatprep.subr.mxu0 0.0
      %303 = vmatpush1.xpose.msra.mxu0 0.0
      %304 = vmatprep.subr.mxu0 0.0
      %305 = vmatpush1.xpose.msra.mxu0 0.0
      %306 = vmatprep.subr.mxu0 0.0
      %307 = vmatpush1.xpose.msra.mxu0 0.0
      %308 = vmatprep.subr.mxu0 0.0
      %309 = vmatpush1.xpose.msra.mxu0 0.0
      %310 = vmatprep.subr.mxu0 0.0
      %311 = vmatpush1.xpose.msra.mxu0 0.0
      %312 = vmatprep.subr.mxu0 0.0
      %313 = vmatpush1.xpose.msra.mxu0 0.0
      %314 = vmatprep.subr.mxu0 0.0
      %315 = vmatpush1.xpose.msra.mxu0 0.0
      %316 = vmatprep.subr.mxu0 0.0
      %317 = vmatpush1.xpose.msra.mxu0 0.0
      %318 = vmatprep.subr.mxu0 0.0
      %319 = vmatpush1.xpose.msra.mxu0 0.0
      %320 = vmatprep.subr.mxu0 0.0
      %321 = vmatpush1.xpose.msra.mxu0 0.0
      %322 = vmatprep.subr.mxu0 0.0
      %323 = vmatpush1.xpose.msra.mxu0 0.0
      %324 = vmatprep.subr.mxu0 0.0
      %325 = vmatpush1.xpose.msra.mxu0 0.0
      %326 = vmatprep.subr.mxu0 0.0
      %327 = vmatpush1.xpose.msra.mxu0 0.0
      %328 = vmatprep.subr.mxu0 0.0
      %329 = vmatpush1.xpose.msra.mxu0 0.0
      %330 = vmatprep.subr.mxu0 0.0
      %331 = vmatpush1.xpose.msra.mxu0 0.0
      %332 = vmatprep.subr.mxu0 0.0
      %333 = vmatpush1.xpose.msra.mxu0 0.0
      %334 = vmatprep.subr.mxu0 0.0
      %335 = vmatpush1.xpose.msra.mxu0 0.0
      %336 = vmatprep.subr.mxu0 0.0
      %337 = vmatpush1.xpose.msra.mxu0 0.0
      %338 = vmatprep.subr.mxu0 0.0
      %339 = vmatpush1.xpose.msra.mxu0 0.0
      %340 = vmatprep.subr.mxu0 0.0
      %341 = vmatpush1.xpose.msra.mxu0 0.0
      %342 = vmatprep.subr.mxu0 0.0
      %343 = vmatpush1.xpose.msra.mxu0 0.0
      %344 = vmatprep.subr.mxu0 0.0
      %345 = vmatpush1.xpose.msra.mxu0 0.0
      %346 = vmatprep.subr.mxu0 0.0
      %347 = vmatpush1.xpose.msra.mxu0 0.0
      %348 = vmatprep.subr.mxu0 0.0
      %349 = vmatpush1.xpose.msra.mxu0 0.0
      %350 = vmatprep.subr.mxu0 0.0
      %351 = vmatpush1.xpose.msra.mxu0 0.0
      %352 = vmatprep.mubr.f32.mxu0 0.0
      %353 = vmatmul.mubr.f32.gmra.mrb[0].mxu0 %v283
      %v354 = vpop.f32.mrb[0].mxu0
      %v355 = vadd.f32 0.0, %v354
      %v356 = vpop.f32.mrb[0].mxu0
      %357 = vdwg.mxu0
      %v358 = vlaneseq
      %v359 = vand.u32 %v358, 127
      %v360 = vstv %s273
      %vm361 = vcmp.ge.s32.totalorder %v359, %v360
      %v362 = vlaneseq
      %v363 = vshrl.u32 %v362, 7
      %vm364 = vcmp.gt.s32.totalorder %v359, %v363
      %vm365 = vmor %vm361, %vm364
      %v366 = vstv %s276
      %v367 = vsel %vm365, %v366, %v355
      %v368 = vsel %vm281, %v367, -inf
      %369 = vmax.xlane.f32.xlu0 %v368
      %v370 = vpop.xlane.xlu0 %369
      %v371 = vsub.f32 %v367, %v370
      %v372 = vmul.f32 %v371, 1.442695
      %v373 = vpow.pop %v372
      %v374 = vsel %vm281, %v373, 0.0
      %375 = vadd.xlane.f32.xlu0 %v374
      %v376 = vpop.xlane.xlu0 %375
      %v378 = vsel %vm281, %v373, 0
      %380 = vmatprep.subr.mxu0 0.0
      %381 = vmatpush1.msra.mxu0 %v280
      %382 = vmatprep.subr.mxu0 0.0
      %383 = vmatpush1.msra.mxu0 0.0
      %384 = vmatprep.subr.mxu0 0.0
      %385 = vmatpush1.msra.mxu0 0.0
      %386 = vmatprep.subr.mxu0 0.0
      %387 = vmatpush1.msra.mxu0 0.0
      %388 = vmatprep.subr.mxu0 0.0
      %389 = vmatpush1.msra.mxu0 0.0
      %390 = vmatprep.subr.mxu0 0.0
      %391 = vmatpush1.msra.mxu0 0.0
      %392 = vmatprep.subr.mxu0 0.0
      %393 = vmatpush1.msra.mxu0 0.0
      %394 = vmatprep.subr.mxu0 0.0
      %395 = vmatpush1.msra.mxu0 0.0
      %396 = vmatprep.subr.mxu0 0.0
      %397 = vmatpush1.msra.mxu0 0.0
      %398 = vmatprep.subr.mxu0 0.0
      %399 = vmatpush1.msra.mxu0 0.0
      %400 = vmatprep.subr.mxu0 0.0
      %401 = vmatpush1.msra.mxu0 0.0
      %402 = vmatprep.subr.mxu0 0.0
      %403 = vmatpush1.msra.mxu0 0.0
      %404 = vmatprep.subr.mxu0 0.0
      %405 = vmatpush1.msra.mxu0 0.0
      %406 = vmatprep.subr.mxu0 0.0
      %407 = vmatpush1.msra.mxu0 0.0
      %408 = vmatprep.subr.mxu0 0.0
      %409 = vmatpush1.msra.mxu0 0.0
      %410 = vmatprep.subr.mxu0 0.0
      %411 = vmatpush1.msra.mxu0 0.0
      %412 = vmatprep.subr.mxu0 0.0
      %413 = vmatpush1.msra.mxu0 0.0
      %414 = vmatprep.subr.mxu0 0.0
      %415 = vmatpush1.msra.mxu0 0.0
      %416 = vmatprep.subr.mxu0 0.0
      %417 = vmatpush1.msra.mxu0 0.0
      %418 = vmatprep.subr.mxu0 0.0
      %419 = vmatpush1.msra.mxu0 0.0
      %420 = vmatprep.subr.mxu0 0.0
      %421 = vmatpush1.msra.mxu0 0.0
      %422 = vmatprep.subr.mxu0 0.0
      %423 = vmatpush1.msra.mxu0 0.0
      %424 = vmatprep.subr.mxu0 0.0
      %425 = vmatpush1.msra.mxu0 0.0
      %426 = vmatprep.subr.mxu0 0.0
      %427 = vmatpush1.msra.mxu0 0.0
      %428 = vmatprep.subr.mxu0 0.0
      %429 = vmatpush1.msra.mxu0 0.0
      %430 = vmatprep.subr.mxu0 0.0
      %431 = vmatpush1.msra.mxu0 0.0
      %432 = vmatprep.subr.mxu0 0.0
      %433 = vmatpush1.msra.mxu0 0.0
      %434 = vmatprep.subr.mxu0 0.0
      %435 = vmatpush1.msra.mxu0 0.0
      %436 = vmatprep.subr.mxu0 0.0
      %437 = vmatpush1.msra.mxu0 0.0
      %438 = vmatprep.subr.mxu0 0.0
      %439 = vmatpush1.msra.mxu0 0.0
      %440 = vmatprep.subr.mxu0 0.0
      %441 = vmatpush1.msra.mxu0 0.0
      %442 = vmatprep.subr.mxu0 0.0
      %443 = vmatpush1.msra.mxu0 0.0
      %444 = vmatprep.mubr.f32.mxu0 0.0
      %445 = vmatmul.mubr.f32.gmra.mrb[0].mxu0 %v378
      %v446 = vpop.f32.mrb[0].mxu0
      %v447 = vadd.f32 0.0, %v446
      %v448 = vpop.f32.mrb[0].mxu0
      %449 = vdwg.mxu0
      %v450 = vrcp.pop %v376
      %v451 = vmul.f32 1.0, %v450
      %v452 = vmul.f32 %v447, %v451
      %453 = vst.msk [vmem:[%s272] sm:$0xff] %vm281, %v452
      %p454 = scmp.lt.s32.totalorder %s27, 1
      %s455 = scalar_select %p454, %s27, 1
      %p456 = scmp.lt.s32.totalorder %s28, 3
      %s457 = scalar_select %p456, %s28, 3
      %s458 = smul.addr %s455, 4
      %s459 = sadd.s32 %s457, %s458
      %s460 = smul.addr %s459, 8
      %s461 = scalar_lea.vmem %s5, %s460
      // Predicated region
      $region33: #{decoder_blocks_forward.15} parent=31 // pred_check
        %p462 = pneg %p139
      $region34: #{decoder_blocks_forward.15} parent=31 // pred_check_branch
        %464 = sbr.rel (%p462) target = $region36
      $region35: #{decoder_blocks_forward.15} parent=31 // pred_region
        _
      $region36: #{decoder_blocks_forward.15} parent=31 // pred_fallthru
        _
    $region32: #{decoder_blocks_forward.15} parent=5 // pred_fallthru
      _
    %p465 = scmp.le.s32.totalorder 2, %s18
    // Predicated region
    $region37: #{decoder_blocks_forward.15} parent=5 // pred_check
      %p466 = pneg %p465
    $region38: #{decoder_blocks_forward.15} parent=5 // pred_check_branch
      %468 = sbr.rel (%p466) target = $region40
    $region39: #{decoder_blocks_forward.15} parent=5 // pred_region
      %s469 = ssub.s32 %s18, 2
      // Predicated region
      $region41: #{decoder_blocks_forward.15} parent=39 // pred_check
        %p470 = pneg %p145
      $region42: #{decoder_blocks_forward.15} parent=39 // pred_check_branch
        %472 = sbr.rel (%p470) target = $region44
      $region43: #{decoder_blocks_forward.15} parent=39 // pred_region
        %p473 = scmp.lt.s32.totalorder %s29, 1
        %s474 = scalar_select %p473, %s29, 1
        %p475 = scmp.lt.s32.totalorder %s30, 3
        %s476 = scalar_select %p475, %s30, 3
        %s477 = smul.addr %s474, 4
        %s478 = sadd.s32 %s476, %s477
        %s479 = smul.addr %s478, 8
        %s480 = scalar_lea.vmem %s5, %s479
      $region44: #{decoder_blocks_forward.15} parent=39 // pred_fallthru
        _
    $region40: #{decoder_blocks_forward.15} parent=5 // pred_fallthru
      _
  $region6: #{decoder_blocks_forward.15} parent=0 // loop_footer
    %s22 = sadd.s32 1, %s18
  $region7: #{decoder_blocks_forward.15} parent=0 // loop_footer_branch
    %17 = sbr.rel target = $region3
  $region8: #{decoder_blocks_forward.15} parent=0 // loop_exit
    _

// kernel: decoder_blocks_forward.16
$region0: #{decoder_blocks_forward.16}
  #allocation0 [shape = 'u32[]', space=smem, size = 0x4, offset = 0x4, fixed_abs, tag = 'smem constant byte address 0x4 - core index']
  #allocation1 [shape = 'u32[144,128]{1,0:T(1,128)}', space=vmem, size = 0x12000, scoped, tag = 'internal scratch']
  #allocation2 [shape = 's32[1]{0}', space=sflag, size = 0x4, scoped, tag = 'scoped memory for decoder_blocks_forward.16']
  #allocation3 [shape = 'u8[512]{0}', space=smem, size = 0x200, scoped, tag = 'prefetched SMEM operand 0']
  %s0 = inlined_call_operand.vmem [shape: s32[2], index: 0, kind: input, shape index: {}]
  %s1 = inlined_call_operand.vmem [shape: f32[2,8,32], index: 1, kind: input, shape index: {}]
  %s2 = inlined_call_operand.vmem [shape: f32[32,32], index: 2, kind: input, shape index: {}]
  %s3 = inlined_call_operand.vmem [shape: f32[1,32], index: 3, kind: input, shape index: {}]
  %s4 = inlined_call_operand.vmem [shape: f32[2,8,32], index: 4, kind: input, shape index: {}]
  %s5 = inlined_call_operand.vmem [shape: f32[1,32], index: 5, kind: input, shape index: {}]
  %s6 = inlined_call_operand.vmem [shape: f32[1,32], index: 6, kind: input, shape index: {}]
  %s7 = inlined_call_operand.vmem [shape: f32[32,32], index: 7, kind: input, shape index: {}]
  %s8 = inlined_call_operand.vmem [shape: f32[2,8,32], index: 8, kind: output, shape index: {0}]
  %s9 = inlined_call_operand.vmem [shape: f32[2,8,32], index: 9, kind: output, shape index: {1}]
  %10 = xla_tuple %s8, %s9
  %s11 = sld [smem:[#allocation0]]
  $region69: #{decoder_blocks_forward.16} parent=0
    _
  %s13 = ssub.s32 1, %s11
  %s14 = scalar_select 0, %s13, %s11
  %s15 = sshll.u32 %s0, 4
  %s16 = int_to_ptr.vmem [resolvable:$true] %s15
  %18 = dma.vmem_to_smem %s16, 16, [#allocation3], [#allocation2]
  %19 = dma.done [#allocation2], 16
  %20 = sfence
  loop: start=0, step=1, limit=4
  $region2: #{decoder_blocks_forward.16} parent=0 // loop_pre_header
    _
  $region3: #{decoder_blocks_forward.16} parent=0 // loop_header
    %s22 = sphi 0, %s26
    %p23 = scmp.ge.s32.totalorder %s22, 4
    %s32 = sphi 0, %s34
    %s35 = sphi 0, %s32
    %s36 = sphi 0, %s35
    %s52 = sphi 0, %s36
    %s56 = sphi 0, %s56
    %s58 = sphi 0, %s56
    %s59 = sphi 0, %s58
    %s73 = sphi 0, %s59
    %s77 = sphi 0, %s77
    %s79 = sphi 0, %s77
    %s80 = sphi 0, %s79
    %s94 = sphi 0, %s80
    %s100 = sphi 0, %s102
    %s103 = sphi 0, %s100
    %s104 = sphi 0, %s103
    %s120 = sphi 0, %s104
    %s124 = sphi 0, %s124
    %s126 = sphi 0, %s124
    %s127 = sphi 0, %s126
    %s141 = sphi 0, %s127
    %s145 = sphi 0, %s145
    %s147 = sphi 0, %s145
    %s148 = sphi 0, %s147
    %s162 = sphi 0, %s148
    %s166 = sphi 0, %s166
    %s168 = sphi 0, %s166
    %s169 = sphi 0, %s168
    %s183 = sphi 0, %s169
    %s189 = sphi 0, %s191
    %s192 = sphi 0, %s189
    %s193 = sphi 0, %s192
    %s209 = sphi 0, %s193
    %s215 = sphi 0, %s217
    %s218 = sphi 0, %s215
    %s219 = sphi 0, %s218
    %s235 = sphi 0, %s219
  $region4: #{decoder_blocks_forward.16} parent=0 // loop_header_branch
    %25 = sbr.rel (%p23) target = $region8
  $region5: #{decoder_blocks_forward.16} parent=0 // loop_body
    %s27 = ssub.s32 %s22, 1
    %s28 = ssub.s32 %s22, 2
    %s29 = sadd.s32 %s22, 1
    %s30 = ssub.s32 %s22, %s29
    %p31 = scmp.eq.s32.totalorder %s30, 0
    %s33 = sadd.s32 %s32, 1
    %s34 = scalar_select %p31, %s32, %s33
    %p37 = pneg %p31
    %p38 = scmp.eq.s32.totalorder %s22, 1
    %p39 = por %p37, %p38
    %p40 = scmp.ne.s32.totalorder %s32, %s35
    %p41 = scmp.eq.s32.totalorder %s22, 0
    %p42 = por %p40, %p41
    %p43 = scmp.ne.s32.totalorder %s32, %s35
    %p44 = scmp.eq.s32.totalorder %s27, 1
    %p45 = por %p43, %p44
    %p46 = scmp.ne.s32.totalorder %s35, %s36
    %p47 = scmp.eq.s32.totalorder %s27, 0
    %p48 = por %p46, %p47
    %p49 = scmp.ne.s32.totalorder %s35, %s36
    %p50 = scmp.eq.s32.totalorder %s28, 1
    %p51 = por %p49, %p50
    %p53 = scmp.ne.s32.totalorder %s36, %s52
    %p54 = scmp.eq.s32.totalorder %s28, 0
    %p55 = por %p53, %p54
    %s57 = sadd.s32 %s56, 1
    %p60 = scmp.eq.s32.totalorder %s22, 1
    %p61 = scmp.ne.s32.totalorder %s56, %s58
    %p62 = scmp.eq.s32.totalorder %s22, 0
    %p63 = por %p61, %p62
    %p64 = scmp.ne.s32.totalorder %s56, %s58
    %p65 = scmp.eq.s32.totalorder %s27, 1
    %p66 = por %p64, %p65
    %p67 = scmp.ne.s32.totalorder %s58, %s59
    %p68 = scmp.eq.s32.totalorder %s27, 0
    %p69 = por %p67, %p68
    %p70 = scmp.ne.s32.totalorder %s58, %s59
    %p71 = scmp.eq.s32.totalorder %s28, 1
    %p72 = por %p70, %p71
    %p74 = scmp.ne.s32.totalorder %s59, %s73
    %p75 = scmp.eq.s32.totalorder %s28, 0
    %p76 = por %p74, %p75
    %s78 = sadd.s32 %s77, 1
    %p81 = scmp.eq.s32.totalorder %s22, 1
    %p82 = scmp.ne.s32.totalorder %s77, %s79
    %p83 = scmp.eq.s32.totalorder %s22, 0
    %p84 = por %p82, %p83
    %p85 = scmp.ne.s32.totalorder %s77, %s79
    %p86 = scmp.eq.s32.totalorder %s27, 1
    %p87 = por %p85, %p86
    %p88 = scmp.ne.s32.totalorder %s79, %s80
    %p89 = scmp.eq.s32.totalorder %s27, 0
    %p90 = por %p88, %p89
    %p91 = scmp.ne.s32.totalorder %s79, %s80
    %p92 = scmp.eq.s32.totalorder %s28, 1
    %p93 = por %p91, %p92
    %p95 = scmp.ne.s32.totalorder %s80, %s94
    %p96 = scmp.eq.s32.totalorder %s28, 0
    %p97 = por %p95, %p96
    %s98 = ssub.s32 %s22, %s29
    %p99 = scmp.eq.s32.totalorder %s98, 0
    %s101 = sadd.s32 %s100, 1
    %s102 = scalar_select %p99, %s100, %s101
    %p105 = pneg %p99
    %p106 = scmp.eq.s32.totalorder %s22, 1
    %p107 = por %p105, %p106
    %p108 = scmp.ne.s32.totalorder %s100, %s103
    %p109 = scmp.eq.s32.totalorder %s22, 0
    %p110 = por %p108, %p109
    %p111 = scmp.ne.s32.totalorder %s100, %s103
    %p112 = scmp.eq.s32.totalorder %s27, 1
    %p113 = por %p111, %p112
    %p114 = scmp.ne.s32.totalorder %s103, %s104
    %p115 = scmp.eq.s32.totalorder %s27, 0
    %p116 = por %p114, %p115
    %p117 = scmp.ne.s32.totalorder %s103, %s104
    %p118 = scmp.eq.s32.totalorder %s28, 1
    %p119 = por %p117, %p118
    %p121 = scmp.ne.s32.totalorder %s104, %s120
    %p122 = scmp.eq.s32.totalorder %s28, 0
    %p123 = por %p121, %p122
    %s125 = sadd.s32 %s124, 1
    %p128 = scmp.eq.s32.totalorder %s22, 1
    %p129 = scmp.ne.s32.totalorder %s124, %s126
    %p130 = scmp.eq.s32.totalorder %s22, 0
    %p131 = por %p129, %p130
    %p132 = scmp.ne.s32.totalorder %s124, %s126
    %p133 = scmp.eq.s32.totalorder %s27, 1
    %p134 = por %p132, %p133
    %p135 = scmp.ne.s32.totalorder %s126, %s127
    %p136 = scmp.eq.s32.totalorder %s27, 0
    %p137 = por %p135, %p136
    %p138 = scmp.ne.s32.totalorder %s126, %s127
    %p139 = scmp.eq.s32.totalorder %s28, 1
    %p140 = por %p138, %p139
    %p142 = scmp.ne.s32.totalorder %s127, %s141
    %p143 = scmp.eq.s32.totalorder %s28, 0
    %p144 = por %p142, %p143
    %s146 = sadd.s32 %s145, 1
    %p149 = scmp.eq.s32.totalorder %s22, 1
    %p150 = scmp.ne.s32.totalorder %s145, %s147
    %p151 = scmp.eq.s32.totalorder %s22, 0
    %p152 = por %p150, %p151
    %p153 = scmp.ne.s32.totalorder %s145, %s147
    %p154 = scmp.eq.s32.totalorder %s27, 1
    %p155 = por %p153, %p154
    %p156 = scmp.ne.s32.totalorder %s147, %s148
    %p157 = scmp.eq.s32.totalorder %s27, 0
    %p158 = por %p156, %p157
    %p159 = scmp.ne.s32.totalorder %s147, %s148
    %p160 = scmp.eq.s32.totalorder %s28, 1
    %p161 = por %p159, %p160
    %p163 = scmp.ne.s32.totalorder %s148, %s162
    %p164 = scmp.eq.s32.totalorder %s28, 0
    %p165 = por %p163, %p164
    %s167 = sadd.s32 %s166, 1
    %p170 = scmp.eq.s32.totalorder %s22, 1
    %p171 = scmp.ne.s32.totalorder %s166, %s168
    %p172 = scmp.eq.s32.totalorder %s22, 0
    %p173 = por %p171, %p172
    %p174 = scmp.ne.s32.totalorder %s166, %s168
    %p175 = scmp.eq.s32.totalorder %s27, 1
    %p176 = por %p174, %p175
    %p177 = scmp.ne.s32.totalorder %s168, %s169
    %p178 = scmp.eq.s32.totalorder %s27, 0
    %p179 = por %p177, %p178
    %p180 = scmp.ne.s32.totalorder %s168, %s169
    %p181 = scmp.eq.s32.totalorder %s28, 1
    %p182 = por %p180, %p181
    %p184 = scmp.ne.s32.totalorder %s169, %s183
    %p185 = scmp.eq.s32.totalorder %s28, 0
    %p186 = por %p184, %p185
    %s187 = ssub.s32 %s22, %s29
    %p188 = scmp.eq.s32.totalorder %s187, 0
    %s190 = sadd.s32 %s189, 1
    %s191 = scalar_select %p188, %s189, %s190
    %p194 = pneg %p188
    %p195 = scmp.eq.s32.totalorder %s22, 1
    %p196 = por %p194, %p195
    %p197 = scmp.ne.s32.totalorder %s189, %s192
    %p198 = scmp.eq.s32.totalorder %s22, 0
    %p199 = por %p197, %p198
    %p200 = scmp.ne.s32.totalorder %s189, %s192
    %p201 = scmp.eq.s32.totalorder %s27, 1
    %p202 = por %p200, %p201
    %p203 = scmp.ne.s32.totalorder %s192, %s193
    %p204 = scmp.eq.s32.totalorder %s27, 0
    %p205 = por %p203, %p204
    %p206 = scmp.ne.s32.totalorder %s192, %s193
    %p207 = scmp.eq.s32.totalorder %s28, 1
    %p208 = por %p206, %p207
    %p210 = scmp.ne.s32.totalorder %s193, %s209
    %p211 = scmp.eq.s32.totalorder %s28, 0
    %p212 = por %p210, %p211
    %s213 = ssub.s32 %s22, %s29
    %p214 = scmp.eq.s32.totalorder %s213, 0
    %s216 = sadd.s32 %s215, 1
    %s217 = scalar_select %p214, %s215, %s216
    %p220 = pneg %p214
    %p221 = scmp.eq.s32.totalorder %s22, 1
    %p222 = por %p220, %p221
    %p223 = scmp.ne.s32.totalorder %s215, %s218
    %p224 = scmp.eq.s32.totalorder %s22, 0
    %p225 = por %p223, %p224
    %p226 = scmp.ne.s32.totalorder %s215, %s218
    %p227 = scmp.eq.s32.totalorder %s27, 1
    %p228 = por %p226, %p227
    %p229 = scmp.ne.s32.totalorder %s218, %s219
    %p230 = scmp.eq.s32.totalorder %s27, 0
    %p231 = por %p229, %p230
    %p232 = scmp.ne.s32.totalorder %s218, %s219
    %p233 = scmp.eq.s32.totalorder %s28, 1
    %p234 = por %p232, %p233
    %p236 = scmp.ne.s32.totalorder %s219, %s235
    %p237 = scmp.eq.s32.totalorder %s28, 0
    %p238 = por %p236, %p237
    %p239 = scmp.le.s32.totalorder 1, %s22
    %p240 = scmp.lt.s32.totalorder %s22, 3
    %p241 = pnand %p239, %p240
    %p242 = pneg %p241
    // Predicated region
    $region9: #{decoder_blocks_forward.16} parent=5 // pred_check
      _
    $region10: #{decoder_blocks_forward.16} parent=5 // pred_check_branch
      %244 = sbr.rel (%p241) target = $region12
    $region11: #{decoder_blocks_forward.16} parent=5 // pred_region
      %s245 = ssub.s32 %s22, 1
      // Predicated region
      $region13: #{decoder_blocks_forward.16} parent=11 // pred_check
        %p246 = pneg %p69
      $region14: #{decoder_blocks_forward.16} parent=11 // pred_check_branch
        %248 = sbr.rel (%p246) target = $region16
      $region15: #{decoder_blocks_forward.16} parent=11 // pred_region
        _
      $region16: #{decoder_blocks_forward.16} parent=11 // pred_fallthru
        _
      // Predicated region
      $region17: #{decoder_blocks_forward.16} parent=11 // pred_check
        %p249 = pneg %p90
      $region18: #{decoder_blocks_forward.16} parent=11 // pred_check_branch
        %251 = sbr.rel (%p249) target = $region20
      $region19: #{decoder_blocks_forward.16} parent=11 // pred_region
        _
      $region20: #{decoder_blocks_forward.16} parent=11 // pred_fallthru
        _
      // Predicated region
      $region21: #{decoder_blocks_forward.16} parent=11 // pred_check
        %p252 = pneg %p137
      $region22: #{decoder_blocks_forward.16} parent=11 // pred_check_branch
        %254 = sbr.rel (%p252) target = $region24
      $region23: #{decoder_blocks_forward.16} parent=11 // pred_region
        _
      $region24: #{decoder_blocks_forward.16} parent=11 // pred_fallthru
        _
      // Predicated region
      $region25: #{decoder_blocks_forward.16} parent=11 // pred_check
        %p255 = pneg %p158
      $region26: #{decoder_blocks_forward.16} parent=11 // pred_check_branch
        %257 = sbr.rel (%p255) target = $region28
      $region27: #{decoder_blocks_forward.16} parent=11 // pred_region
        _
      $region28: #{decoder_blocks_forward.16} parent=11 // pred_fallthru
        _
      // Predicated region
      $region29: #{decoder_blocks_forward.16} parent=11 // pred_check
        %p258 = pneg %p179
      $region30: #{decoder_blocks_forward.16} parent=11 // pred_check_branch
        %260 = sbr.rel (%p258) target = $region32
      $region31: #{decoder_blocks_forward.16} parent=11 // pred_region
        _
      $region32: #{decoder_blocks_forward.16} parent=11 // pred_fallthru
        _
    $region12: #{decoder_blocks_forward.16} parent=5 // pred_fallthru
      _
    %p261 = scmp.lt.s32.totalorder %s22, 2
    // Predicated region
    $region33: #{decoder_blocks_forward.16} parent=5 // pred_check
      %p262 = pneg %p261
    $region34: #{decoder_blocks_forward.16} parent=5 // pred_check_branch
      %264 = sbr.rel (%p262) target = $region36
    $region35: #{decoder_blocks_forward.16} parent=5 // pred_region
      // Predicated region
      $region37: #{decoder_blocks_forward.16} parent=35 // pred_check
        %p265 = pneg %p42
      $region38: #{decoder_blocks_forward.16} parent=35 // pred_check_branch
        %267 = sbr.rel (%p265) target = $region40
      $region39: #{decoder_blocks_forward.16} parent=35 // pred_region
        %p268 = scmp.lt.s32.totalorder %s22, 1
        %s269 = scalar_select %p268, %s22, 1
        %s270 = smul.addr %s269, 8
        %s271 = scalar_lea.vmem %s1, %s270
      $region40: #{decoder_blocks_forward.16} parent=35 // pred_fallthru
        _
      // Predicated region
      $region41: #{decoder_blocks_forward.16} parent=35 // pred_check
        %p272 = pneg %p110
      $region42: #{decoder_blocks_forward.16} parent=35 // pred_check_branch
        %274 = sbr.rel (%p272) target = $region44
      $region43: #{decoder_blocks_forward.16} parent=35 // pred_region
        %p275 = scmp.lt.s32.totalorder %s22, 1
        %s276 = scalar_select %p275, %s22, 1
        %s277 = smul.addr %s276, 8
        %s278 = scalar_lea.vmem %s4, %s277
      $region44: #{decoder_blocks_forward.16} parent=35 // pred_fallthru
        _
    $region36: #{decoder_blocks_forward.16} parent=5 // pred_fallthru
      _
    %p279 = scmp.le.s32.totalorder 1, %s22
    %p280 = scmp.lt.s32.totalorder %s22, 3
    %p281 = pnand %p279, %p280
    %p282 = pneg %p281
    // Predicated region
    $region45: #{decoder_blocks_forward.16} parent=5 // pred_check
      _
    $region46: #{decoder_blocks_forward.16} parent=5 // pred_check_branch
      %284 = sbr.rel (%p281) target = $region48
    $region47: #{decoder_blocks_forward.16} parent=5 // pred_region
      %s285 = ssub.s32 %s22, 1
      %p286 = scmp.lt.s32.totalorder %s27, 1
      %s287 = scalar_select %p286, %s27, 1
      %s288 = smul.addr %s287, 8
      %s289 = scalar_lea.vmem %s1, %s288
      %p290 = pneg %p48
      %p291 = pneg %p45
      %p292 = pneg %p69
      %p293 = pneg %p66
      %p294 = pneg %p90
      %p295 = pneg %p87
      %p296 = scmp.lt.s32.totalorder %s27, 1
      %s297 = scalar_select %p296, %s27, 1
      %s298 = smul.addr %s297, 8
      %s299 = scalar_lea.vmem %s4, %s298
      %p300 = pneg %p116
      %p301 = pneg %p113
      %p302 = pneg %p137
      %p303 = pneg %p134
      %p304 = pneg %p158
      %p305 = pneg %p155
      %p306 = pneg %p179
      %p307 = pneg %p176
      %p308 = pneg %p205
      %p309 = pneg %p202
      %p310 = scmp.lt.s32.totalorder %s27, 1
      %s311 = scalar_select %p310, %s27, 1
      %s312 = smul.addr %s311, 8
      %s313 = scalar_lea.vmem %s8, %s312
      %p314 = pneg %p231
      %p315 = pneg %p228
      %p316 = scmp.lt.s32.totalorder %s27, 1
      %s317 = scalar_select %p316, %s27, 1
      %s318 = smul.addr %s317, 8
      %s319 = scalar_lea.vmem %s9, %s318
      %p320 = scmp.lt.s32.totalorder %s27, 1
      %s321 = scalar_select %p320, %s27, 1
      %s322 = smul.addr %s321, 8
      %s323 = scalar_lea.vmem %s1, %s322
      %p324 = scmp.lt.s32.totalorder %s27, 1
      %s325 = scalar_select %p324, %s27, 1
      %s326 = smul.addr %s325, 8
      %s327 = scalar_lea.vmem %s4, %s326
      %p328 = scmp.lt.s32.totalorder %s27, 1
      %s329 = scalar_select %p328, %s27, 1
      %s330 = smul.addr %s329, 8
      %s331 = scalar_lea.vmem %s8, %s330
      %p332 = scmp.lt.s32.totalorder %s27, 1
      %s333 = scalar_select %p332, %s27, 1
      %s334 = smul.addr %s333, 8
      %s335 = scalar_lea.vmem %s9, %s334
      %v336 = vld [vmem:[%s323] sm:$0xff]
      %v337 = vld [vmem:[%s2] sm:$0xff]
      %v338 = vld [vmem:[%s2 + $0x8] sm:$0xff]
      %v339 = vld [vmem:[%s2 + $0x10] sm:$0xff]
      %v340 = vld [vmem:[%s2 + $0x18] sm:$0xff]
      %v341 = vld [vmem:[%s3] sm:$0x1]
      %v343 = vlaneseq
      %v344 = vshrl.u32 %v343, 7
      %v345 = vsub.s32 0, %v344
      %v346 = vrot.slane %v341, %v345
      %vm348 = vcmask 261120
      %v350 = vsel %vm348, %v336, 0
      %352 = vmatprep.subr.mxu0 0.0
      %353 = vmatpush1.msra.mxu0 %v337
      %354 = vmatprep.subr.mxu0 0.0
      %355 = vmatpush1.msra.mxu0 %v338
      %356 = vmatprep.subr.mxu0 0.0
      %357 = vmatpush1.msra.mxu0 %v339
      %358 = vmatprep.subr.mxu0 0.0
      %359 = vmatpush1.msra.mxu0 %v340
      %360 = vmatprep.subr.mxu0 0.0
      %361 = vmatpush1.msra.mxu0 0.0
      %362 = vmatprep.subr.mxu0 0.0
      %363 = vmatpush1.msra.mxu0 0.0
      %364 = vmatprep.subr.mxu0 0.0
      %365 = vmatpush1.msra.mxu0 0.0
      %366 = vmatprep.subr.mxu0 0.0
      %367 = vmatpush1.msra.mxu0 0.0
      %368 = vmatprep.subr.mxu0 0.0
      %369 = vmatpush1.msra.mxu0 0.0
      %370 = vmatprep.subr.mxu0 0.0
      %371 = vmatpush1.msra.mxu0 0.0
      %372 = vmatprep.subr.mxu0 0.0
      %373 = vmatpush1.msra.mxu0 0.0
      %374 = vmatprep.subr.mxu0 0.0
      %375 = vmatpush1.msra.mxu0 0.0
      %376 = vmatprep.subr.mxu0 0.0
      %377 = vmatpush1.msra.mxu0 0.0
      %378 = vmatprep.subr.mxu0 0.0
      %379 = vmatpush1.msra.mxu0 0.0
      %380 = vmatprep.subr.mxu0 0.0
      %381 = vmatpush1.msra.mxu0 0.0
      %382 = vmatprep.subr.mxu0 0.0
      %383 = vmatpush1.msra.mxu0 0.0
      %384 = vmatprep.subr.mxu0 0.0
      %385 = vmatpush1.msra.mxu0 0.0
      %386 = vmatprep.subr.mxu0 0.0
      %387 = vmatpush1.msra.mxu0 0.0
      %388 = vmatprep.subr.mxu0 0.0
      %389 = vmatpush1.msra.mxu0 0.0
      %390 = vmatprep.subr.mxu0 0.0
      %391 = vmatpush1.msra.mxu0 0.0
      %392 = vmatprep.subr.mxu0 0.0
      %393 = vmatpush1.msra.mxu0 0.0
      %394 = vmatprep.subr.mxu0 0.0
      %395 = vmatpush1.msra.mxu0 0.0
      %396 = vmatprep.subr.mxu0 0.0
      %397 = vmatpush1.msra.mxu0 0.0
      %398 = vmatprep.subr.mxu0 0.0
      %399 = vmatpush1.msra.mxu0 0.0
      %400 = vmatprep.subr.mxu0 0.0
      %401 = vmatpush1.msra.mxu0 0.0
      %402 = vmatprep.subr.mxu0 0.0
      %403 = vmatpush1.msra.mxu0 0.0
      %404 = vmatprep.subr.mxu0 0.0
      %405 = vmatpush1.msra.mxu0 0.0
      %406 = vmatprep.subr.mxu0 0.0
      %407 = vmatpush1.msra.mxu0 0.0
      %408 = vmatprep.subr.mxu0 0.0
      %409 = vmatpush1.msra.mxu0 0.0
      %410 = vmatprep.subr.mxu0 0.0
      %411 = vmatpush1.msra.mxu0 0.0
      %412 = vmatprep.subr.mxu0 0.0
      %413 = vmatpush1.msra.mxu0 0.0
      %414 = vmatprep.subr.mxu0 0.0
      %415 = vmatpush1.msra.mxu0 0.0
      %416 = vmatprep.mubr.f32.mxu0 0.0
      %417 = vmatmul.mubr.f32.gmra.mrb[0].mxu0 %v350
      %v418 = vpop.f32.mrb[0].mxu0
      %v419 = vadd.f32 %v346, %v418
      %v420 = vpop.f32.mrb[0].mxu0
      %421 = vdwg.mxu0
      %s422 = sld [smem:[#allocation3 + %s27]]
      %v423 = vlaneseq
      %v424 = vshrl.u32 %v423, 7
      %v425 = vstv %s422
      %vm426 = vcmp.lt.s32.totalorder %v424, %v425
      %v427 = vsel %vm426, %v419, 0.0
      %v428 = vld [vmem:[%s327] sm:$0xff]
      %v429 = vadd.f32 %v427, %v428
      %v430 = vld [vmem:[%s5] sm:$0x1]
      %v431 = vld [vmem:[%s6] sm:$0x1]
      %v432 = vsel %vm348, %v429, 0.0
      %433 = vadd.xlane.f32.xlu0 %v432
      %v434 = vpop.xlane.xlu0 %433
      %v435 = vrcp.pop 32.0
      %v436 = vmul.f32 %v434, %v435
      %v437 = vsub.f32 %v429, %v436
      %v438 = vmul.f32 %v437, %v437
      %v439 = vsel %vm348, %v438, 0.0
      %440 = vadd.xlane.f32.xlu0 %v439
      %v441 = vpop.xlane.xlu0 %440
      %v442 = vmul.f32 %v441, %v435
      %v443 = vadd.f32 %v442, 1e-05
      %v444 = vrsqrt.pop %v443
      %v445 = vmul.f32 %v437, %v444
      %v447 = vlaneseq
      %v448 = vshrl.u32 %v447, 7
      %v449 = vsub.s32 0, %v448
      %v450 = vrot.slane %v430, %v449
      %v452 = vmul.f32 %v445, %v450
      %v454 = vlaneseq
      %v455 = vshrl.u32 %v454, 7
      %v456 = vsub.s32 0, %v455
      %v457 = vrot.slane %v431, %v456
      %v459 = vadd.f32 %v452, %v457
      %460 = vst.msk [vmem:[%s331] sm:$0xff] %vm348, %v459
      %v461 = vld [vmem:[%s7] sm:$0xff]
      %v462 = vld [vmem:[%s7 + $0x8] sm:$0xff]
      %v463 = vld [vmem:[%s7 + $0x10] sm:$0xff]
      %v464 = vld [vmem:[%s7 + $0x18] sm:$0xff]
      %v466 = vsel %vm348, %v459, 0
      %468 = vmatprep.subr.mxu0 0.0
      %469 = vmatpush1.msra.mxu0 %v461
      %470 = vmatprep.subr.mxu0 0.0
      %471 = vmatpush1.msra.mxu0 %v462
      %472 = vmatprep.subr.mxu0 0.0
      %473 = vmatpush1.msra.mxu0 %v463
      %474 = vmatprep.subr.mxu0 0.0
      %475 = vmatpush1.msra.mxu0 %v464
      %476 = vmatprep.subr.mxu0 0.0
      %477 = vmatpush1.msra.mxu0 0.0
      %478 = vmatprep.subr.mxu0 0.0
      %479 = vmatpush1.msra.mxu0 0.0
      %480 = vmatprep.subr.mxu0 0.0
      %481 = vmatpush1.msra.mxu0 0.0
      %482 = vmatprep.subr.mxu0 0.0
      %483 = vmatpush1.msra.mxu0 0.0
      %484 = vmatprep.subr.mxu0 0.0
      %485 = vmatpush1.msra.mxu0 0.0
      %486 = vmatprep.subr.mxu0 0.0
      %487 = vmatpush1.msra.mxu0 0.0
      %488 = vmatprep.subr.mxu0 0.0
      %489 = vmatpush1.msra.mxu0 0.0
      %490 = vmatprep.subr.mxu0 0.0
      %491 = vmatpush1.msra.mxu0 0.0
      %492 = vmatprep.subr.mxu0 0.0
      %493 = vmatpush1.msra.mxu0 0.0
      %494 = vmatprep.subr.mxu0 0.0
      %495 = vmatpush1.msra.mxu0 0.0
      %496 = vmatprep.subr.mxu0 0.0
      %497 = vmatpush1.msra.mxu0 0.0
      %498 = vmatprep.subr.mxu0 0.0
      %499 = vmatpush1.msra.mxu0 0.0
      %500 = vmatprep.subr.mxu0 0.0
      %501 = vmatpush1.msra.mxu0 0.0
      %502 = vmatprep.subr.mxu0 0.0
      %503 = vmatpush1.msra.mxu0 0.0
      %504 = vmatprep.subr.mxu0 0.0
      %505 = vmatpush1.msra.mxu0 0.0
      %506 = vmatprep.subr.mxu0 0.0
      %507 = vmatpush1.msra.mxu0 0.0
      %508 = vmatprep.subr.mxu0 0.0
      %509 = vmatpush1.msra.mxu0 0.0
      %510 = vmatprep.subr.mxu0 0.0
      %511 = vmatpush1.msra.mxu0 0.0
      %512 = vmatprep.subr.mxu0 0.0
      %513 = vmatpush1.msra.mxu0 0.0
      %514 = vmatprep.subr.mxu0 0.0
      %515 = vmatpush1.msra.mxu0 0.0
      %516 = vmatprep.subr.mxu0 0.0
      %517 = vmatpush1.msra.mxu0 0.0
      %518 = vmatprep.subr.mxu0 0.0
      %519 = vmatpush1.msra.mxu0 0.0
      %520 = vmatprep.subr.mxu0 0.0
      %521 = vmatpush1.msra.mxu0 0.0
      %522 = vmatprep.subr.mxu0 0.0
      %523 = vmatpush1.msra.mxu0 0.0
      %524 = vmatprep.subr.mxu0 0.0
      %525 = vmatpush1.msra.mxu0 0.0
      %526 = vmatprep.subr.mxu0 0.0
      %527 = vmatpush1.msra.mxu0 0.0
      %528 = vmatprep.subr.mxu0 0.0
      %529 = vmatpush1.msra.mxu0 0.0
      %530 = vmatprep.subr.mxu0 0.0
      %531 = vmatpush1.msra.mxu0 0.0
      %532 = vmatprep.mubr.f32.mxu0 0.0
      %533 = vmatmul.mubr.f32.gmra.mrb[0].mxu0 %v466
      %v534 = vpop.f32.mrb[0].mxu0
      %v535 = vadd.f32 0.0, %v534
      %v536 = vpop.f32.mrb[0].mxu0
      %537 = vdwg.mxu0
      %538 = vst.msk [vmem:[%s335] sm:$0xff] %vm348, %v535
      %p539 = scmp.lt.s32.totalorder %s27, 1
      %s540 = scalar_select %p539, %s27, 1
      %s541 = smul.addr %s540, 8
      %s542 = scalar_lea.vmem %s8, %s541
      %p543 = scmp.lt.s32.totalorder %s27, 1
      %s544 = scalar_select %p543, %s27, 1
      %s545 = smul.addr %s544, 8
      %s546 = scalar_lea.vmem %s9, %s545
      // Predicated region
      $region49: #{decoder_blocks_forward.16} parent=47 // pred_check
        %p547 = pneg %p202
      $region50: #{decoder_blocks_forward.16} parent=47 // pred_check_branch
        %549 = sbr.rel (%p547) target = $region52
      $region51: #{decoder_blocks_forward.16} parent=47 // pred_region
        _
      $region52: #{decoder_blocks_forward.16} parent=47 // pred_fallthru
        _
      // Predicated region
      $region53: #{decoder_blocks_forward.16} parent=47 // pred_check
        %p550 = pneg %p228
      $region54: #{decoder_blocks_forward.16} parent=47 // pred_check_branch
        %552 = sbr.rel (%p550) target = $region56
      $region55: #{decoder_blocks_forward.16} parent=47 // pred_region
        _
      $region56: #{decoder_blocks_forward.16} parent=47 // pred_fallthru
        _
    $region48: #{decoder_blocks_forward.16} parent=5 // pred_fallthru
      _
    %p553 = scmp.le.s32.totalorder 2, %s22
    // Predicated region
    $region57: #{decoder_blocks_forward.16} parent=5 // pred_check
      %p554 = pneg %p553
    $region58: #{decoder_blocks_forward.16} parent=5 // pred_check_branch
      %556 = sbr.rel (%p554) target = $region60
    $region59: #{decoder_blocks_forward.16} parent=5 // pred_region
      %s557 = ssub.s32 %s22, 2
      // Predicated region
      $region61: #{decoder_blocks_forward.16} parent=59 // pred_check
        %p558 = pneg %p208
      $region62: #{decoder_blocks_forward.16} parent=59 // pred_check_branch
        %560 = sbr.rel (%p558) target = $region64
      $region63: #{decoder_blocks_forward.16} parent=59 // pred_region
        %p561 = scmp.lt.s32.totalorder %s28, 1
        %s562 = scalar_select %p561, %s28, 1
        %s563 = smul.addr %s562, 8
        %s564 = scalar_lea.vmem %s8, %s563
      $region64: #{decoder_blocks_forward.16} parent=59 // pred_fallthru
        _
      // Predicated region
      $region65: #{decoder_blocks_forward.16} parent=59 // pred_check
        %p565 = pneg %p234
      $region66: #{decoder_blocks_forward.16} parent=59 // pred_check_branch
        %567 = sbr.rel (%p565) target = $region68
      $region67: #{decoder_blocks_forward.16} parent=59 // pred_region
        %p568 = scmp.lt.s32.totalorder %s28, 1
        %s569 = scalar_select %p568, %s28, 1
        %s570 = smul.addr %s569, 8
        %s571 = scalar_lea.vmem %s9, %s570
      $region68: #{decoder_blocks_forward.16} parent=59 // pred_fallthru
        _
    $region60: #{decoder_blocks_forward.16} parent=5 // pred_fallthru
      _
  $region6: #{decoder_blocks_forward.16} parent=0 // loop_footer
    %s26 = sadd.s32 1, %s22
  $region7: #{decoder_blocks_forward.16} parent=0 // loop_footer_branch
    %21 = sbr.rel target = $region3
  $region8: #{decoder_blocks_forward.16} parent=0 // loop_exit
    _

// kernel: decoder_blocks_forward.12
$region0: #{decoder_blocks_forward.12}
  #allocation0 [shape = 'u32[]', space=smem, size = 0x4, offset = 0x4, fixed_abs, tag = 'smem constant byte address 0x4 - core index']
  #allocation1 [shape = 'u32[144,128]{1,0:T(1,128)}', space=vmem, size = 0x12000, scoped, tag = 'internal scratch']
  #allocation2 [shape = 'f32[16,64]{1,0:T(8,128)}', space=vmem, size = 0x2000, scoped, tag = 'scratch operand']
  %s0 = inlined_call_operand.vmem [shape: f32[16,32], index: 0, kind: input, shape index: {}]
  %s1 = inlined_call_operand.vmem [shape: f32[32,64], index: 1, kind: input, shape index: {}]
  %s2 = inlined_call_operand.vmem [shape: f32[16,32], index: 2, kind: output, shape index: {0}]
  %s3 = inlined_call_operand.vmem [shape: f32[16,32], index: 3, kind: output, shape index: {1}]
  %4 = xla_tuple %s2, %s3
  %s5 = sld [smem:[#allocation0]]
  $region34: #{decoder_blocks_forward.12} parent=0
    _
  %s7 = ssub.s32 1, %s5
  %s8 = scalar_select 0, %s7, %s5
  // Predicated region
  $region2: #{decoder_blocks_forward.12} parent=0 // pred_check
    _
  $region3: #{decoder_blocks_forward.12} parent=0 // pred_check_branch
    %10 = sbr.rel (0) target = $region5
  $region4: #{decoder_blocks_forward.12} parent=0 // pred_region
    _
  $region5: #{decoder_blocks_forward.12} parent=0 // pred_fallthru
    _
  // Predicated region
  $region6: #{decoder_blocks_forward.12} parent=0 // pred_check
    _
  $region7: #{decoder_blocks_forward.12} parent=0 // pred_check_branch
    %12 = sbr.rel (0) target = $region9
  $region8: #{decoder_blocks_forward.12} parent=0 // pred_region
    _
  $region9: #{decoder_blocks_forward.12} parent=0 // pred_fallthru
    _
  %p13 = scmp.eq.s32.totalorder 0, 0
  // Predicated region
  $region10: #{decoder_blocks_forward.12} parent=0 // pred_check
    %p14 = pneg %p13
  $region11: #{decoder_blocks_forward.12} parent=0 // pred_check_branch
    %16 = sbr.rel (%p14) target = $region13
  $region12: #{decoder_blocks_forward.12} parent=0 // pred_region
    %vm17 = vcmask 523264
    %18 = vst.msk [vmem:[#allocation2] sm:$0xff] %vm17, 0.0
    %19 = vst.msk [vmem:[#allocation2 + $0x8] sm:$0xff] %vm17, 0.0
  $region13: #{decoder_blocks_forward.12} parent=0 // pred_fallthru
    _
  %v20 = vld [vmem:[#allocation2] sm:$0xff]
  %v21 = vld [vmem:[#allocation2 + $0x8] sm:$0xff]
  %v22 = vld [vmem:[%s0] sm:$0xff]
  %v23 = vld [vmem:[%s0 + $0x8] sm:$0xff]
  %v24 = vld [vmem:[%s1] sm:$0xff]
  %v25 = vld [vmem:[%s1 + $0x8] sm:$0xff]
  %v26 = vld [vmem:[%s1 + $0x10] sm:$0xff]
  %v27 = vld [vmem:[%s1 + $0x18] sm:$0xff]
  %vm28 = vcmask 261120
  %v30 = vsel %vm28, %v22, 0
  %v33 = vsel %vm28, %v23, 0
  %35 = vmatprep.subr.mxu0 0.0
  %36 = vmatpush1.msra.mxu0 %v24
  %37 = vmatprep.subr.mxu0 0.0
  %38 = vmatpush1.msra.mxu0 %v25
  %39 = vmatprep.subr.mxu0 0.0
  %40 = vmatpush1.msra.mxu0 %v26
  %41 = vmatprep.subr.mxu0 0.0
  %42 = vmatpush1.msra.mxu0 %v27
  %43 = vmatprep.subr.mxu0 0.0
  %44 = vmatpush1.msra.mxu0 0.0
  %45 = vmatprep.subr.mxu0 0.0
  %46 = vmatpush1.msra.mxu0 0.0
  %47 = vmatprep.subr.mxu0 0.0
  %48 = vmatpush1.msra.mxu0 0.0
  %49 = vmatprep.subr.mxu0 0.0
  %50 = vmatpush1.msra.mxu0 0.0
  %51 = vmatprep.subr.mxu0 0.0
  %52 = vmatpush1.msra.mxu0 0.0
  %53 = vmatprep.subr.mxu0 0.0
  %54 = vmatpush1.msra.mxu0 0.0
  %55 = vmatprep.subr.mxu0 0.0
  %56 = vmatpush1.msra.mxu0 0.0
  %57 = vmatprep.subr.mxu0 0.0
  %58 = vmatpush1.msra.mxu0 0.0
  %59 = vmatprep.subr.mxu0 0.0
  %60 = vmatpush1.msra.mxu0 0.0
  %61 = vmatprep.subr.mxu0 0.0
  %62 = vmatpush1.msra.mxu0 0.0
  %63 = vmatprep.subr.mxu0 0.0
  %64 = vmatpush1.msra.mxu0 0.0
  %65 = vmatprep.subr.mxu0 0.0
  %66 = vmatpush1.msra.mxu0 0.0
  %67 = vmatprep.subr.mxu0 0.0
  %68 = vmatpush1.msra.mxu0 0.0
  %69 = vmatprep.subr.mxu0 0.0
  %70 = vmatpush1.msra.mxu0 0.0
  %71 = vmatprep.subr.mxu0 0.0
  %72 = vmatpush1.msra.mxu0 0.0
  %73 = vmatprep.subr.mxu0 0.0
  %74 = vmatpush1.msra.mxu0 0.0
  %75 = vmatprep.subr.mxu0 0.0
  %76 = vmatpush1.msra.mxu0 0.0
  %77 = vmatprep.subr.mxu0 0.0
  %78 = vmatpush1.msra.mxu0 0.0
  %79 = vmatprep.subr.mxu0 0.0
  %80 = vmatpush1.msra.mxu0 0.0
  %81 = vmatprep.subr.mxu0 0.0
  %82 = vmatpush1.msra.mxu0 0.0
  %83 = vmatprep.subr.mxu0 0.0
  %84 = vmatpush1.msra.mxu0 0.0
  %85 = vmatprep.subr.mxu0 0.0
  %86 = vmatpush1.msra.mxu0 0.0
  %87 = vmatprep.subr.mxu0 0.0
  %88 = vmatpush1.msra.mxu0 0.0
  %89 = vmatprep.subr.mxu0 0.0
  %90 = vmatpush1.msra.mxu0 0.0
  %91 = vmatprep.subr.mxu0 0.0
  %92 = vmatpush1.msra.mxu0 0.0
  %93 = vmatprep.subr.mxu0 0.0
  %94 = vmatpush1.msra.mxu0 0.0
  %95 = vmatprep.subr.mxu0 0.0
  %96 = vmatpush1.msra.mxu0 0.0
  %97 = vmatprep.subr.mxu0 0.0
  %98 = vmatpush1.msra.mxu0 0.0
  %99 = vmatprep.mubr.f32.mxu0 0.0
  %100 = vmatmul.mubr.f32.gmra.mrb[0].mxu0 %v30
  %v101 = vpop.f32.mrb[0].mxu0
  %v102 = vadd.f32 0.0, %v101
  %v103 = vpop.f32.mrb[0].mxu0
  %104 = vmatprep.mubr.f32.mxu0 0.0
  %105 = vmatmul.mubr.f32.gmra.mrb[0].mxu0 %v33
  %v106 = vpop.f32.mrb[0].mxu0
  %v107 = vadd.f32 0.0, %v106
  %v108 = vpop.f32.mrb[0].mxu0
  %109 = vdwg.mxu0
  %v110 = vadd.f32 %v20, %v102
  %v111 = vadd.f32 %v21, %v107
  %vm112 = vcmask 523264
  %113 = vst.msk [vmem:[#allocation2] sm:$0xff] %vm112, %v110
  %114 = vst.msk [vmem:[#allocation2 + $0x8] sm:$0xff] %vm112, %v111
  // Predicated region
  $region14: #{decoder_blocks_forward.12} parent=0 // pred_check
    %p115 = pneg %p13
  $region15: #{decoder_blocks_forward.12} parent=0 // pred_check_branch
    %117 = sbr.rel (%p115) target = $region17
  $region16: #{decoder_blocks_forward.12} parent=0 // pred_region
    %v118 = vld [vmem:[#allocation2] sm:$0xff]
    %v119 = vld [vmem:[#allocation2 + $0x8] sm:$0xff]
    %120 = vst.msk [vmem:[%s2] sm:$0xff] %vm28, %v118
    %121 = vst.msk [vmem:[%s2 + $0x8] sm:$0xff] %vm28, %v119
    %124 = vrot.lane.b32.xlu0 %v118, 96
    %v125 = vpop.permute.xlu0 %124
    %126 = vrot.lane.b32.xlu0 %v119, 96
    %v127 = vpop.permute.xlu0 %126
    %130 = vst.msk [vmem:[%s3] sm:$0xff] %vm28, %v125
    %131 = vst.msk [vmem:[%s3 + $0x8] sm:$0xff] %vm28, %v127
  $region17: #{decoder_blocks_forward.12} parent=0 // pred_fallthru
    _
  // Predicated region
  $region18: #{decoder_blocks_forward.12} parent=0 // pred_check
    _
  $region19: #{decoder_blocks_forward.12} parent=0 // pred_check_branch
    %133 = sbr.rel (0) target = $region21
  $region20: #{decoder_blocks_forward.12} parent=0 // pred_region
    _
  $region21: #{decoder_blocks_forward.12} parent=0 // pred_fallthru
    _
  // Predicated region
  $region22: #{decoder_blocks_forward.12} parent=0 // pred_check
    _
  $region23: #{decoder_blocks_forward.12} parent=0 // pred_check_branch
    %135 = sbr.rel (0) target = $region25
  $region24: #{decoder_blocks_forward.12} parent=0 // pred_region
    _
  $region25: #{decoder_blocks_forward.12} parent=0 // pred_fallthru
    _
  // Predicated region
  $region26: #{decoder_blocks_forward.12} parent=0 // pred_check
    _
  $region27: #{decoder_blocks_forward.12} parent=0 // pred_check_branch
    %137 = sbr.rel (0) target = $region29
  $region28: #{decoder_blocks_forward.12} parent=0 // pred_region
    _
  $region29: #{decoder_blocks_forward.12} parent=0 // pred_fallthru
    _
  // Predicated region
  $region30: #{decoder_blocks_forward.12} parent=0 // pred_check
    _
  $region31: #{decoder_blocks_forward.12} parent=0 // pred_check_branch
    %139 = sbr.rel (0) target = $region33
  $region32: #{decoder_blocks_forward.12} parent=0 // pred_region
    _
  $region33: #{decoder_blocks_forward.12} parent=0 // pred_fallthru
    _

// kernel: decoder_blocks_forward.21
$region0: #{decoder_blocks_forward.21}
  #allocation0 [shape = 'u32[]', space=smem, size = 0x4, offset = 0x4, fixed_abs, tag = 'smem constant byte address 0x4 - core index']
  #allocation1 [shape = 'u32[144,128]{1,0:T(1,128)}', space=vmem, size = 0x12000, scoped, tag = 'internal scratch']
  #allocation2 [shape = 's32[1]{0}', space=sflag, size = 0x4, scoped, tag = 'scoped memory for decoder_blocks_forward.21']
  #allocation3 [shape = 'u8[512]{0}', space=smem, size = 0x200, scoped, tag = 'prefetched SMEM operand 0']
  #allocation4 [shape = 'u8[512]{0}', space=smem, size = 0x200, scoped, tag = 'prefetched SMEM operand 1']
  %s0 = inlined_call_operand.vmem [shape: s32[2], index: 0, kind: input, shape index: {}]
  %s1 = inlined_call_operand.vmem [shape: s32[2], index: 1, kind: input, shape index: {}]
  %s2 = inlined_call_operand.vmem [shape: f32[2,4,8,8], index: 2, kind: input, shape index: {}]
  %s3 = inlined_call_operand.vmem [shape: f32[2,4,8,8], index: 3, kind: input, shape index: {}]
  %s4 = inlined_call_operand.vmem [shape: f32[2,4,8,8], index: 4, kind: input, shape index: {}]
  %s5 = inlined_call_operand.vmem [shape: f32[2,8,32], index: 5, kind: input, shape index: {}]
  %s6 = inlined_call_operand.vmem [shape: f32[32,32], index: 6, kind: input, shape index: {}]
  %s7 = inlined_call_operand.vmem [shape: f32[1,32], index: 7, kind: input, shape index: {}]
  %s8 = inlined_call_operand.vmem [shape: f32[1,32], index: 8, kind: input, shape index: {}]
  %s9 = inlined_call_operand.vmem [shape: f32[1,32], index: 9, kind: input, shape index: {}]
  %s10 = inlined_call_operand.vmem [shape: f32[32,64], index: 10, kind: input, shape index: {}]
  %s11 = inlined_call_operand.vmem [shape: f32[1,64], index: 11, kind: input, shape index: {}]
  %s12 = inlined_call_operand.vmem [shape: f32[64,32], index: 12, kind: input, shape index: {}]
  %s13 = inlined_call_operand.vmem [shape: f32[1,32], index: 13, kind: input, shape index: {}]
  %s14 = inlined_call_operand.vmem [shape: f32[1,32], index: 14, kind: input, shape index: {}]
  %s15 = inlined_call_operand.vmem [shape: f32[1,32], index: 15, kind: input, shape index: {}]
  %s16 = inlined_call_operand.hbm [shape: f32[2,8,32], index: 16, kind: output, shape index: {}]
  %s17 = sld [smem:[#allocation0]]
  $region89: #{decoder_blocks_forward.21} parent=0
    _
  %s19 = ssub.s32 1, %s17
  %s20 = scalar_select 0, %s19, %s17
  %s21 = sshll.u32 %s0, 4
  %s22 = int_to_ptr.vmem [resolvable:$true] %s21
  %24 = dma.vmem_to_smem %s22, 16, [#allocation3], [#allocation2]
  %s25 = sshll.u32 %s1, 4
  %s26 = int_to_ptr.vmem [resolvable:$true] %s25
  %28 = dma.vmem_to_smem %s26, 16, [#allocation4], [#allocation2]
  %29 = dma.done [#allocation2], 32
  %30 = sfence
  $region1: #{decoder_blocks_forward.21} parent=0
    #allocation5 [shape = 'u8[8192]{0}', space=vmem, size = 0x2000, scoped, tag = 'output window, operand 0']
    #allocation6 [shape = 's32[2]{0}', space=sflag, size = 0x8, scoped, tag = 'scoped memory for decoder_blocks_forward.21']
    %31 = vsyncpa [#allocation6], 0
    %s32 = scalar_lea.sflag [#allocation6], 1
    %33 = vsyncpa %s32, 0
    loop: start=0, step=1, limit=4
    $region2: #{decoder_blocks_forward.21} parent=1 // loop_pre_header
      _
    $region3: #{decoder_blocks_forward.21} parent=1 // loop_header
      %s35 = sphi 0, %s39
      %p36 = scmp.ge.s32.totalorder %s35, 4
      %s45 = sphi 0, %s47
      %s48 = sphi 0, %s45
      %s49 = sphi 0, %s48
      %s65 = sphi 0, %s49
      %s71 = sphi 0, %s73
      %s74 = sphi 0, %s71
      %s75 = sphi 0, %s74
      %s91 = sphi 0, %s75
      %s97 = sphi 0, %s99
      %s100 = sphi 0, %s97
      %s101 = sphi 0, %s100
      %s117 = sphi 0, %s101
      %s123 = sphi 0, %s125
      %s126 = sphi 0, %s123
      %s127 = sphi 0, %s126
      %s143 = sphi 0, %s127
      %s147 = sphi 0, %s147
      %s149 = sphi 0, %s147
      %s150 = sphi 0, %s149
      %s164 = sphi 0, %s150
      %s168 = sphi 0, %s168
      %s170 = sphi 0, %s168
      %s171 = sphi 0, %s170
      %s185 = sphi 0, %s171
      %s189 = sphi 0, %s189
      %s191 = sphi 0, %s189
      %s192 = sphi 0, %s191
      %s206 = sphi 0, %s192
      %s210 = sphi 0, %s210
      %s212 = sphi 0, %s210
      %s213 = sphi 0, %s212
      %s227 = sphi 0, %s213
      %s231 = sphi 0, %s231
      %s233 = sphi 0, %s231
      %s234 = sphi 0, %s233
      %s248 = sphi 0, %s234
      %s252 = sphi 0, %s252
      %s254 = sphi 0, %s252
      %s255 = sphi 0, %s254
      %s269 = sphi 0, %s255
      %s273 = sphi 0, %s273
      %s275 = sphi 0, %s273
      %s276 = sphi 0, %s275
      %s290 = sphi 0, %s276
      %s294 = sphi 0, %s294
      %s296 = sphi 0, %s294
      %s297 = sphi 0, %s296
      %s311 = sphi 0, %s297
      %s315 = sphi 0, %s315
      %s317 = sphi 0, %s315
      %s318 = sphi 0, %s317
      %s332 = sphi 0, %s318
      %s336 = sphi 0, %s336
      %s338 = sphi 0, %s336
      %s339 = sphi 0, %s338
      %s353 = sphi 0, %s339
      %s359 = sphi 0, %s361
      %s362 = sphi 0, %s359
      %s363 = sphi 0, %s362
      %s379 = sphi 0, %s363
    $region4: #{decoder_blocks_forward.21} parent=1 // loop_header_branch
      %38 = sbr.rel (%p36) target = $region8
    $region5: #{decoder_blocks_forward.21} parent=1 // loop_body
      %s40 = ssub.s32 %s35, 1
      %s41 = ssub.s32 %s35, 2
      %s42 = sadd.s32 %s35, 1
      %s43 = ssub.s32 %s35, %s42
      %p44 = scmp.eq.s32.totalorder %s43, 0
      %s46 = sadd.s32 %s45, 1
      %s47 = scalar_select %p44, %s45, %s46
      %p50 = pneg %p44
      %p51 = scmp.eq.s32.totalorder %s35, 1
      %p52 = por %p50, %p51
      %p53 = scmp.ne.s32.totalorder %s45, %s48
      %p54 = scmp.eq.s32.totalorder %s35, 0
      %p55 = por %p53, %p54
      %p56 = scmp.ne.s32.totalorder %s45, %s48
      %p57 = scmp.eq.s32.totalorder %s40, 1
      %p58 = por %p56, %p57
      %p59 = scmp.ne.s32.totalorder %s48, %s49
      %p60 = scmp.eq.s32.totalorder %s40, 0
      %p61 = por %p59, %p60
      %p62 = scmp.ne.s32.totalorder %s48, %s49
      %p63 = scmp.eq.s32.totalorder %s41, 1
      %p64 = por %p62, %p63
      %p66 = scmp.ne.s32.totalorder %s49, %s65
      %p67 = scmp.eq.s32.totalorder %s41, 0
      %p68 = por %p66, %p67
      %s69 = ssub.s32 %s35, %s42
      %p70 = scmp.eq.s32.totalorder %s69, 0
      %s72 = sadd.s32 %s71, 1
      %s73 = scalar_select %p70, %s71, %s72
      %p76 = pneg %p70
      %p77 = scmp.eq.s32.totalorder %s35, 1
      %p78 = por %p76, %p77
      %p79 = scmp.ne.s32.totalorder %s71, %s74
      %p80 = scmp.eq.s32.totalorder %s35, 0
      %p81 = por %p79, %p80
      %p82 = scmp.ne.s32.totalorder %s71, %s74
      %p83 = scmp.eq.s32.totalorder %s40, 1
      %p84 = por %p82, %p83
      %p85 = scmp.ne.s32.totalorder %s74, %s75
      %p86 = scmp.eq.s32.totalorder %s40, 0
      %p87 = por %p85, %p86
      %p88 = scmp.ne.s32.totalorder %s74, %s75
      %p89 = scmp.eq.s32.totalorder %s41, 1
      %p90 = por %p88, %p89
      %p92 = scmp.ne.s32.totalorder %s75, %s91
      %p93 = scmp.eq.s32.totalorder %s41, 0
      %p94 = por %p92, %p93
      %s95 = ssub.s32 %s35, %s42
      %p96 = scmp.eq.s32.totalorder %s95, 0
      %s98 = sadd.s32 %s97, 1
      %s99 = scalar_select %p96, %s97, %s98
      %p102 = pneg %p96
      %p103 = scmp.eq.s32.totalorder %s35, 1
      %p104 = por %p102, %p103
      %p105 = scmp.ne.s32.totalorder %s97, %s100
      %p106 = scmp.eq.s32.totalorder %s35, 0
      %p107 = por %p105, %p106
      %p108 = scmp.ne.s32.totalorder %s97, %s100
      %p109 = scmp.eq.s32.totalorder %s40, 1
      %p110 = por %p108, %p109
      %p111 = scmp.ne.s32.totalorder %s100, %s101
      %p112 = scmp.eq.s32.totalorder %s40, 0
      %p113 = por %p111, %p112
      %p114 = scmp.ne.s32.totalorder %s100, %s101
      %p115 = scmp.eq.s32.totalorder %s41, 1
      %p116 = por %p114, %p115
      %p118 = scmp.ne.s32.totalorder %s101, %s117
      %p119 = scmp.eq.s32.totalorder %s41, 0
      %p120 = por %p118, %p119
      %s121 = ssub.s32 %s35, %s42
      %p122 = scmp.eq.s32.totalorder %s121, 0
      %s124 = sadd.s32 %s123, 1
      %s125 = scalar_select %p122, %s123, %s124
      %p128 = pneg %p122
      %p129 = scmp.eq.s32.totalorder %s35, 1
      %p130 = por %p128, %p129
      %p131 = scmp.ne.s32.totalorder %s123, %s126
      %p132 = scmp.eq.s32.totalorder %s35, 0
      %p133 = por %p131, %p132
      %p134 = scmp.ne.s32.totalorder %s123, %s126
      %p135 = scmp.eq.s32.totalorder %s40, 1
      %p136 = por %p134, %p135
      %p137 = scmp.ne.s32.totalorder %s126, %s127
      %p138 = scmp.eq.s32.totalorder %s40, 0
      %p139 = por %p137, %p138
      %p140 = scmp.ne.s32.totalorder %s126, %s127
      %p141 = scmp.eq.s32.totalorder %s41, 1
      %p142 = por %p140, %p141
      %p144 = scmp.ne.s32.totalorder %s127, %s143
      %p145 = scmp.eq.s32.totalorder %s41, 0
      %p146 = por %p144, %p145
      %s148 = sadd.s32 %s147, 1
      %p151 = scmp.eq.s32.totalorder %s35, 1
      %p152 = scmp.ne.s32.totalorder %s147, %s149
      %p153 = scmp.eq.s32.totalorder %s35, 0
      %p154 = por %p152, %p153
      %p155 = scmp.ne.s32.totalorder %s147, %s149
      %p156 = scmp.eq.s32.totalorder %s40, 1
      %p157 = por %p155, %p156
      %p158 = scmp.ne.s32.totalorder %s149, %s150
      %p159 = scmp.eq.s32.totalorder %s40, 0
      %p160 = por %p158, %p159
      %p161 = scmp.ne.s32.totalorder %s149, %s150
      %p162 = scmp.eq.s32.totalorder %s41, 1
      %p163 = por %p161, %p162
      %p165 = scmp.ne.s32.totalorder %s150, %s164
      %p166 = scmp.eq.s32.totalorder %s41, 0
      %p167 = por %p165, %p166
      %s169 = sadd.s32 %s168, 1
      %p172 = scmp.eq.s32.totalorder %s35, 1
      %p173 = scmp.ne.s32.totalorder %s168, %s170
      %p174 = scmp.eq.s32.totalorder %s35, 0
      %p175 = por %p173, %p174
      %p176 = scmp.ne.s32.totalorder %s168, %s170
      %p177 = scmp.eq.s32.totalorder %s40, 1
      %p178 = por %p176, %p177
      %p179 = scmp.ne.s32.totalorder %s170, %s171
      %p180 = scmp.eq.s32.totalorder %s40, 0
      %p181 = por %p179, %p180
      %p182 = scmp.ne.s32.totalorder %s170, %s171
      %p183 = scmp.eq.s32.totalorder %s41, 1
      %p184 = por %p182, %p183
      %p186 = scmp.ne.s32.totalorder %s171, %s185
      %p187 = scmp.eq.s32.totalorder %s41, 0
      %p188 = por %p186, %p187
      %s190 = sadd.s32 %s189, 1
      %p193 = scmp.eq.s32.totalorder %s35, 1
      %p194 = scmp.ne.s32.totalorder %s189, %s191
      %p195 = scmp.eq.s32.totalorder %s35, 0
      %p196 = por %p194, %p195
      %p197 = scmp.ne.s32.totalorder %s189, %s191
      %p198 = scmp.eq.s32.totalorder %s40, 1
      %p199 = por %p197, %p198
      %p200 = scmp.ne.s32.totalorder %s191, %s192
      %p201 = scmp.eq.s32.totalorder %s40, 0
      %p202 = por %p200, %p201
      %p203 = scmp.ne.s32.totalorder %s191, %s192
      %p204 = scmp.eq.s32.totalorder %s41, 1
      %p205 = por %p203, %p204
      %p207 = scmp.ne.s32.totalorder %s192, %s206
      %p208 = scmp.eq.s32.totalorder %s41, 0
      %p209 = por %p207, %p208
      %s211 = sadd.s32 %s210, 1
      %p214 = scmp.eq.s32.totalorder %s35, 1
      %p215 = scmp.ne.s32.totalorder %s210, %s212
      %p216 = scmp.eq.s32.totalorder %s35, 0
      %p217 = por %p215, %p216
      %p218 = scmp.ne.s32.totalorder %s210, %s212
      %p219 = scmp.eq.s32.totalorder %s40, 1
      %p220 = por %p218, %p219
      %p221 = scmp.ne.s32.totalorder %s212, %s213
      %p222 = scmp.eq.s32.totalorder %s40, 0
      %p223 = por %p221, %p222
      %p224 = scmp.ne.s32.totalorder %s212, %s213
      %p225 = scmp.eq.s32.totalorder %s41, 1
      %p226 = por %p224, %p225
      %p228 = scmp.ne.s32.totalorder %s213, %s227
      %p229 = scmp.eq.s32.totalorder %s41, 0
      %p230 = por %p228, %p229
      %s232 = sadd.s32 %s231, 1
      %p235 = scmp.eq.s32.totalorder %s35, 1
      %p236 = scmp.ne.s32.totalorder %s231, %s233
      %p237 = scmp.eq.s32.totalorder %s35, 0
      %p238 = por %p236, %p237
      %p239 = scmp.ne.s32.totalorder %s231, %s233
      %p240 = scmp.eq.s32.totalorder %s40, 1
      %p241 = por %p239, %p240
      %p242 = scmp.ne.s32.totalorder %s233, %s234
      %p243 = scmp.eq.s32.totalorder %s40, 0
      %p244 = por %p242, %p243
      %p245 = scmp.ne.s32.totalorder %s233, %s234
      %p246 = scmp.eq.s32.totalorder %s41, 1
      %p247 = por %p245, %p246
      %p249 = scmp.ne.s32.totalorder %s234, %s248
      %p250 = scmp.eq.s32.totalorder %s41, 0
      %p251 = por %p249, %p250
      %s253 = sadd.s32 %s252, 1
      %p256 = scmp.eq.s32.totalorder %s35, 1
      %p257 = scmp.ne.s32.totalorder %s252, %s254
      %p258 = scmp.eq.s32.totalorder %s35, 0
      %p259 = por %p257, %p258
      %p260 = scmp.ne.s32.totalorder %s252, %s254
      %p261 = scmp.eq.s32.totalorder %s40, 1
      %p262 = por %p260, %p261
      %p263 = scmp.ne.s32.totalorder %s254, %s255
      %p264 = scmp.eq.s32.totalorder %s40, 0
      %p265 = por %p263, %p264
      %p266 = scmp.ne.s32.totalorder %s254, %s255
      %p267 = scmp.eq.s32.totalorder %s41, 1
      %p268 = por %p266, %p267
      %p270 = scmp.ne.s32.totalorder %s255, %s269
      %p271 = scmp.eq.s32.totalorder %s41, 0
      %p272 = por %p270, %p271
      %s274 = sadd.s32 %s273, 1
      %p277 = scmp.eq.s32.totalorder %s35, 1
      %p278 = scmp.ne.s32.totalorder %s273, %s275
      %p279 = scmp.eq.s32.totalorder %s35, 0
      %p280 = por %p278, %p279
      %p281 = scmp.ne.s32.totalorder %s273, %s275
      %p282 = scmp.eq.s32.totalorder %s40, 1
      %p283 = por %p281, %p282
      %p284 = scmp.ne.s32.totalorder %s275, %s276
      %p285 = scmp.eq.s32.totalorder %s40, 0
      %p286 = por %p284, %p285
      %p287 = scmp.ne.s32.totalorder %s275, %s276
      %p288 = scmp.eq.s32.totalorder %s41, 1
      %p289 = por %p287, %p288
      %p291 = scmp.ne.s32.totalorder %s276, %s290
      %p292 = scmp.eq.s32.totalorder %s41, 0
      %p293 = por %p291, %p292
      %s295 = sadd.s32 %s294, 1
      %p298 = scmp.eq.s32.totalorder %s35, 1
      %p299 = scmp.ne.s32.totalorder %s294, %s296
      %p300 = scmp.eq.s32.totalorder %s35, 0
      %p301 = por %p299, %p300
      %p302 = scmp.ne.s32.totalorder %s294, %s296
      %p303 = scmp.eq.s32.totalorder %s40, 1
      %p304 = por %p302, %p303
      %p305 = scmp.ne.s32.totalorder %s296, %s297
      %p306 = scmp.eq.s32.totalorder %s40, 0
      %p307 = por %p305, %p306
      %p308 = scmp.ne.s32.totalorder %s296, %s297
      %p309 = scmp.eq.s32.totalorder %s41, 1
      %p310 = por %p308, %p309
      %p312 = scmp.ne.s32.totalorder %s297, %s311
      %p313 = scmp.eq.s32.totalorder %s41, 0
      %p314 = por %p312, %p313
      %s316 = sadd.s32 %s315, 1
      %p319 = scmp.eq.s32.totalorder %s35, 1
      %p320 = scmp.ne.s32.totalorder %s315, %s317
      %p321 = scmp.eq.s32.totalorder %s35, 0
      %p322 = por %p320, %p321
      %p323 = scmp.ne.s32.totalorder %s315, %s317
      %p324 = scmp.eq.s32.totalorder %s40, 1
      %p325 = por %p323, %p324
      %p326 = scmp.ne.s32.totalorder %s317, %s318
      %p327 = scmp.eq.s32.totalorder %s40, 0
      %p328 = por %p326, %p327
      %p329 = scmp.ne.s32.totalorder %s317, %s318
      %p330 = scmp.eq.s32.totalorder %s41, 1
      %p331 = por %p329, %p330
      %p333 = scmp.ne.s32.totalorder %s318, %s332
      %p334 = scmp.eq.s32.totalorder %s41, 0
      %p335 = por %p333, %p334
      %s337 = sadd.s32 %s336, 1
      %p340 = scmp.eq.s32.totalorder %s35, 1
      %p341 = scmp.ne.s32.totalorder %s336, %s338
      %p342 = scmp.eq.s32.totalorder %s35, 0
      %p343 = por %p341, %p342
      %p344 = scmp.ne.s32.totalorder %s336, %s338
      %p345 = scmp.eq.s32.totalorder %s40, 1
      %p346 = por %p344, %p345
      %p347 = scmp.ne.s32.totalorder %s338, %s339
      %p348 = scmp.eq.s32.totalorder %s40, 0
      %p349 = por %p347, %p348
      %p350 = scmp.ne.s32.totalorder %s338, %s339
      %p351 = scmp.eq.s32.totalorder %s41, 1
      %p352 = por %p350, %p351
      %p354 = scmp.ne.s32.totalorder %s339, %s353
      %p355 = scmp.eq.s32.totalorder %s41, 0
      %p356 = por %p354, %p355
      %s357 = ssub.s32 %s35, %s42
      %p358 = scmp.eq.s32.totalorder %s357, 0
      %s360 = sadd.s32 %s359, 1
      %s361 = scalar_select %p358, %s359, %s360
      %p364 = pneg %p358
      %p365 = scmp.eq.s32.totalorder %s35, 1
      %p366 = por %p364, %p365
      %p367 = scmp.ne.s32.totalorder %s359, %s362
      %p368 = scmp.eq.s32.totalorder %s35, 0
      %p369 = por %p367, %p368
      %p370 = scmp.ne.s32.totalorder %s359, %s362
      %p371 = scmp.eq.s32.totalorder %s40, 1
      %p372 = por %p370, %p371
      %p373 = scmp.ne.s32.totalorder %s362, %s363
      %p374 = scmp.eq.s32.totalorder %s40, 0
      %p375 = por %p373, %p374
      %p376 = scmp.ne.s32.totalorder %s362, %s363
      %p377 = scmp.eq.s32.totalorder %s41, 1
      %p378 = por %p376, %p377
      %p380 = scmp.ne.s32.totalorder %s363, %s379
      %p381 = scmp.eq.s32.totalorder %s41, 0
      %p382 = por %p380, %p381
      %p383 = scmp.le.s32.totalorder 1, %s35
      %p384 = scmp.lt.s32.totalorder %s35, 3
      %p385 = pnand %p383, %p384
      %p386 = pneg %p385
      // Predicated region
      $region9: #{decoder_blocks_forward.21} parent=5 // pred_check
        _
      $region10: #{decoder_blocks_forward.21} parent=5 // pred_check_branch
        %388 = sbr.rel (%p385) target = $region12
      $region11: #{decoder_blocks_forward.21} parent=5 // pred_region
        %s389 = ssub.s32 %s35, 1
        // Predicated region
        $region13: #{decoder_blocks_forward.21} parent=11 // pred_check
          %p390 = pneg %p160
        $region14: #{decoder_blocks_forward.21} parent=11 // pred_check_branch
          %392 = sbr.rel (%p390) target = $region16
        $region15: #{decoder_blocks_forward.21} parent=11 // pred_region
          _
        $region16: #{decoder_blocks_forward.21} parent=11 // pred_fallthru
          _
        // Predicated region
        $region17: #{decoder_blocks_forward.21} parent=11 // pred_check
          %p393 = pneg %p181
        $region18: #{decoder_blocks_forward.21} parent=11 // pred_check_branch
          %395 = sbr.rel (%p393) target = $region20
        $region19: #{decoder_blocks_forward.21} parent=11 // pred_region
          _
        $region20: #{decoder_blocks_forward.21} parent=11 // pred_fallthru
          _
        // Predicated region
        $region21: #{decoder_blocks_forward.21} parent=11 // pred_check
          %p396 = pneg %p202
        $region22: #{decoder_blocks_forward.21} parent=11 // pred_check_branch
          %398 = sbr.rel (%p396) target = $region24
        $region23: #{decoder_blocks_forward.21} parent=11 // pred_region
          _
        $region24: #{decoder_blocks_forward.21} parent=11 // pred_fallthru
          _
        // Predicated region
        $region25: #{decoder_blocks_forward.21} parent=11 // pred_check
          %p399 = pneg %p223
        $region26: #{decoder_blocks_forward.21} parent=11 // pred_check_branch
          %401 = sbr.rel (%p399) target = $region28
        $region27: #{decoder_blocks_forward.21} parent=11 // pred_region
          _
        $region28: #{decoder_blocks_forward.21} parent=11 // pred_fallthru
          _
        // Predicated region
        $region29: #{decoder_blocks_forward.21} parent=11 // pred_check
          %p402 = pneg %p244
        $region30: #{decoder_blocks_forward.21} parent=11 // pred_check_branch
          %404 = sbr.rel (%p402) target = $region32
        $region31: #{decoder_blocks_forward.21} parent=11 // pred_region
          _
        $region32: #{decoder_blocks_forward.21} parent=11 // pred_fallthru
          _
        // Predicated region
        $region33: #{decoder_blocks_forward.21} parent=11 // pred_check
          %p405 = pneg %p265
        $region34: #{decoder_blocks_forward.21} parent=11 // pred_check_branch
          %407 = sbr.rel (%p405) target = $region36
        $region35: #{decoder_blocks_forward.21} parent=11 // pred_region
          _
        $region36: #{decoder_blocks_forward.21} parent=11 // pred_fallthru
          _
        // Predicated region
        $region37: #{decoder_blocks_forward.21} parent=11 // pred_check
          %p408 = pneg %p286
        $region38: #{decoder_blocks_forward.21} parent=11 // pred_check_branch
          %410 = sbr.rel (%p408) target = $region40
        $region39: #{decoder_blocks_forward.21} parent=11 // pred_region
          _
        $region40: #{decoder_blocks_forward.21} parent=11 // pred_fallthru
          _
        // Predicated region
        $region41: #{decoder_blocks_forward.21} parent=11 // pred_check
          %p411 = pneg %p307
        $region42: #{decoder_blocks_forward.21} parent=11 // pred_check_branch
          %413 = sbr.rel (%p411) target = $region44
        $region43: #{decoder_blocks_forward.21} parent=11 // pred_region
          _
        $region44: #{decoder_blocks_forward.21} parent=11 // pred_fallthru
          _
        // Predicated region
        $region45: #{decoder_blocks_forward.21} parent=11 // pred_check
          %p414 = pneg %p328
        $region46: #{decoder_blocks_forward.21} parent=11 // pred_check_branch
          %416 = sbr.rel (%p414) target = $region48
        $region47: #{decoder_blocks_forward.21} parent=11 // pred_region
          _
        $region48: #{decoder_blocks_forward.21} parent=11 // pred_fallthru
          _
        // Predicated region
        $region49: #{decoder_blocks_forward.21} parent=11 // pred_check
          %p417 = pneg %p349
        $region50: #{decoder_blocks_forward.21} parent=11 // pred_check_branch
          %419 = sbr.rel (%p417) target = $region52
        $region51: #{decoder_blocks_forward.21} parent=11 // pred_region
          _
        $region52: #{decoder_blocks_forward.21} parent=11 // pred_fallthru
          _
      $region12: #{decoder_blocks_forward.21} parent=5 // pred_fallthru
        _
      %p420 = scmp.lt.s32.totalorder %s35, 2
      // Predicated region
      $region53: #{decoder_blocks_forward.21} parent=5 // pred_check
        %p421 = pneg %p420
      $region54: #{decoder_blocks_forward.21} parent=5 // pred_check_branch
        %423 = sbr.rel (%p421) target = $region56
      $region55: #{decoder_blocks_forward.21} parent=5 // pred_region
        // Predicated region
        $region57: #{decoder_blocks_forward.21} parent=55 // pred_check
          %p424 = pneg %p55
        $region58: #{decoder_blocks_forward.21} parent=55 // pred_check_branch
          %426 = sbr.rel (%p424) target = $region60
        $region59: #{decoder_blocks_forward.21} parent=55 // pred_region
          %p427 = scmp.lt.s32.totalorder %s35, 1
          %s428 = scalar_select %p427, %s35, 1
          %s429 = smul.addr %s428, 4
          %s430 = smul.addr %s429, 8
          %s431 = scalar_lea.vmem %s2, %s430
        $region60: #{decoder_blocks_forward.21} parent=55 // pred_fallthru
          _
        // Predicated region
        $region61: #{decoder_blocks_forward.21} parent=55 // pred_check
          %p432 = pneg %p81
        $region62: #{decoder_blocks_forward.21} parent=55 // pred_check_branch
          %434 = sbr.rel (%p432) target = $region64
        $region63: #{decoder_blocks_forward.21} parent=55 // pred_region
          %p435 = scmp.lt.s32.totalorder %s35, 1
          %s436 = scalar_select %p435, %s35, 1
          %s437 = smul.addr %s436, 4
          %s438 = smul.addr %s437, 8
          %s439 = scalar_lea.vmem %s3, %s438
        $region64: #{decoder_blocks_forward.21} parent=55 // pred_fallthru
          _
        // Predicated region
        $region65: #{decoder_blocks_forward.21} parent=55 // pred_check
          %p440 = pneg %p107
        $region66: #{decoder_blocks_forward.21} parent=55 // pred_check_branch
          %442 = sbr.rel (%p440) target = $region68
        $region67: #{decoder_blocks_forward.21} parent=55 // pred_region
          %p443 = scmp.lt.s32.totalorder %s35, 1
          %s444 = scalar_select %p443, %s35, 1
          %s445 = smul.addr %s444, 4
          %s446 = smul.addr %s445, 8
          %s447 = scalar_lea.vmem %s4, %s446
        $region68: #{decoder_blocks_forward.21} parent=55 // pred_fallthru
          _
        // Predicated region
        $region69: #{decoder_blocks_forward.21} parent=55 // pred_check
          %p448 = pneg %p133
        $region70: #{decoder_blocks_forward.21} parent=55 // pred_check_branch
          %450 = sbr.rel (%p448) target = $region72
        $region71: #{decoder_blocks_forward.21} parent=55 // pred_region
          %p451 = scmp.lt.s32.totalorder %s35, 1
          %s452 = scalar_select %p451, %s35, 1
          %s453 = smul.addr %s452, 8
          %s454 = scalar_lea.vmem %s5, %s453
        $region72: #{decoder_blocks_forward.21} parent=55 // pred_fallthru
          _
      $region56: #{decoder_blocks_forward.21} parent=5 // pred_fallthru
        _
      %p455 = scmp.le.s32.totalorder 1, %s35
      %p456 = scmp.lt.s32.totalorder %s35, 3
      %p457 = pnand %p455, %p456
      %p458 = pneg %p457
      // Predicated region
      $region73: #{decoder_blocks_forward.21} parent=5 // pred_check
        _
      $region74: #{decoder_blocks_forward.21} parent=5 // pred_check_branch
        %460 = sbr.rel (%p457) target = $region76
      $region75: #{decoder_blocks_forward.21} parent=5 // pred_region
        %s461 = ssub.s32 %s35, 1
        %p462 = scmp.lt.s32.totalorder %s40, 1
        %s463 = scalar_select %p462, %s40, 1
        %s464 = smul.addr %s463, 4
        %s465 = smul.addr %s464, 8
        %s466 = scalar_lea.vmem %s2, %s465
        %p467 = pneg %p61
        %p468 = pneg %p58
        %p469 = scmp.lt.s32.totalorder %s40, 1
        %s470 = scalar_select %p469, %s40, 1
        %s471 = smul.addr %s470, 4
        %s472 = smul.addr %s471, 8
        %s473 = scalar_lea.vmem %s3, %s472
        %p474 = pneg %p87
        %p475 = pneg %p84
        %p476 = scmp.lt.s32.totalorder %s40, 1
        %s477 = scalar_select %p476, %s40, 1
        %s478 = smul.addr %s477, 4
        %s479 = smul.addr %s478, 8
        %s480 = scalar_lea.vmem %s4, %s479
        %p481 = pneg %p113
        %p482 = pneg %p110
        %p483 = scmp.lt.s32.totalorder %s40, 1
        %s484 = scalar_select %p483, %s40, 1
        %s485 = smul.addr %s484, 8
        %s486 = scalar_lea.vmem %s5, %s485
        %p487 = pneg %p139
        %p488 = pneg %p136
        %p489 = pneg %p160
        %p490 = pneg %p157
        %p491 = pneg %p181
        %p492 = pneg %p178
        %p493 = pneg %p202
        %p494 = pneg %p199
        %p495 = pneg %p223
        %p496 = pneg %p220
        %p497 = pneg %p244
        %p498 = pneg %p241
        %p499 = pneg %p265
        %p500 = pneg %p262
        %p501 = pneg %p286
        %p502 = pneg %p283
        %p503 = pneg %p307
        %p504 = pneg %p304
        %p505 = pneg %p328
        %p506 = pneg %p325
        %p507 = pneg %p349
        %p508 = pneg %p346
        %p509 = pneg %p375
        %p510 = pneg %p372
        %s511 = sand.u32 %s362, 1
        %s512 = scalar_lea.sflag [#allocation6], %s511
        %s513 = sand.u32 %s362, 1
        %s514 = smul.addr %s513, 8
        %s515 = scalar_lea.vmem [#allocation5], %s514
        %p516 = scmp.lt.s32.totalorder %s40, 1
        %s517 = scalar_select %p516, %s40, 1
        %s518 = smul.addr %s517, 4
        %s519 = smul.addr %s518, 8
        %s520 = scalar_lea.vmem %s2, %s519
        %p521 = scmp.lt.s32.totalorder %s40, 1
        %s522 = scalar_select %p521, %s40, 1
        %s523 = smul.addr %s522, 4
        %s524 = smul.addr %s523, 8
        %s525 = scalar_lea.vmem %s3, %s524
        %p526 = scmp.lt.s32.totalorder %s40, 1
        %s527 = scalar_select %p526, %s40, 1
        %s528 = smul.addr %s527, 4
        %s529 = smul.addr %s528, 8
        %s530 = scalar_lea.vmem %s4, %s529
        %p531 = scmp.lt.s32.totalorder %s40, 1
        %s532 = scalar_select %p531, %s40, 1
        %s533 = smul.addr %s532, 8
        %s534 = scalar_lea.vmem %s5, %s533
        %s535 = sld [smem:[#allocation3 + %s40]]
        %s536 = sld [smem:[#allocation4 + %s40]]
        %v537 = vlaneseq
        %v538 = vand.u32 %v537, 127
        %v539 = vstv %s536
        %vm540 = vcmp.ge.s32.totalorder %v538, %v539
        %v541 = vld [vmem:[%s520] sm:$0xff]
        %v542 = vmul.f32 %v541, 0.35355338
        %v543 = vld [vmem:[%s525] sm:$0xff]
        %v544 = vld [vmem:[%s530] sm:$0xff]
        %vm545 = vcmask 64512
        %v547 = vsel %vm545, %v542, 0
        %v550 = vsel %vm545, %v543, 0
        %552 = vmatprep.subr.mxu0 0.0
        %553 = vmatpush1.xpose.msra.mxu0 %v550
        %554 = vmatprep.subr.mxu0 0.0
        %555 = vmatpush1.xpose.msra.mxu0 0.0
        %556 = vmatprep.subr.mxu0 0.0
        %557 = vmatpush1.xpose.msra.mxu0 0.0
        %558 = vmatprep.subr.mxu0 0.0
        %559 = vmatpush1.xpose.msra.mxu0 0.0
        %560 = vmatprep.subr.mxu0 0.0
        %561 = vmatpush1.xpose.msra.mxu0 0.0
        %562 = vmatprep.subr.mxu0 0.0
        %563 = vmatpush1.xpose.msra.mxu0 0.0
        %564 = vmatprep.subr.mxu0 0.0
        %565 = vmatpush1.xpose.msra.mxu0 0.0
        %566 = vmatprep.subr.mxu0 0.0
        %567 = vmatpush1.xpose.msra.mxu0 0.0
        %568 = vmatprep.subr.mxu0 0.0
        %569 = vmatpush1.xpose.msra.mxu0 0.0
        %570 = vmatprep.subr.mxu0 0.0
        %571 = vmatpush1.xpose.msra.mxu0 0.0
        %572 = vmatprep.subr.mxu0 0.0
        %573 = vmatpush1.xpose.msra.mxu0 0.0
        %574 = vmatprep.subr.mxu0 0.0
        %575 = vmatpush1.xpose.msra.mxu0 0.0
        %576 = vmatprep.subr.mxu0 0.0
        %577 = vmatpush1.xpose.msra.mxu0 0.0
        %578 = vmatprep.subr.mxu0 0.0
        %579 = vmatpush1.xpose.msra.mxu0 0.0
        %580 = vmatprep.subr.mxu0 0.0
        %581 = vmatpush1.xpose.msra.mxu0 0.0
        %582 = vmatprep.subr.mxu0 0.0
        %583 = vmatpush1.xpose.msra.mxu0 0.0
        %584 = vmatprep.subr.mxu0 0.0
        %585 = vmatpush1.xpose.msra.mxu0 0.0
        %586 = vmatprep.subr.mxu0 0.0
        %587 = vmatpush1.xpose.msra.mxu0 0.0
        %588 = vmatprep.subr.mxu0 0.0
        %589 = vmatpush1.xpose.msra.mxu0 0.0
        %590 = vmatprep.subr.mxu0 0.0
        %591 = vmatpush1.xpose.msra.mxu0 0.0
        %592 = vmatprep.subr.mxu0 0.0
        %593 = vmatpush1.xpose.msra.mxu0 0.0
        %594 = vmatprep.subr.mxu0 0.0
        %595 = vmatpush1.xpose.msra.mxu0 0.0
        %596 = vmatprep.subr.mxu0 0.0
        %597 = vmatpush1.xpose.msra.mxu0 0.0
        %598 = vmatprep.subr.mxu0 0.0
        %599 = vmatpush1.xpose.msra.mxu0 0.0
        %600 = vmatprep.subr.mxu0 0.0
        %601 = vmatpush1.xpose.msra.mxu0 0.0
        %602 = vmatprep.subr.mxu0 0.0
        %603 = vmatpush1.xpose.msra.mxu0 0.0
        %604 = vmatprep.subr.mxu0 0.0
        %605 = vmatpush1.xpose.msra.mxu0 0.0
        %606 = vmatprep.subr.mxu0 0.0
        %607 = vmatpush1.xpose.msra.mxu0 0.0
        %608 = vmatprep.subr.mxu0 0.0
        %609 = vmatpush1.xpose.msra.mxu0 0.0
        %610 = vmatprep.subr.mxu0 0.0
        %611 = vmatpush1.xpose.msra.mxu0 0.0
        %612 = vmatprep.subr.mxu0 0.0
        %613 = vmatpush1.xpose.msra.mxu0 0.0
        %614 = vmatprep.subr.mxu0 0.0
        %615 = vmatpush1.xpose.msra.mxu0 0.0
        %616 = vmatprep.mubr.f32.mxu0 0.0
        %617 = vmatmul.mubr.f32.gmra.mrb[0].mxu0 %v547
        %v618 = vpop.f32.mrb[0].mxu0
        %v619 = vadd.f32 0.0, %v618
        %v620 = vpop.f32.mrb[0].mxu0
        %621 = vdwg.mxu0
        %v622 = vsel %vm540, -inf, %v619
        %v623 = vsel %vm545, %v622, -inf
        %624 = vmax.xlane.f32.xlu0 %v623
        %v625 = vpop.xlane.xlu0 %624
        %v626 = vsub.f32 %v622, %v625
        %v627 = vmul.f32 %v626, 1.442695
        %v628 = vpow.pop %v627
        %v629 = vsel %vm545, %v628, 0.0
        %630 = vadd.xlane.f32.xlu0 %v629
        %v631 = vpop.xlane.xlu0 %630
        %v633 = vsel %vm545, %v628, 0
        %635 = vmatprep.subr.mxu0 0.0
        %636 = vmatpush1.msra.mxu0 %v544
        %637 = vmatprep.subr.mxu0 0.0
        %638 = vmatpush1.msra.mxu0 0.0
        %639 = vmatprep.subr.mxu0 0.0
        %640 = vmatpush1.msra.mxu0 0.0
        %641 = vmatprep.subr.mxu0 0.0
        %642 = vmatpush1.msra.mxu0 0.0
        %643 = vmatprep.subr.mxu0 0.0
        %644 = vmatpush1.msra.mxu0 0.0
        %645 = vmatprep.subr.mxu0 0.0
        %646 = vmatpush1.msra.mxu0 0.0
        %647 = vmatprep.subr.mxu0 0.0
        %648 = vmatpush1.msra.mxu0 0.0
        %649 = vmatprep.subr.mxu0 0.0
        %650 = vmatpush1.msra.mxu0 0.0
        %651 = vmatprep.subr.mxu0 0.0
        %652 = vmatpush1.msra.mxu0 0.0
        %653 = vmatprep.subr.mxu0 0.0
        %654 = vmatpush1.msra.mxu0 0.0
        %655 = vmatprep.subr.mxu0 0.0
        %656 = vmatpush1.msra.mxu0 0.0
        %657 = vmatprep.subr.mxu0 0.0
        %658 = vmatpush1.msra.mxu0 0.0
        %659 = vmatprep.subr.mxu0 0.0
        %660 = vmatpush1.msra.mxu0 0.0
        %661 = vmatprep.subr.mxu0 0.0
        %662 = vmatpush1.msra.mxu0 0.0
        %663 = vmatprep.subr.mxu0 0.0
        %664 = vmatpush1.msra.mxu0 0.0
        %665 = vmatprep.subr.mxu0 0.0
        %666 = vmatpush1.msra.mxu0 0.0
        %667 = vmatprep.subr.mxu0 0.0
        %668 = vmatpush1.msra.mxu0 0.0
        %669 = vmatprep.subr.mxu0 0.0
        %670 = vmatpush1.msra.mxu0 0.0
        %671 = vmatprep.subr.mxu0 0.0
        %672 = vmatpush1.msra.mxu0 0.0
        %673 = vmatprep.subr.mxu0 0.0
        %674 = vmatpush1.msra.mxu0 0.0
        %675 = vmatprep.subr.mxu0 0.0
        %676 = vmatpush1.msra.mxu0 0.0
        %677 = vmatprep.subr.mxu0 0.0
        %678 = vmatpush1.msra.mxu0 0.0
        %679 = vmatprep.subr.mxu0 0.0
        %680 = vmatpush1.msra.mxu0 0.0
        %681 = vmatprep.subr.mxu0 0.0
        %682 = vmatpush1.msra.mxu0 0.0
        %683 = vmatprep.subr.mxu0 0.0
        %684 = vmatpush1.msra.mxu0 0.0
        %685 = vmatprep.subr.mxu0 0.0
        %686 = vmatpush1.msra.mxu0 0.0
        %687 = vmatprep.subr.mxu0 0.0
        %688 = vmatpush1.msra.mxu0 0.0
        %689 = vmatprep.subr.mxu0 0.0
        %690 = vmatpush1.msra.mxu0 0.0
        %691 = vmatprep.subr.mxu0 0.0
        %692 = vmatpush1.msra.mxu0 0.0
        %693 = vmatprep.subr.mxu0 0.0
        %694 = vmatpush1.msra.mxu0 0.0
        %695 = vmatprep.subr.mxu0 0.0
        %696 = vmatpush1.msra.mxu0 0.0
        %697 = vmatprep.subr.mxu0 0.0
        %698 = vmatpush1.msra.mxu0 0.0
        %699 = vmatprep.mubr.f32.mxu0 0.0
        %700 = vmatmul.mubr.f32.gmra.mrb[0].mxu0 %v633
        %v701 = vpop.f32.mrb[0].mxu0
        %v702 = vadd.f32 0.0, %v701
        %v703 = vpop.f32.mrb[0].mxu0
        %704 = vdwg.mxu0
        %v705 = vrcp.pop %v631
        %v706 = vmul.f32 1.0, %v705
        %v707 = vmul.f32 %v702, %v706
        %s708 = scalar_lea.vmem %s520, 8
        %v709 = vld [vmem:[%s708] sm:$0xff]
        %v710 = vmul.f32 %v709, 0.35355338
        %s711 = scalar_lea.vmem %s525, 8
        %v712 = vld [vmem:[%s711] sm:$0xff]
        %s713 = scalar_lea.vmem %s530, 8
        %v714 = vld [vmem:[%s713] sm:$0xff]
        %v716 = vsel %vm545, %v710, 0
        %v719 = vsel %vm545, %v712, 0
        %721 = vmatprep.subr.mxu0 0.0
        %722 = vmatpush1.xpose.msra.mxu0 %v719
        %723 = vmatprep.subr.mxu0 0.0
        %724 = vmatpush1.xpose.msra.mxu0 0.0
        %725 = vmatprep.subr.mxu0 0.0
        %726 = vmatpush1.xpose.msra.mxu0 0.0
        %727 = vmatprep.subr.mxu0 0.0
        %728 = vmatpush1.xpose.msra.mxu0 0.0
        %729 = vmatprep.subr.mxu0 0.0
        %730 = vmatpush1.xpose.msra.mxu0 0.0
        %731 = vmatprep.subr.mxu0 0.0
        %732 = vmatpush1.xpose.msra.mxu0 0.0
        %733 = vmatprep.subr.mxu0 0.0
        %734 = vmatpush1.xpose.msra.mxu0 0.0
        %735 = vmatprep.subr.mxu0 0.0
        %736 = vmatpush1.xpose.msra.mxu0 0.0
        %737 = vmatprep.subr.mxu0 0.0
        %738 = vmatpush1.xpose.msra.mxu0 0.0
        %739 = vmatprep.subr.mxu0 0.0
        %740 = vmatpush1.xpose.msra.mxu0 0.0
        %741 = vmatprep.subr.mxu0 0.0
        %742 = vmatpush1.xpose.msra.mxu0 0.0
        %743 = vmatprep.subr.mxu0 0.0
        %744 = vmatpush1.xpose.msra.mxu0 0.0
        %745 = vmatprep.subr.mxu0 0.0
        %746 = vmatpush1.xpose.msra.mxu0 0.0
        %747 = vmatprep.subr.mxu0 0.0
        %748 = vmatpush1.xpose.msra.mxu0 0.0
        %749 = vmatprep.subr.mxu0 0.0
        %750 = vmatpush1.xpose.msra.mxu0 0.0
        %751 = vmatprep.subr.mxu0 0.0
        %752 = vmatpush1.xpose.msra.mxu0 0.0
        %753 = vmatprep.subr.mxu0 0.0
        %754 = vmatpush1.xpose.msra.mxu0 0.0
        %755 = vmatprep.subr.mxu0 0.0
        %756 = vmatpush1.xpose.msra.mxu0 0.0
        %757 = vmatprep.subr.mxu0 0.0
        %758 = vmatpush1.xpose.msra.mxu0 0.0
        %759 = vmatprep.subr.mxu0 0.0
        %760 = vmatpush1.xpose.msra.mxu0 0.0
        %761 = vmatprep.subr.mxu0 0.0
        %762 = vmatpush1.xpose.msra.mxu0 0.0
        %763 = vmatprep.subr.mxu0 0.0
        %764 = vmatpush1.xpose.msra.mxu0 0.0
        %765 = vmatprep.subr.mxu0 0.0
        %766 = vmatpush1.xpose.msra.mxu0 0.0
        %767 = vmatprep.subr.mxu0 0.0
        %768 = vmatpush1.xpose.msra.mxu0 0.0
        %769 = vmatprep.subr.mxu0 0.0
        %770 = vmatpush1.xpose.msra.mxu0 0.0
        %771 = vmatprep.subr.mxu0 0.0
        %772 = vmatpush1.xpose.msra.mxu0 0.0
        %773 = vmatprep.subr.mxu0 0.0
        %774 = vmatpush1.xpose.msra.mxu0 0.0
        %775 = vmatprep.subr.mxu0 0.0
        %776 = vmatpush1.xpose.msra.mxu0 0.0
        %777 = vmatprep.subr.mxu0 0.0
        %778 = vmatpush1.xpose.msra.mxu0 0.0
        %779 = vmatprep.subr.mxu0 0.0
        %780 = vmatpush1.xpose.msra.mxu0 0.0
        %781 = vmatprep.subr.mxu0 0.0
        %782 = vmatpush1.xpose.msra.mxu0 0.0
        %783 = vmatprep.subr.mxu0 0.0
        %784 = vmatpush1.xpose.msra.mxu0 0.0
        %785 = vmatprep.mubr.f32.mxu0 0.0
        %786 = vmatmul.mubr.f32.gmra.mrb[0].mxu0 %v716
        %v787 = vpop.f32.mrb[0].mxu0
        %v788 = vadd.f32 0.0, %v787
        %v789 = vpop.f32.mrb[0].mxu0
        %790 = vdwg.mxu0
        %v791 = vsel %vm540, -inf, %v788
        %v792 = vsel %vm545, %v791, -inf
        %793 = vmax.xlane.f32.xlu0 %v792
        %v794 = vpop.xlane.xlu0 %793
        %v795 = vsub.f32 %v791, %v794
        %v796 = vmul.f32 %v795, 1.442695
        %v797 = vpow.pop %v796
        %v798 = vsel %vm545, %v797, 0.0
        %799 = vadd.xlane.f32.xlu0 %v798
        %v800 = vpop.xlane.xlu0 %799
        %v802 = vsel %vm545, %v797, 0
        %804 = vmatprep.subr.mxu0 0.0
        %805 = vmatpush1.msra.mxu0 %v714
        %806 = vmatprep.subr.mxu0 0.0
        %807 = vmatpush1.msra.mxu0 0.0
        %808 = vmatprep.subr.mxu0 0.0
        %809 = vmatpush1.msra.mxu0 0.0
        %810 = vmatprep.subr.mxu0 0.0
        %811 = vmatpush1.msra.mxu0 0.0
        %812 = vmatprep.subr.mxu0 0.0
        %813 = vmatpush1.msra.mxu0 0.0
        %814 = vmatprep.subr.mxu0 0.0
        %815 = vmatpush1.msra.mxu0 0.0
        %816 = vmatprep.subr.mxu0 0.0
        %817 = vmatpush1.msra.mxu0 0.0
        %818 = vmatprep.subr.mxu0 0.0
        %819 = vmatpush1.msra.mxu0 0.0
        %820 = vmatprep.subr.mxu0 0.0
        %821 = vmatpush1.msra.mxu0 0.0
        %822 = vmatprep.subr.mxu0 0.0
        %823 = vmatpush1.msra.mxu0 0.0
        %824 = vmatprep.subr.mxu0 0.0
        %825 = vmatpush1.msra.mxu0 0.0
        %826 = vmatprep.subr.mxu0 0.0
        %827 = vmatpush1.msra.mxu0 0.0
        %828 = vmatprep.subr.mxu0 0.0
        %829 = vmatpush1.msra.mxu0 0.0
        %830 = vmatprep.subr.mxu0 0.0
        %831 = vmatpush1.msra.mxu0 0.0
        %832 = vmatprep.subr.mxu0 0.0
        %833 = vmatpush1.msra.mxu0 0.0
        %834 = vmatprep.subr.mxu0 0.0
        %835 = vmatpush1.msra.mxu0 0.0
        %836 = vmatprep.subr.mxu0 0.0
        %837 = vmatpush1.msra.mxu0 0.0
        %838 = vmatprep.subr.mxu0 0.0
        %839 = vmatpush1.msra.mxu0 0.0
        %840 = vmatprep.subr.mxu0 0.0
        %841 = vmatpush1.msra.mxu0 0.0
        %842 = vmatprep.subr.mxu0 0.0
        %843 = vmatpush1.msra.mxu0 0.0
        %844 = vmatprep.subr.mxu0 0.0
        %845 = vmatpush1.msra.mxu0 0.0
        %846 = vmatprep.subr.mxu0 0.0
        %847 = vmatpush1.msra.mxu0 0.0
        %848 = vmatprep.subr.mxu0 0.0
        %849 = vmatpush1.msra.mxu0 0.0
        %850 = vmatprep.subr.mxu0 0.0
        %851 = vmatpush1.msra.mxu0 0.0
        %852 = vmatprep.subr.mxu0 0.0
        %853 = vmatpush1.msra.mxu0 0.0
        %854 = vmatprep.subr.mxu0 0.0
        %855 = vmatpush1.msra.mxu0 0.0
        %856 = vmatprep.subr.mxu0 0.0
        %857 = vmatpush1.msra.mxu0 0.0
        %858 = vmatprep.subr.mxu0 0.0
        %859 = vmatpush1.msra.mxu0 0.0
        %860 = vmatprep.subr.mxu0 0.0
        %861 = vmatpush1.msra.mxu0 0.0
        %862 = vmatprep.subr.mxu0 0.0
        %863 = vmatpush1.msra.mxu0 0.0
        %864 = vmatprep.subr.mxu0 0.0
        %865 = vmatpush1.msra.mxu0 0.0
        %866 = vmatprep.subr.mxu0 0.0
        %867 = vmatpush1.msra.mxu0 0.0
        %868 = vmatprep.mubr.f32.mxu0 0.0
        %869 = vmatmul.mubr.f32.gmra.mrb[0].mxu0 %v802
        %v870 = vpop.f32.mrb[0].mxu0
        %v871 = vadd.f32 0.0, %v870
        %v872 = vpop.f32.mrb[0].mxu0
        %873 = vdwg.mxu0
        %v874 = vrcp.pop %v800
        %v875 = vmul.f32 1.0, %v874
        %v876 = vmul.f32 %v871, %v875
        %s877 = scalar_lea.vmem %s520, 16
        %v878 = vld [vmem:[%s877] sm:$0xff]
        %v879 = vmul.f32 %v878, 0.35355338
        %s880 = scalar_lea.vmem %s525, 16
        %v881 = vld [vmem:[%s880] sm:$0xff]
        %s882 = scalar_lea.vmem %s530, 16
        %v883 = vld [vmem:[%s882] sm:$0xff]
        %v885 = vsel %vm545, %v879, 0
        %v888 = vsel %vm545, %v881, 0
        %890 = vmatprep.subr.mxu0 0.0
        %891 = vmatpush1.xpose.msra.mxu0 %v888
        %892 = vmatprep.subr.mxu0 0.0
        %893 = vmatpush1.xpose.msra.mxu0 0.0
        %894 = vmatprep.subr.mxu0 0.0
        %895 = vmatpush1.xpose.msra.mxu0 0.0
        %896 = vmatprep.subr.mxu0 0.0
        %897 = vmatpush1.xpose.msra.mxu0 0.0
        %898 = vmatprep.subr.mxu0 0.0
        %899 = vmatpush1.xpose.msra.mxu0 0.0
        %900 = vmatprep.subr.mxu0 0.0
        %901 = vmatpush1.xpose.msra.mxu0 0.0
        %902 = vmatprep.subr.mxu0 0.0
        %903 = vmatpush1.xpose.msra.mxu0 0.0
        %904 = vmatprep.subr.mxu0 0.0
        %905 = vmatpush1.xpose.msra.mxu0 0.0
        %906 = vmatprep.subr.mxu0 0.0
        %907 = vmatpush1.xpose.msra.mxu0 0.0
        %908 = vmatprep.subr.mxu0 0.0
        %909 = vmatpush1.xpose.msra.mxu0 0.0
        %910 = vmatprep.subr.mxu0 0.0
        %911 = vmatpush1.xpose.msra.mxu0 0.0
        %912 = vmatprep.subr.mxu0 0.0
        %913 = vmatpush1.xpose.msra.mxu0 0.0
        %914 = vmatprep.subr.mxu0 0.0
        %915 = vmatpush1.xpose.msra.mxu0 0.0
        %916 = vmatprep.subr.mxu0 0.0
        %917 = vmatpush1.xpose.msra.mxu0 0.0
        %918 = vmatprep.subr.mxu0 0.0
        %919 = vmatpush1.xpose.msra.mxu0 0.0
        %920 = vmatprep.subr.mxu0 0.0
        %921 = vmatpush1.xpose.msra.mxu0 0.0
        %922 = vmatprep.subr.mxu0 0.0
        %923 = vmatpush1.xpose.msra.mxu0 0.0
        %924 = vmatprep.subr.mxu0 0.0
        %925 = vmatpush1.xpose.msra.mxu0 0.0
        %926 = vmatprep.subr.mxu0 0.0
        %927 = vmatpush1.xpose.msra.mxu0 0.0
        %928 = vmatprep.subr.mxu0 0.0
        %929 = vmatpush1.xpose.msra.mxu0 0.0
        %930 = vmatprep.subr.mxu0 0.0
        %931 = vmatpush1.xpose.msra.mxu0 0.0
        %932 = vmatprep.subr.mxu0 0.0
        %933 = vmatpush1.xpose.msra.mxu0 0.0
        %934 = vmatprep.subr.mxu0 0.0
        %935 = vmatpush1.xpose.msra.mxu0 0.0
        %936 = vmatprep.subr.mxu0 0.0
        %937 = vmatpush1.xpose.msra.mxu0 0.0
        %938 = vmatprep.subr.mxu0 0.0
        %939 = vmatpush1.xpose.msra.mxu0 0.0
        %940 = vmatprep.subr.mxu0 0.0
        %941 = vmatpush1.xpose.msra.mxu0 0.0
        %942 = vmatprep.subr.mxu0 0.0
        %943 = vmatpush1.xpose.msra.mxu0 0.0
        %944 = vmatprep.subr.mxu0 0.0
        %945 = vmatpush1.xpose.msra.mxu0 0.0
        %946 = vmatprep.subr.mxu0 0.0
        %947 = vmatpush1.xpose.msra.mxu0 0.0
        %948 = vmatprep.subr.mxu0 0.0
        %949 = vmatpush1.xpose.msra.mxu0 0.0
        %950 = vmatprep.subr.mxu0 0.0
        %951 = vmatpush1.xpose.msra.mxu0 0.0
        %952 = vmatprep.subr.mxu0 0.0
        %953 = vmatpush1.xpose.msra.mxu0 0.0
        %954 = vmatprep.mubr.f32.mxu0 0.0
        %955 = vmatmul.mubr.f32.gmra.mrb[0].mxu0 %v885
        %v956 = vpop.f32.mrb[0].mxu0
        %v957 = vadd.f32 0.0, %v956
        %v958 = vpop.f32.mrb[0].mxu0
        %959 = vdwg.mxu0
        %v960 = vsel %vm540, -inf, %v957
        %v961 = vsel %vm545, %v960, -inf
        %962 = vmax.xlane.f32.xlu0 %v961
        %v963 = vpop.xlane.xlu0 %962
        %v964 = vsub.f32 %v960, %v963
        %v965 = vmul.f32 %v964, 1.442695
        %v966 = vpow.pop %v965
        %v967 = vsel %vm545, %v966, 0.0
        %968 = vadd.xlane.f32.xlu0 %v967
        %v969 = vpop.xlane.xlu0 %968
        %v971 = vsel %vm545, %v966, 0
        %973 = vmatprep.subr.mxu0 0.0
        %974 = vmatpush1.msra.mxu0 %v883
        %975 = vmatprep.subr.mxu0 0.0
        %976 = vmatpush1.msra.mxu0 0.0
        %977 = vmatprep.subr.mxu0 0.0
        %978 = vmatpush1.msra.mxu0 0.0
        %979 = vmatprep.subr.mxu0 0.0
        %980 = vmatpush1.msra.mxu0 0.0
        %981 = vmatprep.subr.mxu0 0.0
        %982 = vmatpush1.msra.mxu0 0.0
        %983 = vmatprep.subr.mxu0 0.0
        %984 = vmatpush1.msra.mxu0 0.0
        %985 = vmatprep.subr.mxu0 0.0
        %986 = vmatpush1.msra.mxu0 0.0
        %987 = vmatprep.subr.mxu0 0.0
        %988 = vmatpush1.msra.mxu0 0.0
        %989 = vmatprep.subr.mxu0 0.0
        %990 = vmatpush1.msra.mxu0 0.0
        %991 = vmatprep.subr.mxu0 0.0
        %992 = vmatpush1.msra.mxu0 0.0
        %993 = vmatprep.subr.mxu0 0.0
        %994 = vmatpush1.msra.mxu0 0.0
        %995 = vmatprep.subr.mxu0 0.0
        %996 = vmatpush1.msra.mxu0 0.0
        %997 = vmatprep.subr.mxu0 0.0
        %998 = vmatpush1.msra.mxu0 0.0
        %999 = vmatprep.subr.mxu0 0.0
        %1000 = vmatpush1.msra.mxu0 0.0
        %1001 = vmatprep.subr.mxu0 0.0
        %1002 = vmatpush1.msra.mxu0 0.0
        %1003 = vmatprep.subr.mxu0 0.0
        %1004 = vmatpush1.msra.mxu0 0.0
        %1005 = vmatprep.subr.mxu0 0.0
        %1006 = vmatpush1.msra.mxu0 0.0
        %1007 = vmatprep.subr.mxu0 0.0
        %1008 = vmatpush1.msra.mxu0 0.0
        %1009 = vmatprep.subr.mxu0 0.0
        %1010 = vmatpush1.msra.mxu0 0.0
        %1011 = vmatprep.subr.mxu0 0.0
        %1012 = vmatpush1.msra.mxu0 0.0
        %1013 = vmatprep.subr.mxu0 0.0
        %1014 = vmatpush1.msra.mxu0 0.0
        %1015 = vmatprep.subr.mxu0 0.0
        %1016 = vmatpush1.msra.mxu0 0.0
        %1017 = vmatprep.subr.mxu0 0.0
        %1018 = vmatpush1.msra.mxu0 0.0
        %1019 = vmatprep.subr.mxu0 0.0
        %1020 = vmatpush1.msra.mxu0 0.0
        %1021 = vmatprep.subr.mxu0 0.0
        %1022 = vmatpush1.msra.mxu0 0.0
        %1023 = vmatprep.subr.mxu0 0.0
        %1024 = vmatpush1.msra.mxu0 0.0
        %1025 = vmatprep.subr.mxu0 0.0
        %1026 = vmatpush1.msra.mxu0 0.0
        %1027 = vmatprep.subr.mxu0 0.0
        %1028 = vmatpush1.msra.mxu0 0.0
        %1029 = vmatprep.subr.mxu0 0.0
        %1030 = vmatpush1.msra.mxu0 0.0
        %1031 = vmatprep.subr.mxu0 0.0
        %1032 = vmatpush1.msra.mxu0 0.0
        %1033 = vmatprep.subr.mxu0 0.0
        %1034 = vmatpush1.msra.mxu0 0.0
        %1035 = vmatprep.subr.mxu0 0.0
        %1036 = vmatpush1.msra.mxu0 0.0
        %1037 = vmatprep.mubr.f32.mxu0 0.0
        %1038 = vmatmul.mubr.f32.gmra.mrb[0].mxu0 %v971
        %v1039 = vpop.f32.mrb[0].mxu0
        %v1040 = vadd.f32 0.0, %v1039
        %v1041 = vpop.f32.mrb[0].mxu0
        %1042 = vdwg.mxu0
        %v1043 = vrcp.pop %v969
        %v1044 = vmul.f32 1.0, %v1043
        %v1045 = vmul.f32 %v1040, %v1044
        %s1046 = scalar_lea.vmem %s520, 24
        %v1047 = vld [vmem:[%s1046] sm:$0xff]
        %v1048 = vmul.f32 %v1047, 0.35355338
        %s1049 = scalar_lea.vmem %s525, 24
        %v1050 = vld [vmem:[%s1049] sm:$0xff]
        %s1051 = scalar_lea.vmem %s530, 24
        %v1052 = vld [vmem:[%s1051] sm:$0xff]
        %v1054 = vsel %vm545, %v1048, 0
        %v1057 = vsel %vm545, %v1050, 0
        %1059 = vmatprep.subr.mxu0 0.0
        %1060 = vmatpush1.xpose.msra.mxu0 %v1057
        %1061 = vmatprep.subr.mxu0 0.0
        %1062 = vmatpush1.xpose.msra.mxu0 0.0
        %1063 = vmatprep.subr.mxu0 0.0
        %1064 = vmatpush1.xpose.msra.mxu0 0.0
        %1065 = vmatprep.subr.mxu0 0.0
        %1066 = vmatpush1.xpose.msra.mxu0 0.0
        %1067 = vmatprep.subr.mxu0 0.0
        %1068 = vmatpush1.xpose.msra.mxu0 0.0
        %1069 = vmatprep.subr.mxu0 0.0
        %1070 = vmatpush1.xpose.msra.mxu0 0.0
        %1071 = vmatprep.subr.mxu0 0.0
        %1072 = vmatpush1.xpose.msra.mxu0 0.0
        %1073 = vmatprep.subr.mxu0 0.0
        %1074 = vmatpush1.xpose.msra.mxu0 0.0
        %1075 = vmatprep.subr.mxu0 0.0
        %1076 = vmatpush1.xpose.msra.mxu0 0.0
        %1077 = vmatprep.subr.mxu0 0.0
        %1078 = vmatpush1.xpose.msra.mxu0 0.0
        %1079 = vmatprep.subr.mxu0 0.0
        %1080 = vmatpush1.xpose.msra.mxu0 0.0
        %1081 = vmatprep.subr.mxu0 0.0
        %1082 = vmatpush1.xpose.msra.mxu0 0.0
        %1083 = vmatprep.subr.mxu0 0.0
        %1084 = vmatpush1.xpose.msra.mxu0 0.0
        %1085 = vmatprep.subr.mxu0 0.0
        %1086 = vmatpush1.xpose.msra.mxu0 0.0
        %1087 = vmatprep.subr.mxu0 0.0
        %1088 = vmatpush1.xpose.msra.mxu0 0.0
        %1089 = vmatprep.subr.mxu0 0.0
        %1090 = vmatpush1.xpose.msra.mxu0 0.0
        %1091 = vmatprep.subr.mxu0 0.0
        %1092 = vmatpush1.xpose.msra.mxu0 0.0
        %1093 = vmatprep.subr.mxu0 0.0
        %1094 = vmatpush1.xpose.msra.mxu0 0.0
        %1095 = vmatprep.subr.mxu0 0.0
        %1096 = vmatpush1.xpose.msra.mxu0 0.0
        %1097 = vmatprep.subr.mxu0 0.0
        %1098 = vmatpush1.xpose.msra.mxu0 0.0
        %1099 = vmatprep.subr.mxu0 0.0
        %1100 = vmatpush1.xpose.msra.mxu0 0.0
        %1101 = vmatprep.subr.mxu0 0.0
        %1102 = vmatpush1.xpose.msra.mxu0 0.0
        %1103 = vmatprep.subr.mxu0 0.0
        %1104 = vmatpush1.xpose.msra.mxu0 0.0
        %1105 = vmatprep.subr.mxu0 0.0
        %1106 = vmatpush1.xpose.msra.mxu0 0.0
        %1107 = vmatprep.subr.mxu0 0.0
        %1108 = vmatpush1.xpose.msra.mxu0 0.0
        %1109 = vmatprep.subr.mxu0 0.0
        %1110 = vmatpush1.xpose.msra.mxu0 0.0
        %1111 = vmatprep.subr.mxu0 0.0
        %1112 = vmatpush1.xpose.msra.mxu0 0.0
        %1113 = vmatprep.subr.mxu0 0.0
        %1114 = vmatpush1.xpose.msra.mxu0 0.0
        %1115 = vmatprep.subr.mxu0 0.0
        %1116 = vmatpush1.xpose.msra.mxu0 0.0
        %1117 = vmatprep.subr.mxu0 0.0
        %1118 = vmatpush1.xpose.msra.mxu0 0.0
        %1119 = vmatprep.subr.mxu0 0.0
        %1120 = vmatpush1.xpose.msra.mxu0 0.0
        %1121 = vmatprep.subr.mxu0 0.0
        %1122 = vmatpush1.xpose.msra.mxu0 0.0
        %1123 = vmatprep.mubr.f32.mxu0 0.0
        %1124 = vmatmul.mubr.f32.gmra.mrb[0].mxu0 %v1054
        %v1125 = vpop.f32.mrb[0].mxu0
        %v1126 = vadd.f32 0.0, %v1125
        %v1127 = vpop.f32.mrb[0].mxu0
        %1128 = vdwg.mxu0
        %v1129 = vsel %vm540, -inf, %v1126
        %v1130 = vsel %vm545, %v1129, -inf
        %1131 = vmax.xlane.f32.xlu0 %v1130
        %v1132 = vpop.xlane.xlu0 %1131
        %v1133 = vsub.f32 %v1129, %v1132
        %v1134 = vmul.f32 %v1133, 1.442695
        %v1135 = vpow.pop %v1134
        %v1136 = vsel %vm545, %v1135, 0.0
        %1137 = vadd.xlane.f32.xlu0 %v1136
        %v1138 = vpop.xlane.xlu0 %1137
        %v1140 = vsel %vm545, %v1135, 0
        %1142 = vmatprep.subr.mxu0 0.0
        %1143 = vmatpush1.msra.mxu0 %v1052
        %1144 = vmatprep.subr.mxu0 0.0
        %1145 = vmatpush1.msra.mxu0 0.0
        %1146 = vmatprep.subr.mxu0 0.0
        %1147 = vmatpush1.msra.mxu0 0.0
        %1148 = vmatprep.subr.mxu0 0.0
        %1149 = vmatpush1.msra.mxu0 0.0
        %1150 = vmatprep.subr.mxu0 0.0
        %1151 = vmatpush1.msra.mxu0 0.0
        %1152 = vmatprep.subr.mxu0 0.0
        %1153 = vmatpush1.msra.mxu0 0.0
        %1154 = vmatprep.subr.mxu0 0.0
        %1155 = vmatpush1.msra.mxu0 0.0
        %1156 = vmatprep.subr.mxu0 0.0
        %1157 = vmatpush1.msra.mxu0 0.0
        %1158 = vmatprep.subr.mxu0 0.0
        %1159 = vmatpush1.msra.mxu0 0.0
        %1160 = vmatprep.subr.mxu0 0.0
        %1161 = vmatpush1.msra.mxu0 0.0
        %1162 = vmatprep.subr.mxu0 0.0
        %1163 = vmatpush1.msra.mxu0 0.0
        %1164 = vmatprep.subr.mxu0 0.0
        %1165 = vmatpush1.msra.mxu0 0.0
        %1166 = vmatprep.subr.mxu0 0.0
        %1167 = vmatpush1.msra.mxu0 0.0
        %1168 = vmatprep.subr.mxu0 0.0
        %1169 = vmatpush1.msra.mxu0 0.0
        %1170 = vmatprep.subr.mxu0 0.0
        %1171 = vmatpush1.msra.mxu0 0.0
        %1172 = vmatprep.subr.mxu0 0.0
        %1173 = vmatpush1.msra.mxu0 0.0
        %1174 = vmatprep.subr.mxu0 0.0
        %1175 = vmatpush1.msra.mxu0 0.0
        %1176 = vmatprep.subr.mxu0 0.0
        %1177 = vmatpush1.msra.mxu0 0.0
        %1178 = vmatprep.subr.mxu0 0.0
        %1179 = vmatpush1.msra.mxu0 0.0
        %1180 = vmatprep.subr.mxu0 0.0
        %1181 = vmatpush1.msra.mxu0 0.0
        %1182 = vmatprep.subr.mxu0 0.0
        %1183 = vmatpush1.msra.mxu0 0.0
        %1184 = vmatprep.subr.mxu0 0.0
        %1185 = vmatpush1.msra.mxu0 0.0
        %1186 = vmatprep.subr.mxu0 0.0
        %1187 = vmatpush1.msra.mxu0 0.0
        %1188 = vmatprep.subr.mxu0 0.0
        %1189 = vmatpush1.msra.mxu0 0.0
        %1190 = vmatprep.subr.mxu0 0.0
        %1191 = vmatpush1.msra.mxu0 0.0
        %1192 = vmatprep.subr.mxu0 0.0
        %1193 = vmatpush1.msra.mxu0 0.0
        %1194 = vmatprep.subr.mxu0 0.0
        %1195 = vmatpush1.msra.mxu0 0.0
        %1196 = vmatprep.subr.mxu0 0.0
        %1197 = vmatpush1.msra.mxu0 0.0
        %1198 = vmatprep.subr.mxu0 0.0
        %1199 = vmatpush1.msra.mxu0 0.0
        %1200 = vmatprep.subr.mxu0 0.0
        %1201 = vmatpush1.msra.mxu0 0.0
        %1202 = vmatprep.subr.mxu0 0.0
        %1203 = vmatpush1.msra.mxu0 0.0
        %1204 = vmatprep.subr.mxu0 0.0
        %1205 = vmatpush1.msra.mxu0 0.0
        %1206 = vmatprep.mubr.f32.mxu0 0.0
        %1207 = vmatmul.mubr.f32.gmra.mrb[0].mxu0 %v1140
        %v1208 = vpop.f32.mrb[0].mxu0
        %v1209 = vadd.f32 0.0, %v1208
        %v1210 = vpop.f32.mrb[0].mxu0
        %1211 = vdwg.mxu0
        %v1212 = vrcp.pop %v1138
        %v1213 = vmul.f32 1.0, %v1212
        %v1214 = vmul.f32 %v1209, %v1213
        %1216 = vrot.lane.b32.xlu0 %v876, 8
        %v1217 = vpop.permute.xlu0 %1216
        %1220 = vrot.lane.b32.xlu0 %v1045, 16
        %v1221 = vpop.permute.xlu0 %1220
        %1224 = vrot.lane.b32.xlu0 %v1214, 24
        %v1225 = vpop.permute.xlu0 %1224
        %v1227 = vsel %vm545, %v707, %v1217
        %vm1228 = vcmask 130048
        %v1229 = vsel %vm1228, %v1227, %v1221
        %vm1230 = vcmask 195584
        %v1231 = vsel %vm1230, %v1229, %v1225
        %v1232 = vlaneseq
        %v1233 = vshrl.u32 %v1232, 7
        %v1234 = vstv %s535
        %vm1235 = vcmp.lt.s32.totalorder %v1233, %v1234
        %v1236 = vld [vmem:[%s6] sm:$0xff]
        %v1237 = vld [vmem:[%s6 + $0x8] sm:$0xff]
        %v1238 = vld [vmem:[%s6 + $0x10] sm:$0xff]
        %v1239 = vld [vmem:[%s6 + $0x18] sm:$0xff]
        %v1240 = vld [vmem:[%s7] sm:$0x1]
        %v1242 = vlaneseq
        %v1243 = vshrl.u32 %v1242, 7
        %v1244 = vsub.s32 0, %v1243
        %v1245 = vrot.slane %v1240, %v1244
        %vm1247 = vcmask 261120
        %v1249 = vsel %vm1247, %v1231, 0
        %1251 = vmatprep.subr.mxu0 0.0
        %1252 = vmatpush1.msra.mxu0 %v1236
        %1253 = vmatprep.subr.mxu0 0.0
        %1254 = vmatpush1.msra.mxu0 %v1237
        %1255 = vmatprep.subr.mxu0 0.0
        %1256 = vmatpush1.msra.mxu0 %v1238
        %1257 = vmatprep.subr.mxu0 0.0
        %1258 = vmatpush1.msra.mxu0 %v1239
        %1259 = vmatprep.subr.mxu0 0.0
        %1260 = vmatpush1.msra.mxu0 0.0
        %1261 = vmatprep.subr.mxu0 0.0
        %1262 = vmatpush1.msra.mxu0 0.0
        %1263 = vmatprep.subr.mxu0 0.0
        %1264 = vmatpush1.msra.mxu0 0.0
        %1265 = vmatprep.subr.mxu0 0.0
        %1266 = vmatpush1.msra.mxu0 0.0
        %1267 = vmatprep.subr.mxu0 0.0
        %1268 = vmatpush1.msra.mxu0 0.0
        %1269 = vmatprep.subr.mxu0 0.0
        %1270 = vmatpush1.msra.mxu0 0.0
        %1271 = vmatprep.subr.mxu0 0.0
        %1272 = vmatpush1.msra.mxu0 0.0
        %1273 = vmatprep.subr.mxu0 0.0
        %1274 = vmatpush1.msra.mxu0 0.0
        %1275 = vmatprep.subr.mxu0 0.0
        %1276 = vmatpush1.msra.mxu0 0.0
        %1277 = vmatprep.subr.mxu0 0.0
        %1278 = vmatpush1.msra.mxu0 0.0
        %1279 = vmatprep.subr.mxu0 0.0
        %1280 = vmatpush1.msra.mxu0 0.0
        %1281 = vmatprep.subr.mxu0 0.0
        %1282 = vmatpush1.msra.mxu0 0.0
        %1283 = vmatprep.subr.mxu0 0.0
        %1284 = vmatpush1.msra.mxu0 0.0
        %1285 = vmatprep.subr.mxu0 0.0
        %1286 = vmatpush1.msra.mxu0 0.0
        %1287 = vmatprep.subr.mxu0 0.0
        %1288 = vmatpush1.msra.mxu0 0.0
        %1289 = vmatprep.subr.mxu0 0.0
        %1290 = vmatpush1.msra.mxu0 0.0
        %1291 = vmatprep.subr.mxu0 0.0
        %1292 = vmatpush1.msra.mxu0 0.0
        %1293 = vmatprep.subr.mxu0 0.0
        %1294 = vmatpush1.msra.mxu0 0.0
        %1295 = vmatprep.subr.mxu0 0.0
        %1296 = vmatpush1.msra.mxu0 0.0
        %1297 = vmatprep.subr.mxu0 0.0
        %1298 = vmatpush1.msra.mxu0 0.0
        %1299 = vmatprep.subr.mxu0 0.0
        %1300 = vmatpush1.msra.mxu0 0.0
        %1301 = vmatprep.subr.mxu0 0.0
        %1302 = vmatpush1.msra.mxu0 0.0
        %1303 = vmatprep.subr.mxu0 0.0
        %1304 = vmatpush1.msra.mxu0 0.0
        %1305 = vmatprep.subr.mxu0 0.0
        %1306 = vmatpush1.msra.mxu0 0.0
        %1307 = vmatprep.subr.mxu0 0.0
        %1308 = vmatpush1.msra.mxu0 0.0
        %1309 = vmatprep.subr.mxu0 0.0
        %1310 = vmatpush1.msra.mxu0 0.0
        %1311 = vmatprep.subr.mxu0 0.0
        %1312 = vmatpush1.msra.mxu0 0.0
        %1313 = vmatprep.subr.mxu0 0.0
        %1314 = vmatpush1.msra.mxu0 0.0
        %1315 = vmatprep.mubr.f32.mxu0 0.0
        %1316 = vmatmul.mubr.f32.gmra.mrb[0].mxu0 %v1249
        %v1317 = vpop.f32.mrb[0].mxu0
        %v1318 = vadd.f32 %v1245, %v1317
        %v1319 = vpop.f32.mrb[0].mxu0
        %1320 = vdwg.mxu0
        %v1321 = vsel %vm1235, %v1318, 0.0
        %v1322 = vld [vmem:[%s534] sm:$0xff]
        %v1323 = vadd.f32 %v1321, %v1322
        %v1324 = vld [vmem:[%s8] sm:$0x1]
        %v1325 = vld [vmem:[%s9] sm:$0x1]
        %v1326 = vsel %vm1247, %v1323, 0.0
        %1327 = vadd.xlane.f32.xlu0 %v1326
        %v1328 = vpop.xlane.xlu0 %1327
        %v1329 = vrcp.pop 32.0
        %v1330 = vmul.f32 %v1328, %v1329
        %v1331 = vsub.f32 %v1323, %v1330
        %v1332 = vmul.f32 %v1331, %v1331
        %v1333 = vsel %vm1247, %v1332, 0.0
        %1334 = vadd.xlane.f32.xlu0 %v1333
        %v1335 = vpop.xlane.xlu0 %1334
        %v1336 = vmul.f32 %v1335, %v1329
        %v1337 = vadd.f32 %v1336, 1e-05
        %v1338 = vrsqrt.pop %v1337
        %v1339 = vmul.f32 %v1331, %v1338
        %v1341 = vlaneseq
        %v1342 = vshrl.u32 %v1341, 7
        %v1343 = vsub.s32 0, %v1342
        %v1344 = vrot.slane %v1324, %v1343
        %v1346 = vmul.f32 %v1339, %v1344
        %v1348 = vlaneseq
        %v1349 = vshrl.u32 %v1348, 7
        %v1350 = vsub.s32 0, %v1349
        %v1351 = vrot.slane %v1325, %v1350
        %v1353 = vadd.f32 %v1346, %v1351
        %v1354 = vld [vmem:[%s10] sm:$0xff]
        %v1355 = vld [vmem:[%s10 + $0x8] sm:$0xff]
        %v1356 = vld [vmem:[%s10 + $0x10] sm:$0xff]
        %v1357 = vld [vmem:[%s10 + $0x18] sm:$0xff]
        %v1358 = vld [vmem:[%s11] sm:$0x1]
        %v1360 = vlaneseq
        %v1361 = vshrl.u32 %v1360, 7
        %v1362 = vsub.s32 0, %v1361
        %v1363 = vrot.slane %v1358, %v1362
        %v1366 = vsel %vm1247, %v1353, 0
        %1368 = vmatprep.subr.mxu0 0.0
        %1369 = vmatpush1.msra.mxu0 %v1354
        %1370 = vmatprep.subr.mxu0 0.0
        %1371 = vmatpush1.msra.mxu0 %v1355
        %1372 = vmatprep.subr.mxu0 0.0
        %1373 = vmatpush1.msra.mxu0 %v1356
        %1374 = vmatprep.subr.mxu0 0.0
        %1375 = vmatpush1.msra.mxu0 %v1357
        %1376 = vmatprep.subr.mxu0 0.0
        %1377 = vmatpush1.msra.mxu0 0.0
        %1378 = vmatprep.subr.mxu0 0.0
        %1379 = vmatpush1.msra.mxu0 0.0
        %1380 = vmatprep.subr.mxu0 0.0
        %1381 = vmatpush1.msra.mxu0 0.0
        %1382 = vmatprep.subr.mxu0 0.0
        %1383 = vmatpush1.msra.mxu0 0.0
        %1384 = vmatprep.subr.mxu0 0.0
        %1385 = vmatpush1.msra.mxu0 0.0
        %1386 = vmatprep.subr.mxu0 0.0
        %1387 = vmatpush1.msra.mxu0 0.0
        %1388 = vmatprep.subr.mxu0 0.0
        %1389 = vmatpush1.msra.mxu0 0.0
        %1390 = vmatprep.subr.mxu0 0.0
        %1391 = vmatpush1.msra.mxu0 0.0
        %1392 = vmatprep.subr.mxu0 0.0
        %1393 = vmatpush1.msra.mxu0 0.0
        %1394 = vmatprep.subr.mxu0 0.0
        %1395 = vmatpush1.msra.mxu0 0.0
        %1396 = vmatprep.subr.mxu0 0.0
        %1397 = vmatpush1.msra.mxu0 0.0
        %1398 = vmatprep.subr.mxu0 0.0
        %1399 = vmatpush1.msra.mxu0 0.0
        %1400 = vmatprep.subr.mxu0 0.0
        %1401 = vmatpush1.msra.mxu0 0.0
        %1402 = vmatprep.subr.mxu0 0.0
        %1403 = vmatpush1.msra.mxu0 0.0
        %1404 = vmatprep.subr.mxu0 0.0
        %1405 = vmatpush1.msra.mxu0 0.0
        %1406 = vmatprep.subr.mxu0 0.0
        %1407 = vmatpush1.msra.mxu0 0.0
        %1408 = vmatprep.subr.mxu0 0.0
        %1409 = vmatpush1.msra.mxu0 0.0
        %1410 = vmatprep.subr.mxu0 0.0
        %1411 = vmatpush1.msra.mxu0 0.0
        %1412 = vmatprep.subr.mxu0 0.0
        %1413 = vmatpush1.msra.mxu0 0.0
        %1414 = vmatprep.subr.mxu0 0.0
        %1415 = vmatpush1.msra.mxu0 0.0
        %1416 = vmatprep.subr.mxu0 0.0
        %1417 = vmatpush1.msra.mxu0 0.0
        %1418 = vmatprep.subr.mxu0 0.0
        %1419 = vmatpush1.msra.mxu0 0.0
        %1420 = vmatprep.subr.mxu0 0.0
        %1421 = vmatpush1.msra.mxu0 0.0
        %1422 = vmatprep.subr.mxu0 0.0
        %1423 = vmatpush1.msra.mxu0 0.0
        %1424 = vmatprep.subr.mxu0 0.0
        %1425 = vmatpush1.msra.mxu0 0.0
        %1426 = vmatprep.subr.mxu0 0.0
        %1427 = vmatpush1.msra.mxu0 0.0
        %1428 = vmatprep.subr.mxu0 0.0
        %1429 = vmatpush1.msra.mxu0 0.0
        %1430 = vmatprep.subr.mxu0 0.0
        %1431 = vmatpush1.msra.mxu0 0.0
        %1432 = vmatprep.mubr.f32.mxu0 0.0
        %1433 = vmatmul.mubr.f32.gmra.mrb[0].mxu0 %v1366
        %v1434 = vpop.f32.mrb[0].mxu0
        %v1435 = vadd.f32 %v1363, %v1434
        %v1436 = vpop.f32.mrb[0].mxu0
        %1437 = vdwg.mxu0
        %v1438 = vmul.f32 %v1435, 0.5
        %v1439 = vmul.f32 %v1435, 0.70710677
        %vm1440 = vcmp.ge.f32.partialorder %v1439, 0.0
        %v1441 = vsel %vm1440, 1.0, -1.0
        %v1442 = vand.u32 2147483647, %v1439
        %v1443 = vmul.f32 %v1442, 0.3275911
        %v1444 = vadd.f32 %v1443, 1.0
        %v1445 = vrcp.pop %v1444
        %v1446 = vmul.f32 1.0, %v1445
        %v1447 = vmul.f32 %v1446, 1.0614054
        %v1448 = vadd.f32 %v1447, -1.4531521
        %v1449 = vmul.f32 %v1448, %v1446
        %v1450 = vadd.f32 %v1449, 1.4214138
        %v1451 = vmul.f32 %v1450, %v1446
        %v1452 = vadd.f32 %v1451, -0.28449672
        %v1453 = vmul.f32 %v1452, %v1446
        %v1454 = vadd.f32 %v1453, 0.2548296
        %v1455 = vmul.f32 %v1454, %v1446
        %v1456 = vsub.f32 0.0, %v1442
        %v1457 = vmul.f32 %v1456, %v1442
        %v1458 = vmul.f32 %v1457, 1.442695
        %v1459 = vpow.pop %v1458
        %v1460 = vmul.f32 %v1455, %v1459
        %v1461 = vsub.f32 1.0, %v1460
        %v1462 = vmul.f32 %v1441, %v1461
        %v1463 = vadd.f32 %v1462, 1.0
        %v1464 = vmul.f32 %v1438, %v1463
        %v1465 = vld [vmem:[%s12] sm:$0xff]
        %v1466 = vld [vmem:[%s12 + $0x8] sm:$0xff]
        %v1467 = vld [vmem:[%s12 + $0x10] sm:$0xff]
        %v1468 = vld [vmem:[%s12 + $0x18] sm:$0xff]
        %v1469 = vld [vmem:[%s12 + $0x20] sm:$0xff]
        %v1470 = vld [vmem:[%s12 + $0x28] sm:$0xff]
        %v1471 = vld [vmem:[%s12 + $0x30] sm:$0xff]
        %v1472 = vld [vmem:[%s12 + $0x38] sm:$0xff]
        %v1473 = vld [vmem:[%s13] sm:$0x1]
        %v1475 = vlaneseq
        %v1476 = vshrl.u32 %v1475, 7
        %v1477 = vsub.s32 0, %v1476
        %v1478 = vrot.slane %v1473, %v1477
        %vm1480 = vcmask 523264
        %v1482 = vsel %vm1480, %v1464, 0
        %1484 = vmatprep.subr.mxu0 0.0
        %1485 = vmatpush1.msra.mxu0 %v1465
        %1486 = vmatprep.subr.mxu0 0.0
        %1487 = vmatpush1.msra.mxu0 %v1466
        %1488 = vmatprep.subr.mxu0 0.0
        %1489 = vmatpush1.msra.mxu0 %v1467
        %1490 = vmatprep.subr.mxu0 0.0
        %1491 = vmatpush1.msra.mxu0 %v1468
        %1492 = vmatprep.subr.mxu0 0.0
        %1493 = vmatpush1.msra.mxu0 %v1469
        %1494 = vmatprep.subr.mxu0 0.0
        %1495 = vmatpush1.msra.mxu0 %v1470
        %1496 = vmatprep.subr.mxu0 0.0
        %1497 = vmatpush1.msra.mxu0 %v1471
        %1498 = vmatprep.subr.mxu0 0.0
        %1499 = vmatpush1.msra.mxu0 %v1472
        %1500 = vmatprep.subr.mxu0 0.0
        %1501 = vmatpush1.msra.mxu0 0.0
        %1502 = vmatprep.subr.mxu0 0.0
        %1503 = vmatpush1.msra.mxu0 0.0
        %1504 = vmatprep.subr.mxu0 0.0
        %1505 = vmatpush1.msra.mxu0 0.0
        %1506 = vmatprep.subr.mxu0 0.0
        %1507 = vmatpush1.msra.mxu0 0.0
        %1508 = vmatprep.subr.mxu0 0.0
        %1509 = vmatpush1.msra.mxu0 0.0
        %1510 = vmatprep.subr.mxu0 0.0
        %1511 = vmatpush1.msra.mxu0 0.0
        %1512 = vmatprep.subr.mxu0 0.0
        %1513 = vmatpush1.msra.mxu0 0.0
        %1514 = vmatprep.subr.mxu0 0.0
        %1515 = vmatpush1.msra.mxu0 0.0
        %1516 = vmatprep.subr.mxu0 0.0
        %1517 = vmatpush1.msra.mxu0 0.0
        %1518 = vmatprep.subr.mxu0 0.0
        %1519 = vmatpush1.msra.mxu0 0.0
        %1520 = vmatprep.subr.mxu0 0.0
        %1521 = vmatpush1.msra.mxu0 0.0
        %1522 = vmatprep.subr.mxu0 0.0
        %1523 = vmatpush1.msra.mxu0 0.0
        %1524 = vmatprep.subr.mxu0 0.0
        %1525 = vmatpush1.msra.mxu0 0.0
        %1526 = vmatprep.subr.mxu0 0.0
        %1527 = vmatpush1.msra.mxu0 0.0
        %1528 = vmatprep.subr.mxu0 0.0
        %1529 = vmatpush1.msra.mxu0 0.0
        %1530 = vmatprep.subr.mxu0 0.0
        %1531 = vmatpush1.msra.mxu0 0.0
        %1532 = vmatprep.subr.mxu0 0.0
        %1533 = vmatpush1.msra.mxu0 0.0
        %1534 = vmatprep.subr.mxu0 0.0
        %1535 = vmatpush1.msra.mxu0 0.0
        %1536 = vmatprep.subr.mxu0 0.0
        %1537 = vmatpush1.msra.mxu0 0.0
        %1538 = vmatprep.subr.mxu0 0.0
        %1539 = vmatpush1.msra.mxu0 0.0
        %1540 = vmatprep.subr.mxu0 0.0
        %1541 = vmatpush1.msra.mxu0 0.0
        %1542 = vmatprep.subr.mxu0 0.0
        %1543 = vmatpush1.msra.mxu0 0.0
        %1544 = vmatprep.subr.mxu0 0.0
        %1545 = vmatpush1.msra.mxu0 0.0
        %1546 = vmatprep.subr.mxu0 0.0
        %1547 = vmatpush1.msra.mxu0 0.0
        %1548 = vmatprep.mubr.f32.mxu0 0.0
        %1549 = vmatmul.mubr.f32.gmra.mrb[0].mxu0 %v1482
        %v1550 = vpop.f32.mrb[0].mxu0
        %v1551 = vadd.f32 %v1478, %v1550
        %v1552 = vpop.f32.mrb[0].mxu0
        %1553 = vdwg.mxu0
        %v1554 = vsel %vm1235, %v1551, 0.0
        %v1555 = vadd.f32 %v1554, %v1323
        %v1556 = vld [vmem:[%s14] sm:$0x1]
        %v1557 = vld [vmem:[%s15] sm:$0x1]
        %v1558 = vsel %vm1247, %v1555, 0.0
        %1559 = vadd.xlane.f32.xlu0 %v1558
        %v1560 = vpop.xlane.xlu0 %1559
        %v1561 = vmul.f32 %v1560, %v1329
        %v1562 = vsub.f32 %v1555, %v1561
        %v1563 = vmul.f32 %v1562, %v1562
        %v1564 = vsel %vm1247, %v1563, 0.0
        %1565 = vadd.xlane.f32.xlu0 %v1564
        %v1566 = vpop.xlane.xlu0 %1565
        %v1567 = vmul.f32 %v1566, %v1329
        %v1568 = vadd.f32 %v1567, 1e-05
        %v1569 = vrsqrt.pop %v1568
        %v1570 = vmul.f32 %v1562, %v1569
        %v1572 = vlaneseq
        %v1573 = vshrl.u32 %v1572, 7
        %v1574 = vsub.s32 0, %v1573
        %v1575 = vrot.slane %v1556, %v1574
        %v1577 = vmul.f32 %v1570, %v1575
        %v1579 = vlaneseq
        %v1580 = vshrl.u32 %v1579, 7
        %v1581 = vsub.s32 0, %v1580
        %v1582 = vrot.slane %v1557, %v1581
        %v1584 = vadd.f32 %v1577, %v1582
        %1585 = vst.msk [vmem:[%s515] sm:$0xff] %vm1247, %v1584
        %s1586 = sand.u32 %s362, 1
        %s1587 = scalar_lea.sflag [#allocation6], %s1586
        %s1588 = sand.u32 %s362, 1
        %s1589 = smul.addr %s1588, 8
        %s1590 = scalar_lea.vmem [#allocation5], %s1589
        // Predicated region
        $region77: #{decoder_blocks_forward.21} parent=75 // pred_check
          %p1591 = pneg %p372
        $region78: #{decoder_blocks_forward.21} parent=75 // pred_check_branch
          %1593 = sbr.rel (%p1591) target = $region80
        $region79: #{decoder_blocks_forward.21} parent=75 // pred_region
          %s1595 = ssub.s32 128, 128
          %1596 = vsyncadd %s1587, %s1595
          %s1597 = smul.addr %s40, 128
          %s1598 = scalar_lea.hbm %s16, %s1597
          %s1600 = sshll.u32 %s1590, 4
          %s1601 = int_to_ptr.vmem [resolvable:$true] %s1600
          %1603 = dma.vmem_to_hbm [thread:$0]  %s1601, 128, %s1598, %s1587
        $region80: #{decoder_blocks_forward.21} parent=75 // pred_fallthru
          _
      $region76: #{decoder_blocks_forward.21} parent=5 // pred_fallthru
        _
      %p1604 = scmp.le.s32.totalorder 2, %s35
      // Predicated region
      $region81: #{decoder_blocks_forward.21} parent=5 // pred_check
        %p1605 = pneg %p1604
      $region82: #{decoder_blocks_forward.21} parent=5 // pred_check_branch
        %1607 = sbr.rel (%p1605) target = $region84
      $region83: #{decoder_blocks_forward.21} parent=5 // pred_region
        %s1608 = ssub.s32 %s35, 2
        // Predicated region
        $region85: #{decoder_blocks_forward.21} parent=83 // pred_check
          %p1609 = pneg %p378
        $region86: #{decoder_blocks_forward.21} parent=83 // pred_check_branch
          %1611 = sbr.rel (%p1609) target = $region88
        $region87: #{decoder_blocks_forward.21} parent=83 // pred_region
          %s1612 = sand.u32 %s363, 1
          %s1613 = scalar_lea.sflag [#allocation6], %s1612
          %s1614 = sand.u32 %s363, 1
          %s1615 = smul.addr %s1614, 8
          %s1616 = scalar_lea.vmem [#allocation5], %s1615
          %1617 = dma.done %s1613, 128
        $region88: #{decoder_blocks_forward.21} parent=83 // pred_fallthru
          _
      $region84: #{decoder_blocks_forward.21} parent=5 // pred_fallthru
        _
    $region6: #{decoder_blocks_forward.21} parent=1 // loop_footer
      %s39 = sadd.s32 1, %s35
    $region7: #{decoder_blocks_forward.21} parent=1 // loop_footer_branch
      %34 = sbr.rel target = $region3
    $region8: #{decoder_blocks_forward.21} parent=1 // loop_exit
      _
    %1618 = vsyncpa [#allocation6], 1
    %s1619 = scalar_lea.sflag [#allocation6], 1
    %1620 = vsyncpa %s1619, 1

// kernel: decoder_blocks_forward.17
$region0: #{decoder_blocks_forward.17}
  #allocation0 [shape = 'u32[]', space=smem, size = 0x4, offset = 0x4, fixed_abs, tag = 'smem constant byte address 0x4 - core index']
  #allocation1 [shape = 'u32[144,128]{1,0:T(1,128)}', space=vmem, size = 0x12000, scoped, tag = 'internal scratch']
  #allocation2 [shape = 's32[1]{0}', space=sflag, size = 0x4, scoped, tag = 'scoped memory for decoder_blocks_forward.17']
  #allocation3 [shape = 'u8[512]{0}', space=smem, size = 0x200, scoped, tag = 'prefetched SMEM operand 0']
  #allocation4 [shape = 'u8[512]{0}', space=smem, size = 0x200, scoped, tag = 'prefetched SMEM operand 1']
  %s0 = inlined_call_operand.vmem [shape: s32[2], index: 0, kind: input, shape index: {}]
  %s1 = inlined_call_operand.vmem [shape: s32[2], index: 1, kind: input, shape index: {}]
  %s2 = inlined_call_operand.vmem [shape: f32[2,4,8,8], index: 2, kind: input, shape index: {}]
  %s3 = inlined_call_operand.vmem [shape: f32[2,4,8,8], index: 3, kind: input, shape index: {}]
  %s4 = inlined_call_operand.vmem [shape: f32[2,4,8,8], index: 4, kind: input, shape index: {}]
  %s5 = inlined_call_operand.vmem [shape: f32[2,8,32], index: 5, kind: input, shape index: {}]
  %s6 = inlined_call_operand.vmem [shape: f32[32,32], index: 6, kind: input, shape index: {}]
  %s7 = inlined_call_operand.vmem [shape: f32[1,32], index: 7, kind: input, shape index: {}]
  %s8 = inlined_call_operand.vmem [shape: f32[1,32], index: 8, kind: input, shape index: {}]
  %s9 = inlined_call_operand.vmem [shape: f32[1,32], index: 9, kind: input, shape index: {}]
  %s10 = inlined_call_operand.vmem [shape: f32[32,64], index: 10, kind: input, shape index: {}]
  %s11 = inlined_call_operand.vmem [shape: f32[1,64], index: 11, kind: input, shape index: {}]
  %s12 = inlined_call_operand.vmem [shape: f32[64,32], index: 12, kind: input, shape index: {}]
  %s13 = inlined_call_operand.vmem [shape: f32[1,32], index: 13, kind: input, shape index: {}]
  %s14 = inlined_call_operand.vmem [shape: f32[1,32], index: 14, kind: input, shape index: {}]
  %s15 = inlined_call_operand.vmem [shape: f32[1,32], index: 15, kind: input, shape index: {}]
  %s16 = inlined_call_operand.vmem [shape: f32[2,8,32], index: 16, kind: output, shape index: {}]
  %s17 = sld [smem:[#allocation0]]
  $region89: #{decoder_blocks_forward.17} parent=0
    _
  %s19 = ssub.s32 1, %s17
  %s20 = scalar_select 0, %s19, %s17
  %s21 = sshll.u32 %s0, 4
  %s22 = int_to_ptr.vmem [resolvable:$true] %s21
  %24 = dma.vmem_to_smem %s22, 16, [#allocation3], [#allocation2]
  %s25 = sshll.u32 %s1, 4
  %s26 = int_to_ptr.vmem [resolvable:$true] %s25
  %28 = dma.vmem_to_smem %s26, 16, [#allocation4], [#allocation2]
  %29 = dma.done [#allocation2], 32
  %30 = sfence
  loop: start=0, step=1, limit=4
  $region2: #{decoder_blocks_forward.17} parent=0 // loop_pre_header
    _
  $region3: #{decoder_blocks_forward.17} parent=0 // loop_header
    %s32 = sphi 0, %s36
    %p33 = scmp.ge.s32.totalorder %s32, 4
    %s42 = sphi 0, %s44
    %s45 = sphi 0, %s42
    %s46 = sphi 0, %s45
    %s62 = sphi 0, %s46
    %s68 = sphi 0, %s70
    %s71 = sphi 0, %s68
    %s72 = sphi 0, %s71
    %s88 = sphi 0, %s72
    %s94 = sphi 0, %s96
    %s97 = sphi 0, %s94
    %s98 = sphi 0, %s97
    %s114 = sphi 0, %s98
    %s120 = sphi 0, %s122
    %s123 = sphi 0, %s120
    %s124 = sphi 0, %s123
    %s140 = sphi 0, %s124
    %s144 = sphi 0, %s144
    %s146 = sphi 0, %s144
    %s147 = sphi 0, %s146
    %s161 = sphi 0, %s147
    %s165 = sphi 0, %s165
    %s167 = sphi 0, %s165
    %s168 = sphi 0, %s167
    %s182 = sphi 0, %s168
    %s186 = sphi 0, %s186
    %s188 = sphi 0, %s186
    %s189 = sphi 0, %s188
    %s203 = sphi 0, %s189
    %s207 = sphi 0, %s207
    %s209 = sphi 0, %s207
    %s210 = sphi 0, %s209
    %s224 = sphi 0, %s210
    %s228 = sphi 0, %s228
    %s230 = sphi 0, %s228
    %s231 = sphi 0, %s230
    %s245 = sphi 0, %s231
    %s249 = sphi 0, %s249
    %s251 = sphi 0, %s249
    %s252 = sphi 0, %s251
    %s266 = sphi 0, %s252
    %s270 = sphi 0, %s270
    %s272 = sphi 0, %s270
    %s273 = sphi 0, %s272
    %s287 = sphi 0, %s273
    %s291 = sphi 0, %s291
    %s293 = sphi 0, %s291
    %s294 = sphi 0, %s293
    %s308 = sphi 0, %s294
    %s312 = sphi 0, %s312
    %s314 = sphi 0, %s312
    %s315 = sphi 0, %s314
    %s329 = sphi 0, %s315
    %s333 = sphi 0, %s333
    %s335 = sphi 0, %s333
    %s336 = sphi 0, %s335
    %s350 = sphi 0, %s336
    %s356 = sphi 0, %s358
    %s359 = sphi 0, %s356
    %s360 = sphi 0, %s359
    %s376 = sphi 0, %s360
  $region4: #{decoder_blocks_forward.17} parent=0 // loop_header_branch
    %35 = sbr.rel (%p33) target = $region8
  $region5: #{decoder_blocks_forward.17} parent=0 // loop_body
    %s37 = ssub.s32 %s32, 1
    %s38 = ssub.s32 %s32, 2
    %s39 = sadd.s32 %s32, 1
    %s40 = ssub.s32 %s32, %s39
    %p41 = scmp.eq.s32.totalorder %s40, 0
    %s43 = sadd.s32 %s42, 1
    %s44 = scalar_select %p41, %s42, %s43
    %p47 = pneg %p41
    %p48 = scmp.eq.s32.totalorder %s32, 1
    %p49 = por %p47, %p48
    %p50 = scmp.ne.s32.totalorder %s42, %s45
    %p51 = scmp.eq.s32.totalorder %s32, 0
    %p52 = por %p50, %p51
    %p53 = scmp.ne.s32.totalorder %s42, %s45
    %p54 = scmp.eq.s32.totalorder %s37, 1
    %p55 = por %p53, %p54
    %p56 = scmp.ne.s32.totalorder %s45, %s46
    %p57 = scmp.eq.s32.totalorder %s37, 0
    %p58 = por %p56, %p57
    %p59 = scmp.ne.s32.totalorder %s45, %s46
    %p60 = scmp.eq.s32.totalorder %s38, 1
    %p61 = por %p59, %p60
    %p63 = scmp.ne.s32.totalorder %s46, %s62
    %p64 = scmp.eq.s32.totalorder %s38, 0
    %p65 = por %p63, %p64
    %s66 = ssub.s32 %s32, %s39
    %p67 = scmp.eq.s32.totalorder %s66, 0
    %s69 = sadd.s32 %s68, 1
    %s70 = scalar_select %p67, %s68, %s69
    %p73 = pneg %p67
    %p74 = scmp.eq.s32.totalorder %s32, 1
    %p75 = por %p73, %p74
    %p76 = scmp.ne.s32.totalorder %s68, %s71
    %p77 = scmp.eq.s32.totalorder %s32, 0
    %p78 = por %p76, %p77
    %p79 = scmp.ne.s32.totalorder %s68, %s71
    %p80 = scmp.eq.s32.totalorder %s37, 1
    %p81 = por %p79, %p80
    %p82 = scmp.ne.s32.totalorder %s71, %s72
    %p83 = scmp.eq.s32.totalorder %s37, 0
    %p84 = por %p82, %p83
    %p85 = scmp.ne.s32.totalorder %s71, %s72
    %p86 = scmp.eq.s32.totalorder %s38, 1
    %p87 = por %p85, %p86
    %p89 = scmp.ne.s32.totalorder %s72, %s88
    %p90 = scmp.eq.s32.totalorder %s38, 0
    %p91 = por %p89, %p90
    %s92 = ssub.s32 %s32, %s39
    %p93 = scmp.eq.s32.totalorder %s92, 0
    %s95 = sadd.s32 %s94, 1
    %s96 = scalar_select %p93, %s94, %s95
    %p99 = pneg %p93
    %p100 = scmp.eq.s32.totalorder %s32, 1
    %p101 = por %p99, %p100
    %p102 = scmp.ne.s32.totalorder %s94, %s97
    %p103 = scmp.eq.s32.totalorder %s32, 0
    %p104 = por %p102, %p103
    %p105 = scmp.ne.s32.totalorder %s94, %s97
    %p106 = scmp.eq.s32.totalorder %s37, 1
    %p107 = por %p105, %p106
    %p108 = scmp.ne.s32.totalorder %s97, %s98
    %p109 = scmp.eq.s32.totalorder %s37, 0
    %p110 = por %p108, %p109
    %p111 = scmp.ne.s32.totalorder %s97, %s98
    %p112 = scmp.eq.s32.totalorder %s38, 1
    %p113 = por %p111, %p112
    %p115 = scmp.ne.s32.totalorder %s98, %s114
    %p116 = scmp.eq.s32.totalorder %s38, 0
    %p117 = por %p115, %p116
    %s118 = ssub.s32 %s32, %s39
    %p119 = scmp.eq.s32.totalorder %s118, 0
    %s121 = sadd.s32 %s120, 1
    %s122 = scalar_select %p119, %s120, %s121
    %p125 = pneg %p119
    %p126 = scmp.eq.s32.totalorder %s32, 1
    %p127 = por %p125, %p126
    %p128 = scmp.ne.s32.totalorder %s120, %s123
    %p129 = scmp.eq.s32.totalorder %s32, 0
    %p130 = por %p128, %p129
    %p131 = scmp.ne.s32.totalorder %s120, %s123
    %p132 = scmp.eq.s32.totalorder %s37, 1
    %p133 = por %p131, %p132
    %p134 = scmp.ne.s32.totalorder %s123, %s124
    %p135 = scmp.eq.s32.totalorder %s37, 0
    %p136 = por %p134, %p135
    %p137 = scmp.ne.s32.totalorder %s123, %s124
    %p138 = scmp.eq.s32.totalorder %s38, 1
    %p139 = por %p137, %p138
    %p141 = scmp.ne.s32.totalorder %s124, %s140
    %p142 = scmp.eq.s32.totalorder %s38, 0
    %p143 = por %p141, %p142
    %s145 = sadd.s32 %s144, 1
    %p148 = scmp.eq.s32.totalorder %s32, 1
    %p149 = scmp.ne.s32.totalorder %s144, %s146
    %p150 = scmp.eq.s32.totalorder %s32, 0
    %p151 = por %p149, %p150
    %p152 = scmp.ne.s32.totalorder %s144, %s146
    %p153 = scmp.eq.s32.totalorder %s37, 1
    %p154 = por %p152, %p153
    %p155 = scmp.ne.s32.totalorder %s146, %s147
    %p156 = scmp.eq.s32.totalorder %s37, 0
    %p157 = por %p155, %p156
    %p158 = scmp.ne.s32.totalorder %s146, %s147
    %p159 = scmp.eq.s32.totalorder %s38, 1
    %p160 = por %p158, %p159
    %p162 = scmp.ne.s32.totalorder %s147, %s161
    %p163 = scmp.eq.s32.totalorder %s38, 0
    %p164 = por %p162, %p163
    %s166 = sadd.s32 %s165, 1
    %p169 = scmp.eq.s32.totalorder %s32, 1
    %p170 = scmp.ne.s32.totalorder %s165, %s167
    %p171 = scmp.eq.s32.totalorder %s32, 0
    %p172 = por %p170, %p171
    %p173 = scmp.ne.s32.totalorder %s165, %s167
    %p174 = scmp.eq.s32.totalorder %s37, 1
    %p175 = por %p173, %p174
    %p176 = scmp.ne.s32.totalorder %s167, %s168
    %p177 = scmp.eq.s32.totalorder %s37, 0
    %p178 = por %p176, %p177
    %p179 = scmp.ne.s32.totalorder %s167, %s168
    %p180 = scmp.eq.s32.totalorder %s38, 1
    %p181 = por %p179, %p180
    %p183 = scmp.ne.s32.totalorder %s168, %s182
    %p184 = scmp.eq.s32.totalorder %s38, 0
    %p185 = por %p183, %p184
    %s187 = sadd.s32 %s186, 1
    %p190 = scmp.eq.s32.totalorder %s32, 1
    %p191 = scmp.ne.s32.totalorder %s186, %s188
    %p192 = scmp.eq.s32.totalorder %s32, 0
    %p193 = por %p191, %p192
    %p194 = scmp.ne.s32.totalorder %s186, %s188
    %p195 = scmp.eq.s32.totalorder %s37, 1
    %p196 = por %p194, %p195
    %p197 = scmp.ne.s32.totalorder %s188, %s189
    %p198 = scmp.eq.s32.totalorder %s37, 0
    %p199 = por %p197, %p198
    %p200 = scmp.ne.s32.totalorder %s188, %s189
    %p201 = scmp.eq.s32.totalorder %s38, 1
    %p202 = por %p200, %p201
    %p204 = scmp.ne.s32.totalorder %s189, %s203
    %p205 = scmp.eq.s32.totalorder %s38, 0
    %p206 = por %p204, %p205
    %s208 = sadd.s32 %s207, 1
    %p211 = scmp.eq.s32.totalorder %s32, 1
    %p212 = scmp.ne.s32.totalorder %s207, %s209
    %p213 = scmp.eq.s32.totalorder %s32, 0
    %p214 = por %p212, %p213
    %p215 = scmp.ne.s32.totalorder %s207, %s209
    %p216 = scmp.eq.s32.totalorder %s37, 1
    %p217 = por %p215, %p216
    %p218 = scmp.ne.s32.totalorder %s209, %s210
    %p219 = scmp.eq.s32.totalorder %s37, 0
    %p220 = por %p218, %p219
    %p221 = scmp.ne.s32.totalorder %s209, %s210
    %p222 = scmp.eq.s32.totalorder %s38, 1
    %p223 = por %p221, %p222
    %p225 = scmp.ne.s32.totalorder %s210, %s224
    %p226 = scmp.eq.s32.totalorder %s38, 0
    %p227 = por %p225, %p226
    %s229 = sadd.s32 %s228, 1
    %p232 = scmp.eq.s32.totalorder %s32, 1
    %p233 = scmp.ne.s32.totalorder %s228, %s230
    %p234 = scmp.eq.s32.totalorder %s32, 0
    %p235 = por %p233, %p234
    %p236 = scmp.ne.s32.totalorder %s228, %s230
    %p237 = scmp.eq.s32.totalorder %s37, 1
    %p238 = por %p236, %p237
    %p239 = scmp.ne.s32.totalorder %s230, %s231
    %p240 = scmp.eq.s32.totalorder %s37, 0
    %p241 = por %p239, %p240
    %p242 = scmp.ne.s32.totalorder %s230, %s231
    %p243 = scmp.eq.s32.totalorder %s38, 1
    %p244 = por %p242, %p243
    %p246 = scmp.ne.s32.totalorder %s231, %s245
    %p247 = scmp.eq.s32.totalorder %s38, 0
    %p248 = por %p246, %p247
    %s250 = sadd.s32 %s249, 1
    %p253 = scmp.eq.s32.totalorder %s32, 1
    %p254 = scmp.ne.s32.totalorder %s249, %s251
    %p255 = scmp.eq.s32.totalorder %s32, 0
    %p256 = por %p254, %p255
    %p257 = scmp.ne.s32.totalorder %s249, %s251
    %p258 = scmp.eq.s32.totalorder %s37, 1
    %p259 = por %p257, %p258
    %p260 = scmp.ne.s32.totalorder %s251, %s252
    %p261 = scmp.eq.s32.totalorder %s37, 0
    %p262 = por %p260, %p261
    %p263 = scmp.ne.s32.totalorder %s251, %s252
    %p264 = scmp.eq.s32.totalorder %s38, 1
    %p265 = por %p263, %p264
    %p267 = scmp.ne.s32.totalorder %s252, %s266
    %p268 = scmp.eq.s32.totalorder %s38, 0
    %p269 = por %p267, %p268
    %s271 = sadd.s32 %s270, 1
    %p274 = scmp.eq.s32.totalorder %s32, 1
    %p275 = scmp.ne.s32.totalorder %s270, %s272
    %p276 = scmp.eq.s32.totalorder %s32, 0
    %p277 = por %p275, %p276
    %p278 = scmp.ne.s32.totalorder %s270, %s272
    %p279 = scmp.eq.s32.totalorder %s37, 1
    %p280 = por %p278, %p279
    %p281 = scmp.ne.s32.totalorder %s272, %s273
    %p282 = scmp.eq.s32.totalorder %s37, 0
    %p283 = por %p281, %p282
    %p284 = scmp.ne.s32.totalorder %s272, %s273
    %p285 = scmp.eq.s32.totalorder %s38, 1
    %p286 = por %p284, %p285
    %p288 = scmp.ne.s32.totalorder %s273, %s287
    %p289 = scmp.eq.s32.totalorder %s38, 0
    %p290 = por %p288, %p289
    %s292 = sadd.s32 %s291, 1
    %p295 = scmp.eq.s32.totalorder %s32, 1
    %p296 = scmp.ne.s32.totalorder %s291, %s293
    %p297 = scmp.eq.s32.totalorder %s32, 0
    %p298 = por %p296, %p297
    %p299 = scmp.ne.s32.totalorder %s291, %s293
    %p300 = scmp.eq.s32.totalorder %s37, 1
    %p301 = por %p299, %p300
    %p302 = scmp.ne.s32.totalorder %s293, %s294
    %p303 = scmp.eq.s32.totalorder %s37, 0
    %p304 = por %p302, %p303
    %p305 = scmp.ne.s32.totalorder %s293, %s294
    %p306 = scmp.eq.s32.totalorder %s38, 1
    %p307 = por %p305, %p306
    %p309 = scmp.ne.s32.totalorder %s294, %s308
    %p310 = scmp.eq.s32.totalorder %s38, 0
    %p311 = por %p309, %p310
    %s313 = sadd.s32 %s312, 1
    %p316 = scmp.eq.s32.totalorder %s32, 1
    %p317 = scmp.ne.s32.totalorder %s312, %s314
    %p318 = scmp.eq.s32.totalorder %s32, 0
    %p319 = por %p317, %p318
    %p320 = scmp.ne.s32.totalorder %s312, %s314
    %p321 = scmp.eq.s32.totalorder %s37, 1
    %p322 = por %p320, %p321
    %p323 = scmp.ne.s32.totalorder %s314, %s315
    %p324 = scmp.eq.s32.totalorder %s37, 0
    %p325 = por %p323, %p324
    %p326 = scmp.ne.s32.totalorder %s314, %s315
    %p327 = scmp.eq.s32.totalorder %s38, 1
    %p328 = por %p326, %p327
    %p330 = scmp.ne.s32.totalorder %s315, %s329
    %p331 = scmp.eq.s32.totalorder %s38, 0
    %p332 = por %p330, %p331
    %s334 = sadd.s32 %s333, 1
    %p337 = scmp.eq.s32.totalorder %s32, 1
    %p338 = scmp.ne.s32.totalorder %s333, %s335
    %p339 = scmp.eq.s32.totalorder %s32, 0
    %p340 = por %p338, %p339
    %p341 = scmp.ne.s32.totalorder %s333, %s335
    %p342 = scmp.eq.s32.totalorder %s37, 1
    %p343 = por %p341, %p342
    %p344 = scmp.ne.s32.totalorder %s335, %s336
    %p345 = scmp.eq.s32.totalorder %s37, 0
    %p346 = por %p344, %p345
    %p347 = scmp.ne.s32.totalorder %s335, %s336
    %p348 = scmp.eq.s32.totalorder %s38, 1
    %p349 = por %p347, %p348
    %p351 = scmp.ne.s32.totalorder %s336, %s350
    %p352 = scmp.eq.s32.totalorder %s38, 0
    %p353 = por %p351, %p352
    %s354 = ssub.s32 %s32, %s39
    %p355 = scmp.eq.s32.totalorder %s354, 0
    %s357 = sadd.s32 %s356, 1
    %s358 = scalar_select %p355, %s356, %s357
    %p361 = pneg %p355
    %p362 = scmp.eq.s32.totalorder %s32, 1
    %p363 = por %p361, %p362
    %p364 = scmp.ne.s32.totalorder %s356, %s359
    %p365 = scmp.eq.s32.totalorder %s32, 0
    %p366 = por %p364, %p365
    %p367 = scmp.ne.s32.totalorder %s356, %s359
    %p368 = scmp.eq.s32.totalorder %s37, 1
    %p369 = por %p367, %p368
    %p370 = scmp.ne.s32.totalorder %s359, %s360
    %p371 = scmp.eq.s32.totalorder %s37, 0
    %p372 = por %p370, %p371
    %p373 = scmp.ne.s32.totalorder %s359, %s360
    %p374 = scmp.eq.s32.totalorder %s38, 1
    %p375 = por %p373, %p374
    %p377 = scmp.ne.s32.totalorder %s360, %s376
    %p378 = scmp.eq.s32.totalorder %s38, 0
    %p379 = por %p377, %p378
    %p380 = scmp.le.s32.totalorder 1, %s32
    %p381 = scmp.lt.s32.totalorder %s32, 3
    %p382 = pnand %p380, %p381
    %p383 = pneg %p382
    // Predicated region
    $region9: #{decoder_blocks_forward.17} parent=5 // pred_check
      _
    $region10: #{decoder_blocks_forward.17} parent=5 // pred_check_branch
      %385 = sbr.rel (%p382) target = $region12
    $region11: #{decoder_blocks_forward.17} parent=5 // pred_region
      %s386 = ssub.s32 %s32, 1
      // Predicated region
      $region13: #{decoder_blocks_forward.17} parent=11 // pred_check
        %p387 = pneg %p157
      $region14: #{decoder_blocks_forward.17} parent=11 // pred_check_branch
        %389 = sbr.rel (%p387) target = $region16
      $region15: #{decoder_blocks_forward.17} parent=11 // pred_region
        _
      $region16: #{decoder_blocks_forward.17} parent=11 // pred_fallthru
        _
      // Predicated region
      $region17: #{decoder_blocks_forward.17} parent=11 // pred_check
        %p390 = pneg %p178
      $region18: #{decoder_blocks_forward.17} parent=11 // pred_check_branch
        %392 = sbr.rel (%p390) target = $region20
      $region19: #{decoder_blocks_forward.17} parent=11 // pred_region
        _
      $region20: #{decoder_blocks_forward.17} parent=11 // pred_fallthru
        _
      // Predicated region
      $region21: #{decoder_blocks_forward.17} parent=11 // pred_check
        %p393 = pneg %p199
      $region22: #{decoder_blocks_forward.17} parent=11 // pred_check_branch
        %395 = sbr.rel (%p393) target = $region24
      $region23: #{decoder_blocks_forward.17} parent=11 // pred_region
        _
      $region24: #{decoder_blocks_forward.17} parent=11 // pred_fallthru
        _
      // Predicated region
      $region25: #{decoder_blocks_forward.17} parent=11 // pred_check
        %p396 = pneg %p220
      $region26: #{decoder_blocks_forward.17} parent=11 // pred_check_branch
        %398 = sbr.rel (%p396) target = $region28
      $region27: #{decoder_blocks_forward.17} parent=11 // pred_region
        _
      $region28: #{decoder_blocks_forward.17} parent=11 // pred_fallthru
        _
      // Predicated region
      $region29: #{decoder_blocks_forward.17} parent=11 // pred_check
        %p399 = pneg %p241
      $region30: #{decoder_blocks_forward.17} parent=11 // pred_check_branch
        %401 = sbr.rel (%p399) target = $region32
      $region31: #{decoder_blocks_forward.17} parent=11 // pred_region
        _
      $region32: #{decoder_blocks_forward.17} parent=11 // pred_fallthru
        _
      // Predicated region
      $region33: #{decoder_blocks_forward.17} parent=11 // pred_check
        %p402 = pneg %p262
      $region34: #{decoder_blocks_forward.17} parent=11 // pred_check_branch
        %404 = sbr.rel (%p402) target = $region36
      $region35: #{decoder_blocks_forward.17} parent=11 // pred_region
        _
      $region36: #{decoder_blocks_forward.17} parent=11 // pred_fallthru
        _
      // Predicated region
      $region37: #{decoder_blocks_forward.17} parent=11 // pred_check
        %p405 = pneg %p283
      $region38: #{decoder_blocks_forward.17} parent=11 // pred_check_branch
        %407 = sbr.rel (%p405) target = $region40
      $region39: #{decoder_blocks_forward.17} parent=11 // pred_region
        _
      $region40: #{decoder_blocks_forward.17} parent=11 // pred_fallthru
        _
      // Predicated region
      $region41: #{decoder_blocks_forward.17} parent=11 // pred_check
        %p408 = pneg %p304
      $region42: #{decoder_blocks_forward.17} parent=11 // pred_check_branch
        %410 = sbr.rel (%p408) target = $region44
      $region43: #{decoder_blocks_forward.17} parent=11 // pred_region
        _
      $region44: #{decoder_blocks_forward.17} parent=11 // pred_fallthru
        _
      // Predicated region
      $region45: #{decoder_blocks_forward.17} parent=11 // pred_check
        %p411 = pneg %p325
      $region46: #{decoder_blocks_forward.17} parent=11 // pred_check_branch
        %413 = sbr.rel (%p411) target = $region48
      $region47: #{decoder_blocks_forward.17} parent=11 // pred_region
        _
      $region48: #{decoder_blocks_forward.17} parent=11 // pred_fallthru
        _
      // Predicated region
      $region49: #{decoder_blocks_forward.17} parent=11 // pred_check
        %p414 = pneg %p346
      $region50: #{decoder_blocks_forward.17} parent=11 // pred_check_branch
        %416 = sbr.rel (%p414) target = $region52
      $region51: #{decoder_blocks_forward.17} parent=11 // pred_region
        _
      $region52: #{decoder_blocks_forward.17} parent=11 // pred_fallthru
        _
    $region12: #{decoder_blocks_forward.17} parent=5 // pred_fallthru
      _
    %p417 = scmp.lt.s32.totalorder %s32, 2
    // Predicated region
    $region53: #{decoder_blocks_forward.17} parent=5 // pred_check
      %p418 = pneg %p417
    $region54: #{decoder_blocks_forward.17} parent=5 // pred_check_branch
      %420 = sbr.rel (%p418) target = $region56
    $region55: #{decoder_blocks_forward.17} parent=5 // pred_region
      // Predicated region
      $region57: #{decoder_blocks_forward.17} parent=55 // pred_check
        %p421 = pneg %p52
      $region58: #{decoder_blocks_forward.17} parent=55 // pred_check_branch
        %423 = sbr.rel (%p421) target = $region60
      $region59: #{decoder_blocks_forward.17} parent=55 // pred_region
        %p424 = scmp.lt.s32.totalorder %s32, 1
        %s425 = scalar_select %p424, %s32, 1
        %s426 = smul.addr %s425, 4
        %s427 = smul.addr %s426, 8
        %s428 = scalar_lea.vmem %s2, %s427
      $region60: #{decoder_blocks_forward.17} parent=55 // pred_fallthru
        _
      // Predicated region
      $region61: #{decoder_blocks_forward.17} parent=55 // pred_check
        %p429 = pneg %p78
      $region62: #{decoder_blocks_forward.17} parent=55 // pred_check_branch
        %431 = sbr.rel (%p429) target = $region64
      $region63: #{decoder_blocks_forward.17} parent=55 // pred_region
        %p432 = scmp.lt.s32.totalorder %s32, 1
        %s433 = scalar_select %p432, %s32, 1
        %s434 = smul.addr %s433, 4
        %s435 = smul.addr %s434, 8
        %s436 = scalar_lea.vmem %s3, %s435
      $region64: #{decoder_blocks_forward.17} parent=55 // pred_fallthru
        _
      // Predicated region
      $region65: #{decoder_blocks_forward.17} parent=55 // pred_check
        %p437 = pneg %p104
      $region66: #{decoder_blocks_forward.17} parent=55 // pred_check_branch
        %439 = sbr.rel (%p437) target = $region68
      $region67: #{decoder_blocks_forward.17} parent=55 // pred_region
        %p440 = scmp.lt.s32.totalorder %s32, 1
        %s441 = scalar_select %p440, %s32, 1
        %s442 = smul.addr %s441, 4
        %s443 = smul.addr %s442, 8
        %s444 = scalar_lea.vmem %s4, %s443
      $region68: #{decoder_blocks_forward.17} parent=55 // pred_fallthru
        _
      // Predicated region
      $region69: #{decoder_blocks_forward.17} parent=55 // pred_check
        %p445 = pneg %p130
      $region70: #{decoder_blocks_forward.17} parent=55 // pred_check_branch
        %447 = sbr.rel (%p445) target = $region72
      $region71: #{decoder_blocks_forward.17} parent=55 // pred_region
        %p448 = scmp.lt.s32.totalorder %s32, 1
        %s449 = scalar_select %p448, %s32, 1
        %s450 = smul.addr %s449, 8
        %s451 = scalar_lea.vmem %s5, %s450
      $region72: #{decoder_blocks_forward.17} parent=55 // pred_fallthru
        _
    $region56: #{decoder_blocks_forward.17} parent=5 // pred_fallthru
      _
    %p452 = scmp.le.s32.totalorder 1, %s32
    %p453 = scmp.lt.s32.totalorder %s32, 3
    %p454 = pnand %p452, %p453
    %p455 = pneg %p454
    // Predicated region
    $region73: #{decoder_blocks_forward.17} parent=5 // pred_check
      _
    $region74: #{decoder_blocks_forward.17} parent=5 // pred_check_branch
      %457 = sbr.rel (%p454) target = $region76
    $region75: #{decoder_blocks_forward.17} parent=5 // pred_region
      %s458 = ssub.s32 %s32, 1
      %p459 = scmp.lt.s32.totalorder %s37, 1
      %s460 = scalar_select %p459, %s37, 1
      %s461 = smul.addr %s460, 4
      %s462 = smul.addr %s461, 8
      %s463 = scalar_lea.vmem %s2, %s462
      %p464 = pneg %p58
      %p465 = pneg %p55
      %p466 = scmp.lt.s32.totalorder %s37, 1
      %s467 = scalar_select %p466, %s37, 1
      %s468 = smul.addr %s467, 4
      %s469 = smul.addr %s468, 8
      %s470 = scalar_lea.vmem %s3, %s469
      %p471 = pneg %p84
      %p472 = pneg %p81
      %p473 = scmp.lt.s32.totalorder %s37, 1
      %s474 = scalar_select %p473, %s37, 1
      %s475 = smul.addr %s474, 4
      %s476 = smul.addr %s475, 8
      %s477 = scalar_lea.vmem %s4, %s476
      %p478 = pneg %p110
      %p479 = pneg %p107
      %p480 = scmp.lt.s32.totalorder %s37, 1
      %s481 = scalar_select %p480, %s37, 1
      %s482 = smul.addr %s481, 8
      %s483 = scalar_lea.vmem %s5, %s482
      %p484 = pneg %p136
      %p485 = pneg %p133
      %p486 = pneg %p157
      %p487 = pneg %p154
      %p488 = pneg %p178
      %p489 = pneg %p175
      %p490 = pneg %p199
      %p491 = pneg %p196
      %p492 = pneg %p220
      %p493 = pneg %p217
      %p494 = pneg %p241
      %p495 = pneg %p238
      %p496 = pneg %p262
      %p497 = pneg %p259
      %p498 = pneg %p283
      %p499 = pneg %p280
      %p500 = pneg %p304
      %p501 = pneg %p301
      %p502 = pneg %p325
      %p503 = pneg %p322
      %p504 = pneg %p346
      %p505 = pneg %p343
      %p506 = pneg %p372
      %p507 = pneg %p369
      %p508 = scmp.lt.s32.totalorder %s37, 1
      %s509 = scalar_select %p508, %s37, 1
      %s510 = smul.addr %s509, 8
      %s511 = scalar_lea.vmem %s16, %s510
      %p512 = scmp.lt.s32.totalorder %s37, 1
      %s513 = scalar_select %p512, %s37, 1
      %s514 = smul.addr %s513, 4
      %s515 = smul.addr %s514, 8
      %s516 = scalar_lea.vmem %s2, %s515
      %p517 = scmp.lt.s32.totalorder %s37, 1
      %s518 = scalar_select %p517, %s37, 1
      %s519 = smul.addr %s518, 4
      %s520 = smul.addr %s519, 8
      %s521 = scalar_lea.vmem %s3, %s520
      %p522 = scmp.lt.s32.totalorder %s37, 1
      %s523 = scalar_select %p522, %s37, 1
      %s524 = smul.addr %s523, 4
      %s525 = smul.addr %s524, 8
      %s526 = scalar_lea.vmem %s4, %s525
      %p527 = scmp.lt.s32.totalorder %s37, 1
      %s528 = scalar_select %p527, %s37, 1
      %s529 = smul.addr %s528, 8
      %s530 = scalar_lea.vmem %s5, %s529
      %p531 = scmp.lt.s32.totalorder %s37, 1
      %s532 = scalar_select %p531, %s37, 1
      %s533 = smul.addr %s532, 8
      %s534 = scalar_lea.vmem %s16, %s533
      %s535 = sld [smem:[#allocation3 + %s37]]
      %s536 = sld [smem:[#allocation4 + %s37]]
      %v537 = vlaneseq
      %v538 = vand.u32 %v537, 127
      %v539 = vstv %s536
      %vm540 = vcmp.ge.s32.totalorder %v538, %v539
      %v541 = vld [vmem:[%s516] sm:$0xff]
      %v542 = vmul.f32 %v541, 0.35355338
      %v543 = vld [vmem:[%s521] sm:$0xff]
      %v544 = vld [vmem:[%s526] sm:$0xff]
      %vm545 = vcmask 64512
      %v547 = vsel %vm545, %v542, 0
      %v550 = vsel %vm545, %v543, 0
      %552 = vmatprep.subr.mxu0 0.0
      %553 = vmatpush1.xpose.msra.mxu0 %v550
      %554 = vmatprep.subr.mxu0 0.0
      %555 = vmatpush1.xpose.msra.mxu0 0.0
      %556 = vmatprep.subr.mxu0 0.0
      %557 = vmatpush1.xpose.msra.mxu0 0.0
      %558 = vmatprep.subr.mxu0 0.0
      %559 = vmatpush1.xpose.msra.mxu0 0.0
      %560 = vmatprep.subr.mxu0 0.0
      %561 = vmatpush1.xpose.msra.mxu0 0.0
      %562 = vmatprep.subr.mxu0 0.0
      %563 = vmatpush1.xpose.msra.mxu0 0.0
      %564 = vmatprep.subr.mxu0 0.0
      %565 = vmatpush1.xpose.msra.mxu0 0.0
      %566 = vmatprep.subr.mxu0 0.0
      %567 = vmatpush1.xpose.msra.mxu0 0.0
      %568 = vmatprep.subr.mxu0 0.0
      %569 = vmatpush1.xpose.msra.mxu0 0.0
      %570 = vmatprep.subr.mxu0 0.0
      %571 = vmatpush1.xpose.msra.mxu0 0.0
      %572 = vmatprep.subr.mxu0 0.0
      %573 = vmatpush1.xpose.msra.mxu0 0.0
      %574 = vmatprep.subr.mxu0 0.0
      %575 = vmatpush1.xpose.msra.mxu0 0.0
      %576 = vmatprep.subr.mxu0 0.0
      %577 = vmatpush1.xpose.msra.mxu0 0.0
      %578 = vmatprep.subr.mxu0 0.0
      %579 = vmatpush1.xpose.msra.mxu0 0.0
      %580 = vmatprep.subr.mxu0 0.0
      %581 = vmatpush1.xpose.msra.mxu0 0.0
      %582 = vmatprep.subr.mxu0 0.0
      %583 = vmatpush1.xpose.msra.mxu0 0.0
      %584 = vmatprep.subr.mxu0 0.0
      %585 = vmatpush1.xpose.msra.mxu0 0.0
      %586 = vmatprep.subr.mxu0 0.0
      %587 = vmatpush1.xpose.msra.mxu0 0.0
      %588 = vmatprep.subr.mxu0 0.0
      %589 = vmatpush1.xpose.msra.mxu0 0.0
      %590 = vmatprep.subr.mxu0 0.0
      %591 = vmatpush1.xpose.msra.mxu0 0.0
      %592 = vmatprep.subr.mxu0 0.0
      %593 = vmatpush1.xpose.msra.mxu0 0.0
      %594 = vmatprep.subr.mxu0 0.0
      %595 = vmatpush1.xpose.msra.mxu0 0.0
      %596 = vmatprep.subr.mxu0 0.0
      %597 = vmatpush1.xpose.msra.mxu0 0.0
      %598 = vmatprep.subr.mxu0 0.0
      %599 = vmatpush1.xpose.msra.mxu0 0.0
      %600 = vmatprep.subr.mxu0 0.0
      %601 = vmatpush1.xpose.msra.mxu0 0.0
      %602 = vmatprep.subr.mxu0 0.0
      %603 = vmatpush1.xpose.msra.mxu0 0.0
      %604 = vmatprep.subr.mxu0 0.0
      %605 = vmatpush1.xpose.msra.mxu0 0.0
      %606 = vmatprep.subr.mxu0 0.0
      %607 = vmatpush1.xpose.msra.mxu0 0.0
      %608 = vmatprep.subr.mxu0 0.0
      %609 = vmatpush1.xpose.msra.mxu0 0.0
      %610 = vmatprep.subr.mxu0 0.0
      %611 = vmatpush1.xpose.msra.mxu0 0.0
      %612 = vmatprep.subr.mxu0 0.0
      %613 = vmatpush1.xpose.msra.mxu0 0.0
      %614 = vmatprep.subr.mxu0 0.0
      %615 = vmatpush1.xpose.msra.mxu0 0.0
      %616 = vmatprep.mubr.f32.mxu0 0.0
      %617 = vmatmul.mubr.f32.gmra.mrb[0].mxu0 %v547
      %v618 = vpop.f32.mrb[0].mxu0
      %v619 = vadd.f32 0.0, %v618
      %v620 = vpop.f32.mrb[0].mxu0
      %621 = vdwg.mxu0
      %v622 = vsel %vm540, -inf, %v619
      %v623 = vsel %vm545, %v622, -inf
      %624 = vmax.xlane.f32.xlu0 %v623
      %v625 = vpop.xlane.xlu0 %624
      %v626 = vsub.f32 %v622, %v625
      %v627 = vmul.f32 %v626, 1.442695
      %v628 = vpow.pop %v627
      %v629 = vsel %vm545, %v628, 0.0
      %630 = vadd.xlane.f32.xlu0 %v629
      %v631 = vpop.xlane.xlu0 %630
      %v633 = vsel %vm545, %v628, 0
      %635 = vmatprep.subr.mxu0 0.0
      %636 = vmatpush1.msra.mxu0 %v544
      %637 = vmatprep.subr.mxu0 0.0
      %638 = vmatpush1.msra.mxu0 0.0
      %639 = vmatprep.subr.mxu0 0.0
      %640 = vmatpush1.msra.mxu0 0.0
      %641 = vmatprep.subr.mxu0 0.0
      %642 = vmatpush1.msra.mxu0 0.0
      %643 = vmatprep.subr.mxu0 0.0
      %644 = vmatpush1.msra.mxu0 0.0
      %645 = vmatprep.subr.mxu0 0.0
      %646 = vmatpush1.msra.mxu0 0.0
      %647 = vmatprep.subr.mxu0 0.0
      %648 = vmatpush1.msra.mxu0 0.0
      %649 = vmatprep.subr.mxu0 0.0
      %650 = vmatpush1.msra.mxu0 0.0
      %651 = vmatprep.subr.mxu0 0.0
      %652 = vmatpush1.msra.mxu0 0.0
      %653 = vmatprep.subr.mxu0 0.0
      %654 = vmatpush1.msra.mxu0 0.0
      %655 = vmatprep.subr.mxu0 0.0
      %656 = vmatpush1.msra.mxu0 0.0
      %657 = vmatprep.subr.mxu0 0.0
      %658 = vmatpush1.msra.mxu0 0.0
      %659 = vmatprep.subr.mxu0 0.0
      %660 = vmatpush1.msra.mxu0 0.0
      %661 = vmatprep.subr.mxu0 0.0
      %662 = vmatpush1.msra.mxu0 0.0
      %663 = vmatprep.subr.mxu0 0.0
      %664 = vmatpush1.msra.mxu0 0.0
      %665 = vmatprep.subr.mxu0 0.0
      %666 = vmatpush1.msra.mxu0 0.0
      %667 = vmatprep.subr.mxu0 0.0
      %668 = vmatpush1.msra.mxu0 0.0
      %669 = vmatprep.subr.mxu0 0.0
      %670 = vmatpush1.msra.mxu0 0.0
      %671 = vmatprep.subr.mxu0 0.0
      %672 = vmatpush1.msra.mxu0 0.0
      %673 = vmatprep.subr.mxu0 0.0
      %674 = vmatpush1.msra.mxu0 0.0
      %675 = vmatprep.subr.mxu0 0.0
      %676 = vmatpush1.msra.mxu0 0.0
      %677 = vmatprep.subr.mxu0 0.0
      %678 = vmatpush1.msra.mxu0 0.0
      %679 = vmatprep.subr.mxu0 0.0
      %680 = vmatpush1.msra.mxu0 0.0
      %681 = vmatprep.subr.mxu0 0.0
      %682 = vmatpush1.msra.mxu0 0.0
      %683 = vmatprep.subr.mxu0 0.0
      %684 = vmatpush1.msra.mxu0 0.0
      %685 = vmatprep.subr.mxu0 0.0
      %686 = vmatpush1.msra.mxu0 0.0
      %687 = vmatprep.subr.mxu0 0.0
      %688 = vmatpush1.msra.mxu0 0.0
      %689 = vmatprep.subr.mxu0 0.0
      %690 = vmatpush1.msra.mxu0 0.0
      %691 = vmatprep.subr.mxu0 0.0
      %692 = vmatpush1.msra.mxu0 0.0
      %693 = vmatprep.subr.mxu0 0.0
      %694 = vmatpush1.msra.mxu0 0.0
      %695 = vmatprep.subr.mxu0 0.0
      %696 = vmatpush1.msra.mxu0 0.0
      %697 = vmatprep.subr.mxu0 0.0
      %698 = vmatpush1.msra.mxu0 0.0
      %699 = vmatprep.mubr.f32.mxu0 0.0
      %700 = vmatmul.mubr.f32.gmra.mrb[0].mxu0 %v633
      %v701 = vpop.f32.mrb[0].mxu0
      %v702 = vadd.f32 0.0, %v701
      %v703 = vpop.f32.mrb[0].mxu0
      %704 = vdwg.mxu0
      %v705 = vrcp.pop %v631
      %v706 = vmul.f32 1.0, %v705
      %v707 = vmul.f32 %v702, %v706
      %s708 = scalar_lea.vmem %s516, 8
      %v709 = vld [vmem:[%s708] sm:$0xff]
      %v710 = vmul.f32 %v709, 0.35355338
      %s711 = scalar_lea.vmem %s521, 8
      %v712 = vld [vmem:[%s711] sm:$0xff]
      %s713 = scalar_lea.vmem %s526, 8
      %v714 = vld [vmem:[%s713] sm:$0xff]
      %v716 = vsel %vm545, %v710, 0
      %v719 = vsel %vm545, %v712, 0
      %721 = vmatprep.subr.mxu0 0.0
      %722 = vmatpush1.xpose.msra.mxu0 %v719
      %723 = vmatprep.subr.mxu0 0.0
      %724 = vmatpush1.xpose.msra.mxu0 0.0
      %725 = vmatprep.subr.mxu0 0.0
      %726 = vmatpush1.xpose.msra.mxu0 0.0
      %727 = vmatprep.subr.mxu0 0.0
      %728 = vmatpush1.xpose.msra.mxu0 0.0
      %729 = vmatprep.subr.mxu0 0.0
      %730 = vmatpush1.xpose.msra.mxu0 0.0
      %731 = vmatprep.subr.mxu0 0.0
      %732 = vmatpush1.xpose.msra.mxu0 0.0
      %733 = vmatprep.subr.mxu0 0.0
      %734 = vmatpush1.xpose.msra.mxu0 0.0
      %735 = vmatprep.subr.mxu0 0.0
      %736 = vmatpush1.xpose.msra.mxu0 0.0
      %737 = vmatprep.subr.mxu0 0.0
      %738 = vmatpush1.xpose.msra.mxu0 0.0
      %739 = vmatprep.subr.mxu0 0.0
      %740 = vmatpush1.xpose.msra.mxu0 0.0
      %741 = vmatprep.subr.mxu0 0.0
      %742 = vmatpush1.xpose.msra.mxu0 0.0
      %743 = vmatprep.subr.mxu0 0.0
      %744 = vmatpush1.xpose.msra.mxu0 0.0
      %745 = vmatprep.subr.mxu0 0.0
      %746 = vmatpush1.xpose.msra.mxu0 0.0
      %747 = vmatprep.subr.mxu0 0.0
      %748 = vmatpush1.xpose.msra.mxu0 0.0
      %749 = vmatprep.subr.mxu0 0.0
      %750 = vmatpush1.xpose.msra.mxu0 0.0
      %751 = vmatprep.subr.mxu0 0.0
      %752 = vmatpush1.xpose.msra.mxu0 0.0
      %753 = vmatprep.subr.mxu0 0.0
      %754 = vmatpush1.xpose.msra.mxu0 0.0
      %755 = vmatprep.subr.mxu0 0.0
      %756 = vmatpush1.xpose.msra.mxu0 0.0
      %757 = vmatprep.subr.mxu0 0.0
      %758 = vmatpush1.xpose.msra.mxu0 0.0
      %759 = vmatprep.subr.mxu0 0.0
      %760 = vmatpush1.xpose.msra.mxu0 0.0
      %761 = vmatprep.subr.mxu0 0.0
      %762 = vmatpush1.xpose.msra.mxu0 0.0
      %763 = vmatprep.subr.mxu0 0.0
      %764 = vmatpush1.xpose.msra.mxu0 0.0
      %765 = vmatprep.subr.mxu0 0.0
      %766 = vmatpush1.xpose.msra.mxu0 0.0
      %767 = vmatprep.subr.mxu0 0.0
      %768 = vmatpush1.xpose.msra.mxu0 0.0
      %769 = vmatprep.subr.mxu0 0.0
      %770 = vmatpush1.xpose.msra.mxu0 0.0
      %771 = vmatprep.subr.mxu0 0.0
      %772 = vmatpush1.xpose.msra.mxu0 0.0
      %773 = vmatprep.subr.mxu0 0.0
      %774 = vmatpush1.xpose.msra.mxu0 0.0
      %775 = vmatprep.subr.mxu0 0.0
      %776 = vmatpush1.xpose.msra.mxu0 0.0
      %777 = vmatprep.subr.mxu0 0.0
      %778 = vmatpush1.xpose.msra.mxu0 0.0
      %779 = vmatprep.subr.mxu0 0.0
      %780 = vmatpush1.xpose.msra.mxu0 0.0
      %781 = vmatprep.subr.mxu0 0.0
      %782 = vmatpush1.xpose.msra.mxu0 0.0
      %783 = vmatprep.subr.mxu0 0.0
      %784 = vmatpush1.xpose.msra.mxu0 0.0
      %785 = vmatprep.mubr.f32.mxu0 0.0
      %786 = vmatmul.mubr.f32.gmra.mrb[0].mxu0 %v716
      %v787 = vpop.f32.mrb[0].mxu0
      %v788 = vadd.f32 0.0, %v787
      %v789 = vpop.f32.mrb[0].mxu0
      %790 = vdwg.mxu0
      %v791 = vsel %vm540, -inf, %v788
      %v792 = vsel %vm545, %v791, -inf
      %793 = vmax.xlane.f32.xlu0 %v792
      %v794 = vpop.xlane.xlu0 %793
      %v795 = vsub.f32 %v791, %v794
      %v796 = vmul.f32 %v795, 1.442695
      %v797 = vpow.pop %v796
      %v798 = vsel %vm545, %v797, 0.0
      %799 = vadd.xlane.f32.xlu0 %v798
      %v800 = vpop.xlane.xlu0 %799
      %v802 = vsel %vm545, %v797, 0
      %804 = vmatprep.subr.mxu0 0.0
      %805 = vmatpush1.msra.mxu0 %v714
      %806 = vmatprep.subr.mxu0 0.0
      %807 = vmatpush1.msra.mxu0 0.0
      %808 = vmatprep.subr.mxu0 0.0
      %809 = vmatpush1.msra.mxu0 0.0
      %810 = vmatprep.subr.mxu0 0.0
      %811 = vmatpush1.msra.mxu0 0.0
      %812 = vmatprep.subr.mxu0 0.0
      %813 = vmatpush1.msra.mxu0 0.0
      %814 = vmatprep.subr.mxu0 0.0
      %815 = vmatpush1.msra.mxu0 0.0
      %816 = vmatprep.subr.mxu0 0.0
      %817 = vmatpush1.msra.mxu0 0.0
      %818 = vmatprep.subr.mxu0 0.0
      %819 = vmatpush1.msra.mxu0 0.0
      %820 = vmatprep.subr.mxu0 0.0
      %821 = vmatpush1.msra.mxu0 0.0
      %822 = vmatprep.subr.mxu0 0.0
      %823 = vmatpush1.msra.mxu0 0.0
      %824 = vmatprep.subr.mxu0 0.0
      %825 = vmatpush1.msra.mxu0 0.0
      %826 = vmatprep.subr.mxu0 0.0
      %827 = vmatpush1.msra.mxu0 0.0
      %828 = vmatprep.subr.mxu0 0.0
      %829 = vmatpush1.msra.mxu0 0.0
      %830 = vmatprep.subr.mxu0 0.0
      %831 = vmatpush1.msra.mxu0 0.0
      %832 = vmatprep.subr.mxu0 0.0
      %833 = vmatpush1.msra.mxu0 0.0
      %834 = vmatprep.subr.mxu0 0.0
      %835 = vmatpush1.msra.mxu0 0.0
      %836 = vmatprep.subr.mxu0 0.0
      %837 = vmatpush1.msra.mxu0 0.0
      %838 = vmatprep.subr.mxu0 0.0
      %839 = vmatpush1.msra.mxu0 0.0
      %840 = vmatprep.subr.mxu0 0.0
      %841 = vmatpush1.msra.mxu0 0.0
      %842 = vmatprep.subr.mxu0 0.0
      %843 = vmatpush1.msra.mxu0 0.0
      %844 = vmatprep.subr.mxu0 0.0
      %845 = vmatpush1.msra.mxu0 0.0
      %846 = vmatprep.subr.mxu0 0.0
      %847 = vmatpush1.msra.mxu0 0.0
      %848 = vmatprep.subr.mxu0 0.0
      %849 = vmatpush1.msra.mxu0 0.0
      %850 = vmatprep.subr.mxu0 0.0
      %851 = vmatpush1.msra.mxu0 0.0
      %852 = vmatprep.subr.mxu0 0.0
      %853 = vmatpush1.msra.mxu0 0.0
      %854 = vmatprep.subr.mxu0 0.0
      %855 = vmatpush1.msra.mxu0 0.0
      %856 = vmatprep.subr.mxu0 0.0
      %857 = vmatpush1.msra.mxu0 0.0
      %858 = vmatprep.subr.mxu0 0.0
      %859 = vmatpush1.msra.mxu0 0.0
      %860 = vmatprep.subr.mxu0 0.0
      %861 = vmatpush1.msra.mxu0 0.0
      %862 = vmatprep.subr.mxu0 0.0
      %863 = vmatpush1.msra.mxu0 0.0
      %864 = vmatprep.subr.mxu0 0.0
      %865 = vmatpush1.msra.mxu0 0.0
      %866 = vmatprep.subr.mxu0 0.0
      %867 = vmatpush1.msra.mxu0 0.0
      %868 = vmatprep.mubr.f32.mxu0 0.0
      %869 = vmatmul.mubr.f32.gmra.mrb[0].mxu0 %v802
      %v870 = vpop.f32.mrb[0].mxu0
      %v871 = vadd.f32 0.0, %v870
      %v872 = vpop.f32.mrb[0].mxu0
      %873 = vdwg.mxu0
      %v874 = vrcp.pop %v800
      %v875 = vmul.f32 1.0, %v874
      %v876 = vmul.f32 %v871, %v875
      %s877 = scalar_lea.vmem %s516, 16
      %v878 = vld [vmem:[%s877] sm:$0xff]
      %v879 = vmul.f32 %v878, 0.35355338
      %s880 = scalar_lea.vmem %s521, 16
      %v881 = vld [vmem:[%s880] sm:$0xff]
      %s882 = scalar_lea.vmem %s526, 16
      %v883 = vld [vmem:[%s882] sm:$0xff]
      %v885 = vsel %vm545, %v879, 0
      %v888 = vsel %vm545, %v881, 0
      %890 = vmatprep.subr.mxu0 0.0
      %891 = vmatpush1.xpose.msra.mxu0 %v888
      %892 = vmatprep.subr.mxu0 0.0
      %893 = vmatpush1.xpose.msra.mxu0 0.0
      %894 = vmatprep.subr.mxu0 0.0
      %895 = vmatpush1.xpose.msra.mxu0 0.0
      %896 = vmatprep.subr.mxu0 0.0
      %897 = vmatpush1.xpose.msra.mxu0 0.0
      %898 = vmatprep.subr.mxu0 0.0
      %899 = vmatpush1.xpose.msra.mxu0 0.0
      %900 = vmatprep.subr.mxu0 0.0
      %901 = vmatpush1.xpose.msra.mxu0 0.0
      %902 = vmatprep.subr.mxu0 0.0
      %903 = vmatpush1.xpose.msra.mxu0 0.0
      %904 = vmatprep.subr.mxu0 0.0
      %905 = vmatpush1.xpose.msra.mxu0 0.0
      %906 = vmatprep.subr.mxu0 0.0
      %907 = vmatpush1.xpose.msra.mxu0 0.0
      %908 = vmatprep.subr.mxu0 0.0
      %909 = vmatpush1.xpose.msra.mxu0 0.0
      %910 = vmatprep.subr.mxu0 0.0
      %911 = vmatpush1.xpose.msra.mxu0 0.0
      %912 = vmatprep.subr.mxu0 0.0
      %913 = vmatpush1.xpose.msra.mxu0 0.0
      %914 = vmatprep.subr.mxu0 0.0
      %915 = vmatpush1.xpose.msra.mxu0 0.0
      %916 = vmatprep.subr.mxu0 0.0
      %917 = vmatpush1.xpose.msra.mxu0 0.0
      %918 = vmatprep.subr.mxu0 0.0
      %919 = vmatpush1.xpose.msra.mxu0 0.0
      %920 = vmatprep.subr.mxu0 0.0
      %921 = vmatpush1.xpose.msra.mxu0 0.0
      %922 = vmatprep.subr.mxu0 0.0
      %923 = vmatpush1.xpose.msra.mxu0 0.0
      %924 = vmatprep.subr.mxu0 0.0
      %925 = vmatpush1.xpose.msra.mxu0 0.0
      %926 = vmatprep.subr.mxu0 0.0
      %927 = vmatpush1.xpose.msra.mxu0 0.0
      %928 = vmatprep.subr.mxu0 0.0
      %929 = vmatpush1.xpose.msra.mxu0 0.0
      %930 = vmatprep.subr.mxu0 0.0
      %931 = vmatpush1.xpose.msra.mxu0 0.0
      %932 = vmatprep.subr.mxu0 0.0
      %933 = vmatpush1.xpose.msra.mxu0 0.0
      %934 = vmatprep.subr.mxu0 0.0
      %935 = vmatpush1.xpose.msra.mxu0 0.0
      %936 = vmatprep.subr.mxu0 0.0
      %937 = vmatpush1.xpose.msra.mxu0 0.0
      %938 = vmatprep.subr.mxu0 0.0
      %939 = vmatpush1.xpose.msra.mxu0 0.0
      %940 = vmatprep.subr.mxu0 0.0
      %941 = vmatpush1.xpose.msra.mxu0 0.0
      %942 = vmatprep.subr.mxu0 0.0
      %943 = vmatpush1.xpose.msra.mxu0 0.0
      %944 = vmatprep.subr.mxu0 0.0
      %945 = vmatpush1.xpose.msra.mxu0 0.0
      %946 = vmatprep.subr.mxu0 0.0
      %947 = vmatpush1.xpose.msra.mxu0 0.0
      %948 = vmatprep.subr.mxu0 0.0
      %949 = vmatpush1.xpose.msra.mxu0 0.0
      %950 = vmatprep.subr.mxu0 0.0
      %951 = vmatpush1.xpose.msra.mxu0 0.0
      %952 = vmatprep.subr.mxu0 0.0
      %953 = vmatpush1.xpose.msra.mxu0 0.0
      %954 = vmatprep.mubr.f32.mxu0 0.0
      %955 = vmatmul.mubr.f32.gmra.mrb[0].mxu0 %v885
      %v956 = vpop.f32.mrb[0].mxu0
      %v957 = vadd.f32 0.0, %v956
      %v958 = vpop.f32.mrb[0].mxu0
      %959 = vdwg.mxu0
      %v960 = vsel %vm540, -inf, %v957
      %v961 = vsel %vm545, %v960, -inf
      %962 = vmax.xlane.f32.xlu0 %v961
      %v963 = vpop.xlane.xlu0 %962
      %v964 = vsub.f32 %v960, %v963
      %v965 = vmul.f32 %v964, 1.442695
      %v966 = vpow.pop %v965
      %v967 = vsel %vm545, %v966, 0.0
      %968 = vadd.xlane.f32.xlu0 %v967
      %v969 = vpop.xlane.xlu0 %968
      %v971 = vsel %vm545, %v966, 0
      %973 = vmatprep.subr.mxu0 0.0
      %974 = vmatpush1.msra.mxu0 %v883
      %975 = vmatprep.subr.mxu0 0.0
      %976 = vmatpush1.msra.mxu0 0.0
      %977 = vmatprep.subr.mxu0 0.0
      %978 = vmatpush1.msra.mxu0 0.0
      %979 = vmatprep.subr.mxu0 0.0
      %980 = vmatpush1.msra.mxu0 0.0
      %981 = vmatprep.subr.mxu0 0.0
      %982 = vmatpush1.msra.mxu0 0.0
      %983 = vmatprep.subr.mxu0 0.0
      %984 = vmatpush1.msra.mxu0 0.0
      %985 = vmatprep.subr.mxu0 0.0
      %986 = vmatpush1.msra.mxu0 0.0
      %987 = vmatprep.subr.mxu0 0.0
      %988 = vmatpush1.msra.mxu0 0.0
      %989 = vmatprep.subr.mxu0 0.0
      %990 = vmatpush1.msra.mxu0 0.0
      %991 = vmatprep.subr.mxu0 0.0
      %992 = vmatpush1.msra.mxu0 0.0
      %993 = vmatprep.subr.mxu0 0.0
      %994 = vmatpush1.msra.mxu0 0.0
      %995 = vmatprep.subr.mxu0 0.0
      %996 = vmatpush1.msra.mxu0 0.0
      %997 = vmatprep.subr.mxu0 0.0
      %998 = vmatpush1.msra.mxu0 0.0
      %999 = vmatprep.subr.mxu0 0.0
      %1000 = vmatpush1.msra.mxu0 0.0
      %1001 = vmatprep.subr.mxu0 0.0
      %1002 = vmatpush1.msra.mxu0 0.0
      %1003 = vmatprep.subr.mxu0 0.0
      %1004 = vmatpush1.msra.mxu0 0.0
      %1005 = vmatprep.subr.mxu0 0.0
      %1006 = vmatpush1.msra.mxu0 0.0
      %1007 = vmatprep.subr.mxu0 0.0
      %1008 = vmatpush1.msra.mxu0 0.0
      %1009 = vmatprep.subr.mxu0 0.0
      %1010 = vmatpush1.msra.mxu0 0.0
      %1011 = vmatprep.subr.mxu0 0.0
      %1012 = vmatpush1.msra.mxu0 0.0
      %1013 = vmatprep.subr.mxu0 0.0
      %1014 = vmatpush1.msra.mxu0 0.0
      %1015 = vmatprep.subr.mxu0 0.0
      %1016 = vmatpush1.msra.mxu0 0.0
      %1017 = vmatprep.subr.mxu0 0.0
      %1018 = vmatpush1.msra.mxu0 0.0
      %1019 = vmatprep.subr.mxu0 0.0
      %1020 = vmatpush1.msra.mxu0 0.0
      %1021 = vmatprep.subr.mxu0 0.0
      %1022 = vmatpush1.msra.mxu0 0.0
      %1023 = vmatprep.subr.mxu0 0.0
      %1024 = vmatpush1.msra.mxu0 0.0
      %1025 = vmatprep.subr.mxu0 0.0
      %1026 = vmatpush1.msra.mxu0 0.0
      %1027 = vmatprep.subr.mxu0 0.0
      %1028 = vmatpush1.msra.mxu0 0.0
      %1029 = vmatprep.subr.mxu0 0.0
      %1030 = vmatpush1.msra.mxu0 0.0
      %1031 = vmatprep.subr.mxu0 0.0
      %1032 = vmatpush1.msra.mxu0 0.0
      %1033 = vmatprep.subr.mxu0 0.0
      %1034 = vmatpush1.msra.mxu0 0.0
      %1035 = vmatprep.subr.mxu0 0.0
      %1036 = vmatpush1.msra.mxu0 0.0
      %1037 = vmatprep.mubr.f32.mxu0 0.0
      %1038 = vmatmul.mubr.f32.gmra.mrb[0].mxu0 %v971
      %v1039 = vpop.f32.mrb[0].mxu0
      %v1040 = vadd.f32 0.0, %v1039
      %v1041 = vpop.f32.mrb[0].mxu0
      %1042 = vdwg.mxu0
      %v1043 = vrcp.pop %v969
      %v1044 = vmul.f32 1.0, %v1043
      %v1045 = vmul.f32 %v1040, %v1044
      %s1046 = scalar_lea.vmem %s516, 24
      %v1047 = vld [vmem:[%s1046] sm:$0xff]
      %v1048 = vmul.f32 %v1047, 0.35355338
      %s1049 = scalar_lea.vmem %s521, 24
      %v1050 = vld [vmem:[%s1049] sm:$0xff]
      %s1051 = scalar_lea.vmem %s526, 24
      %v1052 = vld [vmem:[%s1051] sm:$0xff]
      %v1054 = vsel %vm545, %v1048, 0
      %v1057 = vsel %vm545, %v1050, 0
      %1059 = vmatprep.subr.mxu0 0.0
      %1060 = vmatpush1.xpose.msra.mxu0 %v1057
      %1061 = vmatprep.subr.mxu0 0.0
      %1062 = vmatpush1.xpose.msra.mxu0 0.0
      %1063 = vmatprep.subr.mxu0 0.0
      %1064 = vmatpush1.xpose.msra.mxu0 0.0
      %1065 = vmatprep.subr.mxu0 0.0
      %1066 = vmatpush1.xpose.msra.mxu0 0.0
      %1067 = vmatprep.subr.mxu0 0.0
      %1068 = vmatpush1.xpose.msra.mxu0 0.0
      %1069 = vmatprep.subr.mxu0 0.0
      %1070 = vmatpush1.xpose.msra.mxu0 0.0
      %1071 = vmatprep.subr.mxu0 0.0
      %1072 = vmatpush1.xpose.msra.mxu0 0.0
      %1073 = vmatprep.subr.mxu0 0.0
      %1074 = vmatpush1.xpose.msra.mxu0 0.0
      %1075 = vmatprep.subr.mxu0 0.0
      %1076 = vmatpush1.xpose.msra.mxu0 0.0
      %1077 = vmatprep.subr.mxu0 0.0
      %1078 = vmatpush1.xpose.msra.mxu0 0.0
      %1079 = vmatprep.subr.mxu0 0.0
      %1080 = vmatpush1.xpose.msra.mxu0 0.0
      %1081 = vmatprep.subr.mxu0 0.0
      %1082 = vmatpush1.xpose.msra.mxu0 0.0
      %1083 = vmatprep.subr.mxu0 0.0
      %1084 = vmatpush1.xpose.msra.mxu0 0.0
      %1085 = vmatprep.subr.mxu0 0.0
      %1086 = vmatpush1.xpose.msra.mxu0 0.0
      %1087 = vmatprep.subr.mxu0 0.0
      %1088 = vmatpush1.xpose.msra.mxu0 0.0
      %1089 = vmatprep.subr.mxu0 0.0
      %1090 = vmatpush1.xpose.msra.mxu0 0.0
      %1091 = vmatprep.subr.mxu0 0.0
      %1092 = vmatpush1.xpose.msra.mxu0 0.0
      %1093 = vmatprep.subr.mxu0 0.0
      %1094 = vmatpush1.xpose.msra.mxu0 0.0
      %1095 = vmatprep.subr.mxu0 0.0
      %1096 = vmatpush1.xpose.msra.mxu0 0.0
      %1097 = vmatprep.subr.mxu0 0.0
      %1098 = vmatpush1.xpose.msra.mxu0 0.0
      %1099 = vmatprep.subr.mxu0 0.0
      %1100 = vmatpush1.xpose.msra.mxu0 0.0
      %1101 = vmatprep.subr.mxu0 0.0
      %1102 = vmatpush1.xpose.msra.mxu0 0.0
      %1103 = vmatprep.subr.mxu0 0.0
      %1104 = vmatpush1.xpose.msra.mxu0 0.0
      %1105 = vmatprep.subr.mxu0 0.0
      %1106 = vmatpush1.xpose.msra.mxu0 0.0
      %1107 = vmatprep.subr.mxu0 0.0
      %1108 = vmatpush1.xpose.msra.mxu0 0.0
      %1109 = vmatprep.subr.mxu0 0.0
      %1110 = vmatpush1.xpose.msra.mxu0 0.0
      %1111 = vmatprep.subr.mxu0 0.0
      %1112 = vmatpush1.xpose.msra.mxu0 0.0
      %1113 = vmatprep.subr.mxu0 0.0
      %1114 = vmatpush1.xpose.msra.mxu0 0.0
      %1115 = vmatprep.subr.mxu0 0.0
      %1116 = vmatpush1.xpose.msra.mxu0 0.0
      %1117 = vmatprep.subr.mxu0 0.0
      %1118 = vmatpush1.xpose.msra.mxu0 0.0
      %1119 = vmatprep.subr.mxu0 0.0
      %1120 = vmatpush1.xpose.msra.mxu0 0.0
      %1121 = vmatprep.subr.mxu0 0.0
      %1122 = vmatpush1.xpose.msra.mxu0 0.0
      %1123 = vmatprep.mubr.f32.mxu0 0.0
      %1124 = vmatmul.mubr.f32.gmra.mrb[0].mxu0 %v1054
      %v1125 = vpop.f32.mrb[0].mxu0
      %v1126 = vadd.f32 0.0, %v1125
      %v1127 = vpop.f32.mrb[0].mxu0
      %1128 = vdwg.mxu0
      %v1129 = vsel %vm540, -inf, %v1126
      %v1130 = vsel %vm545, %v1129, -inf
      %1131 = vmax.xlane.f32.xlu0 %v1130
      %v1132 = vpop.xlane.xlu0 %1131
      %v1133 = vsub.f32 %v1129, %v1132
      %v1134 = vmul.f32 %v1133, 1.442695
      %v1135 = vpow.pop %v1134
      %v1136 = vsel %vm545, %v1135, 0.0
      %1137 = vadd.xlane.f32.xlu0 %v1136
      %v1138 = vpop.xlane.xlu0 %1137
      %v1140 = vsel %vm545, %v1135, 0
      %1142 = vmatprep.subr.mxu0 0.0
      %1143 = vmatpush1.msra.mxu0 %v1052
      %1144 = vmatprep.subr.mxu0 0.0
      %1145 = vmatpush1.msra.mxu0 0.0
      %1146 = vmatprep.subr.mxu0 0.0
      %1147 = vmatpush1.msra.mxu0 0.0
      %1148 = vmatprep.subr.mxu0 0.0
      %1149 = vmatpush1.msra.mxu0 0.0
      %1150 = vmatprep.subr.mxu0 0.0
      %1151 = vmatpush1.msra.mxu0 0.0
      %1152 = vmatprep.subr.mxu0 0.0
      %1153 = vmatpush1.msra.mxu0 0.0
      %1154 = vmatprep.subr.mxu0 0.0
      %1155 = vmatpush1.msra.mxu0 0.0
      %1156 = vmatprep.subr.mxu0 0.0
      %1157 = vmatpush1.msra.mxu0 0.0
      %1158 = vmatprep.subr.mxu0 0.0
      %1159 = vmatpush1.msra.mxu0 0.0
      %1160 = vmatprep.subr.mxu0 0.0
      %1161 = vmatpush1.msra.mxu0 0.0
      %1162 = vmatprep.subr.mxu0 0.0
      %1163 = vmatpush1.msra.mxu0 0.0
      %1164 = vmatprep.subr.mxu0 0.0
      %1165 = vmatpush1.msra.mxu0 0.0
      %1166 = vmatprep.subr.mxu0 0.0
      %1167 = vmatpush1.msra.mxu0 0.0
      %1168 = vmatprep.subr.mxu0 0.0
      %1169 = vmatpush1.msra.mxu0 0.0
      %1170 = vmatprep.subr.mxu0 0.0
      %1171 = vmatpush1.msra.mxu0 0.0
      %1172 = vmatprep.subr.mxu0 0.0
      %1173 = vmatpush1.msra.mxu0 0.0
      %1174 = vmatprep.subr.mxu0 0.0
      %1175 = vmatpush1.msra.mxu0 0.0
      %1176 = vmatprep.subr.mxu0 0.0
      %1177 = vmatpush1.msra.mxu0 0.0
      %1178 = vmatprep.subr.mxu0 0.0
      %1179 = vmatpush1.msra.mxu0 0.0
      %1180 = vmatprep.subr.mxu0 0.0
      %1181 = vmatpush1.msra.mxu0 0.0
      %1182 = vmatprep.subr.mxu0 0.0
      %1183 = vmatpush1.msra.mxu0 0.0
      %1184 = vmatprep.subr.mxu0 0.0
      %1185 = vmatpush1.msra.mxu0 0.0
      %1186 = vmatprep.subr.mxu0 0.0
      %1187 = vmatpush1.msra.mxu0 0.0
      %1188 = vmatprep.subr.mxu0 0.0
      %1189 = vmatpush1.msra.mxu0 0.0
      %1190 = vmatprep.subr.mxu0 0.0
      %1191 = vmatpush1.msra.mxu0 0.0
      %1192 = vmatprep.subr.mxu0 0.0
      %1193 = vmatpush1.msra.mxu0 0.0
      %1194 = vmatprep.subr.mxu0 0.0
      %1195 = vmatpush1.msra.mxu0 0.0
      %1196 = vmatprep.subr.mxu0 0.0
      %1197 = vmatpush1.msra.mxu0 0.0
      %1198 = vmatprep.subr.mxu0 0.0
      %1199 = vmatpush1.msra.mxu0 0.0
      %1200 = vmatprep.subr.mxu0 0.0
      %1201 = vmatpush1.msra.mxu0 0.0
      %1202 = vmatprep.subr.mxu0 0.0
      %1203 = vmatpush1.msra.mxu0 0.0
      %1204 = vmatprep.subr.mxu0 0.0
      %1205 = vmatpush1.msra.mxu0 0.0
      %1206 = vmatprep.mubr.f32.mxu0 0.0
      %1207 = vmatmul.mubr.f32.gmra.mrb[0].mxu0 %v1140
      %v1208 = vpop.f32.mrb[0].mxu0
      %v1209 = vadd.f32 0.0, %v1208
      %v1210 = vpop.f32.mrb[0].mxu0
      %1211 = vdwg.mxu0
      %v1212 = vrcp.pop %v1138
      %v1213 = vmul.f32 1.0, %v1212
      %v1214 = vmul.f32 %v1209, %v1213
      %1216 = vrot.lane.b32.xlu0 %v876, 8
      %v1217 = vpop.permute.xlu0 %1216
      %1220 = vrot.lane.b32.xlu0 %v1045, 16
      %v1221 = vpop.permute.xlu0 %1220
      %1224 = vrot.lane.b32.xlu0 %v1214, 24
      %v1225 = vpop.permute.xlu0 %1224
      %v1227 = vsel %vm545, %v707, %v1217
      %vm1228 = vcmask 130048
      %v1229 = vsel %vm1228, %v1227, %v1221
      %vm1230 = vcmask 195584
      %v1231 = vsel %vm1230, %v1229, %v1225
      %v1232 = vlaneseq
      %v1233 = vshrl.u32 %v1232, 7
      %v1234 = vstv %s535
      %vm1235 = vcmp.lt.s32.totalorder %v1233, %v1234
      %v1236 = vld [vmem:[%s6] sm:$0xff]
      %v1237 = vld [vmem:[%s6 + $0x8] sm:$0xff]
      %v1238 = vld [vmem:[%s6 + $0x10] sm:$0xff]
      %v1239 = vld [vmem:[%s6 + $0x18] sm:$0xff]
      %v1240 = vld [vmem:[%s7] sm:$0x1]
      %v1242 = vlaneseq
      %v1243 = vshrl.u32 %v1242, 7
      %v1244 = vsub.s32 0, %v1243
      %v1245 = vrot.slane %v1240, %v1244
      %vm1247 = vcmask 261120
      %v1249 = vsel %vm1247, %v1231, 0
      %1251 = vmatprep.subr.mxu0 0.0
      %1252 = vmatpush1.msra.mxu0 %v1236
      %1253 = vmatprep.subr.mxu0 0.0
      %1254 = vmatpush1.msra.mxu0 %v1237
      %1255 = vmatprep.subr.mxu0 0.0
      %1256 = vmatpush1.msra.mxu0 %v1238
      %1257 = vmatprep.subr.mxu0 0.0
      %1258 = vmatpush1.msra.mxu0 %v1239
      %1259 = vmatprep.subr.mxu0 0.0
      %1260 = vmatpush1.msra.mxu0 0.0
      %1261 = vmatprep.subr.mxu0 0.0
      %1262 = vmatpush1.msra.mxu0 0.0
      %1263 = vmatprep.subr.mxu0 0.0
      %1264 = vmatpush1.msra.mxu0 0.0
      %1265 = vmatprep.subr.mxu0 0.0
      %1266 = vmatpush1.msra.mxu0 0.0
      %1267 = vmatprep.subr.mxu0 0.0
      %1268 = vmatpush1.msra.mxu0 0.0
      %1269 = vmatprep.subr.mxu0 0.0
      %1270 = vmatpush1.msra.mxu0 0.0
      %1271 = vmatprep.subr.mxu0 0.0
      %1272 = vmatpush1.msra.mxu0 0.0
      %1273 = vmatprep.subr.mxu0 0.0
      %1274 = vmatpush1.msra.mxu0 0.0
      %1275 = vmatprep.subr.mxu0 0.0
      %1276 = vmatpush1.msra.mxu0 0.0
      %1277 = vmatprep.subr.mxu0 0.0
      %1278 = vmatpush1.msra.mxu0 0.0
      %1279 = vmatprep.subr.mxu0 0.0
      %1280 = vmatpush1.msra.mxu0 0.0
      %1281 = vmatprep.subr.mxu0 0.0
      %1282 = vmatpush1.msra.mxu0 0.0
      %1283 = vmatprep.subr.mxu0 0.0
      %1284 = vmatpush1.msra.mxu0 0.0
      %1285 = vmatprep.subr.mxu0 0.0
      %1286 = vmatpush1.msra.mxu0 0.0
      %1287 = vmatprep.subr.mxu0 0.0
      %1288 = vmatpush1.msra.mxu0 0.0
      %1289 = vmatprep.subr.mxu0 0.0
      %1290 = vmatpush1.msra.mxu0 0.0
      %1291 = vmatprep.subr.mxu0 0.0
      %1292 = vmatpush1.msra.mxu0 0.0
      %1293 = vmatprep.subr.mxu0 0.0
      %1294 = vmatpush1.msra.mxu0 0.0
      %1295 = vmatprep.subr.mxu0 0.0
      %1296 = vmatpush1.msra.mxu0 0.0
      %1297 = vmatprep.subr.mxu0 0.0
      %1298 = vmatpush1.msra.mxu0 0.0
      %1299 = vmatprep.subr.mxu0 0.0
      %1300 = vmatpush1.msra.mxu0 0.0
      %1301 = vmatprep.subr.mxu0 0.0
      %1302 = vmatpush1.msra.mxu0 0.0
      %1303 = vmatprep.subr.mxu0 0.0
      %1304 = vmatpush1.msra.mxu0 0.0
      %1305 = vmatprep.subr.mxu0 0.0
      %1306 = vmatpush1.msra.mxu0 0.0
      %1307 = vmatprep.subr.mxu0 0.0
      %1308 = vmatpush1.msra.mxu0 0.0
      %1309 = vmatprep.subr.mxu0 0.0
      %1310 = vmatpush1.msra.mxu0 0.0
      %1311 = vmatprep.subr.mxu0 0.0
      %1312 = vmatpush1.msra.mxu0 0.0
      %1313 = vmatprep.subr.mxu0 0.0
      %1314 = vmatpush1.msra.mxu0 0.0
      %1315 = vmatprep.mubr.f32.mxu0 0.0
      %1316 = vmatmul.mubr.f32.gmra.mrb[0].mxu0 %v1249
      %v1317 = vpop.f32.mrb[0].mxu0
      %v1318 = vadd.f32 %v1245, %v1317
      %v1319 = vpop.f32.mrb[0].mxu0
      %1320 = vdwg.mxu0
      %v1321 = vsel %vm1235, %v1318, 0.0
      %v1322 = vld [vmem:[%s530] sm:$0xff]
      %v1323 = vadd.f32 %v1321, %v1322
      %v1324 = vld [vmem:[%s8] sm:$0x1]
      %v1325 = vld [vmem:[%s9] sm:$0x1]
      %v1326 = vsel %vm1247, %v1323, 0.0
      %1327 = vadd.xlane.f32.xlu0 %v1326
      %v1328 = vpop.xlane.xlu0 %1327
      %v1329 = vrcp.pop 32.0
      %v1330 = vmul.f32 %v1328, %v1329
      %v1331 = vsub.f32 %v1323, %v1330
      %v1332 = vmul.f32 %v1331, %v1331
      %v1333 = vsel %vm1247, %v1332, 0.0
      %1334 = vadd.xlane.f32.xlu0 %v1333
      %v1335 = vpop.xlane.xlu0 %1334
      %v1336 = vmul.f32 %v1335, %v1329
      %v1337 = vadd.f32 %v1336, 1e-05
      %v1338 = vrsqrt.pop %v1337
      %v1339 = vmul.f32 %v1331, %v1338
      %v1341 = vlaneseq
      %v1342 = vshrl.u32 %v1341, 7
      %v1343 = vsub.s32 0, %v1342
      %v1344 = vrot.slane %v1324, %v1343
      %v1346 = vmul.f32 %v1339, %v1344
      %v1348 = vlaneseq
      %v1349 = vshrl.u32 %v1348, 7
      %v1350 = vsub.s32 0, %v1349
      %v1351 = vrot.slane %v1325, %v1350
      %v1353 = vadd.f32 %v1346, %v1351
      %v1354 = vld [vmem:[%s10] sm:$0xff]
      %v1355 = vld [vmem:[%s10 + $0x8] sm:$0xff]
      %v1356 = vld [vmem:[%s10 + $0x10] sm:$0xff]
      %v1357 = vld [vmem:[%s10 + $0x18] sm:$0xff]
      %v1358 = vld [vmem:[%s11] sm:$0x1]
      %v1360 = vlaneseq
      %v1361 = vshrl.u32 %v1360, 7
      %v1362 = vsub.s32 0, %v1361
      %v1363 = vrot.slane %v1358, %v1362
      %v1366 = vsel %vm1247, %v1353, 0
      %1368 = vmatprep.subr.mxu0 0.0
      %1369 = vmatpush1.msra.mxu0 %v1354
      %1370 = vmatprep.subr.mxu0 0.0
      %1371 = vmatpush1.msra.mxu0 %v1355
      %1372 = vmatprep.subr.mxu0 0.0
      %1373 = vmatpush1.msra.mxu0 %v1356
      %1374 = vmatprep.subr.mxu0 0.0
      %1375 = vmatpush1.msra.mxu0 %v1357
      %1376 = vmatprep.subr.mxu0 0.0
      %1377 = vmatpush1.msra.mxu0 0.0
      %1378 = vmatprep.subr.mxu0 0.0
      %1379 = vmatpush1.msra.mxu0 0.0
      %1380 = vmatprep.subr.mxu0 0.0
      %1381 = vmatpush1.msra.mxu0 0.0
      %1382 = vmatprep.subr.mxu0 0.0
      %1383 = vmatpush1.msra.mxu0 0.0
      %1384 = vmatprep.subr.mxu0 0.0
      %1385 = vmatpush1.msra.mxu0 0.0
      %1386 = vmatprep.subr.mxu0 0.0
      %1387 = vmatpush1.msra.mxu0 0.0
      %1388 = vmatprep.subr.mxu0 0.0
      %1389 = vmatpush1.msra.mxu0 0.0
      %1390 = vmatprep.subr.mxu0 0.0
      %1391 = vmatpush1.msra.mxu0 0.0
      %1392 = vmatprep.subr.mxu0 0.0
      %1393 = vmatpush1.msra.mxu0 0.0
      %1394 = vmatprep.subr.mxu0 0.0
      %1395 = vmatpush1.msra.mxu0 0.0
      %1396 = vmatprep.subr.mxu0 0.0
      %1397 = vmatpush1.msra.mxu0 0.0
      %1398 = vmatprep.subr.mxu0 0.0
      %1399 = vmatpush1.msra.mxu0 0.0
      %1400 = vmatprep.subr.mxu0 0.0
      %1401 = vmatpush1.msra.mxu0 0.0
      %1402 = vmatprep.subr.mxu0 0.0
      %1403 = vmatpush1.msra.mxu0 0.0
      %1404 = vmatprep.subr.mxu0 0.0
      %1405 = vmatpush1.msra.mxu0 0.0
      %1406 = vmatprep.subr.mxu0 0.0
      %1407 = vmatpush1.msra.mxu0 0.0
      %1408 = vmatprep.subr.mxu0 0.0
      %1409 = vmatpush1.msra.mxu0 0.0
      %1410 = vmatprep.subr.mxu0 0.0
      %1411 = vmatpush1.msra.mxu0 0.0
      %1412 = vmatprep.subr.mxu0 0.0
      %1413 = vmatpush1.msra.mxu0 0.0
      %1414 = vmatprep.subr.mxu0 0.0
      %1415 = vmatpush1.msra.mxu0 0.0
      %1416 = vmatprep.subr.mxu0 0.0
      %1417 = vmatpush1.msra.mxu0 0.0
      %1418 = vmatprep.subr.mxu0 0.0
      %1419 = vmatpush1.msra.mxu0 0.0
      %1420 = vmatprep.subr.mxu0 0.0
      %1421 = vmatpush1.msra.mxu0 0.0
      %1422 = vmatprep.subr.mxu0 0.0
      %1423 = vmatpush1.msra.mxu0 0.0
      %1424 = vmatprep.subr.mxu0 0.0
      %1425 = vmatpush1.msra.mxu0 0.0
      %1426 = vmatprep.subr.mxu0 0.0
      %1427 = vmatpush1.msra.mxu0 0.0
      %1428 = vmatprep.subr.mxu0 0.0
      %1429 = vmatpush1.msra.mxu0 0.0
      %1430 = vmatprep.subr.mxu0 0.0
      %1431 = vmatpush1.msra.mxu0 0.0
      %1432 = vmatprep.mubr.f32.mxu0 0.0
      %1433 = vmatmul.mubr.f32.gmra.mrb[0].mxu0 %v1366
      %v1434 = vpop.f32.mrb[0].mxu0
      %v1435 = vadd.f32 %v1363, %v1434
      %v1436 = vpop.f32.mrb[0].mxu0
      %1437 = vdwg.mxu0
      %v1438 = vmul.f32 %v1435, 0.5
      %v1439 = vmul.f32 %v1435, 0.70710677
      %vm1440 = vcmp.ge.f32.partialorder %v1439, 0.0
      %v1441 = vsel %vm1440, 1.0, -1.0
      %v1442 = vand.u32 2147483647, %v1439
      %v1443 = vmul.f32 %v1442, 0.3275911
      %v1444 = vadd.f32 %v1443, 1.0
      %v1445 = vrcp.pop %v1444
      %v1446 = vmul.f32 1.0, %v1445
      %v1447 = vmul.f32 %v1446, 1.0614054
      %v1448 = vadd.f32 %v1447, -1.4531521
      %v1449 = vmul.f32 %v1448, %v1446
      %v1450 = vadd.f32 %v1449, 1.4214138
      %v1451 = vmul.f32 %v1450, %v1446
      %v1452 = vadd.f32 %v1451, -0.28449672
      %v1453 = vmul.f32 %v1452, %v1446
      %v1454 = vadd.f32 %v1453, 0.2548296
      %v1455 = vmul.f32 %v1454, %v1446
      %v1456 = vsub.f32 0.0, %v1442
      %v1457 = vmul.f32 %v1456, %v1442
      %v1458 = vmul.f32 %v1457, 1.442695
      %v1459 = vpow.pop %v1458
      %v1460 = vmul.f32 %v1455, %v1459
      %v1461 = vsub.f32 1.0, %v1460
      %v1462 = vmul.f32 %v1441, %v1461
      %v1463 = vadd.f32 %v1462, 1.0
      %v1464 = vmul.f32 %v1438, %v1463
      %v1465 = vld [vmem:[%s12] sm:$0xff]
      %v1466 = vld [vmem:[%s12 + $0x8] sm:$0xff]
      %v1467 = vld [vmem:[%s12 + $0x10] sm:$0xff]
      %v1468 = vld [vmem:[%s12 + $0x18] sm:$0xff]
      %v1469 = vld [vmem:[%s12 + $0x20] sm:$0xff]
      %v1470 = vld [vmem:[%s12 + $0x28] sm:$0xff]
      %v1471 = vld [vmem:[%s12 + $0x30] sm:$0xff]
      %v1472 = vld [vmem:[%s12 + $0x38] sm:$0xff]
      %v1473 = vld [vmem:[%s13] sm:$0x1]
      %v1475 = vlaneseq
      %v1476 = vshrl.u32 %v1475, 7
      %v1477 = vsub.s32 0, %v1476
      %v1478 = vrot.slane %v1473, %v1477
      %vm1480 = vcmask 523264
      %v1482 = vsel %vm1480, %v1464, 0
      %1484 = vmatprep.subr.mxu0 0.0
      %1485 = vmatpush1.msra.mxu0 %v1465
      %1486 = vmatprep.subr.mxu0 0.0
      %1487 = vmatpush1.msra.mxu0 %v1466
      %1488 = vmatprep.subr.mxu0 0.0
      %1489 = vmatpush1.msra.mxu0 %v1467
      %1490 = vmatprep.subr.mxu0 0.0
      %1491 = vmatpush1.msra.mxu0 %v1468
      %1492 = vmatprep.subr.mxu0 0.0
      %1493 = vmatpush1.msra.mxu0 %v1469
      %1494 = vmatprep.subr.mxu0 0.0
      %1495 = vmatpush1.msra.mxu0 %v1470
      %1496 = vmatprep.subr.mxu0 0.0
      %1497 = vmatpush1.msra.mxu0 %v1471
      %1498 = vmatprep.subr.mxu0 0.0
      %1499 = vmatpush1.msra.mxu0 %v1472
      %1500 = vmatprep.subr.mxu0 0.0
      %1501 = vmatpush1.msra.mxu0 0.0
      %1502 = vmatprep.subr.mxu0 0.0
      %1503 = vmatpush1.msra.mxu0 0.0
      %1504 = vmatprep.subr.mxu0 0.0
      %1505 = vmatpush1.msra.mxu0 0.0
      %1506 = vmatprep.subr.mxu0 0.0
      %1507 = vmatpush1.msra.mxu0 0.0
      %1508 = vmatprep.subr.mxu0 0.0
      %1509 = vmatpush1.msra.mxu0 0.0
      %1510 = vmatprep.subr.mxu0 0.0
      %1511 = vmatpush1.msra.mxu0 0.0
      %1512 = vmatprep.subr.mxu0 0.0
      %1513 = vmatpush1.msra.mxu0 0.0
      %1514 = vmatprep.subr.mxu0 0.0
      %1515 = vmatpush1.msra.mxu0 0.0
      %1516 = vmatprep.subr.mxu0 0.0
      %1517 = vmatpush1.msra.mxu0 0.0
      %1518 = vmatprep.subr.mxu0 0.0
      %1519 = vmatpush1.msra.mxu0 0.0
      %1520 = vmatprep.subr.mxu0 0.0
      %1521 = vmatpush1.msra.mxu0 0.0
      %1522 = vmatprep.subr.mxu0 0.0
      %1523 = vmatpush1.msra.mxu0 0.0
      %1524 = vmatprep.subr.mxu0 0.0
      %1525 = vmatpush1.msra.mxu0 0.0
      %1526 = vmatprep.subr.mxu0 0.0
      %1527 = vmatpush1.msra.mxu0 0.0
      %1528 = vmatprep.subr.mxu0 0.0
      %1529 = vmatpush1.msra.mxu0 0.0
      %1530 = vmatprep.subr.mxu0 0.0
      %1531 = vmatpush1.msra.mxu0 0.0
      %1532 = vmatprep.subr.mxu0 0.0
      %1533 = vmatpush1.msra.mxu0 0.0
      %1534 = vmatprep.subr.mxu0 0.0
      %1535 = vmatpush1.msra.mxu0 0.0
      %1536 = vmatprep.subr.mxu0 0.0
      %1537 = vmatpush1.msra.mxu0 0.0
      %1538 = vmatprep.subr.mxu0 0.0
      %1539 = vmatpush1.msra.mxu0 0.0
      %1540 = vmatprep.subr.mxu0 0.0
      %1541 = vmatpush1.msra.mxu0 0.0
      %1542 = vmatprep.subr.mxu0 0.0
      %1543 = vmatpush1.msra.mxu0 0.0
      %1544 = vmatprep.subr.mxu0 0.0
      %1545 = vmatpush1.msra.mxu0 0.0
      %1546 = vmatprep.subr.mxu0 0.0
      %1547 = vmatpush1.msra.mxu0 0.0
      %1548 = vmatprep.mubr.f32.mxu0 0.0
      %1549 = vmatmul.mubr.f32.gmra.mrb[0].mxu0 %v1482
      %v1550 = vpop.f32.mrb[0].mxu0
      %v1551 = vadd.f32 %v1478, %v1550
      %v1552 = vpop.f32.mrb[0].mxu0
      %1553 = vdwg.mxu0
      %v1554 = vsel %vm1235, %v1551, 0.0
      %v1555 = vadd.f32 %v1554, %v1323
      %v1556 = vld [vmem:[%s14] sm:$0x1]
      %v1557 = vld [vmem:[%s15] sm:$0x1]
      %v1558 = vsel %vm1247, %v1555, 0.0
      %1559 = vadd.xlane.f32.xlu0 %v1558
      %v1560 = vpop.xlane.xlu0 %1559
      %v1561 = vmul.f32 %v1560, %v1329
      %v1562 = vsub.f32 %v1555, %v1561
      %v1563 = vmul.f32 %v1562, %v1562
      %v1564 = vsel %vm1247, %v1563, 0.0
      %1565 = vadd.xlane.f32.xlu0 %v1564
      %v1566 = vpop.xlane.xlu0 %1565
      %v1567 = vmul.f32 %v1566, %v1329
      %v1568 = vadd.f32 %v1567, 1e-05
      %v1569 = vrsqrt.pop %v1568
      %v1570 = vmul.f32 %v1562, %v1569
      %v1572 = vlaneseq
      %v1573 = vshrl.u32 %v1572, 7
      %v1574 = vsub.s32 0, %v1573
      %v1575 = vrot.slane %v1556, %v1574
      %v1577 = vmul.f32 %v1570, %v1575
      %v1579 = vlaneseq
      %v1580 = vshrl.u32 %v1579, 7
      %v1581 = vsub.s32 0, %v1580
      %v1582 = vrot.slane %v1557, %v1581
      %v1584 = vadd.f32 %v1577, %v1582
      %1585 = vst.msk [vmem:[%s534] sm:$0xff] %vm1247, %v1584
      %p1586 = scmp.lt.s32.totalorder %s37, 1
      %s1587 = scalar_select %p1586, %s37, 1
      %s1588 = smul.addr %s1587, 8
      %s1589 = scalar_lea.vmem %s16, %s1588
      // Predicated region
      $region77: #{decoder_blocks_forward.17} parent=75 // pred_check
        %p1590 = pneg %p369
      $region78: #{decoder_blocks_forward.17} parent=75 // pred_check_branch
        %1592 = sbr.rel (%p1590) target = $region80
      $region79: #{decoder_blocks_forward.17} parent=75 // pred_region
        _
      $region80: #{decoder_blocks_forward.17} parent=75 // pred_fallthru
        _
    $region76: #{decoder_blocks_forward.17} parent=5 // pred_fallthru
      _
    %p1593 = scmp.le.s32.totalorder 2, %s32
    // Predicated region
    $region81: #{decoder_blocks_forward.17} parent=5 // pred_check
      %p1594 = pneg %p1593
    $region82: #{decoder_blocks_forward.17} parent=5 // pred_check_branch
      %1596 = sbr.rel (%p1594) target = $region84
    $region83: #{decoder_blocks_forward.17} parent=5 // pred_region
      %s1597 = ssub.s32 %s32, 2
      // Predicated region
      $region85: #{decoder_blocks_forward.17} parent=83 // pred_check
        %p1598 = pneg %p375
      $region86: #{decoder_blocks_forward.17} parent=83 // pred_check_branch
        %1600 = sbr.rel (%p1598) target = $region88
      $region87: #{decoder_blocks_forward.17} parent=83 // pred_region
        %p1601 = scmp.lt.s32.totalorder %s38, 1
        %s1602 = scalar_select %p1601, %s38, 1
        %s1603 = smul.addr %s1602, 8
        %s1604 = scalar_lea.vmem %s16, %s1603
      $region88: #{decoder_blocks_forward.17} parent=83 // pred_fallthru
        _
    $region84: #{decoder_blocks_forward.17} parent=5 // pred_fallthru
      _
  $region6: #{decoder_blocks_forward.17} parent=0 // loop_footer
    %s36 = sadd.s32 1, %s32
  $region7: #{decoder_blocks_forward.17} parent=0 // loop_footer_branch
    %31 = sbr.rel target = $region3
  $region8: #{decoder_blocks_forward.17} parent=0 // loop_exit
    _

</llo_original>
